<compile_context>
chip_gen: v7x
topology: tpu7x:2x2x1
jax: 0.10.0
libtpu: 0.0.40
codegen_flags: <defaults>
</compile_context>

<pallas_src>
import functools

import jax
import jax.numpy as jnp
from jax import lax
from jax.experimental import pallas as pl
from jax.experimental.pallas import tpu as pltpu


def _vmem_limit(need_bytes, headroom=4 << 20, floor=16 << 20, cap=64 << 20):
    """Scoped-VMEM budget: 2x working set + headroom, clamped to [16, 64] MiB."""
    return int(min(max(2 * need_bytes + headroom, floor), cap))


# ---------------------------------------------------------------------------
# Pallas kernel 1: one fused bidirectional LSTM layer (full recurrence)
# ---------------------------------------------------------------------------
def _bilstm_layer_kernel(x_ref, wih_ref, whhf_ref, whhb_ref, b_ref,
                         out_ref, gx_ref, *, seq_len, hidden, unroll):
    """Fused bidirectional LSTM layer.

    x_ref   : (T, B, D)   layer input
    wih_ref : (D, 8H)     [fwd | bwd] input->gate weights, gate order (i,f,o,g)
    whhf_ref: (H, 4H)     fwd hidden->gate weights, gate order (i,f,o,g)
    whhb_ref: (H, 4H)     bwd hidden->gate weights, gate order (i,f,o,g)
    b_ref   : (1, 8H)     [fwd | bwd] summed biases (b_ih + b_hh)
    out_ref : (T, B, 2H)  output, columns [0:H] = fwd, [H:2H] = bwd
    gx_ref  : (T, B, 8H)  VMEM scratch for the precomputed input projection
    """
    T, B, D = x_ref.shape
    H = hidden

    # Hoisted input projection: one large MXU matmul for BOTH directions and
    # all timesteps, bias folded in.  Only h @ W_hh stays in the serial loop.
    x_flat = x_ref[...].reshape(T * B, D)
    gx = jnp.dot(x_flat, wih_ref[...], preferred_element_type=jnp.float32)
    gx_ref[...] = (gx + b_ref[...]).reshape(T, B, 8 * H)

    def lstm_cell(gates, c):
        # gate order (i, f, o, g): one contiguous sigmoid slab + one tanh slab
        sg = jax.nn.sigmoid(gates[:, :3 * H])
        g_g = jnp.tanh(gates[:, 3 * H:])
        i_g = sg[:, 0 * H:1 * H]
        f_g = sg[:, 1 * H:2 * H]
        o_g = sg[:, 2 * H:3 * H]
        c_new = f_g * c + i_g * g_g
        h_new = o_g * jnp.tanh(c_new)
        return h_new, c_new

    def step(i, carry):
        hf, cf, hb, cb = carry
        tf = i
        tb = seq_len - 1 - i
        gx_f = gx_ref[tf]                                   # (B, 8H)
        gx_b = gx_ref[tb]
        gates_f = gx_f[:, :4 * H] + jnp.dot(
            hf, whhf_ref[...], preferred_element_type=jnp.float32)
        gates_b = gx_b[:, 4 * H:] + jnp.dot(
            hb, whhb_ref[...], preferred_element_type=jnp.float32)
        hf_new, cf_new = lstm_cell(gates_f, cf)
        hb_new, cb_new = lstm_cell(gates_b, cb)
        out_ref[tf, :, pl.ds(0, H)] = hf_new
        out_ref[tb, :, pl.ds(H, H)] = hb_new
        return (hf_new, cf_new, hb_new, cb_new)

    z = jnp.zeros((B, H), jnp.float32)
    lax.fori_loop(0, seq_len, step, (z, z, z, z), unroll=unroll)


def bilstm_layer(x_tbd, wih_cat, whh_f, whh_b, bias_cat, *, hidden, unroll):
    """Run one fused bidirectional LSTM layer.  x_tbd: (T, B, D) -> (T, B, 2H)."""
    T, B, D = x_tbd.shape
    H = hidden
    flops = 2 * T * B * (D + H) * 8 * H
    transc = 10 * T * B * H                     # 5 transcendentals per dir/unit
    bytes_acc = 4 * (x_tbd.size + wih_cat.size + whh_f.size + whh_b.size
                     + bias_cat.size + T * B * 2 * H)
    vmem_need = bytes_acc + 4 * T * B * 8 * H   # + gates_x scratch
    kernel = functools.partial(_bilstm_layer_kernel,
                               seq_len=T, hidden=H, unroll=unroll)
    # TODO(synk): for large T*B (v7x 64 MiB VMEM), stream x / gates_x / out over
    # T chunks with double-buffered DMA instead of whole-array VMEM residency.
    return pl.pallas_call(
        kernel,
        out_shape=jax.ShapeDtypeStruct((T, B, 2 * H), jnp.float32),
        scratch_shapes=[pltpu.VMEM((T, B, 8 * H), jnp.float32)],
        cost_estimate=pl.CostEstimate(flops=flops, transcendentals=transc,
                                      bytes_accessed=bytes_acc),
        compiler_params=pltpu.CompilerParams(
            vmem_limit_bytes=_vmem_limit(vmem_need)),
    )(x_tbd, wih_cat, whh_f, whh_b, bias_cat)


# ---------------------------------------------------------------------------
# Pallas kernel 2: attention pooling + fully-connected head
# ---------------------------------------------------------------------------
def _attn_fc_kernel(out_ref, aw1_ref, ab1_ref, aw2_ref, ab2_ref,
                    fw1_ref, fb1_ref, fw2_ref, fb2_ref, logits_ref):
    """out_ref: (T, B, 2H) LSTM outputs.  logits_ref: (B, num_classes).
    aw2_ref is passed as a (1, H) row so the score is a VPU mul + reduction."""
    T, B, H2 = out_ref.shape
    seq = out_ref[...]                                      # (T, B, 2H)
    flat = seq.reshape(T * B, H2)

    # attention scores: Linear(2H,H) -> tanh -> row-dot (replaces (H,1) matmul)
    e = jnp.tanh(jnp.dot(flat, aw1_ref[...],
                         preferred_element_type=jnp.float32) + ab1_ref[...])
    s = jnp.sum(e * aw2_ref[...], axis=-1, keepdims=True) + ab2_ref[...]
    s = s.reshape(T, B, 1)

    # softmax over the sequence axis (dim=1 in PyTorch's (B, T, 1) layout)
    s = s - jnp.max(s, axis=0, keepdims=True)
    w = jnp.exp(s)
    w = w / jnp.sum(w, axis=0, keepdims=True)               # (T, B, 1)

    # context vector = sum_t w[t] * out[t]   -> (B, 2H)
    ctx = jnp.sum(w * seq, axis=0)

    # fc head: Linear(2H,H) -> ReLU -> (Dropout: identity) -> Linear(H,C)
    h = jnp.maximum(
        jnp.dot(ctx, fw1_ref[...], preferred_element_type=jnp.float32)
        + fb1_ref[...], 0.0)
    logits_ref[...] = (jnp.dot(h, fw2_ref[...],
                               preferred_element_type=jnp.float32)
                       + fb2_ref[...])


def attn_fc(lstm_out_tbd, p):
    T, B, H2 = lstm_out_tbd.shape
    H = p["attn_w1"].shape[1]
    C = p["fc_w2"].shape[1]
    flops = 2 * T * B * H2 * H + 2 * T * B * H + 2 * B * H2 * H + 2 * B * H * C
    transc = T * B * (H + 1)
    param_elems = sum(p[k].size for k in ("attn_w1", "attn_b1", "attn_w2",
                                          "attn_b2", "fc_w1", "fc_b1",
                                          "fc_w2", "fc_b2"))
    bytes_acc = 4 * (lstm_out_tbd.size + param_elems + B * C)
    vmem_need = bytes_acc + 4 * T * B * H      # + intermediate 'e'
    # TODO(synk): for large T, tile this kernel over T chunks with a two-pass
    # (running max / sum) softmax instead of whole-(T,B,2H) VMEM residency.
    return pl.pallas_call(
        _attn_fc_kernel,
        out_shape=jax.ShapeDtypeStruct((B, C), jnp.float32),
        cost_estimate=pl.CostEstimate(flops=flops, transcendentals=transc,
                                      bytes_accessed=bytes_acc),
        compiler_params=pltpu.CompilerParams(
            vmem_limit_bytes=_vmem_limit(vmem_need)),
    )(lstm_out_tbd, p["attn_w1"], p["attn_b1"],
      jnp.transpose(p["attn_w2"]),                           # (H,1) -> (1,H)
      p["attn_b2"], p["fc_w1"], p["fc_b1"], p["fc_w2"], p["fc_b2"])


# ---------------------------------------------------------------------------
# Parameter construction (deterministic, PyTorch-style uniform init).
# Stored in PyTorch gate order (i, f, g, o); the wrapper reorders for kernels.
# ---------------------------------------------------------------------------
def init_params(key, *, input_size, hidden_size, num_layers, num_classes):
    params = {"lstm": []}
    bound = 1.0 / jnp.sqrt(hidden_size)

    def uni(key, shape):
        return jax.random.uniform(key, shape, jnp.float32, -bound, bound)

    for layer in range(num_layers):
        d_in = input_size if layer == 0 else 2 * hidden_size
        dirs = {}
        for d in ("fwd", "bwd"):
            key, k1, k2, k3, k4 = jax.random.split(key, 5)
            wih = uni(k1, (d_in, 4 * hidden_size))            # stored transposed
            whh = uni(k2, (hidden_size, 4 * hidden_size))     # stored transposed
            bias = uni(k3, (1, 4 * hidden_size)) + uni(k4, (1, 4 * hidden_size))
            dirs[d] = (wih, whh, bias)
        params["lstm"].append(dirs)

    key, *ks = jax.random.split(key, 9)
    H2 = 2 * hidden_size
    params["attn_w1"] = uni(ks[0], (H2, hidden_size))
    params["attn_b1"] = uni(ks[1], (1, hidden_size))
    params["attn_w2"] = uni(ks[2], (hidden_size, 1))
    params["attn_b2"] = uni(ks[3], (1, 1))
    params["fc_w1"] = uni(ks[4], (H2, hidden_size))
    params["fc_b1"] = uni(ks[5], (1, hidden_size))
    params["fc_w2"] = uni(ks[6], (hidden_size, num_classes))
    params["fc_b2"] = uni(ks[7], (1, num_classes))
    return params


def _reorder_ifog(w, H):
    """Reorder the trailing 4H gate columns from (i,f,g,o) to (i,f,o,g)."""
    i = w[..., 0 * H:1 * H]
    f = w[..., 1 * H:2 * H]
    g = w[..., 2 * H:3 * H]
    o = w[..., 3 * H:4 * H]
    return jnp.concatenate([i, f, o, g], axis=-1)


# ---------------------------------------------------------------------------
# Full forward pass (Pallas kernels for the hot path, JAX glue elsewhere)
# ---------------------------------------------------------------------------
def lstm_classifier_forward(x_bsd, params):
    """x_bsd: (batch, seq_len, input_size) -> logits (batch, num_classes)."""
    x_tbd = jnp.transpose(x_bsd, (1, 0, 2)).astype(jnp.float32)  # (T, B, D)
    T = x_tbd.shape[0]
    H = params["lstm"][0]["fwd"][1].shape[0]
    unroll = True if T <= 16 else 4

    layer_in = x_tbd
    for dirs in params["lstm"]:
        wih_f, whh_f, b_f = dirs["fwd"]
        wih_b, whh_b, b_b = dirs["bwd"]
        wih_cat = jnp.concatenate(
            [_reorder_ifog(wih_f, H), _reorder_ifog(wih_b, H)], axis=-1)
        b_cat = jnp.concatenate(
            [_reorder_ifog(b_f, H), _reorder_ifog(b_b, H)], axis=-1)
        layer_in = bilstm_layer(layer_in, wih_cat,
                                _reorder_ifog(whh_f, H),
                                _reorder_ifog(whh_b, H),
                                b_cat, hidden=H, unroll=unroll)
        # TODO(synk): inter-layer dropout is identity (inference mode).
    return attn_fc(layer_in, params)


# ---------------------------------------------------------------------------
# Pure-JAX reference (same math, PyTorch gate order) for a correctness check
# ---------------------------------------------------------------------------
def _ref_forward(x_bsd, params):
    x_tbd = jnp.transpose(x_bsd, (1, 0, 2))
    T, B, _ = x_tbd.shape

    def run_dir(x, wih, whh, b, reverse):
        H = whh.shape[0]
        xs = x[::-1] if reverse else x

        def step(carry, x_t):
            h, c = carry
            g = x_t @ wih + h @ whh + b
            i_g = jax.nn.sigmoid(g[:, 0 * H:1 * H])
            f_g = jax.nn.sigmoid(g[:, 1 * H:2 * H])
            g_g = jnp.tanh(g[:, 2 * H:3 * H])
            o_g = jax.nn.sigmoid(g[:, 3 * H:4 * H])
            c = f_g * c + i_g * g_g
            h = o_g * jnp.tanh(c)
            return (h, c), h

        _, hs = lax.scan(step, (jnp.zeros((B, H)), jnp.zeros((B, H))), xs)
        return hs[::-1] if reverse else hs

    layer_in = x_tbd
    for dirs in params["lstm"]:
        hf = run_dir(layer_in, *dirs["fwd"], reverse=False)
        hb = run_dir(layer_in, *dirs["bwd"], reverse=True)
        layer_in = jnp.concatenate([hf, hb], axis=-1)

    p = params
    flat = layer_in.reshape(T * B, -1)
    e = jnp.tanh(flat @ p["attn_w1"] + p["attn_b1"])
    s = (e @ p["attn_w2"] + p["attn_b2"]).reshape(T, B, 1)
    w = jax.nn.softmax(s, axis=0)
    ctx = jnp.sum(w * layer_in, axis=0)
    h = jnp.maximum(ctx @ p["fc_w1"] + p["fc_b1"], 0.0)
    return h @ p["fc_w2"] + p["fc_b2"]


if __name__ == "__main__":
    batch, seq_len = 2, 8
    input_size, hidden_size, num_layers, num_classes = 4, 32, 2, 2

    key = jax.random.PRNGKey(0)
    key, xk, pk = jax.random.split(key, 3)
    x = jax.random.normal(xk, (batch, seq_len, input_size), jnp.float32)
    params = init_params(pk, input_size=input_size, hidden_size=hidden_size,
                         num_layers=num_layers, num_classes=num_classes)

    logits = jax.block_until_ready(
        jax.jit(lstm_classifier_forward)(x, params))
    ref = jax.block_until_ready(_ref_forward(x, params))

    assert logits.shape == (batch, num_classes)
    assert jnp.allclose(logits, ref, atol=1e-3, rtol=1e-3), (logits, ref)
    print("KERNEL_OK")
</pallas_src>

<mosaic_0001>
module attributes {stable_mosaic.version = 11 : i64} {
  func.func @_bilstm_layer_kernel(%arg0: memref<8x2x64xf32, #tpu.memory_space<vmem>>, %arg1: memref<64x256xf32, #tpu.memory_space<vmem>>, %arg2: memref<32x128xf32, #tpu.memory_space<vmem>>, %arg3: memref<32x128xf32, #tpu.memory_space<vmem>>, %arg4: memref<1x256xf32, #tpu.memory_space<vmem>>, %arg5: memref<8x2x64xf32, #tpu.memory_space<vmem>>, %arg6: memref<8x2x256xf32, #tpu.memory_space<vmem>>) attributes {dimension_semantics = [], scalar_prefetch = 0 : i64, scratch_operands = 1 : i64, tpu.core_type = #tpu.core_type<tc>} {
    %c0 = arith.constant 0 : index
    %c0_0 = arith.constant 0 : index
    %c0_1 = arith.constant 0 : index
    %0 = vector.load %arg0[%c0, %c0_0, %c0_1] : memref<8x2x64xf32, #tpu.memory_space<vmem>>, vector<8x2x64xf32>
    %1 = vector.shape_cast %0 : vector<8x2x64xf32> to vector<16x64xf32>
    %c0_2 = arith.constant 0 : index
    %c0_3 = arith.constant 0 : index
    %2 = vector.load %arg1[%c0_2, %c0_3] : memref<64x256xf32, #tpu.memory_space<vmem>>, vector<64x256xf32>
    %cst = arith.constant dense<0.000000e+00> : vector<16x256xf32>
    %3 = tpu.matmul %1, %2, %cst {dimension_numbers = #tpu.dot_dimension_numbers<[1], [0], [0], [1], [0, 0, 1, 1], [], []>} : vector<16x64xf32>, vector<64x256xf32>, vector<16x256xf32> -> vector<16x256xf32>
    %c0_4 = arith.constant 0 : index
    %c0_5 = arith.constant 0 : index
    %4 = vector.load %arg4[%c0_4, %c0_5] : memref<1x256xf32, #tpu.memory_space<vmem>>, vector<1x256xf32>
    %5 = vector.broadcast %4 : vector<1x256xf32> to vector<16x256xf32>
    %6 = arith.addf %3, %5 : vector<16x256xf32>
    %7 = vector.shape_cast %6 : vector<16x256xf32> to vector<8x2x256xf32>
    %c0_6 = arith.constant 0 : index
    %c0_7 = arith.constant 0 : index
    %c0_8 = arith.constant 0 : index
    %8 = vector.load %arg6[%c0_6, %c0_7, %c0_8] : memref<8x2x256xf32, #tpu.memory_space<vmem>>, vector<8x2x256xf32>
    tpu.vector_store %arg6[%c0_6, %c0_7, %c0_8], %7 {strides = array<i32>} : memref<8x2x256xf32, #tpu.memory_space<vmem>>, vector<8x2x256xf32>,
    %cst_9 = arith.constant 0.000000e+00 : f32
    %9 = vector.broadcast %cst_9 : f32 to vector<2x32xf32>
    %c0_i32 = arith.constant 0 : i32
    %c7_i32 = arith.constant 7 : i32
    %10 = arith.subi %c7_i32, %c0_i32 : i32
    %11 = arith.index_cast %c0_i32 : i32 to index
    %c0_10 = arith.constant 0 : index
    %c0_11 = arith.constant 0 : index
    %12 = vector.load %arg6[%11, %c0_10, %c0_11] : memref<8x2x256xf32, #tpu.memory_space<vmem>>, vector<1x2x256xf32>
    %13 = vector.shape_cast %12 : vector<1x2x256xf32> to vector<2x256xf32>
    %14 = arith.index_cast %10 : i32 to index
    %c0_12 = arith.constant 0 : index
    %c0_13 = arith.constant 0 : index
    %15 = vector.load %arg6[%14, %c0_12, %c0_13] : memref<8x2x256xf32, #tpu.memory_space<vmem>>, vector<1x2x256xf32>
    %16 = vector.shape_cast %15 : vector<1x2x256xf32> to vector<2x256xf32>
    %17 = vector.extract_strided_slice %13 {offsets = [0, 0], sizes = [2, 128], strides = [1, 1]} : vector<2x256xf32> to vector<2x128xf32>
    %c0_14 = arith.constant 0 : index
    %c0_15 = arith.constant 0 : index
    %18 = vector.load %arg2[%c0_14, %c0_15] : memref<32x128xf32, #tpu.memory_space<vmem>>, vector<32x128xf32>
    %cst_16 = arith.constant dense<0.000000e+00> : vector<2x128xf32>
    %19 = tpu.matmul %9, %18, %cst_16 {dimension_numbers = #tpu.dot_dimension_numbers<[1], [0], [0], [1], [0, 0, 1, 1], [], []>} : vector<2x32xf32>, vector<32x128xf32>, vector<2x128xf32> -> vector<2x128xf32>
    %20 = arith.addf %17, %19 : vector<2x128xf32>
    %21 = vector.extract_strided_slice %16 {offsets = [0, 128], sizes = [2, 128], strides = [1, 1]} : vector<2x256xf32> to vector<2x128xf32>
    %c0_17 = arith.constant 0 : index
    %c0_18 = arith.constant 0 : index
    %22 = vector.load %arg3[%c0_17, %c0_18] : memref<32x128xf32, #tpu.memory_space<vmem>>, vector<32x128xf32>
    %cst_19 = arith.constant dense<0.000000e+00> : vector<2x128xf32>
    %23 = tpu.matmul %9, %22, %cst_19 {dimension_numbers = #tpu.dot_dimension_numbers<[1], [0], [0], [1], [0, 0, 1, 1], [], []>} : vector<2x32xf32>, vector<32x128xf32>, vector<2x128xf32> -> vector<2x128xf32>
    %24 = arith.addf %21, %23 : vector<2x128xf32>
    %25 = vector.extract_strided_slice %20 {offsets = [0, 0], sizes = [2, 96], strides = [1, 1]} : vector<2x128xf32> to vector<2x96xf32>
    %26 = arith.negf %25 : vector<2x96xf32>
    %27 = math.exp %26 : vector<2x96xf32>
    %cst_20 = arith.constant 1.000000e+00 : f32
    %28 = vector.broadcast %cst_20 : f32 to vector<2x96xf32>
    %29 = arith.addf %28, %27 : vector<2x96xf32>
    %30 = arith.divf %28, %29 : vector<2x96xf32>
    %31 = vector.extract_strided_slice %20 {offsets = [0, 96], sizes = [2, 32], strides = [1, 1]} : vector<2x128xf32> to vector<2x32xf32>
    %32 = math.tanh %31 : vector<2x32xf32>
    %33 = vector.extract_strided_slice %30 {offsets = [0, 0], sizes = [2, 32], strides = [1, 1]} : vector<2x96xf32> to vector<2x32xf32>
    %34 = vector.extract_strided_slice %30 {offsets = [0, 32], sizes = [2, 32], strides = [1, 1]} : vector<2x96xf32> to vector<2x32xf32>
    %35 = vector.extract_strided_slice %30 {offsets = [0, 64], sizes = [2, 32], strides = [1, 1]} : vector<2x96xf32> to vector<2x32xf32>
    %36 = arith.mulf %34, %9 : vector<2x32xf32>
    %37 = arith.mulf %33, %32 : vector<2x32xf32>
    %38 = arith.addf %36, %37 : vector<2x32xf32>
    %39 = math.tanh %38 : vector<2x32xf32>
    %40 = arith.mulf %35, %39 : vector<2x32xf32>
    %41 = vector.extract_strided_slice %24 {offsets = [0, 0], sizes = [2, 96], strides = [1, 1]} : vector<2x128xf32> to vector<2x96xf32>
    %42 = arith.negf %41 : vector<2x96xf32>
    %43 = math.exp %42 : vector<2x96xf32>
    %cst_21 = arith.constant 1.000000e+00 : f32
    %44 = vector.broadcast %cst_21 : f32 to vector<2x96xf32>
    %45 = arith.addf %44, %43 : vector<2x96xf32>
    %46 = arith.divf %44, %45 : vector<2x96xf32>
    %47 = vector.extract_strided_slice %24 {offsets = [0, 96], sizes = [2, 32], strides = [1, 1]} : vector<2x128xf32> to vector<2x32xf32>
    %48 = math.tanh %47 : vector<2x32xf32>
    %49 = vector.extract_strided_slice %46 {offsets = [0, 0], sizes = [2, 32], strides = [1, 1]} : vector<2x96xf32> to vector<2x32xf32>
    %50 = vector.extract_strided_slice %46 {offsets = [0, 32], sizes = [2, 32], strides = [1, 1]} : vector<2x96xf32> to vector<2x32xf32>
    %51 = vector.extract_strided_slice %46 {offsets = [0, 64], sizes = [2, 32], strides = [1, 1]} : vector<2x96xf32> to vector<2x32xf32>
    %52 = arith.mulf %50, %9 : vector<2x32xf32>
    %53 = arith.mulf %49, %48 : vector<2x32xf32>
    %54 = arith.addf %52, %53 : vector<2x32xf32>
    %55 = math.tanh %54 : vector<2x32xf32>
    %56 = arith.mulf %51, %55 : vector<2x32xf32>
    %57 = arith.index_cast %c0_i32 : i32 to index
    %c0_22 = arith.constant 0 : index
    %c0_23 = arith.constant 0 : index
    %58 = vector.load %arg5[%57, %c0_22, %c0_23] : memref<8x2x64xf32, #tpu.memory_space<vmem>>, vector<1x2x32xf32>
    %59 = vector.shape_cast %58 : vector<1x2x32xf32> to vector<2x32xf32>
    %60 = vector.shape_cast %40 : vector<2x32xf32> to vector<1x2x32xf32>
    tpu.vector_store %arg5[%57, %c0_22, %c0_23], %60 {strides = array<i32>} : memref<8x2x64xf32, #tpu.memory_space<vmem>>, vector<1x2x32xf32>,
    %61 = arith.index_cast %10 : i32 to index
    %c0_24 = arith.constant 0 : index
    %c32 = arith.constant 32 : index
    %62 = vector.load %arg5[%61, %c0_24, %c32] : memref<8x2x64xf32, #tpu.memory_space<vmem>>, vector<1x2x32xf32>
    %63 = vector.shape_cast %62 : vector<1x2x32xf32> to vector<2x32xf32>
    %64 = vector.shape_cast %56 : vector<2x32xf32> to vector<1x2x32xf32>
    tpu.vector_store %arg5[%61, %c0_24, %c32], %64 {strides = array<i32>} : memref<8x2x64xf32, #tpu.memory_space<vmem>>, vector<1x2x32xf32>,
    %c1_i32 = arith.constant 1 : i32
    %c7_i32_25 = arith.constant 7 : i32
    %65 = arith.subi %c7_i32_25, %c1_i32 : i32
    %66 = arith.index_cast %c1_i32 : i32 to index
    %c0_26 = arith.constant 0 : index
    %c0_27 = arith.constant 0 : index
    %67 = vector.load %arg6[%66, %c0_26, %c0_27] : memref<8x2x256xf32, #tpu.memory_space<vmem>>, vector<1x2x256xf32>
    %68 = vector.shape_cast %67 : vector<1x2x256xf32> to vector<2x256xf32>
    %69 = arith.index_cast %65 : i32 to index
    %c0_28 = arith.constant 0 : index
    %c0_29 = arith.constant 0 : index
    %70 = vector.load %arg6[%69, %c0_28, %c0_29] : memref<8x2x256xf32, #tpu.memory_space<vmem>>, vector<1x2x256xf32>
    %71 = vector.shape_cast %70 : vector<1x2x256xf32> to vector<2x256xf32>
    %72 = vector.extract_strided_slice %68 {offsets = [0, 0], sizes = [2, 128], strides = [1, 1]} : vector<2x256xf32> to vector<2x128xf32>
    %c0_30 = arith.constant 0 : index
    %c0_31 = arith.constant 0 : index
    %73 = vector.load %arg2[%c0_30, %c0_31] : memref<32x128xf32, #tpu.memory_space<vmem>>, vector<32x128xf32>
    %cst_32 = arith.constant dense<0.000000e+00> : vector<2x128xf32>
    %74 = tpu.matmul %40, %73, %cst_32 {dimension_numbers = #tpu.dot_dimension_numbers<[1], [0], [0], [1], [0, 0, 1, 1], [], []>} : vector<2x32xf32>, vector<32x128xf32>, vector<2x128xf32> -> vector<2x128xf32>
    %75 = arith.addf %72, %74 : vector<2x128xf32>
    %76 = vector.extract_strided_slice %71 {offsets = [0, 128], sizes = [2, 128], strides = [1, 1]} : vector<2x256xf32> to vector<2x128xf32>
    %c0_33 = arith.constant 0 : index
    %c0_34 = arith.constant 0 : index
    %77 = vector.load %arg3[%c0_33, %c0_34] : memref<32x128xf32, #tpu.memory_space<vmem>>, vector<32x128xf32>
    %cst_35 = arith.constant dense<0.000000e+00> : vector<2x128xf32>
    %78 = tpu.matmul %56, %77, %cst_35 {dimension_numbers = #tpu.dot_dimension_numbers<[1], [0], [0], [1], [0, 0, 1, 1], [], []>} : vector<2x32xf32>, vector<32x128xf32>, vector<2x128xf32> -> vector<2x128xf32>
    %79 = arith.addf %76, %78 : vector<2x128xf32>
    %80 = vector.extract_strided_slice %75 {offsets = [0, 0], sizes = [2, 96], strides = [1, 1]} : vector<2x128xf32> to vector<2x96xf32>
    %81 = arith.negf %80 : vector<2x96xf32>
    %82 = math.exp %81 : vector<2x96xf32>
    %cst_36 = arith.constant 1.000000e+00 : f32
    %83 = vector.broadcast %cst_36 : f32 to vector<2x96xf32>
    %84 = arith.addf %83, %82 : vector<2x96xf32>
    %85 = arith.divf %83, %84 : vector<2x96xf32>
    %86 = vector.extract_strided_slice %75 {offsets = [0, 96], sizes = [2, 32], strides = [1, 1]} : vector<2x128xf32> to vector<2x32xf32>
    %87 = math.tanh %86 : vector<2x32xf32>
    %88 = vector.extract_strided_slice %85 {offsets = [0, 0], sizes = [2, 32], strides = [1, 1]} : vector<2x96xf32> to vector<2x32xf32>
    %89 = vector.extract_strided_slice %85 {offsets = [0, 32], sizes = [2, 32], strides = [1, 1]} : vector<2x96xf32> to vector<2x32xf32>
    %90 = vector.extract_strided_slice %85 {offsets = [0, 64], sizes = [2, 32], strides = [1, 1]} : vector<2x96xf32> to vector<2x32xf32>
    %91 = arith.mulf %89, %38 : vector<2x32xf32>
    %92 = arith.mulf %88, %87 : vector<2x32xf32>
    %93 = arith.addf %91, %92 : vector<2x32xf32>
    %94 = math.tanh %93 : vector<2x32xf32>
    %95 = arith.mulf %90, %94 : vector<2x32xf32>
    %96 = vector.extract_strided_slice %79 {offsets = [0, 0], sizes = [2, 96], strides = [1, 1]} : vector<2x128xf32> to vector<2x96xf32>
    %97 = arith.negf %96 : vector<2x96xf32>
    %98 = math.exp %97 : vector<2x96xf32>
    %cst_37 = arith.constant 1.000000e+00 : f32
    %99 = vector.broadcast %cst_37 : f32 to vector<2x96xf32>
    %100 = arith.addf %99, %98 : vector<2x96xf32>
    %101 = arith.divf %99, %100 : vector<2x96xf32>
    %102 = vector.extract_strided_slice %79 {offsets = [0, 96], sizes = [2, 32], strides = [1, 1]} : vector<2x128xf32> to vector<2x32xf32>
    %103 = math.tanh %102 : vector<2x32xf32>
    %104 = vector.extract_strided_slice %101 {offsets = [0, 0], sizes = [2, 32], strides = [1, 1]} : vector<2x96xf32> to vector<2x32xf32>
    %105 = vector.extract_strided_slice %101 {offsets = [0, 32], sizes = [2, 32], strides = [1, 1]} : vector<2x96xf32> to vector<2x32xf32>
    %106 = vector.extract_strided_slice %101 {offsets = [0, 64], sizes = [2, 32], strides = [1, 1]} : vector<2x96xf32> to vector<2x32xf32>
    %107 = arith.mulf %105, %54 : vector<2x32xf32>
    %108 = arith.mulf %104, %103 : vector<2x32xf32>
    %109 = arith.addf %107, %108 : vector<2x32xf32>
    %110 = math.tanh %109 : vector<2x32xf32>
    %111 = arith.mulf %106, %110 : vector<2x32xf32>
    %112 = arith.index_cast %c1_i32 : i32 to index
    %c0_38 = arith.constant 0 : index
    %c0_39 = arith.constant 0 : index
    %113 = vector.load %arg5[%112, %c0_38, %c0_39] : memref<8x2x64xf32, #tpu.memory_space<vmem>>, vector<1x2x32xf32>
    %114 = vector.shape_cast %113 : vector<1x2x32xf32> to vector<2x32xf32>
    %115 = vector.shape_cast %95 : vector<2x32xf32> to vector<1x2x32xf32>
    tpu.vector_store %arg5[%112, %c0_38, %c0_39], %115 {strides = array<i32>} : memref<8x2x64xf32, #tpu.memory_space<vmem>>, vector<1x2x32xf32>,
    %116 = arith.index_cast %65 : i32 to index
    %c0_40 = arith.constant 0 : index
    %c32_41 = arith.constant 32 : index
    %117 = vector.load %arg5[%116, %c0_40, %c32_41] : memref<8x2x64xf32, #tpu.memory_space<vmem>>, vector<1x2x32xf32>
    %118 = vector.shape_cast %117 : vector<1x2x32xf32> to vector<2x32xf32>
    %119 = vector.shape_cast %111 : vector<2x32xf32> to vector<1x2x32xf32>
    tpu.vector_store %arg5[%116, %c0_40, %c32_41], %119 {strides = array<i32>} : memref<8x2x64xf32, #tpu.memory_space<vmem>>, vector<1x2x32xf32>,
    %c2_i32 = arith.constant 2 : i32
    %c7_i32_42 = arith.constant 7 : i32
    %120 = arith.subi %c7_i32_42, %c2_i32 : i32
    %121 = arith.index_cast %c2_i32 : i32 to index
    %c0_43 = arith.constant 0 : index
    %c0_44 = arith.constant 0 : index
    %122 = vector.load %arg6[%121, %c0_43, %c0_44] : memref<8x2x256xf32, #tpu.memory_space<vmem>>, vector<1x2x256xf32>
    %123 = vector.shape_cast %122 : vector<1x2x256xf32> to vector<2x256xf32>
    %124 = arith.index_cast %120 : i32 to index
    %c0_45 = arith.constant 0 : index
    %c0_46 = arith.constant 0 : index
    %125 = vector.load %arg6[%124, %c0_45, %c0_46] : memref<8x2x256xf32, #tpu.memory_space<vmem>>, vector<1x2x256xf32>
    %126 = vector.shape_cast %125 : vector<1x2x256xf32> to vector<2x256xf32>
    %127 = vector.extract_strided_slice %123 {offsets = [0, 0], sizes = [2, 128], strides = [1, 1]} : vector<2x256xf32> to vector<2x128xf32>
    %c0_47 = arith.constant 0 : index
    %c0_48 = arith.constant 0 : index
    %128 = vector.load %arg2[%c0_47, %c0_48] : memref<32x128xf32, #tpu.memory_space<vmem>>, vector<32x128xf32>
    %cst_49 = arith.constant dense<0.000000e+00> : vector<2x128xf32>
    %129 = tpu.matmul %95, %128, %cst_49 {dimension_numbers = #tpu.dot_dimension_numbers<[1], [0], [0], [1], [0, 0, 1, 1], [], []>} : vector<2x32xf32>, vector<32x128xf32>, vector<2x128xf32> -> vector<2x128xf32>
    %130 = arith.addf %127, %129 : vector<2x128xf32>
    %131 = vector.extract_strided_slice %126 {offsets = [0, 128], sizes = [2, 128], strides = [1, 1]} : vector<2x256xf32> to vector<2x128xf32>
    %c0_50 = arith.constant 0 : index
    %c0_51 = arith.constant 0 : index
    %132 = vector.load %arg3[%c0_50, %c0_51] : memref<32x128xf32, #tpu.memory_space<vmem>>, vector<32x128xf32>
    %cst_52 = arith.constant dense<0.000000e+00> : vector<2x128xf32>
    %133 = tpu.matmul %111, %132, %cst_52 {dimension_numbers = #tpu.dot_dimension_numbers<[1], [0], [0], [1], [0, 0, 1, 1], [], []>} : vector<2x32xf32>, vector<32x128xf32>, vector<2x128xf32> -> vector<2x128xf32>
    %134 = arith.addf %131, %133 : vector<2x128xf32>
    %135 = vector.extract_strided_slice %130 {offsets = [0, 0], sizes = [2, 96], strides = [1, 1]} : vector<2x128xf32> to vector<2x96xf32>
    %136 = arith.negf %135 : vector<2x96xf32>
    %137 = math.exp %136 : vector<2x96xf32>
    %cst_53 = arith.constant 1.000000e+00 : f32
    %138 = vector.broadcast %cst_53 : f32 to vector<2x96xf32>
    %139 = arith.addf %138, %137 : vector<2x96xf32>
    %140 = arith.divf %138, %139 : vector<2x96xf32>
    %141 = vector.extract_strided_slice %130 {offsets = [0, 96], sizes = [2, 32], strides = [1, 1]} : vector<2x128xf32> to vector<2x32xf32>
    %142 = math.tanh %141 : vector<2x32xf32>
    %143 = vector.extract_strided_slice %140 {offsets = [0, 0], sizes = [2, 32], strides = [1, 1]} : vector<2x96xf32> to vector<2x32xf32>
    %144 = vector.extract_strided_slice %140 {offsets = [0, 32], sizes = [2, 32], strides = [1, 1]} : vector<2x96xf32> to vector<2x32xf32>
    %145 = vector.extract_strided_slice %140 {offsets = [0, 64], sizes = [2, 32], strides = [1, 1]} : vector<2x96xf32> to vector<2x32xf32>
    %146 = arith.mulf %144, %93 : vector<2x32xf32>
    %147 = arith.mulf %143, %142 : vector<2x32xf32>
    %148 = arith.addf %146, %147 : vector<2x32xf32>
    %149 = math.tanh %148 : vector<2x32xf32>
    %150 = arith.mulf %145, %149 : vector<2x32xf32>
    %151 = vector.extract_strided_slice %134 {offsets = [0, 0], sizes = [2, 96], strides = [1, 1]} : vector<2x128xf32> to vector<2x96xf32>
    %152 = arith.negf %151 : vector<2x96xf32>
    %153 = math.exp %152 : vector<2x96xf32>
    %cst_54 = arith.constant 1.000000e+00 : f32
    %154 = vector.broadcast %cst_54 : f32 to vector<2x96xf32>
    %155 = arith.addf %154, %153 : vector<2x96xf32>
    %156 = arith.divf %154, %155 : vector<2x96xf32>
    %157 = vector.extract_strided_slice %134 {offsets = [0, 96], sizes = [2, 32], strides = [1, 1]} : vector<2x128xf32> to vector<2x32xf32>
    %158 = math.tanh %157 : vector<2x32xf32>
    %159 = vector.extract_strided_slice %156 {offsets = [0, 0], sizes = [2, 32], strides = [1, 1]} : vector<2x96xf32> to vector<2x32xf32>
    %160 = vector.extract_strided_slice %156 {offsets = [0, 32], sizes = [2, 32], strides = [1, 1]} : vector<2x96xf32> to vector<2x32xf32>
    %161 = vector.extract_strided_slice %156 {offsets = [0, 64], sizes = [2, 32], strides = [1, 1]} : vector<2x96xf32> to vector<2x32xf32>
    %162 = arith.mulf %160, %109 : vector<2x32xf32>
    %163 = arith.mulf %159, %158 : vector<2x32xf32>
    %164 = arith.addf %162, %163 : vector<2x32xf32>
    %165 = math.tanh %164 : vector<2x32xf32>
    %166 = arith.mulf %161, %165 : vector<2x32xf32>
    %167 = arith.index_cast %c2_i32 : i32 to index
    %c0_55 = arith.constant 0 : index
    %c0_56 = arith.constant 0 : index
    %168 = vector.load %arg5[%167, %c0_55, %c0_56] : memref<8x2x64xf32, #tpu.memory_space<vmem>>, vector<1x2x32xf32>
    %169 = vector.shape_cast %168 : vector<1x2x32xf32> to vector<2x32xf32>
    %170 = vector.shape_cast %150 : vector<2x32xf32> to vector<1x2x32xf32>
    tpu.vector_store %arg5[%167, %c0_55, %c0_56], %170 {strides = array<i32>} : memref<8x2x64xf32, #tpu.memory_space<vmem>>, vector<1x2x32xf32>,
    %171 = arith.index_cast %120 : i32 to index
    %c0_57 = arith.constant 0 : index
    %c32_58 = arith.constant 32 : index
    %172 = vector.load %arg5[%171, %c0_57, %c32_58] : memref<8x2x64xf32, #tpu.memory_space<vmem>>, vector<1x2x32xf32>
    %173 = vector.shape_cast %172 : vector<1x2x32xf32> to vector<2x32xf32>
    %174 = vector.shape_cast %166 : vector<2x32xf32> to vector<1x2x32xf32>
    tpu.vector_store %arg5[%171, %c0_57, %c32_58], %174 {strides = array<i32>} : memref<8x2x64xf32, #tpu.memory_space<vmem>>, vector<1x2x32xf32>,
    %c3_i32 = arith.constant 3 : i32
    %c7_i32_59 = arith.constant 7 : i32
    %175 = arith.subi %c7_i32_59, %c3_i32 : i32
    %176 = arith.index_cast %c3_i32 : i32 to index
    %c0_60 = arith.constant 0 : index
    %c0_61 = arith.constant 0 : index
    %177 = vector.load %arg6[%176, %c0_60, %c0_61] : memref<8x2x256xf32, #tpu.memory_space<vmem>>, vector<1x2x256xf32>
    %178 = vector.shape_cast %177 : vector<1x2x256xf32> to vector<2x256xf32>
    %179 = arith.index_cast %175 : i32 to index
    %c0_62 = arith.constant 0 : index
    %c0_63 = arith.constant 0 : index
    %180 = vector.load %arg6[%179, %c0_62, %c0_63] : memref<8x2x256xf32, #tpu.memory_space<vmem>>, vector<1x2x256xf32>
    %181 = vector.shape_cast %180 : vector<1x2x256xf32> to vector<2x256xf32>
    %182 = vector.extract_strided_slice %178 {offsets = [0, 0], sizes = [2, 128], strides = [1, 1]} : vector<2x256xf32> to vector<2x128xf32>
    %c0_64 = arith.constant 0 : index
    %c0_65 = arith.constant 0 : index
    %183 = vector.load %arg2[%c0_64, %c0_65] : memref<32x128xf32, #tpu.memory_space<vmem>>, vector<32x128xf32>
    %cst_66 = arith.constant dense<0.000000e+00> : vector<2x128xf32>
    %184 = tpu.matmul %150, %183, %cst_66 {dimension_numbers = #tpu.dot_dimension_numbers<[1], [0], [0], [1], [0, 0, 1, 1], [], []>} : vector<2x32xf32>, vector<32x128xf32>, vector<2x128xf32> -> vector<2x128xf32>
    %185 = arith.addf %182, %184 : vector<2x128xf32>
    %186 = vector.extract_strided_slice %181 {offsets = [0, 128], sizes = [2, 128], strides = [1, 1]} : vector<2x256xf32> to vector<2x128xf32>
    %c0_67 = arith.constant 0 : index
    %c0_68 = arith.constant 0 : index
    %187 = vector.load %arg3[%c0_67, %c0_68] : memref<32x128xf32, #tpu.memory_space<vmem>>, vector<32x128xf32>
    %cst_69 = arith.constant dense<0.000000e+00> : vector<2x128xf32>
    %188 = tpu.matmul %166, %187, %cst_69 {dimension_numbers = #tpu.dot_dimension_numbers<[1], [0], [0], [1], [0, 0, 1, 1], [], []>} : vector<2x32xf32>, vector<32x128xf32>, vector<2x128xf32> -> vector<2x128xf32>
    %189 = arith.addf %186, %188 : vector<2x128xf32>
    %190 = vector.extract_strided_slice %185 {offsets = [0, 0], sizes = [2, 96], strides = [1, 1]} : vector<2x128xf32> to vector<2x96xf32>
    %191 = arith.negf %190 : vector<2x96xf32>
    %192 = math.exp %191 : vector<2x96xf32>
    %cst_70 = arith.constant 1.000000e+00 : f32
    %193 = vector.broadcast %cst_70 : f32 to vector<2x96xf32>
    %194 = arith.addf %193, %192 : vector<2x96xf32>
    %195 = arith.divf %193, %194 : vector<2x96xf32>
    %196 = vector.extract_strided_slice %185 {offsets = [0, 96], sizes = [2, 32], strides = [1, 1]} : vector<2x128xf32> to vector<2x32xf32>
    %197 = math.tanh %196 : vector<2x32xf32>
    %198 = vector.extract_strided_slice %195 {offsets = [0, 0], sizes = [2, 32], strides = [1, 1]} : vector<2x96xf32> to vector<2x32xf32>
    %199 = vector.extract_strided_slice %195 {offsets = [0, 32], sizes = [2, 32], strides = [1, 1]} : vector<2x96xf32> to vector<2x32xf32>
    %200 = vector.extract_strided_slice %195 {offsets = [0, 64], sizes = [2, 32], strides = [1, 1]} : vector<2x96xf32> to vector<2x32xf32>
    %201 = arith.mulf %199, %148 : vector<2x32xf32>
    %202 = arith.mulf %198, %197 : vector<2x32xf32>
    %203 = arith.addf %201, %202 : vector<2x32xf32>
    %204 = math.tanh %203 : vector<2x32xf32>
    %205 = arith.mulf %200, %204 : vector<2x32xf32>
    %206 = vector.extract_strided_slice %189 {offsets = [0, 0], sizes = [2, 96], strides = [1, 1]} : vector<2x128xf32> to vector<2x96xf32>
    %207 = arith.negf %206 : vector<2x96xf32>
    %208 = math.exp %207 : vector<2x96xf32>
    %cst_71 = arith.constant 1.000000e+00 : f32
    %209 = vector.broadcast %cst_71 : f32 to vector<2x96xf32>
    %210 = arith.addf %209, %208 : vector<2x96xf32>
    %211 = arith.divf %209, %210 : vector<2x96xf32>
    %212 = vector.extract_strided_slice %189 {offsets = [0, 96], sizes = [2, 32], strides = [1, 1]} : vector<2x128xf32> to vector<2x32xf32>
    %213 = math.tanh %212 : vector<2x32xf32>
    %214 = vector.extract_strided_slice %211 {offsets = [0, 0], sizes = [2, 32], strides = [1, 1]} : vector<2x96xf32> to vector<2x32xf32>
    %215 = vector.extract_strided_slice %211 {offsets = [0, 32], sizes = [2, 32], strides = [1, 1]} : vector<2x96xf32> to vector<2x32xf32>
    %216 = vector.extract_strided_slice %211 {offsets = [0, 64], sizes = [2, 32], strides = [1, 1]} : vector<2x96xf32> to vector<2x32xf32>
    %217 = arith.mulf %215, %164 : vector<2x32xf32>
    %218 = arith.mulf %214, %213 : vector<2x32xf32>
    %219 = arith.addf %217, %218 : vector<2x32xf32>
    %220 = math.tanh %219 : vector<2x32xf32>
    %221 = arith.mulf %216, %220 : vector<2x32xf32>
    %222 = arith.index_cast %c3_i32 : i32 to index
    %c0_72 = arith.constant 0 : index
    %c0_73 = arith.constant 0 : index
    %223 = vector.load %arg5[%222, %c0_72, %c0_73] : memref<8x2x64xf32, #tpu.memory_space<vmem>>, vector<1x2x32xf32>
    %224 = vector.shape_cast %223 : vector<1x2x32xf32> to vector<2x32xf32>
    %225 = vector.shape_cast %205 : vector<2x32xf32> to vector<1x2x32xf32>
    tpu.vector_store %arg5[%222, %c0_72, %c0_73], %225 {strides = array<i32>} : memref<8x2x64xf32, #tpu.memory_space<vmem>>, vector<1x2x32xf32>,
    %226 = arith.index_cast %175 : i32 to index
    %c0_74 = arith.constant 0 : index
    %c32_75 = arith.constant 32 : index
    %227 = vector.load %arg5[%226, %c0_74, %c32_75] : memref<8x2x64xf32, #tpu.memory_space<vmem>>, vector<1x2x32xf32>
    %228 = vector.shape_cast %227 : vector<1x2x32xf32> to vector<2x32xf32>
    %229 = vector.shape_cast %221 : vector<2x32xf32> to vector<1x2x32xf32>
    tpu.vector_store %arg5[%226, %c0_74, %c32_75], %229 {strides = array<i32>} : memref<8x2x64xf32, #tpu.memory_space<vmem>>, vector<1x2x32xf32>,
    %c4_i32 = arith.constant 4 : i32
    %c7_i32_76 = arith.constant 7 : i32
    %230 = arith.subi %c7_i32_76, %c4_i32 : i32
    %231 = arith.index_cast %c4_i32 : i32 to index
    %c0_77 = arith.constant 0 : index
    %c0_78 = arith.constant 0 : index
    %232 = vector.load %arg6[%231, %c0_77, %c0_78] : memref<8x2x256xf32, #tpu.memory_space<vmem>>, vector<1x2x256xf32>
    %233 = vector.shape_cast %232 : vector<1x2x256xf32> to vector<2x256xf32>
    %234 = arith.index_cast %230 : i32 to index
    %c0_79 = arith.constant 0 : index
    %c0_80 = arith.constant 0 : index
    %235 = vector.load %arg6[%234, %c0_79, %c0_80] : memref<8x2x256xf32, #tpu.memory_space<vmem>>, vector<1x2x256xf32>
    %236 = vector.shape_cast %235 : vector<1x2x256xf32> to vector<2x256xf32>
    %237 = vector.extract_strided_slice %233 {offsets = [0, 0], sizes = [2, 128], strides = [1, 1]} : vector<2x256xf32> to vector<2x128xf32>
    %c0_81 = arith.constant 0 : index
    %c0_82 = arith.constant 0 : index
    %238 = vector.load %arg2[%c0_81, %c0_82] : memref<32x128xf32, #tpu.memory_space<vmem>>, vector<32x128xf32>
    %cst_83 = arith.constant dense<0.000000e+00> : vector<2x128xf32>
    %239 = tpu.matmul %205, %238, %cst_83 {dimension_numbers = #tpu.dot_dimension_numbers<[1], [0], [0], [1], [0, 0, 1, 1], [], []>} : vector<2x32xf32>, vector<32x128xf32>, vector<2x128xf32> -> vector<2x128xf32>
    %240 = arith.addf %237, %239 : vector<2x128xf32>
    %241 = vector.extract_strided_slice %236 {offsets = [0, 128], sizes = [2, 128], strides = [1, 1]} : vector<2x256xf32> to vector<2x128xf32>
    %c0_84 = arith.constant 0 : index
    %c0_85 = arith.constant 0 : index
    %242 = vector.load %arg3[%c0_84, %c0_85] : memref<32x128xf32, #tpu.memory_space<vmem>>, vector<32x128xf32>
    %cst_86 = arith.constant dense<0.000000e+00> : vector<2x128xf32>
    %243 = tpu.matmul %221, %242, %cst_86 {dimension_numbers = #tpu.dot_dimension_numbers<[1], [0], [0], [1], [0, 0, 1, 1], [], []>} : vector<2x32xf32>, vector<32x128xf32>, vector<2x128xf32> -> vector<2x128xf32>
    %244 = arith.addf %241, %243 : vector<2x128xf32>
    %245 = vector.extract_strided_slice %240 {offsets = [0, 0], sizes = [2, 96], strides = [1, 1]} : vector<2x128xf32> to vector<2x96xf32>
    %246 = arith.negf %245 : vector<2x96xf32>
    %247 = math.exp %246 : vector<2x96xf32>
    %cst_87 = arith.constant 1.000000e+00 : f32
    %248 = vector.broadcast %cst_87 : f32 to vector<2x96xf32>
    %249 = arith.addf %248, %247 : vector<2x96xf32>
    %250 = arith.divf %248, %249 : vector<2x96xf32>
    %251 = vector.extract_strided_slice %240 {offsets = [0, 96], sizes = [2, 32], strides = [1, 1]} : vector<2x128xf32> to vector<2x32xf32>
    %252 = math.tanh %251 : vector<2x32xf32>
    %253 = vector.extract_strided_slice %250 {offsets = [0, 0], sizes = [2, 32], strides = [1, 1]} : vector<2x96xf32> to vector<2x32xf32>
    %254 = vector.extract_strided_slice %250 {offsets = [0, 32], sizes = [2, 32], strides = [1, 1]} : vector<2x96xf32> to vector<2x32xf32>
    %255 = vector.extract_strided_slice %250 {offsets = [0, 64], sizes = [2, 32], strides = [1, 1]} : vector<2x96xf32> to vector<2x32xf32>
    %256 = arith.mulf %254, %203 : vector<2x32xf32>
    %257 = arith.mulf %253, %252 : vector<2x32xf32>
    %258 = arith.addf %256, %257 : vector<2x32xf32>
    %259 = math.tanh %258 : vector<2x32xf32>
    %260 = arith.mulf %255, %259 : vector<2x32xf32>
    %261 = vector.extract_strided_slice %244 {offsets = [0, 0], sizes = [2, 96], strides = [1, 1]} : vector<2x128xf32> to vector<2x96xf32>
    %262 = arith.negf %261 : vector<2x96xf32>
    %263 = math.exp %262 : vector<2x96xf32>
    %cst_88 = arith.constant 1.000000e+00 : f32
    %264 = vector.broadcast %cst_88 : f32 to vector<2x96xf32>
    %265 = arith.addf %264, %263 : vector<2x96xf32>
    %266 = arith.divf %264, %265 : vector<2x96xf32>
    %267 = vector.extract_strided_slice %244 {offsets = [0, 96], sizes = [2, 32], strides = [1, 1]} : vector<2x128xf32> to vector<2x32xf32>
    %268 = math.tanh %267 : vector<2x32xf32>
    %269 = vector.extract_strided_slice %266 {offsets = [0, 0], sizes = [2, 32], strides = [1, 1]} : vector<2x96xf32> to vector<2x32xf32>
    %270 = vector.extract_strided_slice %266 {offsets = [0, 32], sizes = [2, 32], strides = [1, 1]} : vector<2x96xf32> to vector<2x32xf32>
    %271 = vector.extract_strided_slice %266 {offsets = [0, 64], sizes = [2, 32], strides = [1, 1]} : vector<2x96xf32> to vector<2x32xf32>
    %272 = arith.mulf %270, %219 : vector<2x32xf32>
    %273 = arith.mulf %269, %268 : vector<2x32xf32>
    %274 = arith.addf %272, %273 : vector<2x32xf32>
    %275 = math.tanh %274 : vector<2x32xf32>
    %276 = arith.mulf %271, %275 : vector<2x32xf32>
    %277 = arith.index_cast %c4_i32 : i32 to index
    %c0_89 = arith.constant 0 : index
    %c0_90 = arith.constant 0 : index
    %278 = vector.load %arg5[%277, %c0_89, %c0_90] : memref<8x2x64xf32, #tpu.memory_space<vmem>>, vector<1x2x32xf32>
    %279 = vector.shape_cast %278 : vector<1x2x32xf32> to vector<2x32xf32>
    %280 = vector.shape_cast %260 : vector<2x32xf32> to vector<1x2x32xf32>
    tpu.vector_store %arg5[%277, %c0_89, %c0_90], %280 {strides = array<i32>} : memref<8x2x64xf32, #tpu.memory_space<vmem>>, vector<1x2x32xf32>,
    %281 = arith.index_cast %230 : i32 to index
    %c0_91 = arith.constant 0 : index
    %c32_92 = arith.constant 32 : index
    %282 = vector.load %arg5[%281, %c0_91, %c32_92] : memref<8x2x64xf32, #tpu.memory_space<vmem>>, vector<1x2x32xf32>
    %283 = vector.shape_cast %282 : vector<1x2x32xf32> to vector<2x32xf32>
    %284 = vector.shape_cast %276 : vector<2x32xf32> to vector<1x2x32xf32>
    tpu.vector_store %arg5[%281, %c0_91, %c32_92], %284 {strides = array<i32>} : memref<8x2x64xf32, #tpu.memory_space<vmem>>, vector<1x2x32xf32>,
    %c5_i32 = arith.constant 5 : i32
    %c7_i32_93 = arith.constant 7 : i32
    %285 = arith.subi %c7_i32_93, %c5_i32 : i32
    %286 = arith.index_cast %c5_i32 : i32 to index
    %c0_94 = arith.constant 0 : index
    %c0_95 = arith.constant 0 : index
    %287 = vector.load %arg6[%286, %c0_94, %c0_95] : memref<8x2x256xf32, #tpu.memory_space<vmem>>, vector<1x2x256xf32>
    %288 = vector.shape_cast %287 : vector<1x2x256xf32> to vector<2x256xf32>
    %289 = arith.index_cast %285 : i32 to index
    %c0_96 = arith.constant 0 : index
    %c0_97 = arith.constant 0 : index
    %290 = vector.load %arg6[%289, %c0_96, %c0_97] : memref<8x2x256xf32, #tpu.memory_space<vmem>>, vector<1x2x256xf32>
    %291 = vector.shape_cast %290 : vector<1x2x256xf32> to vector<2x256xf32>
    %292 = vector.extract_strided_slice %288 {offsets = [0, 0], sizes = [2, 128], strides = [1, 1]} : vector<2x256xf32> to vector<2x128xf32>
    %c0_98 = arith.constant 0 : index
    %c0_99 = arith.constant 0 : index
    %293 = vector.load %arg2[%c0_98, %c0_99] : memref<32x128xf32, #tpu.memory_space<vmem>>, vector<32x128xf32>
    %cst_100 = arith.constant dense<0.000000e+00> : vector<2x128xf32>
    %294 = tpu.matmul %260, %293, %cst_100 {dimension_numbers = #tpu.dot_dimension_numbers<[1], [0], [0], [1], [0, 0, 1, 1], [], []>} : vector<2x32xf32>, vector<32x128xf32>, vector<2x128xf32> -> vector<2x128xf32>
    %295 = arith.addf %292, %294 : vector<2x128xf32>
    %296 = vector.extract_strided_slice %291 {offsets = [0, 128], sizes = [2, 128], strides = [1, 1]} : vector<2x256xf32> to vector<2x128xf32>
    %c0_101 = arith.constant 0 : index
    %c0_102 = arith.constant 0 : index
    %297 = vector.load %arg3[%c0_101, %c0_102] : memref<32x128xf32, #tpu.memory_space<vmem>>, vector<32x128xf32>
    %cst_103 = arith.constant dense<0.000000e+00> : vector<2x128xf32>
    %298 = tpu.matmul %276, %297, %cst_103 {dimension_numbers = #tpu.dot_dimension_numbers<[1], [0], [0], [1], [0, 0, 1, 1], [], []>} : vector<2x32xf32>, vector<32x128xf32>, vector<2x128xf32> -> vector<2x128xf32>
    %299 = arith.addf %296, %298 : vector<2x128xf32>
    %300 = vector.extract_strided_slice %295 {offsets = [0, 0], sizes = [2, 96], strides = [1, 1]} : vector<2x128xf32> to vector<2x96xf32>
    %301 = arith.negf %300 : vector<2x96xf32>
    %302 = math.exp %301 : vector<2x96xf32>
    %cst_104 = arith.constant 1.000000e+00 : f32
    %303 = vector.broadcast %cst_104 : f32 to vector<2x96xf32>
    %304 = arith.addf %303, %302 : vector<2x96xf32>
    %305 = arith.divf %303, %304 : vector<2x96xf32>
    %306 = vector.extract_strided_slice %295 {offsets = [0, 96], sizes = [2, 32], strides = [1, 1]} : vector<2x128xf32> to vector<2x32xf32>
    %307 = math.tanh %306 : vector<2x32xf32>
    %308 = vector.extract_strided_slice %305 {offsets = [0, 0], sizes = [2, 32], strides = [1, 1]} : vector<2x96xf32> to vector<2x32xf32>
    %309 = vector.extract_strided_slice %305 {offsets = [0, 32], sizes = [2, 32], strides = [1, 1]} : vector<2x96xf32> to vector<2x32xf32>
    %310 = vector.extract_strided_slice %305 {offsets = [0, 64], sizes = [2, 32], strides = [1, 1]} : vector<2x96xf32> to vector<2x32xf32>
    %311 = arith.mulf %309, %258 : vector<2x32xf32>
    %312 = arith.mulf %308, %307 : vector<2x32xf32>
    %313 = arith.addf %311, %312 : vector<2x32xf32>
    %314 = math.tanh %313 : vector<2x32xf32>
    %315 = arith.mulf %310, %314 : vector<2x32xf32>
    %316 = vector.extract_strided_slice %299 {offsets = [0, 0], sizes = [2, 96], strides = [1, 1]} : vector<2x128xf32> to vector<2x96xf32>
    %317 = arith.negf %316 : vector<2x96xf32>
    %318 = math.exp %317 : vector<2x96xf32>
    %cst_105 = arith.constant 1.000000e+00 : f32
    %319 = vector.broadcast %cst_105 : f32 to vector<2x96xf32>
    %320 = arith.addf %319, %318 : vector<2x96xf32>
    %321 = arith.divf %319, %320 : vector<2x96xf32>
    %322 = vector.extract_strided_slice %299 {offsets = [0, 96], sizes = [2, 32], strides = [1, 1]} : vector<2x128xf32> to vector<2x32xf32>
    %323 = math.tanh %322 : vector<2x32xf32>
    %324 = vector.extract_strided_slice %321 {offsets = [0, 0], sizes = [2, 32], strides = [1, 1]} : vector<2x96xf32> to vector<2x32xf32>
    %325 = vector.extract_strided_slice %321 {offsets = [0, 32], sizes = [2, 32], strides = [1, 1]} : vector<2x96xf32> to vector<2x32xf32>
    %326 = vector.extract_strided_slice %321 {offsets = [0, 64], sizes = [2, 32], strides = [1, 1]} : vector<2x96xf32> to vector<2x32xf32>
    %327 = arith.mulf %325, %274 : vector<2x32xf32>
    %328 = arith.mulf %324, %323 : vector<2x32xf32>
    %329 = arith.addf %327, %328 : vector<2x32xf32>
    %330 = math.tanh %329 : vector<2x32xf32>
    %331 = arith.mulf %326, %330 : vector<2x32xf32>
    %332 = arith.index_cast %c5_i32 : i32 to index
    %c0_106 = arith.constant 0 : index
    %c0_107 = arith.constant 0 : index
    %333 = vector.load %arg5[%332, %c0_106, %c0_107] : memref<8x2x64xf32, #tpu.memory_space<vmem>>, vector<1x2x32xf32>
    %334 = vector.shape_cast %333 : vector<1x2x32xf32> to vector<2x32xf32>
    %335 = vector.shape_cast %315 : vector<2x32xf32> to vector<1x2x32xf32>
    tpu.vector_store %arg5[%332, %c0_106, %c0_107], %335 {strides = array<i32>} : memref<8x2x64xf32, #tpu.memory_space<vmem>>, vector<1x2x32xf32>,
    %336 = arith.index_cast %285 : i32 to index
    %c0_108 = arith.constant 0 : index
    %c32_109 = arith.constant 32 : index
    %337 = vector.load %arg5[%336, %c0_108, %c32_109] : memref<8x2x64xf32, #tpu.memory_space<vmem>>, vector<1x2x32xf32>
    %338 = vector.shape_cast %337 : vector<1x2x32xf32> to vector<2x32xf32>
    %339 = vector.shape_cast %331 : vector<2x32xf32> to vector<1x2x32xf32>
    tpu.vector_store %arg5[%336, %c0_108, %c32_109], %339 {strides = array<i32>} : memref<8x2x64xf32, #tpu.memory_space<vmem>>, vector<1x2x32xf32>,
    %c6_i32 = arith.constant 6 : i32
    %c7_i32_110 = arith.constant 7 : i32
    %340 = arith.subi %c7_i32_110, %c6_i32 : i32
    %341 = arith.index_cast %c6_i32 : i32 to index
    %c0_111 = arith.constant 0 : index
    %c0_112 = arith.constant 0 : index
    %342 = vector.load %arg6[%341, %c0_111, %c0_112] : memref<8x2x256xf32, #tpu.memory_space<vmem>>, vector<1x2x256xf32>
    %343 = vector.shape_cast %342 : vector<1x2x256xf32> to vector<2x256xf32>
    %344 = arith.index_cast %340 : i32 to index
    %c0_113 = arith.constant 0 : index
    %c0_114 = arith.constant 0 : index
    %345 = vector.load %arg6[%344, %c0_113, %c0_114] : memref<8x2x256xf32, #tpu.memory_space<vmem>>, vector<1x2x256xf32>
    %346 = vector.shape_cast %345 : vector<1x2x256xf32> to vector<2x256xf32>
    %347 = vector.extract_strided_slice %343 {offsets = [0, 0], sizes = [2, 128], strides = [1, 1]} : vector<2x256xf32> to vector<2x128xf32>
    %c0_115 = arith.constant 0 : index
    %c0_116 = arith.constant 0 : index
    %348 = vector.load %arg2[%c0_115, %c0_116] : memref<32x128xf32, #tpu.memory_space<vmem>>, vector<32x128xf32>
    %cst_117 = arith.constant dense<0.000000e+00> : vector<2x128xf32>
    %349 = tpu.matmul %315, %348, %cst_117 {dimension_numbers = #tpu.dot_dimension_numbers<[1], [0], [0], [1], [0, 0, 1, 1], [], []>} : vector<2x32xf32>, vector<32x128xf32>, vector<2x128xf32> -> vector<2x128xf32>
    %350 = arith.addf %347, %349 : vector<2x128xf32>
    %351 = vector.extract_strided_slice %346 {offsets = [0, 128], sizes = [2, 128], strides = [1, 1]} : vector<2x256xf32> to vector<2x128xf32>
    %c0_118 = arith.constant 0 : index
    %c0_119 = arith.constant 0 : index
    %352 = vector.load %arg3[%c0_118, %c0_119] : memref<32x128xf32, #tpu.memory_space<vmem>>, vector<32x128xf32>
    %cst_120 = arith.constant dense<0.000000e+00> : vector<2x128xf32>
    %353 = tpu.matmul %331, %352, %cst_120 {dimension_numbers = #tpu.dot_dimension_numbers<[1], [0], [0], [1], [0, 0, 1, 1], [], []>} : vector<2x32xf32>, vector<32x128xf32>, vector<2x128xf32> -> vector<2x128xf32>
    %354 = arith.addf %351, %353 : vector<2x128xf32>
    %355 = vector.extract_strided_slice %350 {offsets = [0, 0], sizes = [2, 96], strides = [1, 1]} : vector<2x128xf32> to vector<2x96xf32>
    %356 = arith.negf %355 : vector<2x96xf32>
    %357 = math.exp %356 : vector<2x96xf32>
    %cst_121 = arith.constant 1.000000e+00 : f32
    %358 = vector.broadcast %cst_121 : f32 to vector<2x96xf32>
    %359 = arith.addf %358, %357 : vector<2x96xf32>
    %360 = arith.divf %358, %359 : vector<2x96xf32>
    %361 = vector.extract_strided_slice %350 {offsets = [0, 96], sizes = [2, 32], strides = [1, 1]} : vector<2x128xf32> to vector<2x32xf32>
    %362 = math.tanh %361 : vector<2x32xf32>
    %363 = vector.extract_strided_slice %360 {offsets = [0, 0], sizes = [2, 32], strides = [1, 1]} : vector<2x96xf32> to vector<2x32xf32>
    %364 = vector.extract_strided_slice %360 {offsets = [0, 32], sizes = [2, 32], strides = [1, 1]} : vector<2x96xf32> to vector<2x32xf32>
    %365 = vector.extract_strided_slice %360 {offsets = [0, 64], sizes = [2, 32], strides = [1, 1]} : vector<2x96xf32> to vector<2x32xf32>
    %366 = arith.mulf %364, %313 : vector<2x32xf32>
    %367 = arith.mulf %363, %362 : vector<2x32xf32>
    %368 = arith.addf %366, %367 : vector<2x32xf32>
    %369 = math.tanh %368 : vector<2x32xf32>
    %370 = arith.mulf %365, %369 : vector<2x32xf32>
    %371 = vector.extract_strided_slice %354 {offsets = [0, 0], sizes = [2, 96], strides = [1, 1]} : vector<2x128xf32> to vector<2x96xf32>
    %372 = arith.negf %371 : vector<2x96xf32>
    %373 = math.exp %372 : vector<2x96xf32>
    %cst_122 = arith.constant 1.000000e+00 : f32
    %374 = vector.broadcast %cst_122 : f32 to vector<2x96xf32>
    %375 = arith.addf %374, %373 : vector<2x96xf32>
    %376 = arith.divf %374, %375 : vector<2x96xf32>
    %377 = vector.extract_strided_slice %354 {offsets = [0, 96], sizes = [2, 32], strides = [1, 1]} : vector<2x128xf32> to vector<2x32xf32>
    %378 = math.tanh %377 : vector<2x32xf32>
    %379 = vector.extract_strided_slice %376 {offsets = [0, 0], sizes = [2, 32], strides = [1, 1]} : vector<2x96xf32> to vector<2x32xf32>
    %380 = vector.extract_strided_slice %376 {offsets = [0, 32], sizes = [2, 32], strides = [1, 1]} : vector<2x96xf32> to vector<2x32xf32>
    %381 = vector.extract_strided_slice %376 {offsets = [0, 64], sizes = [2, 32], strides = [1, 1]} : vector<2x96xf32> to vector<2x32xf32>
    %382 = arith.mulf %380, %329 : vector<2x32xf32>
    %383 = arith.mulf %379, %378 : vector<2x32xf32>
    %384 = arith.addf %382, %383 : vector<2x32xf32>
    %385 = math.tanh %384 : vector<2x32xf32>
    %386 = arith.mulf %381, %385 : vector<2x32xf32>
    %387 = arith.index_cast %c6_i32 : i32 to index
    %c0_123 = arith.constant 0 : index
    %c0_124 = arith.constant 0 : index
    %388 = vector.load %arg5[%387, %c0_123, %c0_124] : memref<8x2x64xf32, #tpu.memory_space<vmem>>, vector<1x2x32xf32>
    %389 = vector.shape_cast %388 : vector<1x2x32xf32> to vector<2x32xf32>
    %390 = vector.shape_cast %370 : vector<2x32xf32> to vector<1x2x32xf32>
    tpu.vector_store %arg5[%387, %c0_123, %c0_124], %390 {strides = array<i32>} : memref<8x2x64xf32, #tpu.memory_space<vmem>>, vector<1x2x32xf32>,
    %391 = arith.index_cast %340 : i32 to index
    %c0_125 = arith.constant 0 : index
    %c32_126 = arith.constant 32 : index
    %392 = vector.load %arg5[%391, %c0_125, %c32_126] : memref<8x2x64xf32, #tpu.memory_space<vmem>>, vector<1x2x32xf32>
    %393 = vector.shape_cast %392 : vector<1x2x32xf32> to vector<2x32xf32>
    %394 = vector.shape_cast %386 : vector<2x32xf32> to vector<1x2x32xf32>
    tpu.vector_store %arg5[%391, %c0_125, %c32_126], %394 {strides = array<i32>} : memref<8x2x64xf32, #tpu.memory_space<vmem>>, vector<1x2x32xf32>,
    %c7_i32_127 = arith.constant 7 : i32
    %c7_i32_128 = arith.constant 7 : i32
    %395 = arith.subi %c7_i32_128, %c7_i32_127 : i32
    %396 = arith.index_cast %c7_i32_127 : i32 to index
    %c0_129 = arith.constant 0 : index
    %c0_130 = arith.constant 0 : index
    %397 = vector.load %arg6[%396, %c0_129, %c0_130] : memref<8x2x256xf32, #tpu.memory_space<vmem>>, vector<1x2x256xf32>
    %398 = vector.shape_cast %397 : vector<1x2x256xf32> to vector<2x256xf32>
    %399 = arith.index_cast %395 : i32 to index
    %c0_131 = arith.constant 0 : index
    %c0_132 = arith.constant 0 : index
    %400 = vector.load %arg6[%399, %c0_131, %c0_132] : memref<8x2x256xf32, #tpu.memory_space<vmem>>, vector<1x2x256xf32>
    %401 = vector.shape_cast %400 : vector<1x2x256xf32> to vector<2x256xf32>
    %402 = vector.extract_strided_slice %398 {offsets = [0, 0], sizes = [2, 128], strides = [1, 1]} : vector<2x256xf32> to vector<2x128xf32>
    %c0_133 = arith.constant 0 : index
    %c0_134 = arith.constant 0 : index
    %403 = vector.load %arg2[%c0_133, %c0_134] : memref<32x128xf32, #tpu.memory_space<vmem>>, vector<32x128xf32>
    %cst_135 = arith.constant dense<0.000000e+00> : vector<2x128xf32>
    %404 = tpu.matmul %370, %403, %cst_135 {dimension_numbers = #tpu.dot_dimension_numbers<[1], [0], [0], [1], [0, 0, 1, 1], [], []>} : vector<2x32xf32>, vector<32x128xf32>, vector<2x128xf32> -> vector<2x128xf32>
    %405 = arith.addf %402, %404 : vector<2x128xf32>
    %406 = vector.extract_strided_slice %401 {offsets = [0, 128], sizes = [2, 128], strides = [1, 1]} : vector<2x256xf32> to vector<2x128xf32>
    %c0_136 = arith.constant 0 : index
    %c0_137 = arith.constant 0 : index
    %407 = vector.load %arg3[%c0_136, %c0_137] : memref<32x128xf32, #tpu.memory_space<vmem>>, vector<32x128xf32>
    %cst_138 = arith.constant dense<0.000000e+00> : vector<2x128xf32>
    %408 = tpu.matmul %386, %407, %cst_138 {dimension_numbers = #tpu.dot_dimension_numbers<[1], [0], [0], [1], [0, 0, 1, 1], [], []>} : vector<2x32xf32>, vector<32x128xf32>, vector<2x128xf32> -> vector<2x128xf32>
    %409 = arith.addf %406, %408 : vector<2x128xf32>
    %410 = vector.extract_strided_slice %405 {offsets = [0, 0], sizes = [2, 96], strides = [1, 1]} : vector<2x128xf32> to vector<2x96xf32>
    %411 = arith.negf %410 : vector<2x96xf32>
    %412 = math.exp %411 : vector<2x96xf32>
    %cst_139 = arith.constant 1.000000e+00 : f32
    %413 = vector.broadcast %cst_139 : f32 to vector<2x96xf32>
    %414 = arith.addf %413, %412 : vector<2x96xf32>
    %415 = arith.divf %413, %414 : vector<2x96xf32>
    %416 = vector.extract_strided_slice %405 {offsets = [0, 96], sizes = [2, 32], strides = [1, 1]} : vector<2x128xf32> to vector<2x32xf32>
    %417 = math.tanh %416 : vector<2x32xf32>
    %418 = vector.extract_strided_slice %415 {offsets = [0, 0], sizes = [2, 32], strides = [1, 1]} : vector<2x96xf32> to vector<2x32xf32>
    %419 = vector.extract_strided_slice %415 {offsets = [0, 32], sizes = [2, 32], strides = [1, 1]} : vector<2x96xf32> to vector<2x32xf32>
    %420 = vector.extract_strided_slice %415 {offsets = [0, 64], sizes = [2, 32], strides = [1, 1]} : vector<2x96xf32> to vector<2x32xf32>
    %421 = arith.mulf %419, %368 : vector<2x32xf32>
    %422 = arith.mulf %418, %417 : vector<2x32xf32>
    %423 = arith.addf %421, %422 : vector<2x32xf32>
    %424 = math.tanh %423 : vector<2x32xf32>
    %425 = arith.mulf %420, %424 : vector<2x32xf32>
    %426 = vector.extract_strided_slice %409 {offsets = [0, 0], sizes = [2, 96], strides = [1, 1]} : vector<2x128xf32> to vector<2x96xf32>
    %427 = arith.negf %426 : vector<2x96xf32>
    %428 = math.exp %427 : vector<2x96xf32>
    %cst_140 = arith.constant 1.000000e+00 : f32
    %429 = vector.broadcast %cst_140 : f32 to vector<2x96xf32>
    %430 = arith.addf %429, %428 : vector<2x96xf32>
    %431 = arith.divf %429, %430 : vector<2x96xf32>
    %432 = vector.extract_strided_slice %409 {offsets = [0, 96], sizes = [2, 32], strides = [1, 1]} : vector<2x128xf32> to vector<2x32xf32>
    %433 = math.tanh %432 : vector<2x32xf32>
    %434 = vector.extract_strided_slice %431 {offsets = [0, 0], sizes = [2, 32], strides = [1, 1]} : vector<2x96xf32> to vector<2x32xf32>
    %435 = vector.extract_strided_slice %431 {offsets = [0, 32], sizes = [2, 32], strides = [1, 1]} : vector<2x96xf32> to vector<2x32xf32>
    %436 = vector.extract_strided_slice %431 {offsets = [0, 64], sizes = [2, 32], strides = [1, 1]} : vector<2x96xf32> to vector<2x32xf32>
    %437 = arith.mulf %435, %384 : vector<2x32xf32>
    %438 = arith.mulf %434, %433 : vector<2x32xf32>
    %439 = arith.addf %437, %438 : vector<2x32xf32>
    %440 = math.tanh %439 : vector<2x32xf32>
    %441 = arith.mulf %436, %440 : vector<2x32xf32>
    %442 = arith.index_cast %c7_i32_127 : i32 to index
    %c0_141 = arith.constant 0 : index
    %c0_142 = arith.constant 0 : index
    %443 = vector.load %arg5[%442, %c0_141, %c0_142] : memref<8x2x64xf32, #tpu.memory_space<vmem>>, vector<1x2x32xf32>
    %444 = vector.shape_cast %443 : vector<1x2x32xf32> to vector<2x32xf32>
    %445 = vector.shape_cast %425 : vector<2x32xf32> to vector<1x2x32xf32>
    tpu.vector_store %arg5[%442, %c0_141, %c0_142], %445 {strides = array<i32>} : memref<8x2x64xf32, #tpu.memory_space<vmem>>, vector<1x2x32xf32>,
    %446 = arith.index_cast %395 : i32 to index
    %c0_143 = arith.constant 0 : index
    %c32_144 = arith.constant 32 : index
    %447 = vector.load %arg5[%446, %c0_143, %c32_144] : memref<8x2x64xf32, #tpu.memory_space<vmem>>, vector<1x2x32xf32>
    %448 = vector.shape_cast %447 : vector<1x2x32xf32> to vector<2x32xf32>
    %449 = vector.shape_cast %441 : vector<2x32xf32> to vector<1x2x32xf32>
    tpu.vector_store %arg5[%446, %c0_143, %c32_144], %449 {strides = array<i32>} : memref<8x2x64xf32, #tpu.memory_space<vmem>>, vector<1x2x32xf32>,
    %c8_i32 = arith.constant 8 : i32
    return
  }
}

module attributes {stable_mosaic.version = 11 : i64} {
  func.func @_bilstm_layer_kernel(%arg0: memref<8x2x4xf32, #tpu.memory_space<vmem>>, %arg1: memref<4x256xf32, #tpu.memory_space<vmem>>, %arg2: memref<32x128xf32, #tpu.memory_space<vmem>>, %arg3: memref<32x128xf32, #tpu.memory_space<vmem>>, %arg4: memref<1x256xf32, #tpu.memory_space<vmem>>, %arg5: memref<8x2x64xf32, #tpu.memory_space<vmem>>, %arg6: memref<8x2x256xf32, #tpu.memory_space<vmem>>) attributes {dimension_semantics = [], scalar_prefetch = 0 : i64, scratch_operands = 1 : i64, tpu.core_type = #tpu.core_type<tc>} {
    %c0 = arith.constant 0 : index
    %c0_0 = arith.constant 0 : index
    %c0_1 = arith.constant 0 : index
    %0 = vector.load %arg0[%c0, %c0_0, %c0_1] : memref<8x2x4xf32, #tpu.memory_space<vmem>>, vector<8x2x4xf32>
    %1 = vector.shape_cast %0 : vector<8x2x4xf32> to vector<16x4xf32>
    %c0_2 = arith.constant 0 : index
    %c0_3 = arith.constant 0 : index
    %2 = vector.load %arg1[%c0_2, %c0_3] : memref<4x256xf32, #tpu.memory_space<vmem>>, vector<4x256xf32>
    %cst = arith.constant dense<0.000000e+00> : vector<16x256xf32>
    %3 = tpu.matmul %1, %2, %cst {dimension_numbers = #tpu.dot_dimension_numbers<[1], [0], [0], [1], [0, 0, 1, 1], [], []>} : vector<16x4xf32>, vector<4x256xf32>, vector<16x256xf32> -> vector<16x256xf32>
    %c0_4 = arith.constant 0 : index
    %c0_5 = arith.constant 0 : index
    %4 = vector.load %arg4[%c0_4, %c0_5] : memref<1x256xf32, #tpu.memory_space<vmem>>, vector<1x256xf32>
    %5 = vector.broadcast %4 : vector<1x256xf32> to vector<16x256xf32>
    %6 = arith.addf %3, %5 : vector<16x256xf32>
    %7 = vector.shape_cast %6 : vector<16x256xf32> to vector<8x2x256xf32>
    %c0_6 = arith.constant 0 : index
    %c0_7 = arith.constant 0 : index
    %c0_8 = arith.constant 0 : index
    %8 = vector.load %arg6[%c0_6, %c0_7, %c0_8] : memref<8x2x256xf32, #tpu.memory_space<vmem>>, vector<8x2x256xf32>
    tpu.vector_store %arg6[%c0_6, %c0_7, %c0_8], %7 {strides = array<i32>} : memref<8x2x256xf32, #tpu.memory_space<vmem>>, vector<8x2x256xf32>,
    %cst_9 = arith.constant 0.000000e+00 : f32
    %9 = vector.broadcast %cst_9 : f32 to vector<2x32xf32>
    %c0_i32 = arith.constant 0 : i32
    %c7_i32 = arith.constant 7 : i32
    %10 = arith.subi %c7_i32, %c0_i32 : i32
    %11 = arith.index_cast %c0_i32 : i32 to index
    %c0_10 = arith.constant 0 : index
    %c0_11 = arith.constant 0 : index
    %12 = vector.load %arg6[%11, %c0_10, %c0_11] : memref<8x2x256xf32, #tpu.memory_space<vmem>>, vector<1x2x256xf32>
    %13 = vector.shape_cast %12 : vector<1x2x256xf32> to vector<2x256xf32>
    %14 = arith.index_cast %10 : i32 to index
    %c0_12 = arith.constant 0 : index
    %c0_13 = arith.constant 0 : index
    %15 = vector.load %arg6[%14, %c0_12, %c0_13] : memref<8x2x256xf32, #tpu.memory_space<vmem>>, vector<1x2x256xf32>
    %16 = vector.shape_cast %15 : vector<1x2x256xf32> to vector<2x256xf32>
    %17 = vector.extract_strided_slice %13 {offsets = [0, 0], sizes = [2, 128], strides = [1, 1]} : vector<2x256xf32> to vector<2x128xf32>
    %c0_14 = arith.constant 0 : index
    %c0_15 = arith.constant 0 : index
    %18 = vector.load %arg2[%c0_14, %c0_15] : memref<32x128xf32, #tpu.memory_space<vmem>>, vector<32x128xf32>
    %cst_16 = arith.constant dense<0.000000e+00> : vector<2x128xf32>
    %19 = tpu.matmul %9, %18, %cst_16 {dimension_numbers = #tpu.dot_dimension_numbers<[1], [0], [0], [1], [0, 0, 1, 1], [], []>} : vector<2x32xf32>, vector<32x128xf32>, vector<2x128xf32> -> vector<2x128xf32>
    %20 = arith.addf %17, %19 : vector<2x128xf32>
    %21 = vector.extract_strided_slice %16 {offsets = [0, 128], sizes = [2, 128], strides = [1, 1]} : vector<2x256xf32> to vector<2x128xf32>
    %c0_17 = arith.constant 0 : index
    %c0_18 = arith.constant 0 : index
    %22 = vector.load %arg3[%c0_17, %c0_18] : memref<32x128xf32, #tpu.memory_space<vmem>>, vector<32x128xf32>
    %cst_19 = arith.constant dense<0.000000e+00> : vector<2x128xf32>
    %23 = tpu.matmul %9, %22, %cst_19 {dimension_numbers = #tpu.dot_dimension_numbers<[1], [0], [0], [1], [0, 0, 1, 1], [], []>} : vector<2x32xf32>, vector<32x128xf32>, vector<2x128xf32> -> vector<2x128xf32>
    %24 = arith.addf %21, %23 : vector<2x128xf32>
    %25 = vector.extract_strided_slice %20 {offsets = [0, 0], sizes = [2, 96], strides = [1, 1]} : vector<2x128xf32> to vector<2x96xf32>
    %26 = arith.negf %25 : vector<2x96xf32>
    %27 = math.exp %26 : vector<2x96xf32>
    %cst_20 = arith.constant 1.000000e+00 : f32
    %28 = vector.broadcast %cst_20 : f32 to vector<2x96xf32>
    %29 = arith.addf %28, %27 : vector<2x96xf32>
    %30 = arith.divf %28, %29 : vector<2x96xf32>
    %31 = vector.extract_strided_slice %20 {offsets = [0, 96], sizes = [2, 32], strides = [1, 1]} : vector<2x128xf32> to vector<2x32xf32>
    %32 = math.tanh %31 : vector<2x32xf32>
    %33 = vector.extract_strided_slice %30 {offsets = [0, 0], sizes = [2, 32], strides = [1, 1]} : vector<2x96xf32> to vector<2x32xf32>
    %34 = vector.extract_strided_slice %30 {offsets = [0, 32], sizes = [2, 32], strides = [1, 1]} : vector<2x96xf32> to vector<2x32xf32>
    %35 = vector.extract_strided_slice %30 {offsets = [0, 64], sizes = [2, 32], strides = [1, 1]} : vector<2x96xf32> to vector<2x32xf32>
    %36 = arith.mulf %34, %9 : vector<2x32xf32>
    %37 = arith.mulf %33, %32 : vector<2x32xf32>
    %38 = arith.addf %36, %37 : vector<2x32xf32>
    %39 = math.tanh %38 : vector<2x32xf32>
    %40 = arith.mulf %35, %39 : vector<2x32xf32>
    %41 = vector.extract_strided_slice %24 {offsets = [0, 0], sizes = [2, 96], strides = [1, 1]} : vector<2x128xf32> to vector<2x96xf32>
    %42 = arith.negf %41 : vector<2x96xf32>
    %43 = math.exp %42 : vector<2x96xf32>
    %cst_21 = arith.constant 1.000000e+00 : f32
    %44 = vector.broadcast %cst_21 : f32 to vector<2x96xf32>
    %45 = arith.addf %44, %43 : vector<2x96xf32>
    %46 = arith.divf %44, %45 : vector<2x96xf32>
    %47 = vector.extract_strided_slice %24 {offsets = [0, 96], sizes = [2, 32], strides = [1, 1]} : vector<2x128xf32> to vector<2x32xf32>
    %48 = math.tanh %47 : vector<2x32xf32>
    %49 = vector.extract_strided_slice %46 {offsets = [0, 0], sizes = [2, 32], strides = [1, 1]} : vector<2x96xf32> to vector<2x32xf32>
    %50 = vector.extract_strided_slice %46 {offsets = [0, 32], sizes = [2, 32], strides = [1, 1]} : vector<2x96xf32> to vector<2x32xf32>
    %51 = vector.extract_strided_slice %46 {offsets = [0, 64], sizes = [2, 32], strides = [1, 1]} : vector<2x96xf32> to vector<2x32xf32>
    %52 = arith.mulf %50, %9 : vector<2x32xf32>
    %53 = arith.mulf %49, %48 : vector<2x32xf32>
    %54 = arith.addf %52, %53 : vector<2x32xf32>
    %55 = math.tanh %54 : vector<2x32xf32>
    %56 = arith.mulf %51, %55 : vector<2x32xf32>
    %57 = arith.index_cast %c0_i32 : i32 to index
    %c0_22 = arith.constant 0 : index
    %c0_23 = arith.constant 0 : index
    %58 = vector.load %arg5[%57, %c0_22, %c0_23] : memref<8x2x64xf32, #tpu.memory_space<vmem>>, vector<1x2x32xf32>
    %59 = vector.shape_cast %58 : vector<1x2x32xf32> to vector<2x32xf32>
    %60 = vector.shape_cast %40 : vector<2x32xf32> to vector<1x2x32xf32>
    tpu.vector_store %arg5[%57, %c0_22, %c0_23], %60 {strides = array<i32>} : memref<8x2x64xf32, #tpu.memory_space<vmem>>, vector<1x2x32xf32>,
    %61 = arith.index_cast %10 : i32 to index
    %c0_24 = arith.constant 0 : index
    %c32 = arith.constant 32 : index
    %62 = vector.load %arg5[%61, %c0_24, %c32] : memref<8x2x64xf32, #tpu.memory_space<vmem>>, vector<1x2x32xf32>
    %63 = vector.shape_cast %62 : vector<1x2x32xf32> to vector<2x32xf32>
    %64 = vector.shape_cast %56 : vector<2x32xf32> to vector<1x2x32xf32>
    tpu.vector_store %arg5[%61, %c0_24, %c32], %64 {strides = array<i32>} : memref<8x2x64xf32, #tpu.memory_space<vmem>>, vector<1x2x32xf32>,
    %c1_i32 = arith.constant 1 : i32
    %c7_i32_25 = arith.constant 7 : i32
    %65 = arith.subi %c7_i32_25, %c1_i32 : i32
    %66 = arith.index_cast %c1_i32 : i32 to index
    %c0_26 = arith.constant 0 : index
    %c0_27 = arith.constant 0 : index
    %67 = vector.load %arg6[%66, %c0_26, %c0_27] : memref<8x2x256xf32, #tpu.memory_space<vmem>>, vector<1x2x256xf32>
    %68 = vector.shape_cast %67 : vector<1x2x256xf32> to vector<2x256xf32>
    %69 = arith.index_cast %65 : i32 to index
    %c0_28 = arith.constant 0 : index
    %c0_29 = arith.constant 0 : index
    %70 = vector.load %arg6[%69, %c0_28, %c0_29] : memref<8x2x256xf32, #tpu.memory_space<vmem>>, vector<1x2x256xf32>
    %71 = vector.shape_cast %70 : vector<1x2x256xf32> to vector<2x256xf32>
    %72 = vector.extract_strided_slice %68 {offsets = [0, 0], sizes = [2, 128], strides = [1, 1]} : vector<2x256xf32> to vector<2x128xf32>
    %c0_30 = arith.constant 0 : index
    %c0_31 = arith.constant 0 : index
    %73 = vector.load %arg2[%c0_30, %c0_31] : memref<32x128xf32, #tpu.memory_space<vmem>>, vector<32x128xf32>
    %cst_32 = arith.constant dense<0.000000e+00> : vector<2x128xf32>
    %74 = tpu.matmul %40, %73, %cst_32 {dimension_numbers = #tpu.dot_dimension_numbers<[1], [0], [0], [1], [0, 0, 1, 1], [], []>} : vector<2x32xf32>, vector<32x128xf32>, vector<2x128xf32> -> vector<2x128xf32>
    %75 = arith.addf %72, %74 : vector<2x128xf32>
    %76 = vector.extract_strided_slice %71 {offsets = [0, 128], sizes = [2, 128], strides = [1, 1]} : vector<2x256xf32> to vector<2x128xf32>
    %c0_33 = arith.constant 0 : index
    %c0_34 = arith.constant 0 : index
    %77 = vector.load %arg3[%c0_33, %c0_34] : memref<32x128xf32, #tpu.memory_space<vmem>>, vector<32x128xf32>
    %cst_35 = arith.constant dense<0.000000e+00> : vector<2x128xf32>
    %78 = tpu.matmul %56, %77, %cst_35 {dimension_numbers = #tpu.dot_dimension_numbers<[1], [0], [0], [1], [0, 0, 1, 1], [], []>} : vector<2x32xf32>, vector<32x128xf32>, vector<2x128xf32> -> vector<2x128xf32>
    %79 = arith.addf %76, %78 : vector<2x128xf32>
    %80 = vector.extract_strided_slice %75 {offsets = [0, 0], sizes = [2, 96], strides = [1, 1]} : vector<2x128xf32> to vector<2x96xf32>
    %81 = arith.negf %80 : vector<2x96xf32>
    %82 = math.exp %81 : vector<2x96xf32>
    %cst_36 = arith.constant 1.000000e+00 : f32
    %83 = vector.broadcast %cst_36 : f32 to vector<2x96xf32>
    %84 = arith.addf %83, %82 : vector<2x96xf32>
    %85 = arith.divf %83, %84 : vector<2x96xf32>
    %86 = vector.extract_strided_slice %75 {offsets = [0, 96], sizes = [2, 32], strides = [1, 1]} : vector<2x128xf32> to vector<2x32xf32>
    %87 = math.tanh %86 : vector<2x32xf32>
    %88 = vector.extract_strided_slice %85 {offsets = [0, 0], sizes = [2, 32], strides = [1, 1]} : vector<2x96xf32> to vector<2x32xf32>
    %89 = vector.extract_strided_slice %85 {offsets = [0, 32], sizes = [2, 32], strides = [1, 1]} : vector<2x96xf32> to vector<2x32xf32>
    %90 = vector.extract_strided_slice %85 {offsets = [0, 64], sizes = [2, 32], strides = [1, 1]} : vector<2x96xf32> to vector<2x32xf32>
    %91 = arith.mulf %89, %38 : vector<2x32xf32>
    %92 = arith.mulf %88, %87 : vector<2x32xf32>
    %93 = arith.addf %91, %92 : vector<2x32xf32>
    %94 = math.tanh %93 : vector<2x32xf32>
    %95 = arith.mulf %90, %94 : vector<2x32xf32>
    %96 = vector.extract_strided_slice %79 {offsets = [0, 0], sizes = [2, 96], strides = [1, 1]} : vector<2x128xf32> to vector<2x96xf32>
    %97 = arith.negf %96 : vector<2x96xf32>
    %98 = math.exp %97 : vector<2x96xf32>
    %cst_37 = arith.constant 1.000000e+00 : f32
    %99 = vector.broadcast %cst_37 : f32 to vector<2x96xf32>
    %100 = arith.addf %99, %98 : vector<2x96xf32>
    %101 = arith.divf %99, %100 : vector<2x96xf32>
    %102 = vector.extract_strided_slice %79 {offsets = [0, 96], sizes = [2, 32], strides = [1, 1]} : vector<2x128xf32> to vector<2x32xf32>
    %103 = math.tanh %102 : vector<2x32xf32>
    %104 = vector.extract_strided_slice %101 {offsets = [0, 0], sizes = [2, 32], strides = [1, 1]} : vector<2x96xf32> to vector<2x32xf32>
    %105 = vector.extract_strided_slice %101 {offsets = [0, 32], sizes = [2, 32], strides = [1, 1]} : vector<2x96xf32> to vector<2x32xf32>
    %106 = vector.extract_strided_slice %101 {offsets = [0, 64], sizes = [2, 32], strides = [1, 1]} : vector<2x96xf32> to vector<2x32xf32>
    %107 = arith.mulf %105, %54 : vector<2x32xf32>
    %108 = arith.mulf %104, %103 : vector<2x32xf32>
    %109 = arith.addf %107, %108 : vector<2x32xf32>
    %110 = math.tanh %109 : vector<2x32xf32>
    %111 = arith.mulf %106, %110 : vector<2x32xf32>
    %112 = arith.index_cast %c1_i32 : i32 to index
    %c0_38 = arith.constant 0 : index
    %c0_39 = arith.constant 0 : index
    %113 = vector.load %arg5[%112, %c0_38, %c0_39] : memref<8x2x64xf32, #tpu.memory_space<vmem>>, vector<1x2x32xf32>
    %114 = vector.shape_cast %113 : vector<1x2x32xf32> to vector<2x32xf32>
    %115 = vector.shape_cast %95 : vector<2x32xf32> to vector<1x2x32xf32>
    tpu.vector_store %arg5[%112, %c0_38, %c0_39], %115 {strides = array<i32>} : memref<8x2x64xf32, #tpu.memory_space<vmem>>, vector<1x2x32xf32>,
    %116 = arith.index_cast %65 : i32 to index
    %c0_40 = arith.constant 0 : index
    %c32_41 = arith.constant 32 : index
    %117 = vector.load %arg5[%116, %c0_40, %c32_41] : memref<8x2x64xf32, #tpu.memory_space<vmem>>, vector<1x2x32xf32>
    %118 = vector.shape_cast %117 : vector<1x2x32xf32> to vector<2x32xf32>
    %119 = vector.shape_cast %111 : vector<2x32xf32> to vector<1x2x32xf32>
    tpu.vector_store %arg5[%116, %c0_40, %c32_41], %119 {strides = array<i32>} : memref<8x2x64xf32, #tpu.memory_space<vmem>>, vector<1x2x32xf32>,
    %c2_i32 = arith.constant 2 : i32
    %c7_i32_42 = arith.constant 7 : i32
    %120 = arith.subi %c7_i32_42, %c2_i32 : i32
    %121 = arith.index_cast %c2_i32 : i32 to index
    %c0_43 = arith.constant 0 : index
    %c0_44 = arith.constant 0 : index
    %122 = vector.load %arg6[%121, %c0_43, %c0_44] : memref<8x2x256xf32, #tpu.memory_space<vmem>>, vector<1x2x256xf32>
    %123 = vector.shape_cast %122 : vector<1x2x256xf32> to vector<2x256xf32>
    %124 = arith.index_cast %120 : i32 to index
    %c0_45 = arith.constant 0 : index
    %c0_46 = arith.constant 0 : index
    %125 = vector.load %arg6[%124, %c0_45, %c0_46] : memref<8x2x256xf32, #tpu.memory_space<vmem>>, vector<1x2x256xf32>
    %126 = vector.shape_cast %125 : vector<1x2x256xf32> to vector<2x256xf32>
    %127 = vector.extract_strided_slice %123 {offsets = [0, 0], sizes = [2, 128], strides = [1, 1]} : vector<2x256xf32> to vector<2x128xf32>
    %c0_47 = arith.constant 0 : index
    %c0_48 = arith.constant 0 : index
    %128 = vector.load %arg2[%c0_47, %c0_48] : memref<32x128xf32, #tpu.memory_space<vmem>>, vector<32x128xf32>
    %cst_49 = arith.constant dense<0.000000e+00> : vector<2x128xf32>
    %129 = tpu.matmul %95, %128, %cst_49 {dimension_numbers = #tpu.dot_dimension_numbers<[1], [0], [0], [1], [0, 0, 1, 1], [], []>} : vector<2x32xf32>, vector<32x128xf32>, vector<2x128xf32> -> vector<2x128xf32>
    %130 = arith.addf %127, %129 : vector<2x128xf32>
    %131 = vector.extract_strided_slice %126 {offsets = [0, 128], sizes = [2, 128], strides = [1, 1]} : vector<2x256xf32> to vector<2x128xf32>
    %c0_50 = arith.constant 0 : index
    %c0_51 = arith.constant 0 : index
    %132 = vector.load %arg3[%c0_50, %c0_51] : memref<32x128xf32, #tpu.memory_space<vmem>>, vector<32x128xf32>
    %cst_52 = arith.constant dense<0.000000e+00> : vector<2x128xf32>
    %133 = tpu.matmul %111, %132, %cst_52 {dimension_numbers = #tpu.dot_dimension_numbers<[1], [0], [0], [1], [0, 0, 1, 1], [], []>} : vector<2x32xf32>, vector<32x128xf32>, vector<2x128xf32> -> vector<2x128xf32>
    %134 = arith.addf %131, %133 : vector<2x128xf32>
    %135 = vector.extract_strided_slice %130 {offsets = [0, 0], sizes = [2, 96], strides = [1, 1]} : vector<2x128xf32> to vector<2x96xf32>
    %136 = arith.negf %135 : vector<2x96xf32>
    %137 = math.exp %136 : vector<2x96xf32>
    %cst_53 = arith.constant 1.000000e+00 : f32
    %138 = vector.broadcast %cst_53 : f32 to vector<2x96xf32>
    %139 = arith.addf %138, %137 : vector<2x96xf32>
    %140 = arith.divf %138, %139 : vector<2x96xf32>
    %141 = vector.extract_strided_slice %130 {offsets = [0, 96], sizes = [2, 32], strides = [1, 1]} : vector<2x128xf32> to vector<2x32xf32>
    %142 = math.tanh %141 : vector<2x32xf32>
    %143 = vector.extract_strided_slice %140 {offsets = [0, 0], sizes = [2, 32], strides = [1, 1]} : vector<2x96xf32> to vector<2x32xf32>
    %144 = vector.extract_strided_slice %140 {offsets = [0, 32], sizes = [2, 32], strides = [1, 1]} : vector<2x96xf32> to vector<2x32xf32>
    %145 = vector.extract_strided_slice %140 {offsets = [0, 64], sizes = [2, 32], strides = [1, 1]} : vector<2x96xf32> to vector<2x32xf32>
    %146 = arith.mulf %144, %93 : vector<2x32xf32>
    %147 = arith.mulf %143, %142 : vector<2x32xf32>
    %148 = arith.addf %146, %147 : vector<2x32xf32>
    %149 = math.tanh %148 : vector<2x32xf32>
    %150 = arith.mulf %145, %149 : vector<2x32xf32>
    %151 = vector.extract_strided_slice %134 {offsets = [0, 0], sizes = [2, 96], strides = [1, 1]} : vector<2x128xf32> to vector<2x96xf32>
    %152 = arith.negf %151 : vector<2x96xf32>
    %153 = math.exp %152 : vector<2x96xf32>
    %cst_54 = arith.constant 1.000000e+00 : f32
    %154 = vector.broadcast %cst_54 : f32 to vector<2x96xf32>
    %155 = arith.addf %154, %153 : vector<2x96xf32>
    %156 = arith.divf %154, %155 : vector<2x96xf32>
    %157 = vector.extract_strided_slice %134 {offsets = [0, 96], sizes = [2, 32], strides = [1, 1]} : vector<2x128xf32> to vector<2x32xf32>
    %158 = math.tanh %157 : vector<2x32xf32>
    %159 = vector.extract_strided_slice %156 {offsets = [0, 0], sizes = [2, 32], strides = [1, 1]} : vector<2x96xf32> to vector<2x32xf32>
    %160 = vector.extract_strided_slice %156 {offsets = [0, 32], sizes = [2, 32], strides = [1, 1]} : vector<2x96xf32> to vector<2x32xf32>
    %161 = vector.extract_strided_slice %156 {offsets = [0, 64], sizes = [2, 32], strides = [1, 1]} : vector<2x96xf32> to vector<2x32xf32>
    %162 = arith.mulf %160, %109 : vector<2x32xf32>
    %163 = arith.mulf %159, %158 : vector<2x32xf32>
    %164 = arith.addf %162, %163 : vector<2x32xf32>
    %165 = math.tanh %164 : vector<2x32xf32>
    %166 = arith.mulf %161, %165 : vector<2x32xf32>
    %167 = arith.index_cast %c2_i32 : i32 to index
    %c0_55 = arith.constant 0 : index
    %c0_56 = arith.constant 0 : index
    %168 = vector.load %arg5[%167, %c0_55, %c0_56] : memref<8x2x64xf32, #tpu.memory_space<vmem>>, vector<1x2x32xf32>
    %169 = vector.shape_cast %168 : vector<1x2x32xf32> to vector<2x32xf32>
    %170 = vector.shape_cast %150 : vector<2x32xf32> to vector<1x2x32xf32>
    tpu.vector_store %arg5[%167, %c0_55, %c0_56], %170 {strides = array<i32>} : memref<8x2x64xf32, #tpu.memory_space<vmem>>, vector<1x2x32xf32>,
    %171 = arith.index_cast %120 : i32 to index
    %c0_57 = arith.constant 0 : index
    %c32_58 = arith.constant 32 : index
    %172 = vector.load %arg5[%171, %c0_57, %c32_58] : memref<8x2x64xf32, #tpu.memory_space<vmem>>, vector<1x2x32xf32>
    %173 = vector.shape_cast %172 : vector<1x2x32xf32> to vector<2x32xf32>
    %174 = vector.shape_cast %166 : vector<2x32xf32> to vector<1x2x32xf32>
    tpu.vector_store %arg5[%171, %c0_57, %c32_58], %174 {strides = array<i32>} : memref<8x2x64xf32, #tpu.memory_space<vmem>>, vector<1x2x32xf32>,
    %c3_i32 = arith.constant 3 : i32
    %c7_i32_59 = arith.constant 7 : i32
    %175 = arith.subi %c7_i32_59, %c3_i32 : i32
    %176 = arith.index_cast %c3_i32 : i32 to index
    %c0_60 = arith.constant 0 : index
    %c0_61 = arith.constant 0 : index
    %177 = vector.load %arg6[%176, %c0_60, %c0_61] : memref<8x2x256xf32, #tpu.memory_space<vmem>>, vector<1x2x256xf32>
    %178 = vector.shape_cast %177 : vector<1x2x256xf32> to vector<2x256xf32>
    %179 = arith.index_cast %175 : i32 to index
    %c0_62 = arith.constant 0 : index
    %c0_63 = arith.constant 0 : index
    %180 = vector.load %arg6[%179, %c0_62, %c0_63] : memref<8x2x256xf32, #tpu.memory_space<vmem>>, vector<1x2x256xf32>
    %181 = vector.shape_cast %180 : vector<1x2x256xf32> to vector<2x256xf32>
    %182 = vector.extract_strided_slice %178 {offsets = [0, 0], sizes = [2, 128], strides = [1, 1]} : vector<2x256xf32> to vector<2x128xf32>
    %c0_64 = arith.constant 0 : index
    %c0_65 = arith.constant 0 : index
    %183 = vector.load %arg2[%c0_64, %c0_65] : memref<32x128xf32, #tpu.memory_space<vmem>>, vector<32x128xf32>
    %cst_66 = arith.constant dense<0.000000e+00> : vector<2x128xf32>
    %184 = tpu.matmul %150, %183, %cst_66 {dimension_numbers = #tpu.dot_dimension_numbers<[1], [0], [0], [1], [0, 0, 1, 1], [], []>} : vector<2x32xf32>, vector<32x128xf32>, vector<2x128xf32> -> vector<2x128xf32>
    %185 = arith.addf %182, %184 : vector<2x128xf32>
    %186 = vector.extract_strided_slice %181 {offsets = [0, 128], sizes = [2, 128], strides = [1, 1]} : vector<2x256xf32> to vector<2x128xf32>
    %c0_67 = arith.constant 0 : index
    %c0_68 = arith.constant 0 : index
    %187 = vector.load %arg3[%c0_67, %c0_68] : memref<32x128xf32, #tpu.memory_space<vmem>>, vector<32x128xf32>
    %cst_69 = arith.constant dense<0.000000e+00> : vector<2x128xf32>
    %188 = tpu.matmul %166, %187, %cst_69 {dimension_numbers = #tpu.dot_dimension_numbers<[1], [0], [0], [1], [0, 0, 1, 1], [], []>} : vector<2x32xf32>, vector<32x128xf32>, vector<2x128xf32> -> vector<2x128xf32>
    %189 = arith.addf %186, %188 : vector<2x128xf32>
    %190 = vector.extract_strided_slice %185 {offsets = [0, 0], sizes = [2, 96], strides = [1, 1]} : vector<2x128xf32> to vector<2x96xf32>
    %191 = arith.negf %190 : vector<2x96xf32>
    %192 = math.exp %191 : vector<2x96xf32>
    %cst_70 = arith.constant 1.000000e+00 : f32
    %193 = vector.broadcast %cst_70 : f32 to vector<2x96xf32>
    %194 = arith.addf %193, %192 : vector<2x96xf32>
    %195 = arith.divf %193, %194 : vector<2x96xf32>
    %196 = vector.extract_strided_slice %185 {offsets = [0, 96], sizes = [2, 32], strides = [1, 1]} : vector<2x128xf32> to vector<2x32xf32>
    %197 = math.tanh %196 : vector<2x32xf32>
    %198 = vector.extract_strided_slice %195 {offsets = [0, 0], sizes = [2, 32], strides = [1, 1]} : vector<2x96xf32> to vector<2x32xf32>
    %199 = vector.extract_strided_slice %195 {offsets = [0, 32], sizes = [2, 32], strides = [1, 1]} : vector<2x96xf32> to vector<2x32xf32>
    %200 = vector.extract_strided_slice %195 {offsets = [0, 64], sizes = [2, 32], strides = [1, 1]} : vector<2x96xf32> to vector<2x32xf32>
    %201 = arith.mulf %199, %148 : vector<2x32xf32>
    %202 = arith.mulf %198, %197 : vector<2x32xf32>
    %203 = arith.addf %201, %202 : vector<2x32xf32>
    %204 = math.tanh %203 : vector<2x32xf32>
    %205 = arith.mulf %200, %204 : vector<2x32xf32>
    %206 = vector.extract_strided_slice %189 {offsets = [0, 0], sizes = [2, 96], strides = [1, 1]} : vector<2x128xf32> to vector<2x96xf32>
    %207 = arith.negf %206 : vector<2x96xf32>
    %208 = math.exp %207 : vector<2x96xf32>
    %cst_71 = arith.constant 1.000000e+00 : f32
    %209 = vector.broadcast %cst_71 : f32 to vector<2x96xf32>
    %210 = arith.addf %209, %208 : vector<2x96xf32>
    %211 = arith.divf %209, %210 : vector<2x96xf32>
    %212 = vector.extract_strided_slice %189 {offsets = [0, 96], sizes = [2, 32], strides = [1, 1]} : vector<2x128xf32> to vector<2x32xf32>
    %213 = math.tanh %212 : vector<2x32xf32>
    %214 = vector.extract_strided_slice %211 {offsets = [0, 0], sizes = [2, 32], strides = [1, 1]} : vector<2x96xf32> to vector<2x32xf32>
    %215 = vector.extract_strided_slice %211 {offsets = [0, 32], sizes = [2, 32], strides = [1, 1]} : vector<2x96xf32> to vector<2x32xf32>
    %216 = vector.extract_strided_slice %211 {offsets = [0, 64], sizes = [2, 32], strides = [1, 1]} : vector<2x96xf32> to vector<2x32xf32>
    %217 = arith.mulf %215, %164 : vector<2x32xf32>
    %218 = arith.mulf %214, %213 : vector<2x32xf32>
    %219 = arith.addf %217, %218 : vector<2x32xf32>
    %220 = math.tanh %219 : vector<2x32xf32>
    %221 = arith.mulf %216, %220 : vector<2x32xf32>
    %222 = arith.index_cast %c3_i32 : i32 to index
    %c0_72 = arith.constant 0 : index
    %c0_73 = arith.constant 0 : index
    %223 = vector.load %arg5[%222, %c0_72, %c0_73] : memref<8x2x64xf32, #tpu.memory_space<vmem>>, vector<1x2x32xf32>
    %224 = vector.shape_cast %223 : vector<1x2x32xf32> to vector<2x32xf32>
    %225 = vector.shape_cast %205 : vector<2x32xf32> to vector<1x2x32xf32>
    tpu.vector_store %arg5[%222, %c0_72, %c0_73], %225 {strides = array<i32>} : memref<8x2x64xf32, #tpu.memory_space<vmem>>, vector<1x2x32xf32>,
    %226 = arith.index_cast %175 : i32 to index
    %c0_74 = arith.constant 0 : index
    %c32_75 = arith.constant 32 : index
    %227 = vector.load %arg5[%226, %c0_74, %c32_75] : memref<8x2x64xf32, #tpu.memory_space<vmem>>, vector<1x2x32xf32>
    %228 = vector.shape_cast %227 : vector<1x2x32xf32> to vector<2x32xf32>
    %229 = vector.shape_cast %221 : vector<2x32xf32> to vector<1x2x32xf32>
    tpu.vector_store %arg5[%226, %c0_74, %c32_75], %229 {strides = array<i32>} : memref<8x2x64xf32, #tpu.memory_space<vmem>>, vector<1x2x32xf32>,
    %c4_i32 = arith.constant 4 : i32
    %c7_i32_76 = arith.constant 7 : i32
    %230 = arith.subi %c7_i32_76, %c4_i32 : i32
    %231 = arith.index_cast %c4_i32 : i32 to index
    %c0_77 = arith.constant 0 : index
    %c0_78 = arith.constant 0 : index
    %232 = vector.load %arg6[%231, %c0_77, %c0_78] : memref<8x2x256xf32, #tpu.memory_space<vmem>>, vector<1x2x256xf32>
    %233 = vector.shape_cast %232 : vector<1x2x256xf32> to vector<2x256xf32>
    %234 = arith.index_cast %230 : i32 to index
    %c0_79 = arith.constant 0 : index
    %c0_80 = arith.constant 0 : index
    %235 = vector.load %arg6[%234, %c0_79, %c0_80] : memref<8x2x256xf32, #tpu.memory_space<vmem>>, vector<1x2x256xf32>
    %236 = vector.shape_cast %235 : vector<1x2x256xf32> to vector<2x256xf32>
    %237 = vector.extract_strided_slice %233 {offsets = [0, 0], sizes = [2, 128], strides = [1, 1]} : vector<2x256xf32> to vector<2x128xf32>
    %c0_81 = arith.constant 0 : index
    %c0_82 = arith.constant 0 : index
    %238 = vector.load %arg2[%c0_81, %c0_82] : memref<32x128xf32, #tpu.memory_space<vmem>>, vector<32x128xf32>
    %cst_83 = arith.constant dense<0.000000e+00> : vector<2x128xf32>
    %239 = tpu.matmul %205, %238, %cst_83 {dimension_numbers = #tpu.dot_dimension_numbers<[1], [0], [0], [1], [0, 0, 1, 1], [], []>} : vector<2x32xf32>, vector<32x128xf32>, vector<2x128xf32> -> vector<2x128xf32>
    %240 = arith.addf %237, %239 : vector<2x128xf32>
    %241 = vector.extract_strided_slice %236 {offsets = [0, 128], sizes = [2, 128], strides = [1, 1]} : vector<2x256xf32> to vector<2x128xf32>
    %c0_84 = arith.constant 0 : index
    %c0_85 = arith.constant 0 : index
    %242 = vector.load %arg3[%c0_84, %c0_85] : memref<32x128xf32, #tpu.memory_space<vmem>>, vector<32x128xf32>
    %cst_86 = arith.constant dense<0.000000e+00> : vector<2x128xf32>
    %243 = tpu.matmul %221, %242, %cst_86 {dimension_numbers = #tpu.dot_dimension_numbers<[1], [0], [0], [1], [0, 0, 1, 1], [], []>} : vector<2x32xf32>, vector<32x128xf32>, vector<2x128xf32> -> vector<2x128xf32>
    %244 = arith.addf %241, %243 : vector<2x128xf32>
    %245 = vector.extract_strided_slice %240 {offsets = [0, 0], sizes = [2, 96], strides = [1, 1]} : vector<2x128xf32> to vector<2x96xf32>
    %246 = arith.negf %245 : vector<2x96xf32>
    %247 = math.exp %246 : vector<2x96xf32>
    %cst_87 = arith.constant 1.000000e+00 : f32
    %248 = vector.broadcast %cst_87 : f32 to vector<2x96xf32>
    %249 = arith.addf %248, %247 : vector<2x96xf32>
    %250 = arith.divf %248, %249 : vector<2x96xf32>
    %251 = vector.extract_strided_slice %240 {offsets = [0, 96], sizes = [2, 32], strides = [1, 1]} : vector<2x128xf32> to vector<2x32xf32>
    %252 = math.tanh %251 : vector<2x32xf32>
    %253 = vector.extract_strided_slice %250 {offsets = [0, 0], sizes = [2, 32], strides = [1, 1]} : vector<2x96xf32> to vector<2x32xf32>
    %254 = vector.extract_strided_slice %250 {offsets = [0, 32], sizes = [2, 32], strides = [1, 1]} : vector<2x96xf32> to vector<2x32xf32>
    %255 = vector.extract_strided_slice %250 {offsets = [0, 64], sizes = [2, 32], strides = [1, 1]} : vector<2x96xf32> to vector<2x32xf32>
    %256 = arith.mulf %254, %203 : vector<2x32xf32>
    %257 = arith.mulf %253, %252 : vector<2x32xf32>
    %258 = arith.addf %256, %257 : vector<2x32xf32>
    %259 = math.tanh %258 : vector<2x32xf32>
    %260 = arith.mulf %255, %259 : vector<2x32xf32>
    %261 = vector.extract_strided_slice %244 {offsets = [0, 0], sizes = [2, 96], strides = [1, 1]} : vector<2x128xf32> to vector<2x96xf32>
    %262 = arith.negf %261 : vector<2x96xf32>
    %263 = math.exp %262 : vector<2x96xf32>
    %cst_88 = arith.constant 1.000000e+00 : f32
    %264 = vector.broadcast %cst_88 : f32 to vector<2x96xf32>
    %265 = arith.addf %264, %263 : vector<2x96xf32>
    %266 = arith.divf %264, %265 : vector<2x96xf32>
    %267 = vector.extract_strided_slice %244 {offsets = [0, 96], sizes = [2, 32], strides = [1, 1]} : vector<2x128xf32> to vector<2x32xf32>
    %268 = math.tanh %267 : vector<2x32xf32>
    %269 = vector.extract_strided_slice %266 {offsets = [0, 0], sizes = [2, 32], strides = [1, 1]} : vector<2x96xf32> to vector<2x32xf32>
    %270 = vector.extract_strided_slice %266 {offsets = [0, 32], sizes = [2, 32], strides = [1, 1]} : vector<2x96xf32> to vector<2x32xf32>
    %271 = vector.extract_strided_slice %266 {offsets = [0, 64], sizes = [2, 32], strides = [1, 1]} : vector<2x96xf32> to vector<2x32xf32>
    %272 = arith.mulf %270, %219 : vector<2x32xf32>
    %273 = arith.mulf %269, %268 : vector<2x32xf32>
    %274 = arith.addf %272, %273 : vector<2x32xf32>
    %275 = math.tanh %274 : vector<2x32xf32>
    %276 = arith.mulf %271, %275 : vector<2x32xf32>
    %277 = arith.index_cast %c4_i32 : i32 to index
    %c0_89 = arith.constant 0 : index
    %c0_90 = arith.constant 0 : index
    %278 = vector.load %arg5[%277, %c0_89, %c0_90] : memref<8x2x64xf32, #tpu.memory_space<vmem>>, vector<1x2x32xf32>
    %279 = vector.shape_cast %278 : vector<1x2x32xf32> to vector<2x32xf32>
    %280 = vector.shape_cast %260 : vector<2x32xf32> to vector<1x2x32xf32>
    tpu.vector_store %arg5[%277, %c0_89, %c0_90], %280 {strides = array<i32>} : memref<8x2x64xf32, #tpu.memory_space<vmem>>, vector<1x2x32xf32>,
    %281 = arith.index_cast %230 : i32 to index
    %c0_91 = arith.constant 0 : index
    %c32_92 = arith.constant 32 : index
    %282 = vector.load %arg5[%281, %c0_91, %c32_92] : memref<8x2x64xf32, #tpu.memory_space<vmem>>, vector<1x2x32xf32>
    %283 = vector.shape_cast %282 : vector<1x2x32xf32> to vector<2x32xf32>
    %284 = vector.shape_cast %276 : vector<2x32xf32> to vector<1x2x32xf32>
    tpu.vector_store %arg5[%281, %c0_91, %c32_92], %284 {strides = array<i32>} : memref<8x2x64xf32, #tpu.memory_space<vmem>>, vector<1x2x32xf32>,
    %c5_i32 = arith.constant 5 : i32
    %c7_i32_93 = arith.constant 7 : i32
    %285 = arith.subi %c7_i32_93, %c5_i32 : i32
    %286 = arith.index_cast %c5_i32 : i32 to index
    %c0_94 = arith.constant 0 : index
    %c0_95 = arith.constant 0 : index
    %287 = vector.load %arg6[%286, %c0_94, %c0_95] : memref<8x2x256xf32, #tpu.memory_space<vmem>>, vector<1x2x256xf32>
    %288 = vector.shape_cast %287 : vector<1x2x256xf32> to vector<2x256xf32>
    %289 = arith.index_cast %285 : i32 to index
    %c0_96 = arith.constant 0 : index
    %c0_97 = arith.constant 0 : index
    %290 = vector.load %arg6[%289, %c0_96, %c0_97] : memref<8x2x256xf32, #tpu.memory_space<vmem>>, vector<1x2x256xf32>
    %291 = vector.shape_cast %290 : vector<1x2x256xf32> to vector<2x256xf32>
    %292 = vector.extract_strided_slice %288 {offsets = [0, 0], sizes = [2, 128], strides = [1, 1]} : vector<2x256xf32> to vector<2x128xf32>
    %c0_98 = arith.constant 0 : index
    %c0_99 = arith.constant 0 : index
    %293 = vector.load %arg2[%c0_98, %c0_99] : memref<32x128xf32, #tpu.memory_space<vmem>>, vector<32x128xf32>
    %cst_100 = arith.constant dense<0.000000e+00> : vector<2x128xf32>
    %294 = tpu.matmul %260, %293, %cst_100 {dimension_numbers = #tpu.dot_dimension_numbers<[1], [0], [0], [1], [0, 0, 1, 1], [], []>} : vector<2x32xf32>, vector<32x128xf32>, vector<2x128xf32> -> vector<2x128xf32>
    %295 = arith.addf %292, %294 : vector<2x128xf32>
    %296 = vector.extract_strided_slice %291 {offsets = [0, 128], sizes = [2, 128], strides = [1, 1]} : vector<2x256xf32> to vector<2x128xf32>
    %c0_101 = arith.constant 0 : index
    %c0_102 = arith.constant 0 : index
    %297 = vector.load %arg3[%c0_101, %c0_102] : memref<32x128xf32, #tpu.memory_space<vmem>>, vector<32x128xf32>
    %cst_103 = arith.constant dense<0.000000e+00> : vector<2x128xf32>
    %298 = tpu.matmul %276, %297, %cst_103 {dimension_numbers = #tpu.dot_dimension_numbers<[1], [0], [0], [1], [0, 0, 1, 1], [], []>} : vector<2x32xf32>, vector<32x128xf32>, vector<2x128xf32> -> vector<2x128xf32>
    %299 = arith.addf %296, %298 : vector<2x128xf32>
    %300 = vector.extract_strided_slice %295 {offsets = [0, 0], sizes = [2, 96], strides = [1, 1]} : vector<2x128xf32> to vector<2x96xf32>
    %301 = arith.negf %300 : vector<2x96xf32>
    %302 = math.exp %301 : vector<2x96xf32>
    %cst_104 = arith.constant 1.000000e+00 : f32
    %303 = vector.broadcast %cst_104 : f32 to vector<2x96xf32>
    %304 = arith.addf %303, %302 : vector<2x96xf32>
    %305 = arith.divf %303, %304 : vector<2x96xf32>
    %306 = vector.extract_strided_slice %295 {offsets = [0, 96], sizes = [2, 32], strides = [1, 1]} : vector<2x128xf32> to vector<2x32xf32>
    %307 = math.tanh %306 : vector<2x32xf32>
    %308 = vector.extract_strided_slice %305 {offsets = [0, 0], sizes = [2, 32], strides = [1, 1]} : vector<2x96xf32> to vector<2x32xf32>
    %309 = vector.extract_strided_slice %305 {offsets = [0, 32], sizes = [2, 32], strides = [1, 1]} : vector<2x96xf32> to vector<2x32xf32>
    %310 = vector.extract_strided_slice %305 {offsets = [0, 64], sizes = [2, 32], strides = [1, 1]} : vector<2x96xf32> to vector<2x32xf32>
    %311 = arith.mulf %309, %258 : vector<2x32xf32>
    %312 = arith.mulf %308, %307 : vector<2x32xf32>
    %313 = arith.addf %311, %312 : vector<2x32xf32>
    %314 = math.tanh %313 : vector<2x32xf32>
    %315 = arith.mulf %310, %314 : vector<2x32xf32>
    %316 = vector.extract_strided_slice %299 {offsets = [0, 0], sizes = [2, 96], strides = [1, 1]} : vector<2x128xf32> to vector<2x96xf32>
    %317 = arith.negf %316 : vector<2x96xf32>
    %318 = math.exp %317 : vector<2x96xf32>
    %cst_105 = arith.constant 1.000000e+00 : f32
    %319 = vector.broadcast %cst_105 : f32 to vector<2x96xf32>
    %320 = arith.addf %319, %318 : vector<2x96xf32>
    %321 = arith.divf %319, %320 : vector<2x96xf32>
    %322 = vector.extract_strided_slice %299 {offsets = [0, 96], sizes = [2, 32], strides = [1, 1]} : vector<2x128xf32> to vector<2x32xf32>
    %323 = math.tanh %322 : vector<2x32xf32>
    %324 = vector.extract_strided_slice %321 {offsets = [0, 0], sizes = [2, 32], strides = [1, 1]} : vector<2x96xf32> to vector<2x32xf32>
    %325 = vector.extract_strided_slice %321 {offsets = [0, 32], sizes = [2, 32], strides = [1, 1]} : vector<2x96xf32> to vector<2x32xf32>
    %326 = vector.extract_strided_slice %321 {offsets = [0, 64], sizes = [2, 32], strides = [1, 1]} : vector<2x96xf32> to vector<2x32xf32>
    %327 = arith.mulf %325, %274 : vector<2x32xf32>
    %328 = arith.mulf %324, %323 : vector<2x32xf32>
    %329 = arith.addf %327, %328 : vector<2x32xf32>
    %330 = math.tanh %329 : vector<2x32xf32>
    %331 = arith.mulf %326, %330 : vector<2x32xf32>
    %332 = arith.index_cast %c5_i32 : i32 to index
    %c0_106 = arith.constant 0 : index
    %c0_107 = arith.constant 0 : index
    %333 = vector.load %arg5[%332, %c0_106, %c0_107] : memref<8x2x64xf32, #tpu.memory_space<vmem>>, vector<1x2x32xf32>
    %334 = vector.shape_cast %333 : vector<1x2x32xf32> to vector<2x32xf32>
    %335 = vector.shape_cast %315 : vector<2x32xf32> to vector<1x2x32xf32>
    tpu.vector_store %arg5[%332, %c0_106, %c0_107], %335 {strides = array<i32>} : memref<8x2x64xf32, #tpu.memory_space<vmem>>, vector<1x2x32xf32>,
    %336 = arith.index_cast %285 : i32 to index
    %c0_108 = arith.constant 0 : index
    %c32_109 = arith.constant 32 : index
    %337 = vector.load %arg5[%336, %c0_108, %c32_109] : memref<8x2x64xf32, #tpu.memory_space<vmem>>, vector<1x2x32xf32>
    %338 = vector.shape_cast %337 : vector<1x2x32xf32> to vector<2x32xf32>
    %339 = vector.shape_cast %331 : vector<2x32xf32> to vector<1x2x32xf32>
    tpu.vector_store %arg5[%336, %c0_108, %c32_109], %339 {strides = array<i32>} : memref<8x2x64xf32, #tpu.memory_space<vmem>>, vector<1x2x32xf32>,
    %c6_i32 = arith.constant 6 : i32
    %c7_i32_110 = arith.constant 7 : i32
    %340 = arith.subi %c7_i32_110, %c6_i32 : i32
    %341 = arith.index_cast %c6_i32 : i32 to index
    %c0_111 = arith.constant 0 : index
    %c0_112 = arith.constant 0 : index
    %342 = vector.load %arg6[%341, %c0_111, %c0_112] : memref<8x2x256xf32, #tpu.memory_space<vmem>>, vector<1x2x256xf32>
    %343 = vector.shape_cast %342 : vector<1x2x256xf32> to vector<2x256xf32>
    %344 = arith.index_cast %340 : i32 to index
    %c0_113 = arith.constant 0 : index
    %c0_114 = arith.constant 0 : index
    %345 = vector.load %arg6[%344, %c0_113, %c0_114] : memref<8x2x256xf32, #tpu.memory_space<vmem>>, vector<1x2x256xf32>
    %346 = vector.shape_cast %345 : vector<1x2x256xf32> to vector<2x256xf32>
    %347 = vector.extract_strided_slice %343 {offsets = [0, 0], sizes = [2, 128], strides = [1, 1]} : vector<2x256xf32> to vector<2x128xf32>
    %c0_115 = arith.constant 0 : index
    %c0_116 = arith.constant 0 : index
    %348 = vector.load %arg2[%c0_115, %c0_116] : memref<32x128xf32, #tpu.memory_space<vmem>>, vector<32x128xf32>
    %cst_117 = arith.constant dense<0.000000e+00> : vector<2x128xf32>
    %349 = tpu.matmul %315, %348, %cst_117 {dimension_numbers = #tpu.dot_dimension_numbers<[1], [0], [0], [1], [0, 0, 1, 1], [], []>} : vector<2x32xf32>, vector<32x128xf32>, vector<2x128xf32> -> vector<2x128xf32>
    %350 = arith.addf %347, %349 : vector<2x128xf32>
    %351 = vector.extract_strided_slice %346 {offsets = [0, 128], sizes = [2, 128], strides = [1, 1]} : vector<2x256xf32> to vector<2x128xf32>
    %c0_118 = arith.constant 0 : index
    %c0_119 = arith.constant 0 : index
    %352 = vector.load %arg3[%c0_118, %c0_119] : memref<32x128xf32, #tpu.memory_space<vmem>>, vector<32x128xf32>
    %cst_120 = arith.constant dense<0.000000e+00> : vector<2x128xf32>
    %353 = tpu.matmul %331, %352, %cst_120 {dimension_numbers = #tpu.dot_dimension_numbers<[1], [0], [0], [1], [0, 0, 1, 1], [], []>} : vector<2x32xf32>, vector<32x128xf32>, vector<2x128xf32> -> vector<2x128xf32>
    %354 = arith.addf %351, %353 : vector<2x128xf32>
    %355 = vector.extract_strided_slice %350 {offsets = [0, 0], sizes = [2, 96], strides = [1, 1]} : vector<2x128xf32> to vector<2x96xf32>
    %356 = arith.negf %355 : vector<2x96xf32>
    %357 = math.exp %356 : vector<2x96xf32>
    %cst_121 = arith.constant 1.000000e+00 : f32
    %358 = vector.broadcast %cst_121 : f32 to vector<2x96xf32>
    %359 = arith.addf %358, %357 : vector<2x96xf32>
    %360 = arith.divf %358, %359 : vector<2x96xf32>
    %361 = vector.extract_strided_slice %350 {offsets = [0, 96], sizes = [2, 32], strides = [1, 1]} : vector<2x128xf32> to vector<2x32xf32>
    %362 = math.tanh %361 : vector<2x32xf32>
    %363 = vector.extract_strided_slice %360 {offsets = [0, 0], sizes = [2, 32], strides = [1, 1]} : vector<2x96xf32> to vector<2x32xf32>
    %364 = vector.extract_strided_slice %360 {offsets = [0, 32], sizes = [2, 32], strides = [1, 1]} : vector<2x96xf32> to vector<2x32xf32>
    %365 = vector.extract_strided_slice %360 {offsets = [0, 64], sizes = [2, 32], strides = [1, 1]} : vector<2x96xf32> to vector<2x32xf32>
    %366 = arith.mulf %364, %313 : vector<2x32xf32>
    %367 = arith.mulf %363, %362 : vector<2x32xf32>
    %368 = arith.addf %366, %367 : vector<2x32xf32>
    %369 = math.tanh %368 : vector<2x32xf32>
    %370 = arith.mulf %365, %369 : vector<2x32xf32>
    %371 = vector.extract_strided_slice %354 {offsets = [0, 0], sizes = [2, 96], strides = [1, 1]} : vector<2x128xf32> to vector<2x96xf32>
    %372 = arith.negf %371 : vector<2x96xf32>
    %373 = math.exp %372 : vector<2x96xf32>
    %cst_122 = arith.constant 1.000000e+00 : f32
    %374 = vector.broadcast %cst_122 : f32 to vector<2x96xf32>
    %375 = arith.addf %374, %373 : vector<2x96xf32>
    %376 = arith.divf %374, %375 : vector<2x96xf32>
    %377 = vector.extract_strided_slice %354 {offsets = [0, 96], sizes = [2, 32], strides = [1, 1]} : vector<2x128xf32> to vector<2x32xf32>
    %378 = math.tanh %377 : vector<2x32xf32>
    %379 = vector.extract_strided_slice %376 {offsets = [0, 0], sizes = [2, 32], strides = [1, 1]} : vector<2x96xf32> to vector<2x32xf32>
    %380 = vector.extract_strided_slice %376 {offsets = [0, 32], sizes = [2, 32], strides = [1, 1]} : vector<2x96xf32> to vector<2x32xf32>
    %381 = vector.extract_strided_slice %376 {offsets = [0, 64], sizes = [2, 32], strides = [1, 1]} : vector<2x96xf32> to vector<2x32xf32>
    %382 = arith.mulf %380, %329 : vector<2x32xf32>
    %383 = arith.mulf %379, %378 : vector<2x32xf32>
    %384 = arith.addf %382, %383 : vector<2x32xf32>
    %385 = math.tanh %384 : vector<2x32xf32>
    %386 = arith.mulf %381, %385 : vector<2x32xf32>
    %387 = arith.index_cast %c6_i32 : i32 to index
    %c0_123 = arith.constant 0 : index
    %c0_124 = arith.constant 0 : index
    %388 = vector.load %arg5[%387, %c0_123, %c0_124] : memref<8x2x64xf32, #tpu.memory_space<vmem>>, vector<1x2x32xf32>
    %389 = vector.shape_cast %388 : vector<1x2x32xf32> to vector<2x32xf32>
    %390 = vector.shape_cast %370 : vector<2x32xf32> to vector<1x2x32xf32>
    tpu.vector_store %arg5[%387, %c0_123, %c0_124], %390 {strides = array<i32>} : memref<8x2x64xf32, #tpu.memory_space<vmem>>, vector<1x2x32xf32>,
    %391 = arith.index_cast %340 : i32 to index
    %c0_125 = arith.constant 0 : index
    %c32_126 = arith.constant 32 : index
    %392 = vector.load %arg5[%391, %c0_125, %c32_126] : memref<8x2x64xf32, #tpu.memory_space<vmem>>, vector<1x2x32xf32>
    %393 = vector.shape_cast %392 : vector<1x2x32xf32> to vector<2x32xf32>
    %394 = vector.shape_cast %386 : vector<2x32xf32> to vector<1x2x32xf32>
    tpu.vector_store %arg5[%391, %c0_125, %c32_126], %394 {strides = array<i32>} : memref<8x2x64xf32, #tpu.memory_space<vmem>>, vector<1x2x32xf32>,
    %c7_i32_127 = arith.constant 7 : i32
    %c7_i32_128 = arith.constant 7 : i32
    %395 = arith.subi %c7_i32_128, %c7_i32_127 : i32
    %396 = arith.index_cast %c7_i32_127 : i32 to index
    %c0_129 = arith.constant 0 : index
    %c0_130 = arith.constant 0 : index
    %397 = vector.load %arg6[%396, %c0_129, %c0_130] : memref<8x2x256xf32, #tpu.memory_space<vmem>>, vector<1x2x256xf32>
    %398 = vector.shape_cast %397 : vector<1x2x256xf32> to vector<2x256xf32>
    %399 = arith.index_cast %395 : i32 to index
    %c0_131 = arith.constant 0 : index
    %c0_132 = arith.constant 0 : index
    %400 = vector.load %arg6[%399, %c0_131, %c0_132] : memref<8x2x256xf32, #tpu.memory_space<vmem>>, vector<1x2x256xf32>
    %401 = vector.shape_cast %400 : vector<1x2x256xf32> to vector<2x256xf32>
    %402 = vector.extract_strided_slice %398 {offsets = [0, 0], sizes = [2, 128], strides = [1, 1]} : vector<2x256xf32> to vector<2x128xf32>
    %c0_133 = arith.constant 0 : index
    %c0_134 = arith.constant 0 : index
    %403 = vector.load %arg2[%c0_133, %c0_134] : memref<32x128xf32, #tpu.memory_space<vmem>>, vector<32x128xf32>
    %cst_135 = arith.constant dense<0.000000e+00> : vector<2x128xf32>
    %404 = tpu.matmul %370, %403, %cst_135 {dimension_numbers = #tpu.dot_dimension_numbers<[1], [0], [0], [1], [0, 0, 1, 1], [], []>} : vector<2x32xf32>, vector<32x128xf32>, vector<2x128xf32> -> vector<2x128xf32>
    %405 = arith.addf %402, %404 : vector<2x128xf32>
    %406 = vector.extract_strided_slice %401 {offsets = [0, 128], sizes = [2, 128], strides = [1, 1]} : vector<2x256xf32> to vector<2x128xf32>
    %c0_136 = arith.constant 0 : index
    %c0_137 = arith.constant 0 : index
    %407 = vector.load %arg3[%c0_136, %c0_137] : memref<32x128xf32, #tpu.memory_space<vmem>>, vector<32x128xf32>
    %cst_138 = arith.constant dense<0.000000e+00> : vector<2x128xf32>
    %408 = tpu.matmul %386, %407, %cst_138 {dimension_numbers = #tpu.dot_dimension_numbers<[1], [0], [0], [1], [0, 0, 1, 1], [], []>} : vector<2x32xf32>, vector<32x128xf32>, vector<2x128xf32> -> vector<2x128xf32>
    %409 = arith.addf %406, %408 : vector<2x128xf32>
    %410 = vector.extract_strided_slice %405 {offsets = [0, 0], sizes = [2, 96], strides = [1, 1]} : vector<2x128xf32> to vector<2x96xf32>
    %411 = arith.negf %410 : vector<2x96xf32>
    %412 = math.exp %411 : vector<2x96xf32>
    %cst_139 = arith.constant 1.000000e+00 : f32
    %413 = vector.broadcast %cst_139 : f32 to vector<2x96xf32>
    %414 = arith.addf %413, %412 : vector<2x96xf32>
    %415 = arith.divf %413, %414 : vector<2x96xf32>
    %416 = vector.extract_strided_slice %405 {offsets = [0, 96], sizes = [2, 32], strides = [1, 1]} : vector<2x128xf32> to vector<2x32xf32>
    %417 = math.tanh %416 : vector<2x32xf32>
    %418 = vector.extract_strided_slice %415 {offsets = [0, 0], sizes = [2, 32], strides = [1, 1]} : vector<2x96xf32> to vector<2x32xf32>
    %419 = vector.extract_strided_slice %415 {offsets = [0, 32], sizes = [2, 32], strides = [1, 1]} : vector<2x96xf32> to vector<2x32xf32>
    %420 = vector.extract_strided_slice %415 {offsets = [0, 64], sizes = [2, 32], strides = [1, 1]} : vector<2x96xf32> to vector<2x32xf32>
    %421 = arith.mulf %419, %368 : vector<2x32xf32>
    %422 = arith.mulf %418, %417 : vector<2x32xf32>
    %423 = arith.addf %421, %422 : vector<2x32xf32>
    %424 = math.tanh %423 : vector<2x32xf32>
    %425 = arith.mulf %420, %424 : vector<2x32xf32>
    %426 = vector.extract_strided_slice %409 {offsets = [0, 0], sizes = [2, 96], strides = [1, 1]} : vector<2x128xf32> to vector<2x96xf32>
    %427 = arith.negf %426 : vector<2x96xf32>
    %428 = math.exp %427 : vector<2x96xf32>
    %cst_140 = arith.constant 1.000000e+00 : f32
    %429 = vector.broadcast %cst_140 : f32 to vector<2x96xf32>
    %430 = arith.addf %429, %428 : vector<2x96xf32>
    %431 = arith.divf %429, %430 : vector<2x96xf32>
    %432 = vector.extract_strided_slice %409 {offsets = [0, 96], sizes = [2, 32], strides = [1, 1]} : vector<2x128xf32> to vector<2x32xf32>
    %433 = math.tanh %432 : vector<2x32xf32>
    %434 = vector.extract_strided_slice %431 {offsets = [0, 0], sizes = [2, 32], strides = [1, 1]} : vector<2x96xf32> to vector<2x32xf32>
    %435 = vector.extract_strided_slice %431 {offsets = [0, 32], sizes = [2, 32], strides = [1, 1]} : vector<2x96xf32> to vector<2x32xf32>
    %436 = vector.extract_strided_slice %431 {offsets = [0, 64], sizes = [2, 32], strides = [1, 1]} : vector<2x96xf32> to vector<2x32xf32>
    %437 = arith.mulf %435, %384 : vector<2x32xf32>
    %438 = arith.mulf %434, %433 : vector<2x32xf32>
    %439 = arith.addf %437, %438 : vector<2x32xf32>
    %440 = math.tanh %439 : vector<2x32xf32>
    %441 = arith.mulf %436, %440 : vector<2x32xf32>
    %442 = arith.index_cast %c7_i32_127 : i32 to index
    %c0_141 = arith.constant 0 : index
    %c0_142 = arith.constant 0 : index
    %443 = vector.load %arg5[%442, %c0_141, %c0_142] : memref<8x2x64xf32, #tpu.memory_space<vmem>>, vector<1x2x32xf32>
    %444 = vector.shape_cast %443 : vector<1x2x32xf32> to vector<2x32xf32>
    %445 = vector.shape_cast %425 : vector<2x32xf32> to vector<1x2x32xf32>
    tpu.vector_store %arg5[%442, %c0_141, %c0_142], %445 {strides = array<i32>} : memref<8x2x64xf32, #tpu.memory_space<vmem>>, vector<1x2x32xf32>,
    %446 = arith.index_cast %395 : i32 to index
    %c0_143 = arith.constant 0 : index
    %c32_144 = arith.constant 32 : index
    %447 = vector.load %arg5[%446, %c0_143, %c32_144] : memref<8x2x64xf32, #tpu.memory_space<vmem>>, vector<1x2x32xf32>
    %448 = vector.shape_cast %447 : vector<1x2x32xf32> to vector<2x32xf32>
    %449 = vector.shape_cast %441 : vector<2x32xf32> to vector<1x2x32xf32>
    tpu.vector_store %arg5[%446, %c0_143, %c32_144], %449 {strides = array<i32>} : memref<8x2x64xf32, #tpu.memory_space<vmem>>, vector<1x2x32xf32>,
    %c8_i32 = arith.constant 8 : i32
    return
  }
}

module attributes {stable_mosaic.version = 11 : i64} {
  func.func @_attn_fc_kernel(%arg0: memref<8x2x64xf32, #tpu.memory_space<vmem>>, %arg1: memref<64x32xf32, #tpu.memory_space<vmem>>, %arg2: memref<1x32xf32, #tpu.memory_space<vmem>>, %arg3: memref<1x32xf32, #tpu.memory_space<vmem>>, %arg4: memref<1x1xf32, #tpu.memory_space<vmem>>, %arg5: memref<64x32xf32, #tpu.memory_space<vmem>>, %arg6: memref<1x32xf32, #tpu.memory_space<vmem>>, %arg7: memref<32x2xf32, #tpu.memory_space<vmem>>, %arg8: memref<1x2xf32, #tpu.memory_space<vmem>>, %arg9: memref<2x2xf32, #tpu.memory_space<vmem>>) attributes {dimension_semantics = [], scalar_prefetch = 0 : i64, scratch_operands = 0 : i64, tpu.core_type = #tpu.core_type<tc>} {
    %c0 = arith.constant 0 : index
    %c0_0 = arith.constant 0 : index
    %c0_1 = arith.constant 0 : index
    %0 = vector.load %arg0[%c0, %c0_0, %c0_1] : memref<8x2x64xf32, #tpu.memory_space<vmem>>, vector<8x2x64xf32>
    %1 = vector.shape_cast %0 : vector<8x2x64xf32> to vector<16x64xf32>
    %c0_2 = arith.constant 0 : index
    %c0_3 = arith.constant 0 : index
    %2 = vector.load %arg1[%c0_2, %c0_3] : memref<64x32xf32, #tpu.memory_space<vmem>>, vector<64x32xf32>
    %cst = arith.constant dense<0.000000e+00> : vector<16x32xf32>
    %3 = tpu.matmul %1, %2, %cst {dimension_numbers = #tpu.dot_dimension_numbers<[1], [0], [0], [1], [0, 0, 1, 1], [], []>} : vector<16x64xf32>, vector<64x32xf32>, vector<16x32xf32> -> vector<16x32xf32>
    %c0_4 = arith.constant 0 : index
    %c0_5 = arith.constant 0 : index
    %4 = vector.load %arg2[%c0_4, %c0_5] : memref<1x32xf32, #tpu.memory_space<vmem>>, vector<1x32xf32>
    %5 = vector.broadcast %4 : vector<1x32xf32> to vector<16x32xf32>
    %6 = arith.addf %3, %5 : vector<16x32xf32>
    %7 = math.tanh %6 : vector<16x32xf32>
    %c0_6 = arith.constant 0 : index
    %c0_7 = arith.constant 0 : index
    %8 = vector.load %arg3[%c0_6, %c0_7] : memref<1x32xf32, #tpu.memory_space<vmem>>, vector<1x32xf32>
    %9 = vector.broadcast %8 : vector<1x32xf32> to vector<16x32xf32>
    %10 = arith.mulf %7, %9 : vector<16x32xf32>
    %cst_8 = arith.constant dense<0.000000e+00> : vector<16xf32>
    %11 = vector.multi_reduction <add>, %10, %cst_8 [1] : vector<16x32xf32> to vector<16xf32>
    %12 = vector.shape_cast %11 : vector<16xf32> to vector<16x1xf32>
    %c0_9 = arith.constant 0 : index
    %c0_10 = arith.constant 0 : index
    %13 = vector.load %arg4[%c0_9, %c0_10] : memref<1x1xf32, #tpu.memory_space<vmem>>, vector<1x1xf32>
    %14 = vector.broadcast %13 : vector<1x1xf32> to vector<16x1xf32>
    %15 = arith.addf %12, %14 : vector<16x1xf32>
    %16 = vector.shape_cast %15 : vector<16x1xf32> to vector<8x2x1xf32>
    %cst_11 = arith.constant dense<0xFF800000> : vector<2x1xf32>
    %17 = vector.multi_reduction <maximumf>, %16, %cst_11 [0] : vector<8x2x1xf32> to vector<2x1xf32>
    %18 = vector.shape_cast %17 : vector<2x1xf32> to vector<1x2x1xf32>
    %19 = vector.broadcast %18 : vector<1x2x1xf32> to vector<8x2x1xf32>
    %20 = arith.subf %16, %19 : vector<8x2x1xf32>
    %21 = math.exp %20 : vector<8x2x1xf32>
    %cst_12 = arith.constant dense<0.000000e+00> : vector<2x1xf32>
    %22 = vector.multi_reduction <add>, %21, %cst_12 [0] : vector<8x2x1xf32> to vector<2x1xf32>
    %23 = vector.shape_cast %22 : vector<2x1xf32> to vector<1x2x1xf32>
    %24 = vector.broadcast %23 : vector<1x2x1xf32> to vector<8x2x1xf32>
    %25 = arith.divf %21, %24 : vector<8x2x1xf32>
    %26 = vector.broadcast %25 : vector<8x2x1xf32> to vector<8x2x64xf32>
    %27 = arith.mulf %26, %0 : vector<8x2x64xf32>
    %cst_13 = arith.constant dense<0.000000e+00> : vector<2x64xf32>
    %28 = vector.multi_reduction <add>, %27, %cst_13 [0] : vector<8x2x64xf32> to vector<2x64xf32>
    %c0_14 = arith.constant 0 : index
    %c0_15 = arith.constant 0 : index
    %29 = vector.load %arg5[%c0_14, %c0_15] : memref<64x32xf32, #tpu.memory_space<vmem>>, vector<64x32xf32>
    %cst_16 = arith.constant dense<0.000000e+00> : vector<2x32xf32>
    %30 = tpu.matmul %28, %29, %cst_16 {dimension_numbers = #tpu.dot_dimension_numbers<[1], [0], [0], [1], [0, 0, 1, 1], [], []>} : vector<2x64xf32>, vector<64x32xf32>, vector<2x32xf32> -> vector<2x32xf32>
    %c0_17 = arith.constant 0 : index
    %c0_18 = arith.constant 0 : index
    %31 = vector.load %arg6[%c0_17, %c0_18] : memref<1x32xf32, #tpu.memory_space<vmem>>, vector<1x32xf32>
    %32 = vector.broadcast %31 : vector<1x32xf32> to vector<2x32xf32>
    %33 = arith.addf %30, %32 : vector<2x32xf32>
    %cst_19 = arith.constant 0.000000e+00 : f32
    %34 = vector.broadcast %cst_19 : f32 to vector<2x32xf32>
    %35 = arith.maximumf %33, %34 : vector<2x32xf32>
    %c0_20 = arith.constant 0 : index
    %c0_21 = arith.constant 0 : index
    %36 = vector.load %arg7[%c0_20, %c0_21] : memref<32x2xf32, #tpu.memory_space<vmem>>, vector<32x2xf32>
    %cst_22 = arith.constant dense<0.000000e+00> : vector<2x2xf32>
    %37 = tpu.matmul %35, %36, %cst_22 {dimension_numbers = #tpu.dot_dimension_numbers<[1], [0], [0], [1], [0, 0, 1, 1], [], []>} : vector<2x32xf32>, vector<32x2xf32>, vector<2x2xf32> -> vector<2x2xf32>
    %c0_23 = arith.constant 0 : index
    %c0_24 = arith.constant 0 : index
    %38 = vector.load %arg8[%c0_23, %c0_24] : memref<1x2xf32, #tpu.memory_space<vmem>>, vector<1x2xf32>
    %39 = vector.broadcast %38 : vector<1x2xf32> to vector<2x2xf32>
    %40 = arith.addf %37, %39 : vector<2x2xf32>
    %c0_25 = arith.constant 0 : index
    %c0_26 = arith.constant 0 : index
    %41 = vector.load %arg9[%c0_25, %c0_26] : memref<2x2xf32, #tpu.memory_space<vmem>>, vector<2x2xf32>
    tpu.vector_store %arg9[%c0_25, %c0_26], %40 {strides = array<i32>} : memref<2x2xf32, #tpu.memory_space<vmem>>, vector<2x2xf32>,
    return
  }
}

</mosaic_0001>

<llo_original>
// kernel: lstm_classifier_forward.5
$region0: #{lstm_classifier_forward.5}
  #allocation0 [shape = 'u32[]', space=smem, size = 0x4, offset = 0x4, fixed_abs, tag = 'smem constant byte address 0x4 - core index']
  #allocation1 [shape = 'u32[144,128]{1,0:T(1,128)}', space=vmem, size = 0x12000, scoped, tag = 'internal scratch']
  #allocation2 [shape = 'f32[1,1]{1,0:T(1,128)S(1)}', space=vmem, size = 0x200, scoped, tag = 'scoped memory for lstm_classifier_forward.5']
  %s0 = inlined_call_operand.vmem [shape: f32[8,2,64], index: 0, kind: input, shape index: {}]
  %s1 = inlined_call_operand.vmem [shape: f32[64,32], index: 1, kind: input, shape index: {}]
  %s2 = inlined_call_operand.vmem [shape: f32[1,32], index: 2, kind: input, shape index: {}]
  %s3 = inlined_call_operand.vmem [shape: f32[1,32], index: 3, kind: input, shape index: {}]
  %s4 = inlined_call_operand.<no memory space> [shape: f32[1,1], index: 4, kind: input, shape index: {}]
  %s5 = inlined_call_operand.vmem [shape: f32[64,32], index: 5, kind: input, shape index: {}]
  %s6 = inlined_call_operand.vmem [shape: f32[1,32], index: 6, kind: input, shape index: {}]
  %s7 = inlined_call_operand.vmem [shape: f32[32,2], index: 7, kind: input, shape index: {}]
  %s8 = inlined_call_operand.vmem [shape: f32[1,2], index: 8, kind: input, shape index: {}]
  %s9 = inlined_call_operand.hbm [shape: f32[2,2], index: 9, kind: output, shape index: {}]
  %s10 = sld [smem:[#allocation0]]
  $region46: #{lstm_classifier_forward.5} parent=0
    _
  %s12 = ssub.s32 1, %s10
  %s13 = scalar_select 0, %s12, %s10
  %v14 = vstv %s4
  %15 = vst [vmem:[#allocation2] sm:$0x1] %v14
  $region1: #{lstm_classifier_forward.5} parent=0
    #allocation3 [shape = 'u8[1024]{0}', space=vmem, size = 0x400, scoped, tag = 'output window, operand 0, single buffered']
    #allocation4 [shape = 's32[1]{0}', space=sflag, size = 0x4, scoped, tag = 'scoped memory for lstm_classifier_forward.5']
    %16 = vsyncpa [#allocation4], 0
    // Predicated region
    $region2: #{lstm_classifier_forward.5} parent=1 // pred_check
      _
    $region3: #{lstm_classifier_forward.5} parent=1 // pred_check_branch
      %18 = sbr.rel (0) target = $region5
    $region4: #{lstm_classifier_forward.5} parent=1 // pred_region
      _
    $region5: #{lstm_classifier_forward.5} parent=1 // pred_fallthru
      _
    // Predicated region
    $region6: #{lstm_classifier_forward.5} parent=1 // pred_check
      _
    $region7: #{lstm_classifier_forward.5} parent=1 // pred_check_branch
      %20 = sbr.rel (0) target = $region9
    $region8: #{lstm_classifier_forward.5} parent=1 // pred_region
      _
    $region9: #{lstm_classifier_forward.5} parent=1 // pred_fallthru
      _
    // Predicated region
    $region10: #{lstm_classifier_forward.5} parent=1 // pred_check
      _
    $region11: #{lstm_classifier_forward.5} parent=1 // pred_check_branch
      %22 = sbr.rel (0) target = $region13
    $region12: #{lstm_classifier_forward.5} parent=1 // pred_region
      _
    $region13: #{lstm_classifier_forward.5} parent=1 // pred_fallthru
      _
    // Predicated region
    $region14: #{lstm_classifier_forward.5} parent=1 // pred_check
      _
    $region15: #{lstm_classifier_forward.5} parent=1 // pred_check_branch
      %24 = sbr.rel (0) target = $region17
    $region16: #{lstm_classifier_forward.5} parent=1 // pred_region
      _
    $region17: #{lstm_classifier_forward.5} parent=1 // pred_fallthru
      _
    // Predicated region
    $region18: #{lstm_classifier_forward.5} parent=1 // pred_check
      _
    $region19: #{lstm_classifier_forward.5} parent=1 // pred_check_branch
      %26 = sbr.rel (0) target = $region21
    $region20: #{lstm_classifier_forward.5} parent=1 // pred_region
      _
    $region21: #{lstm_classifier_forward.5} parent=1 // pred_fallthru
      _
    // Predicated region
    $region22: #{lstm_classifier_forward.5} parent=1 // pred_check
      _
    $region23: #{lstm_classifier_forward.5} parent=1 // pred_check_branch
      %28 = sbr.rel (0) target = $region25
    $region24: #{lstm_classifier_forward.5} parent=1 // pred_region
      _
    $region25: #{lstm_classifier_forward.5} parent=1 // pred_fallthru
      _
    // Predicated region
    $region26: #{lstm_classifier_forward.5} parent=1 // pred_check
      _
    $region27: #{lstm_classifier_forward.5} parent=1 // pred_check_branch
      %30 = sbr.rel (0) target = $region29
    $region28: #{lstm_classifier_forward.5} parent=1 // pred_region
      _
    $region29: #{lstm_classifier_forward.5} parent=1 // pred_fallthru
      _
    // Predicated region
    $region30: #{lstm_classifier_forward.5} parent=1 // pred_check
      _
    $region31: #{lstm_classifier_forward.5} parent=1 // pred_check_branch
      %32 = sbr.rel (0) target = $region33
    $region32: #{lstm_classifier_forward.5} parent=1 // pred_region
      _
    $region33: #{lstm_classifier_forward.5} parent=1 // pred_fallthru
      _
    // Predicated region
    $region34: #{lstm_classifier_forward.5} parent=1 // pred_check
      _
    $region35: #{lstm_classifier_forward.5} parent=1 // pred_check_branch
      %34 = sbr.rel (0) target = $region37
    $region36: #{lstm_classifier_forward.5} parent=1 // pred_region
      _
    $region37: #{lstm_classifier_forward.5} parent=1 // pred_fallthru
      _
    %v35 = vld [vmem:[%s0] sm:$0x3]
    %v36 = vld [vmem:[%s0 + $0x2] sm:$0x3]
    %v37 = vld [vmem:[%s0 + $0x4] sm:$0x3]
    %v38 = vld [vmem:[%s0 + $0x6] sm:$0x3]
    %v39 = vld [vmem:[%s0 + $0x8] sm:$0x3]
    %v40 = vld [vmem:[%s0 + $0xa] sm:$0x3]
    %v41 = vld [vmem:[%s0 + $0xc] sm:$0x3]
    %v42 = vld [vmem:[%s0 + $0xe] sm:$0x3]
    %v43 = vld [vmem:[%s1] sm:$0xff]
    %v44 = vld [vmem:[%s1 + $0x8] sm:$0xff]
    %v45 = vld [vmem:[%s1 + $0x10] sm:$0xff]
    %v46 = vld [vmem:[%s1 + $0x18] sm:$0xff]
    %v47 = vld [vmem:[%s1 + $0x20] sm:$0xff]
    %v48 = vld [vmem:[%s1 + $0x28] sm:$0xff]
    %v49 = vld [vmem:[%s1 + $0x30] sm:$0xff]
    %v50 = vld [vmem:[%s1 + $0x38] sm:$0xff]
    %v51 = vld [vmem:[%s2] sm:$0x1]
    %v53 = vlaneseq
    %v54 = vshrl.u32 %v53, 7
    %v55 = vsub.s32 0, %v54
    %v56 = vrot.slane %v51, %v55
    %v66 = vcombine.low %v35, %v36
    %v67 = vcombine.low %v37, %v38
    %v69 = vunpack.c.l.s4 1983009808
    %v70 = vunpack.c.0.s8 %v69
    %v71 = vlaneseq
    %v72 = vshrl.u32 %v71, 7
    %v73 = vsub.s32 %v70, %v72
    %v74 = vrot.slane %v66, %v73
    %v76 = vunpack.c.l.s4 1983009808
    %v77 = vunpack.c.0.s8 %v76
    %v78 = vlaneseq
    %v79 = vshrl.u32 %v78, 7
    %v80 = vsub.s32 %v77, %v79
    %v81 = vrot.slane %v67, %v80
    %v82 = vcombine.low %v74, %v81
    %v83 = vcombine.low %v39, %v40
    %v84 = vcombine.low %v41, %v42
    %v86 = vunpack.c.l.s4 1983009808
    %v87 = vunpack.c.0.s8 %v86
    %v88 = vlaneseq
    %v89 = vshrl.u32 %v88, 7
    %v90 = vsub.s32 %v87, %v89
    %v91 = vrot.slane %v83, %v90
    %v93 = vunpack.c.l.s4 1983009808
    %v94 = vunpack.c.0.s8 %v93
    %v95 = vlaneseq
    %v96 = vshrl.u32 %v95, 7
    %v97 = vsub.s32 %v94, %v96
    %v98 = vrot.slane %v84, %v97
    %v99 = vcombine.low %v91, %v98
    %vm100 = vcmask 523264
    %v101 = vsel %vm100, %v82, 0
    %v103 = vsel %vm100, %v99, 0
    %105 = vmatprep.subr.mxu0 0.0
    %106 = vmatpush1.msra.mxu0 %v43
    %107 = vmatprep.subr.mxu0 0.0
    %108 = vmatpush1.msra.mxu0 %v44
    %109 = vmatprep.subr.mxu0 0.0
    %110 = vmatpush1.msra.mxu0 %v45
    %111 = vmatprep.subr.mxu0 0.0
    %112 = vmatpush1.msra.mxu0 %v46
    %113 = vmatprep.subr.mxu0 0.0
    %114 = vmatpush1.msra.mxu0 %v47
    %115 = vmatprep.subr.mxu0 0.0
    %116 = vmatpush1.msra.mxu0 %v48
    %117 = vmatprep.subr.mxu0 0.0
    %118 = vmatpush1.msra.mxu0 %v49
    %119 = vmatprep.subr.mxu0 0.0
    %120 = vmatpush1.msra.mxu0 %v50
    %121 = vmatprep.subr.mxu0 0.0
    %122 = vmatpush1.msra.mxu0 0.0
    %123 = vmatprep.subr.mxu0 0.0
    %124 = vmatpush1.msra.mxu0 0.0
    %125 = vmatprep.subr.mxu0 0.0
    %126 = vmatpush1.msra.mxu0 0.0
    %127 = vmatprep.subr.mxu0 0.0
    %128 = vmatpush1.msra.mxu0 0.0
    %129 = vmatprep.subr.mxu0 0.0
    %130 = vmatpush1.msra.mxu0 0.0
    %131 = vmatprep.subr.mxu0 0.0
    %132 = vmatpush1.msra.mxu0 0.0
    %133 = vmatprep.subr.mxu0 0.0
    %134 = vmatpush1.msra.mxu0 0.0
    %135 = vmatprep.subr.mxu0 0.0
    %136 = vmatpush1.msra.mxu0 0.0
    %137 = vmatprep.subr.mxu0 0.0
    %138 = vmatpush1.msra.mxu0 0.0
    %139 = vmatprep.subr.mxu0 0.0
    %140 = vmatpush1.msra.mxu0 0.0
    %141 = vmatprep.subr.mxu0 0.0
    %142 = vmatpush1.msra.mxu0 0.0
    %143 = vmatprep.subr.mxu0 0.0
    %144 = vmatpush1.msra.mxu0 0.0
    %145 = vmatprep.subr.mxu0 0.0
    %146 = vmatpush1.msra.mxu0 0.0
    %147 = vmatprep.subr.mxu0 0.0
    %148 = vmatpush1.msra.mxu0 0.0
    %149 = vmatprep.subr.mxu0 0.0
    %150 = vmatpush1.msra.mxu0 0.0
    %151 = vmatprep.subr.mxu0 0.0
    %152 = vmatpush1.msra.mxu0 0.0
    %153 = vmatprep.subr.mxu0 0.0
    %154 = vmatpush1.msra.mxu0 0.0
    %155 = vmatprep.subr.mxu0 0.0
    %156 = vmatpush1.msra.mxu0 0.0
    %157 = vmatprep.subr.mxu0 0.0
    %158 = vmatpush1.msra.mxu0 0.0
    %159 = vmatprep.subr.mxu0 0.0
    %160 = vmatpush1.msra.mxu0 0.0
    %161 = vmatprep.subr.mxu0 0.0
    %162 = vmatpush1.msra.mxu0 0.0
    %163 = vmatprep.subr.mxu0 0.0
    %164 = vmatpush1.msra.mxu0 0.0
    %165 = vmatprep.subr.mxu0 0.0
    %166 = vmatpush1.msra.mxu0 0.0
    %167 = vmatprep.subr.mxu0 0.0
    %168 = vmatpush1.msra.mxu0 0.0
    %169 = vmatprep.mubr.f32.mxu0 0.0
    %170 = vmatmul.mubr.f32.gmra.mrb[0].mxu0 %v101
    %v171 = vpop.f32.mrb[0].mxu0
    %v172 = vadd.f32 %v56, %v171
    %v173 = vpop.f32.mrb[0].mxu0
    %174 = vmatprep.mubr.f32.mxu0 0.0
    %175 = vmatmul.mubr.f32.gmra.mrb[0].mxu0 %v103
    %v176 = vpop.f32.mrb[0].mxu0
    %v177 = vadd.f32 %v56, %v176
    %v178 = vpop.f32.mrb[0].mxu0
    %179 = vdwg.mxu0
    %v180 = vtanh.pop %v172
    %v181 = vtanh.pop %v177
    %v182 = vld [vmem:[%s3] sm:$0x1]
    %v184 = vlaneseq
    %v185 = vshrl.u32 %v184, 7
    %v186 = vsub.s32 0, %v185
    %v187 = vrot.slane %v182, %v186
    %v189 = vmul.f32 %v180, %v187
    %v190 = vmul.f32 %v181, %v187
    %vm191 = vcmask 261120
    %v192 = vsel %vm191, %v189, 0.0
    %193 = vadd.xlane.f32.xlu0 %v192
    %v194 = vpop.xlane.xlu0 %193
    %v195 = vsel %vm191, %v190, 0.0
    %196 = vadd.xlane.f32.xlu0 %v195
    %v197 = vpop.xlane.xlu0 %196
    %v198 = vld [vmem:[#allocation2] sm:$0x1]
    %v200 = vlaneseq
    %v201 = vshrl.u32 %v200, 7
    %v202 = vsub.s32 0, %v201
    %v203 = vrot.slane %v198, %v202
    %v205 = vadd.f32 %v194, %v203
    %v206 = vadd.f32 %v197, %v203
    %v209 = vcombine.high %v205, %v205
    %v211 = vunpack.c.l.s4 1983009808
    %v212 = vunpack.c.0.s8 %v211
    %v213 = vlaneseq
    %v214 = vshrl.u32 %v213, 7
    %v215 = vsub.s32 %v212, %v214
    %v216 = vrot.slane %v205, %v215
    %v218 = vunpack.c.l.s4 1983009808
    %v219 = vunpack.c.0.s8 %v218
    %v220 = vlaneseq
    %v221 = vshrl.u32 %v220, 7
    %v222 = vsub.s32 %v219, %v221
    %v223 = vrot.slane %v209, %v222
    %v224 = vcombine.high %v216, %v216
    %v225 = vcombine.high %v223, %v223
    %v226 = vcombine.high %v206, %v206
    %v228 = vunpack.c.l.s4 1983009808
    %v229 = vunpack.c.0.s8 %v228
    %v230 = vlaneseq
    %v231 = vshrl.u32 %v230, 7
    %v232 = vsub.s32 %v229, %v231
    %v233 = vrot.slane %v206, %v232
    %v235 = vunpack.c.l.s4 1983009808
    %v236 = vunpack.c.0.s8 %v235
    %v237 = vlaneseq
    %v238 = vshrl.u32 %v237, 7
    %v239 = vsub.s32 %v236, %v238
    %v240 = vrot.slane %v226, %v239
    %v241 = vcombine.high %v233, %v233
    %v242 = vcombine.high %v240, %v240
    %vm251 = vcmask 1024
    %v252 = vsel %vm251, %v216, -inf
    %v253 = vsel %vm251, %v224, -inf
    %v254 = vsel %vm251, %v223, -inf
    %v255 = vsel %vm251, %v225, -inf
    %v256 = vsel %vm251, %v233, -inf
    %v257 = vmax.f32 %v252, %v256
    %v258 = vsel %vm251, %v241, -inf
    %v259 = vmax.f32 %v253, %v258
    %v260 = vsel %vm251, %v240, -inf
    %v261 = vmax.f32 %v254, %v260
    %v262 = vsel %vm251, %v242, -inf
    %v263 = vmax.f32 %v255, %v262
    %v264 = vmax.f32 %v257, %v259
    %v265 = vmax.f32 %v261, %v263
    %v266 = vmax.f32 %v264, %v265
    %v267 = vsub.f32 %v216, %v266
    %v268 = vsub.f32 %v224, %v266
    %v269 = vsub.f32 %v223, %v266
    %v270 = vsub.f32 %v225, %v266
    %v271 = vsub.f32 %v233, %v266
    %v272 = vsub.f32 %v241, %v266
    %v273 = vsub.f32 %v240, %v266
    %v274 = vsub.f32 %v242, %v266
    %v275 = vmul.f32 %v267, 1.442695
    %v276 = vpow.pop %v275
    %v277 = vmul.f32 %v268, 1.442695
    %v278 = vpow.pop %v277
    %v279 = vmul.f32 %v269, 1.442695
    %v280 = vpow.pop %v279
    %v281 = vmul.f32 %v270, 1.442695
    %v282 = vpow.pop %v281
    %v283 = vmul.f32 %v271, 1.442695
    %v284 = vpow.pop %v283
    %v285 = vmul.f32 %v272, 1.442695
    %v286 = vpow.pop %v285
    %v287 = vmul.f32 %v273, 1.442695
    %v288 = vpow.pop %v287
    %v289 = vmul.f32 %v274, 1.442695
    %v290 = vpow.pop %v289
    %v291 = vsel %vm251, %v276, 0.0
    %v292 = vsel %vm251, %v278, 0.0
    %v293 = vadd.f32 %v291, %v292
    %v294 = vsel %vm251, %v280, 0.0
    %v295 = vadd.f32 %v293, %v294
    %v296 = vsel %vm251, %v282, 0.0
    %v297 = vadd.f32 %v295, %v296
    %v298 = vsel %vm251, %v284, 0.0
    %v299 = vadd.f32 %v297, %v298
    %v300 = vsel %vm251, %v286, 0.0
    %v301 = vadd.f32 %v299, %v300
    %v302 = vsel %vm251, %v288, 0.0
    %v303 = vadd.f32 %v301, %v302
    %v304 = vsel %vm251, %v290, 0.0
    %v305 = vadd.f32 %v303, %v304
    %v306 = vrcp.pop %v305
    %v307 = vmul.f32 %v276, %v306
    %v308 = vmul.f32 %v278, %v306
    %v309 = vmul.f32 %v280, %v306
    %v310 = vmul.f32 %v282, %v306
    %v311 = vmul.f32 %v284, %v306
    %v312 = vmul.f32 %v286, %v306
    %v313 = vmul.f32 %v288, %v306
    %v314 = vmul.f32 %v290, %v306
    %316 = vset.pattern.permute.xlu0 0
    %317 = vperm.xlu0 %316, %v307
    %v318 = vpop.permute.xlu0 %317
    %v321 = vunpack.c.l.s4 269488144
    %v322 = vunpack.c.0.s8 %v321
    %v323 = vlaneseq
    %v324 = vshrl.u32 %v323, 7
    %v325 = vsub.s32 %v322, %v324
    %v326 = vrot.slane %v318, %v325
    %328 = vset.pattern.permute.xlu0 0
    %329 = vperm.xlu0 %328, %v308
    %v330 = vpop.permute.xlu0 %329
    %v333 = vunpack.c.l.s4 269488144
    %v334 = vunpack.c.0.s8 %v333
    %v335 = vlaneseq
    %v336 = vshrl.u32 %v335, 7
    %v337 = vsub.s32 %v334, %v336
    %v338 = vrot.slane %v330, %v337
    %340 = vset.pattern.permute.xlu0 0
    %341 = vperm.xlu0 %340, %v309
    %v342 = vpop.permute.xlu0 %341
    %v345 = vunpack.c.l.s4 269488144
    %v346 = vunpack.c.0.s8 %v345
    %v347 = vlaneseq
    %v348 = vshrl.u32 %v347, 7
    %v349 = vsub.s32 %v346, %v348
    %v350 = vrot.slane %v342, %v349
    %352 = vset.pattern.permute.xlu0 0
    %353 = vperm.xlu0 %352, %v310
    %v354 = vpop.permute.xlu0 %353
    %v357 = vunpack.c.l.s4 269488144
    %v358 = vunpack.c.0.s8 %v357
    %v359 = vlaneseq
    %v360 = vshrl.u32 %v359, 7
    %v361 = vsub.s32 %v358, %v360
    %v362 = vrot.slane %v354, %v361
    %364 = vset.pattern.permute.xlu0 0
    %365 = vperm.xlu0 %364, %v311
    %v366 = vpop.permute.xlu0 %365
    %v369 = vunpack.c.l.s4 269488144
    %v370 = vunpack.c.0.s8 %v369
    %v371 = vlaneseq
    %v372 = vshrl.u32 %v371, 7
    %v373 = vsub.s32 %v370, %v372
    %v374 = vrot.slane %v366, %v373
    %376 = vset.pattern.permute.xlu0 0
    %377 = vperm.xlu0 %376, %v312
    %v378 = vpop.permute.xlu0 %377
    %v381 = vunpack.c.l.s4 269488144
    %v382 = vunpack.c.0.s8 %v381
    %v383 = vlaneseq
    %v384 = vshrl.u32 %v383, 7
    %v385 = vsub.s32 %v382, %v384
    %v386 = vrot.slane %v378, %v385
    %388 = vset.pattern.permute.xlu0 0
    %389 = vperm.xlu0 %388, %v313
    %v390 = vpop.permute.xlu0 %389
    %v393 = vunpack.c.l.s4 269488144
    %v394 = vunpack.c.0.s8 %v393
    %v395 = vlaneseq
    %v396 = vshrl.u32 %v395, 7
    %v397 = vsub.s32 %v394, %v396
    %v398 = vrot.slane %v390, %v397
    %400 = vset.pattern.permute.xlu0 0
    %401 = vperm.xlu0 %400, %v314
    %v402 = vpop.permute.xlu0 %401
    %v405 = vunpack.c.l.s4 269488144
    %v406 = vunpack.c.0.s8 %v405
    %v407 = vlaneseq
    %v408 = vshrl.u32 %v407, 7
    %v409 = vsub.s32 %v406, %v408
    %v410 = vrot.slane %v402, %v409
    %v411 = vmul.f32 %v326, %v35
    %v412 = vmul.f32 %v338, %v36
    %v413 = vmul.f32 %v350, %v37
    %v414 = vmul.f32 %v362, %v38
    %v415 = vmul.f32 %v374, %v39
    %v416 = vmul.f32 %v386, %v40
    %v417 = vmul.f32 %v398, %v41
    %v418 = vmul.f32 %v410, %v42
    %vm419 = vcmask 517120
    %v420 = vsel %vm419, %v411, 0.0
    %v421 = vsel %vm419, %v412, 0.0
    %v422 = vadd.f32 %v420, %v421
    %v423 = vsel %vm419, %v413, 0.0
    %v424 = vadd.f32 %v422, %v423
    %v425 = vsel %vm419, %v414, 0.0
    %v426 = vadd.f32 %v424, %v425
    %v427 = vsel %vm419, %v415, 0.0
    %v428 = vadd.f32 %v426, %v427
    %v429 = vsel %vm419, %v416, 0.0
    %v430 = vadd.f32 %v428, %v429
    %v431 = vsel %vm419, %v417, 0.0
    %v432 = vadd.f32 %v430, %v431
    %v433 = vsel %vm419, %v418, 0.0
    %v434 = vadd.f32 %v432, %v433
    %v435 = vld [vmem:[%s5] sm:$0xff]
    %v436 = vld [vmem:[%s5 + $0x8] sm:$0xff]
    %v437 = vld [vmem:[%s5 + $0x10] sm:$0xff]
    %v438 = vld [vmem:[%s5 + $0x18] sm:$0xff]
    %v439 = vld [vmem:[%s5 + $0x20] sm:$0xff]
    %v440 = vld [vmem:[%s5 + $0x28] sm:$0xff]
    %v441 = vld [vmem:[%s5 + $0x30] sm:$0xff]
    %v442 = vld [vmem:[%s5 + $0x38] sm:$0xff]
    %v443 = vld [vmem:[%s6] sm:$0x1]
    %v445 = vlaneseq
    %v446 = vshrl.u32 %v445, 7
    %v447 = vsub.s32 0, %v446
    %v448 = vrot.slane %v443, %v447
    %v451 = vsel %vm100, %v434, 0
    %453 = vmatprep.subr.mxu0 0.0
    %454 = vmatpush1.msra.mxu0 %v435
    %455 = vmatprep.subr.mxu0 0.0
    %456 = vmatpush1.msra.mxu0 %v436
    %457 = vmatprep.subr.mxu0 0.0
    %458 = vmatpush1.msra.mxu0 %v437
    %459 = vmatprep.subr.mxu0 0.0
    %460 = vmatpush1.msra.mxu0 %v438
    %461 = vmatprep.subr.mxu0 0.0
    %462 = vmatpush1.msra.mxu0 %v439
    %463 = vmatprep.subr.mxu0 0.0
    %464 = vmatpush1.msra.mxu0 %v440
    %465 = vmatprep.subr.mxu0 0.0
    %466 = vmatpush1.msra.mxu0 %v441
    %467 = vmatprep.subr.mxu0 0.0
    %468 = vmatpush1.msra.mxu0 %v442
    %469 = vmatprep.subr.mxu0 0.0
    %470 = vmatpush1.msra.mxu0 0.0
    %471 = vmatprep.subr.mxu0 0.0
    %472 = vmatpush1.msra.mxu0 0.0
    %473 = vmatprep.subr.mxu0 0.0
    %474 = vmatpush1.msra.mxu0 0.0
    %475 = vmatprep.subr.mxu0 0.0
    %476 = vmatpush1.msra.mxu0 0.0
    %477 = vmatprep.subr.mxu0 0.0
    %478 = vmatpush1.msra.mxu0 0.0
    %479 = vmatprep.subr.mxu0 0.0
    %480 = vmatpush1.msra.mxu0 0.0
    %481 = vmatprep.subr.mxu0 0.0
    %482 = vmatpush1.msra.mxu0 0.0
    %483 = vmatprep.subr.mxu0 0.0
    %484 = vmatpush1.msra.mxu0 0.0
    %485 = vmatprep.subr.mxu0 0.0
    %486 = vmatpush1.msra.mxu0 0.0
    %487 = vmatprep.subr.mxu0 0.0
    %488 = vmatpush1.msra.mxu0 0.0
    %489 = vmatprep.subr.mxu0 0.0
    %490 = vmatpush1.msra.mxu0 0.0
    %491 = vmatprep.subr.mxu0 0.0
    %492 = vmatpush1.msra.mxu0 0.0
    %493 = vmatprep.subr.mxu0 0.0
    %494 = vmatpush1.msra.mxu0 0.0
    %495 = vmatprep.subr.mxu0 0.0
    %496 = vmatpush1.msra.mxu0 0.0
    %497 = vmatprep.subr.mxu0 0.0
    %498 = vmatpush1.msra.mxu0 0.0
    %499 = vmatprep.subr.mxu0 0.0
    %500 = vmatpush1.msra.mxu0 0.0
    %501 = vmatprep.subr.mxu0 0.0
    %502 = vmatpush1.msra.mxu0 0.0
    %503 = vmatprep.subr.mxu0 0.0
    %504 = vmatpush1.msra.mxu0 0.0
    %505 = vmatprep.subr.mxu0 0.0
    %506 = vmatpush1.msra.mxu0 0.0
    %507 = vmatprep.subr.mxu0 0.0
    %508 = vmatpush1.msra.mxu0 0.0
    %509 = vmatprep.subr.mxu0 0.0
    %510 = vmatpush1.msra.mxu0 0.0
    %511 = vmatprep.subr.mxu0 0.0
    %512 = vmatpush1.msra.mxu0 0.0
    %513 = vmatprep.subr.mxu0 0.0
    %514 = vmatpush1.msra.mxu0 0.0
    %515 = vmatprep.subr.mxu0 0.0
    %516 = vmatpush1.msra.mxu0 0.0
    %517 = vmatprep.mubr.f32.mxu0 0.0
    %518 = vmatmul.mubr.f32.gmra.mrb[0].mxu0 %v451
    %v519 = vpop.f32.mrb[0].mxu0
    %v520 = vadd.f32 %v448, %v519
    %v521 = vpop.f32.mrb[0].mxu0
    %522 = vdwg.mxu0
    %v523 = vmax.f32 %v520, 0.0
    %v524 = vld [vmem:[%s7] sm:$0xff]
    %v525 = vld [vmem:[%s7 + $0x8] sm:$0xff]
    %v526 = vld [vmem:[%s7 + $0x10] sm:$0xff]
    %v527 = vld [vmem:[%s7 + $0x18] sm:$0xff]
    %v528 = vld [vmem:[%s8] sm:$0x1]
    %v530 = vlaneseq
    %v531 = vshrl.u32 %v530, 7
    %v532 = vsub.s32 0, %v531
    %v533 = vrot.slane %v528, %v532
    %v536 = vsel %vm191, %v523, 0
    %538 = vmatprep.subr.mxu0 0.0
    %539 = vmatpush1.msra.mxu0 %v524
    %540 = vmatprep.subr.mxu0 0.0
    %541 = vmatpush1.msra.mxu0 %v525
    %542 = vmatprep.subr.mxu0 0.0
    %543 = vmatpush1.msra.mxu0 %v526
    %544 = vmatprep.subr.mxu0 0.0
    %545 = vmatpush1.msra.mxu0 %v527
    %546 = vmatprep.subr.mxu0 0.0
    %547 = vmatpush1.msra.mxu0 0.0
    %548 = vmatprep.subr.mxu0 0.0
    %549 = vmatpush1.msra.mxu0 0.0
    %550 = vmatprep.subr.mxu0 0.0
    %551 = vmatpush1.msra.mxu0 0.0
    %552 = vmatprep.subr.mxu0 0.0
    %553 = vmatpush1.msra.mxu0 0.0
    %554 = vmatprep.subr.mxu0 0.0
    %555 = vmatpush1.msra.mxu0 0.0
    %556 = vmatprep.subr.mxu0 0.0
    %557 = vmatpush1.msra.mxu0 0.0
    %558 = vmatprep.subr.mxu0 0.0
    %559 = vmatpush1.msra.mxu0 0.0
    %560 = vmatprep.subr.mxu0 0.0
    %561 = vmatpush1.msra.mxu0 0.0
    %562 = vmatprep.subr.mxu0 0.0
    %563 = vmatpush1.msra.mxu0 0.0
    %564 = vmatprep.subr.mxu0 0.0
    %565 = vmatpush1.msra.mxu0 0.0
    %566 = vmatprep.subr.mxu0 0.0
    %567 = vmatpush1.msra.mxu0 0.0
    %568 = vmatprep.subr.mxu0 0.0
    %569 = vmatpush1.msra.mxu0 0.0
    %570 = vmatprep.subr.mxu0 0.0
    %571 = vmatpush1.msra.mxu0 0.0
    %572 = vmatprep.subr.mxu0 0.0
    %573 = vmatpush1.msra.mxu0 0.0
    %574 = vmatprep.subr.mxu0 0.0
    %575 = vmatpush1.msra.mxu0 0.0
    %576 = vmatprep.subr.mxu0 0.0
    %577 = vmatpush1.msra.mxu0 0.0
    %578 = vmatprep.subr.mxu0 0.0
    %579 = vmatpush1.msra.mxu0 0.0
    %580 = vmatprep.subr.mxu0 0.0
    %581 = vmatpush1.msra.mxu0 0.0
    %582 = vmatprep.subr.mxu0 0.0
    %583 = vmatpush1.msra.mxu0 0.0
    %584 = vmatprep.subr.mxu0 0.0
    %585 = vmatpush1.msra.mxu0 0.0
    %586 = vmatprep.subr.mxu0 0.0
    %587 = vmatpush1.msra.mxu0 0.0
    %588 = vmatprep.subr.mxu0 0.0
    %589 = vmatpush1.msra.mxu0 0.0
    %590 = vmatprep.subr.mxu0 0.0
    %591 = vmatpush1.msra.mxu0 0.0
    %592 = vmatprep.subr.mxu0 0.0
    %593 = vmatpush1.msra.mxu0 0.0
    %594 = vmatprep.subr.mxu0 0.0
    %595 = vmatpush1.msra.mxu0 0.0
    %596 = vmatprep.subr.mxu0 0.0
    %597 = vmatpush1.msra.mxu0 0.0
    %598 = vmatprep.subr.mxu0 0.0
    %599 = vmatpush1.msra.mxu0 0.0
    %600 = vmatprep.subr.mxu0 0.0
    %601 = vmatpush1.msra.mxu0 0.0
    %602 = vmatprep.mubr.f32.mxu0 0.0
    %603 = vmatmul.mubr.f32.gmra.mrb[0].mxu0 %v536
    %v604 = vpop.f32.mrb[0].mxu0
    %v605 = vadd.f32 %v533, %v604
    %v606 = vpop.f32.mrb[0].mxu0
    %607 = vdwg.mxu0
    %vm608 = vcmask 9216
    %609 = vst.msk [vmem:[#allocation3] sm:$0x3] %vm608, %v605
    // Predicated region
    $region38: #{lstm_classifier_forward.5} parent=1 // pred_check
      _
    $region39: #{lstm_classifier_forward.5} parent=1 // pred_check_branch
      %611 = sbr.rel (0) target = $region41
    $region40: #{lstm_classifier_forward.5} parent=1 // pred_region
      %s613 = ssub.s32 32, 32
      %614 = vsyncadd [#allocation4], %s613
      %s616 = sshll.u32 [#allocation3], 4
      %s617 = int_to_ptr.vmem [resolvable:$true] %s616
      %619 = dma.vmem_to_hbm [thread:$0]  %s617, 32, %s9, [#allocation4]
    $region41: #{lstm_classifier_forward.5} parent=1 // pred_fallthru
      _
    // Predicated region
    $region42: #{lstm_classifier_forward.5} parent=1 // pred_check
      _
    $region43: #{lstm_classifier_forward.5} parent=1 // pred_check_branch
      %621 = sbr.rel (0) target = $region45
    $region44: #{lstm_classifier_forward.5} parent=1 // pred_region
      %622 = dma.done [#allocation4], 32
    $region45: #{lstm_classifier_forward.5} parent=1 // pred_fallthru
      _
    %623 = vsyncpa [#allocation4], 1

// kernel: lstm_classifier_forward.3
$region0: #{lstm_classifier_forward.3}
  #allocation0 [shape = 'u32[]', space=smem, size = 0x4, offset = 0x4, fixed_abs, tag = 'smem constant byte address 0x4 - core index']
  #allocation1 [shape = 'u32[144,128]{1,0:T(1,128)}', space=vmem, size = 0x12000, scoped, tag = 'internal scratch']
  #allocation2 [shape = 'f32[8,2,256]{2,1,0:T(2,128)}', space=vmem, size = 0x4000, scoped, tag = 'scratch operand']
  %s0 = inlined_call_operand.vmem [shape: f32[8,2,4], index: 0, kind: input, shape index: {}]
  %s1 = inlined_call_operand.vmem [shape: f32[4,256], index: 1, kind: input, shape index: {}]
  %s2 = inlined_call_operand.vmem [shape: f32[32,128], index: 2, kind: input, shape index: {}]
  %s3 = inlined_call_operand.vmem [shape: f32[32,128], index: 3, kind: input, shape index: {}]
  %s4 = inlined_call_operand.vmem [shape: f32[1,256], index: 4, kind: input, shape index: {}]
  %s5 = inlined_call_operand.vmem [shape: f32[8,2,64], index: 5, kind: output, shape index: {}]
  %s6 = sld [smem:[#allocation0]]
  $region30: #{lstm_classifier_forward.3} parent=0
    _
  %s8 = ssub.s32 1, %s6
  %s9 = scalar_select 0, %s8, %s6
  // Predicated region
  $region2: #{lstm_classifier_forward.3} parent=0 // pred_check
    _
  $region3: #{lstm_classifier_forward.3} parent=0 // pred_check_branch
    %11 = sbr.rel (0) target = $region5
  $region4: #{lstm_classifier_forward.3} parent=0 // pred_region
    _
  $region5: #{lstm_classifier_forward.3} parent=0 // pred_fallthru
    _
  // Predicated region
  $region6: #{lstm_classifier_forward.3} parent=0 // pred_check
    _
  $region7: #{lstm_classifier_forward.3} parent=0 // pred_check_branch
    %13 = sbr.rel (0) target = $region9
  $region8: #{lstm_classifier_forward.3} parent=0 // pred_region
    _
  $region9: #{lstm_classifier_forward.3} parent=0 // pred_fallthru
    _
  // Predicated region
  $region10: #{lstm_classifier_forward.3} parent=0 // pred_check
    _
  $region11: #{lstm_classifier_forward.3} parent=0 // pred_check_branch
    %15 = sbr.rel (0) target = $region13
  $region12: #{lstm_classifier_forward.3} parent=0 // pred_region
    _
  $region13: #{lstm_classifier_forward.3} parent=0 // pred_fallthru
    _
  // Predicated region
  $region14: #{lstm_classifier_forward.3} parent=0 // pred_check
    _
  $region15: #{lstm_classifier_forward.3} parent=0 // pred_check_branch
    %17 = sbr.rel (0) target = $region17
  $region16: #{lstm_classifier_forward.3} parent=0 // pred_region
    _
  $region17: #{lstm_classifier_forward.3} parent=0 // pred_fallthru
    _
  // Predicated region
  $region18: #{lstm_classifier_forward.3} parent=0 // pred_check
    _
  $region19: #{lstm_classifier_forward.3} parent=0 // pred_check_branch
    %19 = sbr.rel (0) target = $region21
  $region20: #{lstm_classifier_forward.3} parent=0 // pred_region
    _
  $region21: #{lstm_classifier_forward.3} parent=0 // pred_fallthru
    _
  %v20 = vld [vmem:[%s0] sm:$0x3]
  %v21 = vld [vmem:[%s0 + $0x2] sm:$0x3]
  %v22 = vld [vmem:[%s0 + $0x4] sm:$0x3]
  %v23 = vld [vmem:[%s0 + $0x6] sm:$0x3]
  %v24 = vld [vmem:[%s0 + $0x8] sm:$0x3]
  %v25 = vld [vmem:[%s0 + $0xa] sm:$0x3]
  %v26 = vld [vmem:[%s0 + $0xc] sm:$0x3]
  %v27 = vld [vmem:[%s0 + $0xe] sm:$0x3]
  %v28 = vld [vmem:[%s1] sm:$0xff]
  %v29 = vld [vmem:[%s4] sm:$0x3]
  %v31 = vlaneseq
  %v32 = vshrl.u32 %v31, 7
  %v33 = vsub.s32 0, %v32
  %v34 = vrot.slane %v29, %v33
  %v35 = vlaneseq
  %v36 = vshrl.u32 %v35, 7
  %v37 = vsub.s32 1, %v36
  %v38 = vrot.slane %v29, %v37
  %v49 = vcombine.low %v20, %v21
  %v50 = vcombine.low %v22, %v23
  %v52 = vunpack.c.l.s4 1983009808
  %v53 = vunpack.c.0.s8 %v52
  %v54 = vlaneseq
  %v55 = vshrl.u32 %v54, 7
  %v56 = vsub.s32 %v53, %v55
  %v57 = vrot.slane %v49, %v56
  %v59 = vunpack.c.l.s4 1983009808
  %v60 = vunpack.c.0.s8 %v59
  %v61 = vlaneseq
  %v62 = vshrl.u32 %v61, 7
  %v63 = vsub.s32 %v60, %v62
  %v64 = vrot.slane %v50, %v63
  %v65 = vcombine.low %v57, %v64
  %v66 = vcombine.low %v24, %v25
  %v67 = vcombine.low %v26, %v27
  %v69 = vunpack.c.l.s4 1983009808
  %v70 = vunpack.c.0.s8 %v69
  %v71 = vlaneseq
  %v72 = vshrl.u32 %v71, 7
  %v73 = vsub.s32 %v70, %v72
  %v74 = vrot.slane %v66, %v73
  %v76 = vunpack.c.l.s4 1983009808
  %v77 = vunpack.c.0.s8 %v76
  %v78 = vlaneseq
  %v79 = vshrl.u32 %v78, 7
  %v80 = vsub.s32 %v77, %v79
  %v81 = vrot.slane %v67, %v80
  %v82 = vcombine.low %v74, %v81
  %v84 = vcombine.high %v28, %v28
  %vm85 = vcmask 31744
  %v86 = vsel %vm85, %v65, 0
  %v88 = vsel %vm85, %v82, 0
  %vm90 = vcmask 1043456
  %v91 = vsel %vm90, %v28, 0
  %v93 = vsel %vm90, %v84, 0
  %95 = vmatprep.subr.mxu0 %v93
  %96 = vmatpush1.msra.mxu0 %v91
  %97 = vmatprep.subr.mxu0 0.0
  %98 = vmatpush1.msra.mxu0 0.0
  %99 = vmatprep.subr.mxu0 0.0
  %100 = vmatpush1.msra.mxu0 0.0
  %101 = vmatprep.subr.mxu0 0.0
  %102 = vmatpush1.msra.mxu0 0.0
  %103 = vmatprep.subr.mxu0 0.0
  %104 = vmatpush1.msra.mxu0 0.0
  %105 = vmatprep.subr.mxu0 0.0
  %106 = vmatpush1.msra.mxu0 0.0
  %107 = vmatprep.subr.mxu0 0.0
  %108 = vmatpush1.msra.mxu0 0.0
  %109 = vmatprep.subr.mxu0 0.0
  %110 = vmatpush1.msra.mxu0 0.0
  %111 = vmatprep.subr.mxu0 0.0
  %112 = vmatpush1.msra.mxu0 0.0
  %113 = vmatprep.subr.mxu0 0.0
  %114 = vmatpush1.msra.mxu0 0.0
  %115 = vmatprep.subr.mxu0 0.0
  %116 = vmatpush1.msra.mxu0 0.0
  %117 = vmatprep.subr.mxu0 0.0
  %118 = vmatpush1.msra.mxu0 0.0
  %119 = vmatprep.subr.mxu0 0.0
  %120 = vmatpush1.msra.mxu0 0.0
  %121 = vmatprep.subr.mxu0 0.0
  %122 = vmatpush1.msra.mxu0 0.0
  %123 = vmatprep.subr.mxu0 0.0
  %124 = vmatpush1.msra.mxu0 0.0
  %125 = vmatprep.subr.mxu0 0.0
  %126 = vmatpush1.msra.mxu0 0.0
  %127 = vmatprep.subr.mxu0 0.0
  %128 = vmatpush1.msra.mxu0 0.0
  %129 = vmatprep.subr.mxu0 0.0
  %130 = vmatpush1.msra.mxu0 0.0
  %131 = vmatprep.subr.mxu0 0.0
  %132 = vmatpush1.msra.mxu0 0.0
  %133 = vmatprep.subr.mxu0 0.0
  %134 = vmatpush1.msra.mxu0 0.0
  %135 = vmatprep.subr.mxu0 0.0
  %136 = vmatpush1.msra.mxu0 0.0
  %137 = vmatprep.subr.mxu0 0.0
  %138 = vmatpush1.msra.mxu0 0.0
  %139 = vmatprep.subr.mxu0 0.0
  %140 = vmatpush1.msra.mxu0 0.0
  %141 = vmatprep.subr.mxu0 0.0
  %142 = vmatpush1.msra.mxu0 0.0
  %143 = vmatprep.subr.mxu0 0.0
  %144 = vmatpush1.msra.mxu0 0.0
  %145 = vmatprep.subr.mxu0 0.0
  %146 = vmatpush1.msra.mxu0 0.0
  %147 = vmatprep.subr.mxu0 0.0
  %148 = vmatpush1.msra.mxu0 0.0
  %149 = vmatprep.subr.mxu0 0.0
  %150 = vmatpush1.msra.mxu0 0.0
  %151 = vmatprep.subr.mxu0 0.0
  %152 = vmatpush1.msra.mxu0 0.0
  %153 = vmatprep.subr.mxu0 0.0
  %154 = vmatpush1.msra.mxu0 0.0
  %155 = vmatprep.subr.mxu0 0.0
  %156 = vmatpush1.msra.mxu0 0.0
  %157 = vmatprep.subr.mxu0 0.0
  %158 = vmatpush1.msra.mxu0 0.0
  %159 = vmatprep.mubr.f32.mxu0 0.0
  %160 = vmatmul.mubr.f32.gmra.mrb[0].mxu0 %v86
  %v161 = vpop.f32.mrb[0].mxu0
  %v162 = vadd.f32 %v34, %v161
  %v163 = vpop.f32.mrb[0].mxu0
  %v164 = vadd.f32 %v38, %v163
  %165 = vmatprep.mubr.f32.mxu0 0.0
  %166 = vmatmul.mubr.f32.gmra.mrb[0].mxu0 %v88
  %v167 = vpop.f32.mrb[0].mxu0
  %v168 = vadd.f32 %v34, %v167
  %v169 = vpop.f32.mrb[0].mxu0
  %v170 = vadd.f32 %v38, %v169
  %171 = vdwg.mxu0
  %v176 = vcombine.low %v162, %v164
  %v177 = vcombine.high %v162, %v164
  %v179 = vunpack.c.l.s4 1983009808
  %v180 = vunpack.c.0.s8 %v179
  %v181 = vlaneseq
  %v182 = vshrl.u32 %v181, 7
  %v183 = vsub.s32 %v180, %v182
  %v184 = vrot.slane %v176, %v183
  %v186 = vunpack.c.l.s4 1983009808
  %v187 = vunpack.c.0.s8 %v186
  %v188 = vlaneseq
  %v189 = vshrl.u32 %v188, 7
  %v190 = vsub.s32 %v187, %v189
  %v191 = vrot.slane %v177, %v190
  %v192 = vcombine.high %v184, %v184
  %v193 = vcombine.high %v191, %v191
  %v194 = vcombine.low %v168, %v170
  %v195 = vcombine.high %v168, %v170
  %v197 = vunpack.c.l.s4 1983009808
  %v198 = vunpack.c.0.s8 %v197
  %v199 = vlaneseq
  %v200 = vshrl.u32 %v199, 7
  %v201 = vsub.s32 %v198, %v200
  %v202 = vrot.slane %v194, %v201
  %v204 = vunpack.c.l.s4 1983009808
  %v205 = vunpack.c.0.s8 %v204
  %v206 = vlaneseq
  %v207 = vshrl.u32 %v206, 7
  %v208 = vsub.s32 %v205, %v207
  %v209 = vrot.slane %v195, %v208
  %v210 = vcombine.high %v202, %v202
  %v211 = vcombine.high %v209, %v209
  %220 = vst [vmem:[#allocation2] sm:$0xf] %v184
  %221 = vst [vmem:[#allocation2 + $0x4] sm:$0xf] %v192
  %222 = vst [vmem:[#allocation2 + $0x8] sm:$0xf] %v191
  %223 = vst [vmem:[#allocation2 + $0xc] sm:$0xf] %v193
  %224 = vst [vmem:[#allocation2 + $0x10] sm:$0xf] %v202
  %225 = vst [vmem:[#allocation2 + $0x14] sm:$0xf] %v210
  %226 = vst [vmem:[#allocation2 + $0x18] sm:$0xf] %v209
  %227 = vst [vmem:[#allocation2 + $0x1c] sm:$0xf] %v211
  %v228 = vld [vmem:[#allocation2] sm:$0xf]
  %s229 = scalar_lea.vmem [#allocation2], 28
  %v230 = vld [vmem:[%s229] sm:$0xf]
  %v231 = vld [vmem:[%s2] sm:$0xff]
  %v232 = vld [vmem:[%s2 + $0x8] sm:$0xff]
  %v233 = vld [vmem:[%s2 + $0x10] sm:$0xff]
  %v234 = vld [vmem:[%s2 + $0x18] sm:$0xff]
  %vm235 = vcmask 261120
  %v237 = vsel %vm235, 0.0, 0
  %239 = vmatprep.subr.mxu0 0.0
  %240 = vmatpush1.msra.mxu0 %v231
  %241 = vmatprep.subr.mxu0 0.0
  %242 = vmatpush1.msra.mxu0 %v232
  %243 = vmatprep.subr.mxu0 0.0
  %244 = vmatpush1.msra.mxu0 %v233
  %245 = vmatprep.subr.mxu0 0.0
  %246 = vmatpush1.msra.mxu0 %v234
  %247 = vmatprep.subr.mxu0 0.0
  %248 = vmatpush1.msra.mxu0 0.0
  %249 = vmatprep.subr.mxu0 0.0
  %250 = vmatpush1.msra.mxu0 0.0
  %251 = vmatprep.subr.mxu0 0.0
  %252 = vmatpush1.msra.mxu0 0.0
  %253 = vmatprep.subr.mxu0 0.0
  %254 = vmatpush1.msra.mxu0 0.0
  %255 = vmatprep.subr.mxu0 0.0
  %256 = vmatpush1.msra.mxu0 0.0
  %257 = vmatprep.subr.mxu0 0.0
  %258 = vmatpush1.msra.mxu0 0.0
  %259 = vmatprep.subr.mxu0 0.0
  %260 = vmatpush1.msra.mxu0 0.0
  %261 = vmatprep.subr.mxu0 0.0
  %262 = vmatpush1.msra.mxu0 0.0
  %263 = vmatprep.subr.mxu0 0.0
  %264 = vmatpush1.msra.mxu0 0.0
  %265 = vmatprep.subr.mxu0 0.0
  %266 = vmatpush1.msra.mxu0 0.0
  %267 = vmatprep.subr.mxu0 0.0
  %268 = vmatpush1.msra.mxu0 0.0
  %269 = vmatprep.subr.mxu0 0.0
  %270 = vmatpush1.msra.mxu0 0.0
  %271 = vmatprep.subr.mxu0 0.0
  %272 = vmatpush1.msra.mxu0 0.0
  %273 = vmatprep.subr.mxu0 0.0
  %274 = vmatpush1.msra.mxu0 0.0
  %275 = vmatprep.subr.mxu0 0.0
  %276 = vmatpush1.msra.mxu0 0.0
  %277 = vmatprep.subr.mxu0 0.0
  %278 = vmatpush1.msra.mxu0 0.0
  %279 = vmatprep.subr.mxu0 0.0
  %280 = vmatpush1.msra.mxu0 0.0
  %281 = vmatprep.subr.mxu0 0.0
  %282 = vmatpush1.msra.mxu0 0.0
  %283 = vmatprep.subr.mxu0 0.0
  %284 = vmatpush1.msra.mxu0 0.0
  %285 = vmatprep.subr.mxu0 0.0
  %286 = vmatpush1.msra.mxu0 0.0
  %287 = vmatprep.subr.mxu0 0.0
  %288 = vmatpush1.msra.mxu0 0.0
  %289 = vmatprep.subr.mxu0 0.0
  %290 = vmatpush1.msra.mxu0 0.0
  %291 = vmatprep.subr.mxu0 0.0
  %292 = vmatpush1.msra.mxu0 0.0
  %293 = vmatprep.subr.mxu0 0.0
  %294 = vmatpush1.msra.mxu0 0.0
  %295 = vmatprep.subr.mxu0 0.0
  %296 = vmatpush1.msra.mxu0 0.0
  %297 = vmatprep.subr.mxu0 0.0
  %298 = vmatpush1.msra.mxu0 0.0
  %299 = vmatprep.subr.mxu0 0.0
  %300 = vmatpush1.msra.mxu0 0.0
  %301 = vmatprep.subr.mxu0 0.0
  %302 = vmatpush1.msra.mxu0 0.0
  %303 = vmatprep.mubr.f32.mxu0 0.0
  %304 = vmatmul.mubr.f32.gmra.mrb[0].mxu0 %v237
  %v305 = vpop.f32.mrb[0].mxu0
  %v306 = vadd.f32 0.0, %v305
  %v307 = vpop.f32.mrb[0].mxu0
  %308 = vdwg.mxu0
  %v309 = vadd.f32 %v228, %v306
  %v310 = vld [vmem:[%s3] sm:$0xff]
  %v311 = vld [vmem:[%s3 + $0x8] sm:$0xff]
  %v312 = vld [vmem:[%s3 + $0x10] sm:$0xff]
  %v313 = vld [vmem:[%s3 + $0x18] sm:$0xff]
  %314 = vmatprep.subr.mxu0 0.0
  %315 = vmatpush1.msra.mxu0 %v310
  %316 = vmatprep.subr.mxu0 0.0
  %317 = vmatpush1.msra.mxu0 %v311
  %318 = vmatprep.subr.mxu0 0.0
  %319 = vmatpush1.msra.mxu0 %v312
  %320 = vmatprep.subr.mxu0 0.0
  %321 = vmatpush1.msra.mxu0 %v313
  %322 = vmatprep.subr.mxu0 0.0
  %323 = vmatpush1.msra.mxu0 0.0
  %324 = vmatprep.subr.mxu0 0.0
  %325 = vmatpush1.msra.mxu0 0.0
  %326 = vmatprep.subr.mxu0 0.0
  %327 = vmatpush1.msra.mxu0 0.0
  %328 = vmatprep.subr.mxu0 0.0
  %329 = vmatpush1.msra.mxu0 0.0
  %330 = vmatprep.subr.mxu0 0.0
  %331 = vmatpush1.msra.mxu0 0.0
  %332 = vmatprep.subr.mxu0 0.0
  %333 = vmatpush1.msra.mxu0 0.0
  %334 = vmatprep.subr.mxu0 0.0
  %335 = vmatpush1.msra.mxu0 0.0
  %336 = vmatprep.subr.mxu0 0.0
  %337 = vmatpush1.msra.mxu0 0.0
  %338 = vmatprep.subr.mxu0 0.0
  %339 = vmatpush1.msra.mxu0 0.0
  %340 = vmatprep.subr.mxu0 0.0
  %341 = vmatpush1.msra.mxu0 0.0
  %342 = vmatprep.subr.mxu0 0.0
  %343 = vmatpush1.msra.mxu0 0.0
  %344 = vmatprep.subr.mxu0 0.0
  %345 = vmatpush1.msra.mxu0 0.0
  %346 = vmatprep.subr.mxu0 0.0
  %347 = vmatpush1.msra.mxu0 0.0
  %348 = vmatprep.subr.mxu0 0.0
  %349 = vmatpush1.msra.mxu0 0.0
  %350 = vmatprep.subr.mxu0 0.0
  %351 = vmatpush1.msra.mxu0 0.0
  %352 = vmatprep.subr.mxu0 0.0
  %353 = vmatpush1.msra.mxu0 0.0
  %354 = vmatprep.subr.mxu0 0.0
  %355 = vmatpush1.msra.mxu0 0.0
  %356 = vmatprep.subr.mxu0 0.0
  %357 = vmatpush1.msra.mxu0 0.0
  %358 = vmatprep.subr.mxu0 0.0
  %359 = vmatpush1.msra.mxu0 0.0
  %360 = vmatprep.subr.mxu0 0.0
  %361 = vmatpush1.msra.mxu0 0.0
  %362 = vmatprep.subr.mxu0 0.0
  %363 = vmatpush1.msra.mxu0 0.0
  %364 = vmatprep.subr.mxu0 0.0
  %365 = vmatpush1.msra.mxu0 0.0
  %366 = vmatprep.subr.mxu0 0.0
  %367 = vmatpush1.msra.mxu0 0.0
  %368 = vmatprep.subr.mxu0 0.0
  %369 = vmatpush1.msra.mxu0 0.0
  %370 = vmatprep.subr.mxu0 0.0
  %371 = vmatpush1.msra.mxu0 0.0
  %372 = vmatprep.subr.mxu0 0.0
  %373 = vmatpush1.msra.mxu0 0.0
  %374 = vmatprep.subr.mxu0 0.0
  %375 = vmatpush1.msra.mxu0 0.0
  %376 = vmatprep.subr.mxu0 0.0
  %377 = vmatpush1.msra.mxu0 0.0
  %378 = vmatprep.mubr.f32.mxu0 0.0
  %379 = vmatmul.mubr.f32.gmra.mrb[0].mxu0 %v237
  %v380 = vpop.f32.mrb[0].mxu0
  %v381 = vadd.f32 0.0, %v380
  %v382 = vpop.f32.mrb[0].mxu0
  %383 = vdwg.mxu0
  %v385 = vrot.slane %v230, 2
  %v387 = vadd.f32 %v385, %v381
  %v388 = vxor.u32 %v309, 2147483648
  %v389 = vmul.f32 %v388, 1.442695
  %v390 = vpow.pop %v389
  %v391 = vadd.f32 %v390, 1.0
  %v392 = vrcp.pop %v391
  %v393 = vmul.f32 1.0, %v392
  %v394 = vtanh.pop %v309
  %v395 = vmul.f32 %v393, 0.0
  %397 = vrot.lane.b32.xlu0 %v394, 32
  %v398 = vpop.permute.xlu0 %397
  %v400 = vmul.f32 %v393, %v398
  %402 = vrot.lane.b32.xlu0 %v400, 32
  %v403 = vpop.permute.xlu0 %402
  %v405 = vadd.f32 %v395, %v403
  %v406 = vtanh.pop %v405
  %408 = vrot.lane.b32.xlu0 %v406, 32
  %v409 = vpop.permute.xlu0 %408
  %v411 = vmul.f32 %v393, %v409
  %v412 = vxor.u32 %v387, 2147483648
  %v413 = vmul.f32 %v412, 1.442695
  %v414 = vpow.pop %v413
  %v415 = vadd.f32 %v414, 1.0
  %v416 = vrcp.pop %v415
  %v417 = vmul.f32 1.0, %v416
  %v418 = vtanh.pop %v387
  %v419 = vmul.f32 %v417, 0.0
  %421 = vrot.lane.b32.xlu0 %v418, 32
  %v422 = vpop.permute.xlu0 %421
  %v424 = vmul.f32 %v417, %v422
  %426 = vrot.lane.b32.xlu0 %v424, 32
  %v427 = vpop.permute.xlu0 %426
  %v429 = vadd.f32 %v419, %v427
  %v430 = vtanh.pop %v429
  %432 = vrot.lane.b32.xlu0 %v430, 32
  %v433 = vpop.permute.xlu0 %432
  %v435 = vmul.f32 %v417, %v433
  %v438 = vunpack.c.l.s4 1983009808
  %v439 = vunpack.c.0.s8 %v438
  %v440 = vlaneseq
  %v441 = vshrl.u32 %v440, 7
  %v442 = vsub.s32 %v439, %v441
  %v443 = vrot.slane %v411, %v442
  %444 = vrot.lane.b32.xlu0 %v443, 64
  %v445 = vpop.permute.xlu0 %444
  %vm447 = vcmask 254976
  %448 = vst.msk [vmem:[%s5] sm:$0x3] %vm447, %v445
  %v451 = vunpack.c.l.s4 1983009808
  %v452 = vunpack.c.0.s8 %v451
  %v453 = vlaneseq
  %v454 = vshrl.u32 %v453, 7
  %v455 = vsub.s32 %v452, %v454
  %v456 = vrot.slane %v435, %v455
  %457 = vrot.lane.b32.xlu0 %v456, 96
  %v458 = vpop.permute.xlu0 %457
  %s460 = scalar_lea.vmem %s5, 14
  %vm461 = vcmask 517376
  %462 = vst.msk [vmem:[%s460] sm:$0x3] %vm461, %v458
  %s463 = scalar_lea.vmem [#allocation2], 4
  %v464 = vld [vmem:[%s463] sm:$0xf]
  %s465 = scalar_lea.vmem [#allocation2], 24
  %v466 = vld [vmem:[%s465] sm:$0xf]
  %v467 = vld [vmem:[%s2] sm:$0xff]
  %v468 = vld [vmem:[%s2 + $0x8] sm:$0xff]
  %v469 = vld [vmem:[%s2 + $0x10] sm:$0xff]
  %v470 = vld [vmem:[%s2 + $0x18] sm:$0xff]
  %v471 = vsel %vm235, %v445, 0
  %473 = vmatprep.subr.mxu0 0.0
  %474 = vmatpush1.msra.mxu0 %v467
  %475 = vmatprep.subr.mxu0 0.0
  %476 = vmatpush1.msra.mxu0 %v468
  %477 = vmatprep.subr.mxu0 0.0
  %478 = vmatpush1.msra.mxu0 %v469
  %479 = vmatprep.subr.mxu0 0.0
  %480 = vmatpush1.msra.mxu0 %v470
  %481 = vmatprep.subr.mxu0 0.0
  %482 = vmatpush1.msra.mxu0 0.0
  %483 = vmatprep.subr.mxu0 0.0
  %484 = vmatpush1.msra.mxu0 0.0
  %485 = vmatprep.subr.mxu0 0.0
  %486 = vmatpush1.msra.mxu0 0.0
  %487 = vmatprep.subr.mxu0 0.0
  %488 = vmatpush1.msra.mxu0 0.0
  %489 = vmatprep.subr.mxu0 0.0
  %490 = vmatpush1.msra.mxu0 0.0
  %491 = vmatprep.subr.mxu0 0.0
  %492 = vmatpush1.msra.mxu0 0.0
  %493 = vmatprep.subr.mxu0 0.0
  %494 = vmatpush1.msra.mxu0 0.0
  %495 = vmatprep.subr.mxu0 0.0
  %496 = vmatpush1.msra.mxu0 0.0
  %497 = vmatprep.subr.mxu0 0.0
  %498 = vmatpush1.msra.mxu0 0.0
  %499 = vmatprep.subr.mxu0 0.0
  %500 = vmatpush1.msra.mxu0 0.0
  %501 = vmatprep.subr.mxu0 0.0
  %502 = vmatpush1.msra.mxu0 0.0
  %503 = vmatprep.subr.mxu0 0.0
  %504 = vmatpush1.msra.mxu0 0.0
  %505 = vmatprep.subr.mxu0 0.0
  %506 = vmatpush1.msra.mxu0 0.0
  %507 = vmatprep.subr.mxu0 0.0
  %508 = vmatpush1.msra.mxu0 0.0
  %509 = vmatprep.subr.mxu0 0.0
  %510 = vmatpush1.msra.mxu0 0.0
  %511 = vmatprep.subr.mxu0 0.0
  %512 = vmatpush1.msra.mxu0 0.0
  %513 = vmatprep.subr.mxu0 0.0
  %514 = vmatpush1.msra.mxu0 0.0
  %515 = vmatprep.subr.mxu0 0.0
  %516 = vmatpush1.msra.mxu0 0.0
  %517 = vmatprep.subr.mxu0 0.0
  %518 = vmatpush1.msra.mxu0 0.0
  %519 = vmatprep.subr.mxu0 0.0
  %520 = vmatpush1.msra.mxu0 0.0
  %521 = vmatprep.subr.mxu0 0.0
  %522 = vmatpush1.msra.mxu0 0.0
  %523 = vmatprep.subr.mxu0 0.0
  %524 = vmatpush1.msra.mxu0 0.0
  %525 = vmatprep.subr.mxu0 0.0
  %526 = vmatpush1.msra.mxu0 0.0
  %527 = vmatprep.subr.mxu0 0.0
  %528 = vmatpush1.msra.mxu0 0.0
  %529 = vmatprep.subr.mxu0 0.0
  %530 = vmatpush1.msra.mxu0 0.0
  %531 = vmatprep.subr.mxu0 0.0
  %532 = vmatpush1.msra.mxu0 0.0
  %533 = vmatprep.subr.mxu0 0.0
  %534 = vmatpush1.msra.mxu0 0.0
  %535 = vmatprep.subr.mxu0 0.0
  %536 = vmatpush1.msra.mxu0 0.0
  %537 = vmatprep.mubr.f32.mxu0 0.0
  %538 = vmatmul.mubr.f32.gmra.mrb[0].mxu0 %v471
  %v539 = vpop.f32.mrb[0].mxu0
  %v540 = vadd.f32 0.0, %v539
  %v541 = vpop.f32.mrb[0].mxu0
  %542 = vdwg.mxu0
  %v543 = vadd.f32 %v464, %v540
  %v544 = vld [vmem:[%s3] sm:$0xff]
  %v545 = vld [vmem:[%s3 + $0x8] sm:$0xff]
  %v546 = vld [vmem:[%s3 + $0x10] sm:$0xff]
  %v547 = vld [vmem:[%s3 + $0x18] sm:$0xff]
  %548 = vrot.lane.b32.xlu0 %v456, 64
  %v549 = vpop.permute.xlu0 %548
  %v550 = vsel %vm235, %v549, 0
  %552 = vmatprep.subr.mxu0 0.0
  %553 = vmatpush1.msra.mxu0 %v544
  %554 = vmatprep.subr.mxu0 0.0
  %555 = vmatpush1.msra.mxu0 %v545
  %556 = vmatprep.subr.mxu0 0.0
  %557 = vmatpush1.msra.mxu0 %v546
  %558 = vmatprep.subr.mxu0 0.0
  %559 = vmatpush1.msra.mxu0 %v547
  %560 = vmatprep.subr.mxu0 0.0
  %561 = vmatpush1.msra.mxu0 0.0
  %562 = vmatprep.subr.mxu0 0.0
  %563 = vmatpush1.msra.mxu0 0.0
  %564 = vmatprep.subr.mxu0 0.0
  %565 = vmatpush1.msra.mxu0 0.0
  %566 = vmatprep.subr.mxu0 0.0
  %567 = vmatpush1.msra.mxu0 0.0
  %568 = vmatprep.subr.mxu0 0.0
  %569 = vmatpush1.msra.mxu0 0.0
  %570 = vmatprep.subr.mxu0 0.0
  %571 = vmatpush1.msra.mxu0 0.0
  %572 = vmatprep.subr.mxu0 0.0
  %573 = vmatpush1.msra.mxu0 0.0
  %574 = vmatprep.subr.mxu0 0.0
  %575 = vmatpush1.msra.mxu0 0.0
  %576 = vmatprep.subr.mxu0 0.0
  %577 = vmatpush1.msra.mxu0 0.0
  %578 = vmatprep.subr.mxu0 0.0
  %579 = vmatpush1.msra.mxu0 0.0
  %580 = vmatprep.subr.mxu0 0.0
  %581 = vmatpush1.msra.mxu0 0.0
  %582 = vmatprep.subr.mxu0 0.0
  %583 = vmatpush1.msra.mxu0 0.0
  %584 = vmatprep.subr.mxu0 0.0
  %585 = vmatpush1.msra.mxu0 0.0
  %586 = vmatprep.subr.mxu0 0.0
  %587 = vmatpush1.msra.mxu0 0.0
  %588 = vmatprep.subr.mxu0 0.0
  %589 = vmatpush1.msra.mxu0 0.0
  %590 = vmatprep.subr.mxu0 0.0
  %591 = vmatpush1.msra.mxu0 0.0
  %592 = vmatprep.subr.mxu0 0.0
  %593 = vmatpush1.msra.mxu0 0.0
  %594 = vmatprep.subr.mxu0 0.0
  %595 = vmatpush1.msra.mxu0 0.0
  %596 = vmatprep.subr.mxu0 0.0
  %597 = vmatpush1.msra.mxu0 0.0
  %598 = vmatprep.subr.mxu0 0.0
  %599 = vmatpush1.msra.mxu0 0.0
  %600 = vmatprep.subr.mxu0 0.0
  %601 = vmatpush1.msra.mxu0 0.0
  %602 = vmatprep.subr.mxu0 0.0
  %603 = vmatpush1.msra.mxu0 0.0
  %604 = vmatprep.subr.mxu0 0.0
  %605 = vmatpush1.msra.mxu0 0.0
  %606 = vmatprep.subr.mxu0 0.0
  %607 = vmatpush1.msra.mxu0 0.0
  %608 = vmatprep.subr.mxu0 0.0
  %609 = vmatpush1.msra.mxu0 0.0
  %610 = vmatprep.subr.mxu0 0.0
  %611 = vmatpush1.msra.mxu0 0.0
  %612 = vmatprep.subr.mxu0 0.0
  %613 = vmatpush1.msra.mxu0 0.0
  %614 = vmatprep.subr.mxu0 0.0
  %615 = vmatpush1.msra.mxu0 0.0
  %616 = vmatprep.mubr.f32.mxu0 0.0
  %617 = vmatmul.mubr.f32.gmra.mrb[0].mxu0 %v550
  %v618 = vpop.f32.mrb[0].mxu0
  %v619 = vadd.f32 0.0, %v618
  %v620 = vpop.f32.mrb[0].mxu0
  %621 = vdwg.mxu0
  %v623 = vrot.slane %v466, 2
  %v625 = vadd.f32 %v623, %v619
  %v626 = vxor.u32 %v543, 2147483648
  %v627 = vmul.f32 %v626, 1.442695
  %v628 = vpow.pop %v627
  %v629 = vadd.f32 %v628, 1.0
  %v630 = vrcp.pop %v629
  %v631 = vmul.f32 1.0, %v630
  %v632 = vtanh.pop %v543
  %v633 = vmul.f32 %v631, %v405
  %635 = vrot.lane.b32.xlu0 %v632, 32
  %v636 = vpop.permute.xlu0 %635
  %v638 = vmul.f32 %v631, %v636
  %640 = vrot.lane.b32.xlu0 %v638, 32
  %v641 = vpop.permute.xlu0 %640
  %v643 = vadd.f32 %v633, %v641
  %v644 = vtanh.pop %v643
  %646 = vrot.lane.b32.xlu0 %v644, 32
  %v647 = vpop.permute.xlu0 %646
  %v649 = vmul.f32 %v631, %v647
  %v650 = vxor.u32 %v625, 2147483648
  %v651 = vmul.f32 %v650, 1.442695
  %v652 = vpow.pop %v651
  %v653 = vadd.f32 %v652, 1.0
  %v654 = vrcp.pop %v653
  %v655 = vmul.f32 1.0, %v654
  %v656 = vtanh.pop %v625
  %v657 = vmul.f32 %v655, %v429
  %659 = vrot.lane.b32.xlu0 %v656, 32
  %v660 = vpop.permute.xlu0 %659
  %v662 = vmul.f32 %v655, %v660
  %664 = vrot.lane.b32.xlu0 %v662, 32
  %v665 = vpop.permute.xlu0 %664
  %v667 = vadd.f32 %v657, %v665
  %v668 = vtanh.pop %v667
  %670 = vrot.lane.b32.xlu0 %v668, 32
  %v671 = vpop.permute.xlu0 %670
  %v673 = vmul.f32 %v655, %v671
  %v676 = vunpack.c.l.s4 1983009808
  %v677 = vunpack.c.0.s8 %v676
  %v678 = vlaneseq
  %v679 = vshrl.u32 %v678, 7
  %v680 = vsub.s32 %v677, %v679
  %v681 = vrot.slane %v649, %v680
  %682 = vrot.lane.b32.xlu0 %v681, 64
  %v683 = vpop.permute.xlu0 %682
  %s685 = scalar_lea.vmem %s5, 2
  %686 = vst.msk [vmem:[%s685] sm:$0x3] %vm447, %v683
  %v689 = vunpack.c.l.s4 1983009808
  %v690 = vunpack.c.0.s8 %v689
  %v691 = vlaneseq
  %v692 = vshrl.u32 %v691, 7
  %v693 = vsub.s32 %v690, %v692
  %v694 = vrot.slane %v673, %v693
  %695 = vrot.lane.b32.xlu0 %v694, 96
  %v696 = vpop.permute.xlu0 %695
  %s698 = scalar_lea.vmem %s5, 12
  %699 = vst.msk [vmem:[%s698] sm:$0x3] %vm461, %v696
  %s700 = scalar_lea.vmem [#allocation2], 8
  %v701 = vld [vmem:[%s700] sm:$0xf]
  %s702 = scalar_lea.vmem [#allocation2], 20
  %v703 = vld [vmem:[%s702] sm:$0xf]
  %v704 = vld [vmem:[%s2] sm:$0xff]
  %v705 = vld [vmem:[%s2 + $0x8] sm:$0xff]
  %v706 = vld [vmem:[%s2 + $0x10] sm:$0xff]
  %v707 = vld [vmem:[%s2 + $0x18] sm:$0xff]
  %v708 = vsel %vm235, %v683, 0
  %710 = vmatprep.subr.mxu0 0.0
  %711 = vmatpush1.msra.mxu0 %v704
  %712 = vmatprep.subr.mxu0 0.0
  %713 = vmatpush1.msra.mxu0 %v705
  %714 = vmatprep.subr.mxu0 0.0
  %715 = vmatpush1.msra.mxu0 %v706
  %716 = vmatprep.subr.mxu0 0.0
  %717 = vmatpush1.msra.mxu0 %v707
  %718 = vmatprep.subr.mxu0 0.0
  %719 = vmatpush1.msra.mxu0 0.0
  %720 = vmatprep.subr.mxu0 0.0
  %721 = vmatpush1.msra.mxu0 0.0
  %722 = vmatprep.subr.mxu0 0.0
  %723 = vmatpush1.msra.mxu0 0.0
  %724 = vmatprep.subr.mxu0 0.0
  %725 = vmatpush1.msra.mxu0 0.0
  %726 = vmatprep.subr.mxu0 0.0
  %727 = vmatpush1.msra.mxu0 0.0
  %728 = vmatprep.subr.mxu0 0.0
  %729 = vmatpush1.msra.mxu0 0.0
  %730 = vmatprep.subr.mxu0 0.0
  %731 = vmatpush1.msra.mxu0 0.0
  %732 = vmatprep.subr.mxu0 0.0
  %733 = vmatpush1.msra.mxu0 0.0
  %734 = vmatprep.subr.mxu0 0.0
  %735 = vmatpush1.msra.mxu0 0.0
  %736 = vmatprep.subr.mxu0 0.0
  %737 = vmatpush1.msra.mxu0 0.0
  %738 = vmatprep.subr.mxu0 0.0
  %739 = vmatpush1.msra.mxu0 0.0
  %740 = vmatprep.subr.mxu0 0.0
  %741 = vmatpush1.msra.mxu0 0.0
  %742 = vmatprep.subr.mxu0 0.0
  %743 = vmatpush1.msra.mxu0 0.0
  %744 = vmatprep.subr.mxu0 0.0
  %745 = vmatpush1.msra.mxu0 0.0
  %746 = vmatprep.subr.mxu0 0.0
  %747 = vmatpush1.msra.mxu0 0.0
  %748 = vmatprep.subr.mxu0 0.0
  %749 = vmatpush1.msra.mxu0 0.0
  %750 = vmatprep.subr.mxu0 0.0
  %751 = vmatpush1.msra.mxu0 0.0
  %752 = vmatprep.subr.mxu0 0.0
  %753 = vmatpush1.msra.mxu0 0.0
  %754 = vmatprep.subr.mxu0 0.0
  %755 = vmatpush1.msra.mxu0 0.0
  %756 = vmatprep.subr.mxu0 0.0
  %757 = vmatpush1.msra.mxu0 0.0
  %758 = vmatprep.subr.mxu0 0.0
  %759 = vmatpush1.msra.mxu0 0.0
  %760 = vmatprep.subr.mxu0 0.0
  %761 = vmatpush1.msra.mxu0 0.0
  %762 = vmatprep.subr.mxu0 0.0
  %763 = vmatpush1.msra.mxu0 0.0
  %764 = vmatprep.subr.mxu0 0.0
  %765 = vmatpush1.msra.mxu0 0.0
  %766 = vmatprep.subr.mxu0 0.0
  %767 = vmatpush1.msra.mxu0 0.0
  %768 = vmatprep.subr.mxu0 0.0
  %769 = vmatpush1.msra.mxu0 0.0
  %770 = vmatprep.subr.mxu0 0.0
  %771 = vmatpush1.msra.mxu0 0.0
  %772 = vmatprep.subr.mxu0 0.0
  %773 = vmatpush1.msra.mxu0 0.0
  %774 = vmatprep.mubr.f32.mxu0 0.0
  %775 = vmatmul.mubr.f32.gmra.mrb[0].mxu0 %v708
  %v776 = vpop.f32.mrb[0].mxu0
  %v777 = vadd.f32 0.0, %v776
  %v778 = vpop.f32.mrb[0].mxu0
  %779 = vdwg.mxu0
  %v780 = vadd.f32 %v701, %v777
  %v781 = vld [vmem:[%s3] sm:$0xff]
  %v782 = vld [vmem:[%s3 + $0x8] sm:$0xff]
  %v783 = vld [vmem:[%s3 + $0x10] sm:$0xff]
  %v784 = vld [vmem:[%s3 + $0x18] sm:$0xff]
  %785 = vrot.lane.b32.xlu0 %v694, 64
  %v786 = vpop.permute.xlu0 %785
  %v787 = vsel %vm235, %v786, 0
  %789 = vmatprep.subr.mxu0 0.0
  %790 = vmatpush1.msra.mxu0 %v781
  %791 = vmatprep.subr.mxu0 0.0
  %792 = vmatpush1.msra.mxu0 %v782
  %793 = vmatprep.subr.mxu0 0.0
  %794 = vmatpush1.msra.mxu0 %v783
  %795 = vmatprep.subr.mxu0 0.0
  %796 = vmatpush1.msra.mxu0 %v784
  %797 = vmatprep.subr.mxu0 0.0
  %798 = vmatpush1.msra.mxu0 0.0
  %799 = vmatprep.subr.mxu0 0.0
  %800 = vmatpush1.msra.mxu0 0.0
  %801 = vmatprep.subr.mxu0 0.0
  %802 = vmatpush1.msra.mxu0 0.0
  %803 = vmatprep.subr.mxu0 0.0
  %804 = vmatpush1.msra.mxu0 0.0
  %805 = vmatprep.subr.mxu0 0.0
  %806 = vmatpush1.msra.mxu0 0.0
  %807 = vmatprep.subr.mxu0 0.0
  %808 = vmatpush1.msra.mxu0 0.0
  %809 = vmatprep.subr.mxu0 0.0
  %810 = vmatpush1.msra.mxu0 0.0
  %811 = vmatprep.subr.mxu0 0.0
  %812 = vmatpush1.msra.mxu0 0.0
  %813 = vmatprep.subr.mxu0 0.0
  %814 = vmatpush1.msra.mxu0 0.0
  %815 = vmatprep.subr.mxu0 0.0
  %816 = vmatpush1.msra.mxu0 0.0
  %817 = vmatprep.subr.mxu0 0.0
  %818 = vmatpush1.msra.mxu0 0.0
  %819 = vmatprep.subr.mxu0 0.0
  %820 = vmatpush1.msra.mxu0 0.0
  %821 = vmatprep.subr.mxu0 0.0
  %822 = vmatpush1.msra.mxu0 0.0
  %823 = vmatprep.subr.mxu0 0.0
  %824 = vmatpush1.msra.mxu0 0.0
  %825 = vmatprep.subr.mxu0 0.0
  %826 = vmatpush1.msra.mxu0 0.0
  %827 = vmatprep.subr.mxu0 0.0
  %828 = vmatpush1.msra.mxu0 0.0
  %829 = vmatprep.subr.mxu0 0.0
  %830 = vmatpush1.msra.mxu0 0.0
  %831 = vmatprep.subr.mxu0 0.0
  %832 = vmatpush1.msra.mxu0 0.0
  %833 = vmatprep.subr.mxu0 0.0
  %834 = vmatpush1.msra.mxu0 0.0
  %835 = vmatprep.subr.mxu0 0.0
  %836 = vmatpush1.msra.mxu0 0.0
  %837 = vmatprep.subr.mxu0 0.0
  %838 = vmatpush1.msra.mxu0 0.0
  %839 = vmatprep.subr.mxu0 0.0
  %840 = vmatpush1.msra.mxu0 0.0
  %841 = vmatprep.subr.mxu0 0.0
  %842 = vmatpush1.msra.mxu0 0.0
  %843 = vmatprep.subr.mxu0 0.0
  %844 = vmatpush1.msra.mxu0 0.0
  %845 = vmatprep.subr.mxu0 0.0
  %846 = vmatpush1.msra.mxu0 0.0
  %847 = vmatprep.subr.mxu0 0.0
  %848 = vmatpush1.msra.mxu0 0.0
  %849 = vmatprep.subr.mxu0 0.0
  %850 = vmatpush1.msra.mxu0 0.0
  %851 = vmatprep.subr.mxu0 0.0
  %852 = vmatpush1.msra.mxu0 0.0
  %853 = vmatprep.mubr.f32.mxu0 0.0
  %854 = vmatmul.mubr.f32.gmra.mrb[0].mxu0 %v787
  %v855 = vpop.f32.mrb[0].mxu0
  %v856 = vadd.f32 0.0, %v855
  %v857 = vpop.f32.mrb[0].mxu0
  %858 = vdwg.mxu0
  %v860 = vrot.slane %v703, 2
  %v862 = vadd.f32 %v860, %v856
  %v863 = vxor.u32 %v780, 2147483648
  %v864 = vmul.f32 %v863, 1.442695
  %v865 = vpow.pop %v864
  %v866 = vadd.f32 %v865, 1.0
  %v867 = vrcp.pop %v866
  %v868 = vmul.f32 1.0, %v867
  %v869 = vtanh.pop %v780
  %v870 = vmul.f32 %v868, %v643
  %872 = vrot.lane.b32.xlu0 %v869, 32
  %v873 = vpop.permute.xlu0 %872
  %v875 = vmul.f32 %v868, %v873
  %877 = vrot.lane.b32.xlu0 %v875, 32
  %v878 = vpop.permute.xlu0 %877
  %v880 = vadd.f32 %v870, %v878
  %v881 = vtanh.pop %v880
  %883 = vrot.lane.b32.xlu0 %v881, 32
  %v884 = vpop.permute.xlu0 %883
  %v886 = vmul.f32 %v868, %v884
  %v887 = vxor.u32 %v862, 2147483648
  %v888 = vmul.f32 %v887, 1.442695
  %v889 = vpow.pop %v888
  %v890 = vadd.f32 %v889, 1.0
  %v891 = vrcp.pop %v890
  %v892 = vmul.f32 1.0, %v891
  %v893 = vtanh.pop %v862
  %v894 = vmul.f32 %v892, %v667
  %896 = vrot.lane.b32.xlu0 %v893, 32
  %v897 = vpop.permute.xlu0 %896
  %v899 = vmul.f32 %v892, %v897
  %901 = vrot.lane.b32.xlu0 %v899, 32
  %v902 = vpop.permute.xlu0 %901
  %v904 = vadd.f32 %v894, %v902
  %v905 = vtanh.pop %v904
  %907 = vrot.lane.b32.xlu0 %v905, 32
  %v908 = vpop.permute.xlu0 %907
  %v910 = vmul.f32 %v892, %v908
  %v913 = vunpack.c.l.s4 1983009808
  %v914 = vunpack.c.0.s8 %v913
  %v915 = vlaneseq
  %v916 = vshrl.u32 %v915, 7
  %v917 = vsub.s32 %v914, %v916
  %v918 = vrot.slane %v886, %v917
  %919 = vrot.lane.b32.xlu0 %v918, 64
  %v920 = vpop.permute.xlu0 %919
  %s922 = scalar_lea.vmem %s5, 4
  %923 = vst.msk [vmem:[%s922] sm:$0x3] %vm447, %v920
  %v926 = vunpack.c.l.s4 1983009808
  %v927 = vunpack.c.0.s8 %v926
  %v928 = vlaneseq
  %v929 = vshrl.u32 %v928, 7
  %v930 = vsub.s32 %v927, %v929
  %v931 = vrot.slane %v910, %v930
  %932 = vrot.lane.b32.xlu0 %v931, 96
  %v933 = vpop.permute.xlu0 %932
  %s935 = scalar_lea.vmem %s5, 10
  %936 = vst.msk [vmem:[%s935] sm:$0x3] %vm461, %v933
  %s937 = scalar_lea.vmem [#allocation2], 12
  %v938 = vld [vmem:[%s937] sm:$0xf]
  %s939 = scalar_lea.vmem [#allocation2], 16
  %v940 = vld [vmem:[%s939] sm:$0xf]
  %v941 = vld [vmem:[%s2] sm:$0xff]
  %v942 = vld [vmem:[%s2 + $0x8] sm:$0xff]
  %v943 = vld [vmem:[%s2 + $0x10] sm:$0xff]
  %v944 = vld [vmem:[%s2 + $0x18] sm:$0xff]
  %v945 = vsel %vm235, %v920, 0
  %947 = vmatprep.subr.mxu0 0.0
  %948 = vmatpush1.msra.mxu0 %v941
  %949 = vmatprep.subr.mxu0 0.0
  %950 = vmatpush1.msra.mxu0 %v942
  %951 = vmatprep.subr.mxu0 0.0
  %952 = vmatpush1.msra.mxu0 %v943
  %953 = vmatprep.subr.mxu0 0.0
  %954 = vmatpush1.msra.mxu0 %v944
  %955 = vmatprep.subr.mxu0 0.0
  %956 = vmatpush1.msra.mxu0 0.0
  %957 = vmatprep.subr.mxu0 0.0
  %958 = vmatpush1.msra.mxu0 0.0
  %959 = vmatprep.subr.mxu0 0.0
  %960 = vmatpush1.msra.mxu0 0.0
  %961 = vmatprep.subr.mxu0 0.0
  %962 = vmatpush1.msra.mxu0 0.0
  %963 = vmatprep.subr.mxu0 0.0
  %964 = vmatpush1.msra.mxu0 0.0
  %965 = vmatprep.subr.mxu0 0.0
  %966 = vmatpush1.msra.mxu0 0.0
  %967 = vmatprep.subr.mxu0 0.0
  %968 = vmatpush1.msra.mxu0 0.0
  %969 = vmatprep.subr.mxu0 0.0
  %970 = vmatpush1.msra.mxu0 0.0
  %971 = vmatprep.subr.mxu0 0.0
  %972 = vmatpush1.msra.mxu0 0.0
  %973 = vmatprep.subr.mxu0 0.0
  %974 = vmatpush1.msra.mxu0 0.0
  %975 = vmatprep.subr.mxu0 0.0
  %976 = vmatpush1.msra.mxu0 0.0
  %977 = vmatprep.subr.mxu0 0.0
  %978 = vmatpush1.msra.mxu0 0.0
  %979 = vmatprep.subr.mxu0 0.0
  %980 = vmatpush1.msra.mxu0 0.0
  %981 = vmatprep.subr.mxu0 0.0
  %982 = vmatpush1.msra.mxu0 0.0
  %983 = vmatprep.subr.mxu0 0.0
  %984 = vmatpush1.msra.mxu0 0.0
  %985 = vmatprep.subr.mxu0 0.0
  %986 = vmatpush1.msra.mxu0 0.0
  %987 = vmatprep.subr.mxu0 0.0
  %988 = vmatpush1.msra.mxu0 0.0
  %989 = vmatprep.subr.mxu0 0.0
  %990 = vmatpush1.msra.mxu0 0.0
  %991 = vmatprep.subr.mxu0 0.0
  %992 = vmatpush1.msra.mxu0 0.0
  %993 = vmatprep.subr.mxu0 0.0
  %994 = vmatpush1.msra.mxu0 0.0
  %995 = vmatprep.subr.mxu0 0.0
  %996 = vmatpush1.msra.mxu0 0.0
  %997 = vmatprep.subr.mxu0 0.0
  %998 = vmatpush1.msra.mxu0 0.0
  %999 = vmatprep.subr.mxu0 0.0
  %1000 = vmatpush1.msra.mxu0 0.0
  %1001 = vmatprep.subr.mxu0 0.0
  %1002 = vmatpush1.msra.mxu0 0.0
  %1003 = vmatprep.subr.mxu0 0.0
  %1004 = vmatpush1.msra.mxu0 0.0
  %1005 = vmatprep.subr.mxu0 0.0
  %1006 = vmatpush1.msra.mxu0 0.0
  %1007 = vmatprep.subr.mxu0 0.0
  %1008 = vmatpush1.msra.mxu0 0.0
  %1009 = vmatprep.subr.mxu0 0.0
  %1010 = vmatpush1.msra.mxu0 0.0
  %1011 = vmatprep.mubr.f32.mxu0 0.0
  %1012 = vmatmul.mubr.f32.gmra.mrb[0].mxu0 %v945
  %v1013 = vpop.f32.mrb[0].mxu0
  %v1014 = vadd.f32 0.0, %v1013
  %v1015 = vpop.f32.mrb[0].mxu0
  %1016 = vdwg.mxu0
  %v1017 = vadd.f32 %v938, %v1014
  %v1018 = vld [vmem:[%s3] sm:$0xff]
  %v1019 = vld [vmem:[%s3 + $0x8] sm:$0xff]
  %v1020 = vld [vmem:[%s3 + $0x10] sm:$0xff]
  %v1021 = vld [vmem:[%s3 + $0x18] sm:$0xff]
  %1022 = vrot.lane.b32.xlu0 %v931, 64
  %v1023 = vpop.permute.xlu0 %1022
  %v1024 = vsel %vm235, %v1023, 0
  %1026 = vmatprep.subr.mxu0 0.0
  %1027 = vmatpush1.msra.mxu0 %v1018
  %1028 = vmatprep.subr.mxu0 0.0
  %1029 = vmatpush1.msra.mxu0 %v1019
  %1030 = vmatprep.subr.mxu0 0.0
  %1031 = vmatpush1.msra.mxu0 %v1020
  %1032 = vmatprep.subr.mxu0 0.0
  %1033 = vmatpush1.msra.mxu0 %v1021
  %1034 = vmatprep.subr.mxu0 0.0
  %1035 = vmatpush1.msra.mxu0 0.0
  %1036 = vmatprep.subr.mxu0 0.0
  %1037 = vmatpush1.msra.mxu0 0.0
  %1038 = vmatprep.subr.mxu0 0.0
  %1039 = vmatpush1.msra.mxu0 0.0
  %1040 = vmatprep.subr.mxu0 0.0
  %1041 = vmatpush1.msra.mxu0 0.0
  %1042 = vmatprep.subr.mxu0 0.0
  %1043 = vmatpush1.msra.mxu0 0.0
  %1044 = vmatprep.subr.mxu0 0.0
  %1045 = vmatpush1.msra.mxu0 0.0
  %1046 = vmatprep.subr.mxu0 0.0
  %1047 = vmatpush1.msra.mxu0 0.0
  %1048 = vmatprep.subr.mxu0 0.0
  %1049 = vmatpush1.msra.mxu0 0.0
  %1050 = vmatprep.subr.mxu0 0.0
  %1051 = vmatpush1.msra.mxu0 0.0
  %1052 = vmatprep.subr.mxu0 0.0
  %1053 = vmatpush1.msra.mxu0 0.0
  %1054 = vmatprep.subr.mxu0 0.0
  %1055 = vmatpush1.msra.mxu0 0.0
  %1056 = vmatprep.subr.mxu0 0.0
  %1057 = vmatpush1.msra.mxu0 0.0
  %1058 = vmatprep.subr.mxu0 0.0
  %1059 = vmatpush1.msra.mxu0 0.0
  %1060 = vmatprep.subr.mxu0 0.0
  %1061 = vmatpush1.msra.mxu0 0.0
  %1062 = vmatprep.subr.mxu0 0.0
  %1063 = vmatpush1.msra.mxu0 0.0
  %1064 = vmatprep.subr.mxu0 0.0
  %1065 = vmatpush1.msra.mxu0 0.0
  %1066 = vmatprep.subr.mxu0 0.0
  %1067 = vmatpush1.msra.mxu0 0.0
  %1068 = vmatprep.subr.mxu0 0.0
  %1069 = vmatpush1.msra.mxu0 0.0
  %1070 = vmatprep.subr.mxu0 0.0
  %1071 = vmatpush1.msra.mxu0 0.0
  %1072 = vmatprep.subr.mxu0 0.0
  %1073 = vmatpush1.msra.mxu0 0.0
  %1074 = vmatprep.subr.mxu0 0.0
  %1075 = vmatpush1.msra.mxu0 0.0
  %1076 = vmatprep.subr.mxu0 0.0
  %1077 = vmatpush1.msra.mxu0 0.0
  %1078 = vmatprep.subr.mxu0 0.0
  %1079 = vmatpush1.msra.mxu0 0.0
  %1080 = vmatprep.subr.mxu0 0.0
  %1081 = vmatpush1.msra.mxu0 0.0
  %1082 = vmatprep.subr.mxu0 0.0
  %1083 = vmatpush1.msra.mxu0 0.0
  %1084 = vmatprep.subr.mxu0 0.0
  %1085 = vmatpush1.msra.mxu0 0.0
  %1086 = vmatprep.subr.mxu0 0.0
  %1087 = vmatpush1.msra.mxu0 0.0
  %1088 = vmatprep.subr.mxu0 0.0
  %1089 = vmatpush1.msra.mxu0 0.0
  %1090 = vmatprep.mubr.f32.mxu0 0.0
  %1091 = vmatmul.mubr.f32.gmra.mrb[0].mxu0 %v1024
  %v1092 = vpop.f32.mrb[0].mxu0
  %v1093 = vadd.f32 0.0, %v1092
  %v1094 = vpop.f32.mrb[0].mxu0
  %1095 = vdwg.mxu0
  %v1097 = vrot.slane %v940, 2
  %v1099 = vadd.f32 %v1097, %v1093
  %v1100 = vxor.u32 %v1017, 2147483648
  %v1101 = vmul.f32 %v1100, 1.442695
  %v1102 = vpow.pop %v1101
  %v1103 = vadd.f32 %v1102, 1.0
  %v1104 = vrcp.pop %v1103
  %v1105 = vmul.f32 1.0, %v1104
  %v1106 = vtanh.pop %v1017
  %v1107 = vmul.f32 %v1105, %v880
  %1109 = vrot.lane.b32.xlu0 %v1106, 32
  %v1110 = vpop.permute.xlu0 %1109
  %v1112 = vmul.f32 %v1105, %v1110
  %1114 = vrot.lane.b32.xlu0 %v1112, 32
  %v1115 = vpop.permute.xlu0 %1114
  %v1117 = vadd.f32 %v1107, %v1115
  %v1118 = vtanh.pop %v1117
  %1120 = vrot.lane.b32.xlu0 %v1118, 32
  %v1121 = vpop.permute.xlu0 %1120
  %v1123 = vmul.f32 %v1105, %v1121
  %v1124 = vxor.u32 %v1099, 2147483648
  %v1125 = vmul.f32 %v1124, 1.442695
  %v1126 = vpow.pop %v1125
  %v1127 = vadd.f32 %v1126, 1.0
  %v1128 = vrcp.pop %v1127
  %v1129 = vmul.f32 1.0, %v1128
  %v1130 = vtanh.pop %v1099
  %v1131 = vmul.f32 %v1129, %v904
  %1133 = vrot.lane.b32.xlu0 %v1130, 32
  %v1134 = vpop.permute.xlu0 %1133
  %v1136 = vmul.f32 %v1129, %v1134
  %1138 = vrot.lane.b32.xlu0 %v1136, 32
  %v1139 = vpop.permute.xlu0 %1138
  %v1141 = vadd.f32 %v1131, %v1139
  %v1142 = vtanh.pop %v1141
  %1144 = vrot.lane.b32.xlu0 %v1142, 32
  %v1145 = vpop.permute.xlu0 %1144
  %v1147 = vmul.f32 %v1129, %v1145
  %v1150 = vunpack.c.l.s4 1983009808
  %v1151 = vunpack.c.0.s8 %v1150
  %v1152 = vlaneseq
  %v1153 = vshrl.u32 %v1152, 7
  %v1154 = vsub.s32 %v1151, %v1153
  %v1155 = vrot.slane %v1123, %v1154
  %1156 = vrot.lane.b32.xlu0 %v1155, 64
  %v1157 = vpop.permute.xlu0 %1156
  %s1159 = scalar_lea.vmem %s5, 6
  %1160 = vst.msk [vmem:[%s1159] sm:$0x3] %vm447, %v1157
  %v1163 = vunpack.c.l.s4 1983009808
  %v1164 = vunpack.c.0.s8 %v1163
  %v1165 = vlaneseq
  %v1166 = vshrl.u32 %v1165, 7
  %v1167 = vsub.s32 %v1164, %v1166
  %v1168 = vrot.slane %v1147, %v1167
  %1169 = vrot.lane.b32.xlu0 %v1168, 96
  %v1170 = vpop.permute.xlu0 %1169
  %s1172 = scalar_lea.vmem %s5, 8
  %1173 = vst.msk [vmem:[%s1172] sm:$0x3] %vm461, %v1170
  %v1174 = vld [vmem:[%s939] sm:$0xf]
  %v1175 = vld [vmem:[%s937] sm:$0xf]
  %v1176 = vld [vmem:[%s2] sm:$0xff]
  %v1177 = vld [vmem:[%s2 + $0x8] sm:$0xff]
  %v1178 = vld [vmem:[%s2 + $0x10] sm:$0xff]
  %v1179 = vld [vmem:[%s2 + $0x18] sm:$0xff]
  %v1180 = vsel %vm235, %v1157, 0
  %1182 = vmatprep.subr.mxu0 0.0
  %1183 = vmatpush1.msra.mxu0 %v1176
  %1184 = vmatprep.subr.mxu0 0.0
  %1185 = vmatpush1.msra.mxu0 %v1177
  %1186 = vmatprep.subr.mxu0 0.0
  %1187 = vmatpush1.msra.mxu0 %v1178
  %1188 = vmatprep.subr.mxu0 0.0
  %1189 = vmatpush1.msra.mxu0 %v1179
  %1190 = vmatprep.subr.mxu0 0.0
  %1191 = vmatpush1.msra.mxu0 0.0
  %1192 = vmatprep.subr.mxu0 0.0
  %1193 = vmatpush1.msra.mxu0 0.0
  %1194 = vmatprep.subr.mxu0 0.0
  %1195 = vmatpush1.msra.mxu0 0.0
  %1196 = vmatprep.subr.mxu0 0.0
  %1197 = vmatpush1.msra.mxu0 0.0
  %1198 = vmatprep.subr.mxu0 0.0
  %1199 = vmatpush1.msra.mxu0 0.0
  %1200 = vmatprep.subr.mxu0 0.0
  %1201 = vmatpush1.msra.mxu0 0.0
  %1202 = vmatprep.subr.mxu0 0.0
  %1203 = vmatpush1.msra.mxu0 0.0
  %1204 = vmatprep.subr.mxu0 0.0
  %1205 = vmatpush1.msra.mxu0 0.0
  %1206 = vmatprep.subr.mxu0 0.0
  %1207 = vmatpush1.msra.mxu0 0.0
  %1208 = vmatprep.subr.mxu0 0.0
  %1209 = vmatpush1.msra.mxu0 0.0
  %1210 = vmatprep.subr.mxu0 0.0
  %1211 = vmatpush1.msra.mxu0 0.0
  %1212 = vmatprep.subr.mxu0 0.0
  %1213 = vmatpush1.msra.mxu0 0.0
  %1214 = vmatprep.subr.mxu0 0.0
  %1215 = vmatpush1.msra.mxu0 0.0
  %1216 = vmatprep.subr.mxu0 0.0
  %1217 = vmatpush1.msra.mxu0 0.0
  %1218 = vmatprep.subr.mxu0 0.0
  %1219 = vmatpush1.msra.mxu0 0.0
  %1220 = vmatprep.subr.mxu0 0.0
  %1221 = vmatpush1.msra.mxu0 0.0
  %1222 = vmatprep.subr.mxu0 0.0
  %1223 = vmatpush1.msra.mxu0 0.0
  %1224 = vmatprep.subr.mxu0 0.0
  %1225 = vmatpush1.msra.mxu0 0.0
  %1226 = vmatprep.subr.mxu0 0.0
  %1227 = vmatpush1.msra.mxu0 0.0
  %1228 = vmatprep.subr.mxu0 0.0
  %1229 = vmatpush1.msra.mxu0 0.0
  %1230 = vmatprep.subr.mxu0 0.0
  %1231 = vmatpush1.msra.mxu0 0.0
  %1232 = vmatprep.subr.mxu0 0.0
  %1233 = vmatpush1.msra.mxu0 0.0
  %1234 = vmatprep.subr.mxu0 0.0
  %1235 = vmatpush1.msra.mxu0 0.0
  %1236 = vmatprep.subr.mxu0 0.0
  %1237 = vmatpush1.msra.mxu0 0.0
  %1238 = vmatprep.subr.mxu0 0.0
  %1239 = vmatpush1.msra.mxu0 0.0
  %1240 = vmatprep.subr.mxu0 0.0
  %1241 = vmatpush1.msra.mxu0 0.0
  %1242 = vmatprep.subr.mxu0 0.0
  %1243 = vmatpush1.msra.mxu0 0.0
  %1244 = vmatprep.subr.mxu0 0.0
  %1245 = vmatpush1.msra.mxu0 0.0
  %1246 = vmatprep.mubr.f32.mxu0 0.0
  %1247 = vmatmul.mubr.f32.gmra.mrb[0].mxu0 %v1180
  %v1248 = vpop.f32.mrb[0].mxu0
  %v1249 = vadd.f32 0.0, %v1248
  %v1250 = vpop.f32.mrb[0].mxu0
  %1251 = vdwg.mxu0
  %v1252 = vadd.f32 %v1174, %v1249
  %v1253 = vld [vmem:[%s3] sm:$0xff]
  %v1254 = vld [vmem:[%s3 + $0x8] sm:$0xff]
  %v1255 = vld [vmem:[%s3 + $0x10] sm:$0xff]
  %v1256 = vld [vmem:[%s3 + $0x18] sm:$0xff]
  %1257 = vrot.lane.b32.xlu0 %v1168, 64
  %v1258 = vpop.permute.xlu0 %1257
  %v1259 = vsel %vm235, %v1258, 0
  %1261 = vmatprep.subr.mxu0 0.0
  %1262 = vmatpush1.msra.mxu0 %v1253
  %1263 = vmatprep.subr.mxu0 0.0
  %1264 = vmatpush1.msra.mxu0 %v1254
  %1265 = vmatprep.subr.mxu0 0.0
  %1266 = vmatpush1.msra.mxu0 %v1255
  %1267 = vmatprep.subr.mxu0 0.0
  %1268 = vmatpush1.msra.mxu0 %v1256
  %1269 = vmatprep.subr.mxu0 0.0
  %1270 = vmatpush1.msra.mxu0 0.0
  %1271 = vmatprep.subr.mxu0 0.0
  %1272 = vmatpush1.msra.mxu0 0.0
  %1273 = vmatprep.subr.mxu0 0.0
  %1274 = vmatpush1.msra.mxu0 0.0
  %1275 = vmatprep.subr.mxu0 0.0
  %1276 = vmatpush1.msra.mxu0 0.0
  %1277 = vmatprep.subr.mxu0 0.0
  %1278 = vmatpush1.msra.mxu0 0.0
  %1279 = vmatprep.subr.mxu0 0.0
  %1280 = vmatpush1.msra.mxu0 0.0
  %1281 = vmatprep.subr.mxu0 0.0
  %1282 = vmatpush1.msra.mxu0 0.0
  %1283 = vmatprep.subr.mxu0 0.0
  %1284 = vmatpush1.msra.mxu0 0.0
  %1285 = vmatprep.subr.mxu0 0.0
  %1286 = vmatpush1.msra.mxu0 0.0
  %1287 = vmatprep.subr.mxu0 0.0
  %1288 = vmatpush1.msra.mxu0 0.0
  %1289 = vmatprep.subr.mxu0 0.0
  %1290 = vmatpush1.msra.mxu0 0.0
  %1291 = vmatprep.subr.mxu0 0.0
  %1292 = vmatpush1.msra.mxu0 0.0
  %1293 = vmatprep.subr.mxu0 0.0
  %1294 = vmatpush1.msra.mxu0 0.0
  %1295 = vmatprep.subr.mxu0 0.0
  %1296 = vmatpush1.msra.mxu0 0.0
  %1297 = vmatprep.subr.mxu0 0.0
  %1298 = vmatpush1.msra.mxu0 0.0
  %1299 = vmatprep.subr.mxu0 0.0
  %1300 = vmatpush1.msra.mxu0 0.0
  %1301 = vmatprep.subr.mxu0 0.0
  %1302 = vmatpush1.msra.mxu0 0.0
  %1303 = vmatprep.subr.mxu0 0.0
  %1304 = vmatpush1.msra.mxu0 0.0
  %1305 = vmatprep.subr.mxu0 0.0
  %1306 = vmatpush1.msra.mxu0 0.0
  %1307 = vmatprep.subr.mxu0 0.0
  %1308 = vmatpush1.msra.mxu0 0.0
  %1309 = vmatprep.subr.mxu0 0.0
  %1310 = vmatpush1.msra.mxu0 0.0
  %1311 = vmatprep.subr.mxu0 0.0
  %1312 = vmatpush1.msra.mxu0 0.0
  %1313 = vmatprep.subr.mxu0 0.0
  %1314 = vmatpush1.msra.mxu0 0.0
  %1315 = vmatprep.subr.mxu0 0.0
  %1316 = vmatpush1.msra.mxu0 0.0
  %1317 = vmatprep.subr.mxu0 0.0
  %1318 = vmatpush1.msra.mxu0 0.0
  %1319 = vmatprep.subr.mxu0 0.0
  %1320 = vmatpush1.msra.mxu0 0.0
  %1321 = vmatprep.subr.mxu0 0.0
  %1322 = vmatpush1.msra.mxu0 0.0
  %1323 = vmatprep.subr.mxu0 0.0
  %1324 = vmatpush1.msra.mxu0 0.0
  %1325 = vmatprep.mubr.f32.mxu0 0.0
  %1326 = vmatmul.mubr.f32.gmra.mrb[0].mxu0 %v1259
  %v1327 = vpop.f32.mrb[0].mxu0
  %v1328 = vadd.f32 0.0, %v1327
  %v1329 = vpop.f32.mrb[0].mxu0
  %1330 = vdwg.mxu0
  %v1332 = vrot.slane %v1175, 2
  %v1334 = vadd.f32 %v1332, %v1328
  %v1335 = vxor.u32 %v1252, 2147483648
  %v1336 = vmul.f32 %v1335, 1.442695
  %v1337 = vpow.pop %v1336
  %v1338 = vadd.f32 %v1337, 1.0
  %v1339 = vrcp.pop %v1338
  %v1340 = vmul.f32 1.0, %v1339
  %v1341 = vtanh.pop %v1252
  %v1342 = vmul.f32 %v1340, %v1117
  %1344 = vrot.lane.b32.xlu0 %v1341, 32
  %v1345 = vpop.permute.xlu0 %1344
  %v1347 = vmul.f32 %v1340, %v1345
  %1349 = vrot.lane.b32.xlu0 %v1347, 32
  %v1350 = vpop.permute.xlu0 %1349
  %v1352 = vadd.f32 %v1342, %v1350
  %v1353 = vtanh.pop %v1352
  %1355 = vrot.lane.b32.xlu0 %v1353, 32
  %v1356 = vpop.permute.xlu0 %1355
  %v1358 = vmul.f32 %v1340, %v1356
  %v1359 = vxor.u32 %v1334, 2147483648
  %v1360 = vmul.f32 %v1359, 1.442695
  %v1361 = vpow.pop %v1360
  %v1362 = vadd.f32 %v1361, 1.0
  %v1363 = vrcp.pop %v1362
  %v1364 = vmul.f32 1.0, %v1363
  %v1365 = vtanh.pop %v1334
  %v1366 = vmul.f32 %v1364, %v1141
  %1368 = vrot.lane.b32.xlu0 %v1365, 32
  %v1369 = vpop.permute.xlu0 %1368
  %v1371 = vmul.f32 %v1364, %v1369
  %1373 = vrot.lane.b32.xlu0 %v1371, 32
  %v1374 = vpop.permute.xlu0 %1373
  %v1376 = vadd.f32 %v1366, %v1374
  %v1377 = vtanh.pop %v1376
  %1379 = vrot.lane.b32.xlu0 %v1377, 32
  %v1380 = vpop.permute.xlu0 %1379
  %v1382 = vmul.f32 %v1364, %v1380
  %v1385 = vunpack.c.l.s4 1983009808
  %v1386 = vunpack.c.0.s8 %v1385
  %v1387 = vlaneseq
  %v1388 = vshrl.u32 %v1387, 7
  %v1389 = vsub.s32 %v1386, %v1388
  %v1390 = vrot.slane %v1358, %v1389
  %1391 = vrot.lane.b32.xlu0 %v1390, 64
  %v1392 = vpop.permute.xlu0 %1391
  %1394 = vst.msk [vmem:[%s1172] sm:$0x3] %vm447, %v1392
  %v1397 = vunpack.c.l.s4 1983009808
  %v1398 = vunpack.c.0.s8 %v1397
  %v1399 = vlaneseq
  %v1400 = vshrl.u32 %v1399, 7
  %v1401 = vsub.s32 %v1398, %v1400
  %v1402 = vrot.slane %v1382, %v1401
  %1403 = vrot.lane.b32.xlu0 %v1402, 96
  %v1404 = vpop.permute.xlu0 %1403
  %1406 = vst.msk [vmem:[%s1159] sm:$0x3] %vm461, %v1404
  %v1407 = vld [vmem:[%s702] sm:$0xf]
  %v1408 = vld [vmem:[%s700] sm:$0xf]
  %v1409 = vld [vmem:[%s2] sm:$0xff]
  %v1410 = vld [vmem:[%s2 + $0x8] sm:$0xff]
  %v1411 = vld [vmem:[%s2 + $0x10] sm:$0xff]
  %v1412 = vld [vmem:[%s2 + $0x18] sm:$0xff]
  %v1413 = vsel %vm235, %v1392, 0
  %1415 = vmatprep.subr.mxu0 0.0
  %1416 = vmatpush1.msra.mxu0 %v1409
  %1417 = vmatprep.subr.mxu0 0.0
  %1418 = vmatpush1.msra.mxu0 %v1410
  %1419 = vmatprep.subr.mxu0 0.0
  %1420 = vmatpush1.msra.mxu0 %v1411
  %1421 = vmatprep.subr.mxu0 0.0
  %1422 = vmatpush1.msra.mxu0 %v1412
  %1423 = vmatprep.subr.mxu0 0.0
  %1424 = vmatpush1.msra.mxu0 0.0
  %1425 = vmatprep.subr.mxu0 0.0
  %1426 = vmatpush1.msra.mxu0 0.0
  %1427 = vmatprep.subr.mxu0 0.0
  %1428 = vmatpush1.msra.mxu0 0.0
  %1429 = vmatprep.subr.mxu0 0.0
  %1430 = vmatpush1.msra.mxu0 0.0
  %1431 = vmatprep.subr.mxu0 0.0
  %1432 = vmatpush1.msra.mxu0 0.0
  %1433 = vmatprep.subr.mxu0 0.0
  %1434 = vmatpush1.msra.mxu0 0.0
  %1435 = vmatprep.subr.mxu0 0.0
  %1436 = vmatpush1.msra.mxu0 0.0
  %1437 = vmatprep.subr.mxu0 0.0
  %1438 = vmatpush1.msra.mxu0 0.0
  %1439 = vmatprep.subr.mxu0 0.0
  %1440 = vmatpush1.msra.mxu0 0.0
  %1441 = vmatprep.subr.mxu0 0.0
  %1442 = vmatpush1.msra.mxu0 0.0
  %1443 = vmatprep.subr.mxu0 0.0
  %1444 = vmatpush1.msra.mxu0 0.0
  %1445 = vmatprep.subr.mxu0 0.0
  %1446 = vmatpush1.msra.mxu0 0.0
  %1447 = vmatprep.subr.mxu0 0.0
  %1448 = vmatpush1.msra.mxu0 0.0
  %1449 = vmatprep.subr.mxu0 0.0
  %1450 = vmatpush1.msra.mxu0 0.0
  %1451 = vmatprep.subr.mxu0 0.0
  %1452 = vmatpush1.msra.mxu0 0.0
  %1453 = vmatprep.subr.mxu0 0.0
  %1454 = vmatpush1.msra.mxu0 0.0
  %1455 = vmatprep.subr.mxu0 0.0
  %1456 = vmatpush1.msra.mxu0 0.0
  %1457 = vmatprep.subr.mxu0 0.0
  %1458 = vmatpush1.msra.mxu0 0.0
  %1459 = vmatprep.subr.mxu0 0.0
  %1460 = vmatpush1.msra.mxu0 0.0
  %1461 = vmatprep.subr.mxu0 0.0
  %1462 = vmatpush1.msra.mxu0 0.0
  %1463 = vmatprep.subr.mxu0 0.0
  %1464 = vmatpush1.msra.mxu0 0.0
  %1465 = vmatprep.subr.mxu0 0.0
  %1466 = vmatpush1.msra.mxu0 0.0
  %1467 = vmatprep.subr.mxu0 0.0
  %1468 = vmatpush1.msra.mxu0 0.0
  %1469 = vmatprep.subr.mxu0 0.0
  %1470 = vmatpush1.msra.mxu0 0.0
  %1471 = vmatprep.subr.mxu0 0.0
  %1472 = vmatpush1.msra.mxu0 0.0
  %1473 = vmatprep.subr.mxu0 0.0
  %1474 = vmatpush1.msra.mxu0 0.0
  %1475 = vmatprep.subr.mxu0 0.0
  %1476 = vmatpush1.msra.mxu0 0.0
  %1477 = vmatprep.subr.mxu0 0.0
  %1478 = vmatpush1.msra.mxu0 0.0
  %1479 = vmatprep.mubr.f32.mxu0 0.0
  %1480 = vmatmul.mubr.f32.gmra.mrb[0].mxu0 %v1413
  %v1481 = vpop.f32.mrb[0].mxu0
  %v1482 = vadd.f32 0.0, %v1481
  %v1483 = vpop.f32.mrb[0].mxu0
  %1484 = vdwg.mxu0
  %v1485 = vadd.f32 %v1407, %v1482
  %v1486 = vld [vmem:[%s3] sm:$0xff]
  %v1487 = vld [vmem:[%s3 + $0x8] sm:$0xff]
  %v1488 = vld [vmem:[%s3 + $0x10] sm:$0xff]
  %v1489 = vld [vmem:[%s3 + $0x18] sm:$0xff]
  %1490 = vrot.lane.b32.xlu0 %v1402, 64
  %v1491 = vpop.permute.xlu0 %1490
  %v1492 = vsel %vm235, %v1491, 0
  %1494 = vmatprep.subr.mxu0 0.0
  %1495 = vmatpush1.msra.mxu0 %v1486
  %1496 = vmatprep.subr.mxu0 0.0
  %1497 = vmatpush1.msra.mxu0 %v1487
  %1498 = vmatprep.subr.mxu0 0.0
  %1499 = vmatpush1.msra.mxu0 %v1488
  %1500 = vmatprep.subr.mxu0 0.0
  %1501 = vmatpush1.msra.mxu0 %v1489
  %1502 = vmatprep.subr.mxu0 0.0
  %1503 = vmatpush1.msra.mxu0 0.0
  %1504 = vmatprep.subr.mxu0 0.0
  %1505 = vmatpush1.msra.mxu0 0.0
  %1506 = vmatprep.subr.mxu0 0.0
  %1507 = vmatpush1.msra.mxu0 0.0
  %1508 = vmatprep.subr.mxu0 0.0
  %1509 = vmatpush1.msra.mxu0 0.0
  %1510 = vmatprep.subr.mxu0 0.0
  %1511 = vmatpush1.msra.mxu0 0.0
  %1512 = vmatprep.subr.mxu0 0.0
  %1513 = vmatpush1.msra.mxu0 0.0
  %1514 = vmatprep.subr.mxu0 0.0
  %1515 = vmatpush1.msra.mxu0 0.0
  %1516 = vmatprep.subr.mxu0 0.0
  %1517 = vmatpush1.msra.mxu0 0.0
  %1518 = vmatprep.subr.mxu0 0.0
  %1519 = vmatpush1.msra.mxu0 0.0
  %1520 = vmatprep.subr.mxu0 0.0
  %1521 = vmatpush1.msra.mxu0 0.0
  %1522 = vmatprep.subr.mxu0 0.0
  %1523 = vmatpush1.msra.mxu0 0.0
  %1524 = vmatprep.subr.mxu0 0.0
  %1525 = vmatpush1.msra.mxu0 0.0
  %1526 = vmatprep.subr.mxu0 0.0
  %1527 = vmatpush1.msra.mxu0 0.0
  %1528 = vmatprep.subr.mxu0 0.0
  %1529 = vmatpush1.msra.mxu0 0.0
  %1530 = vmatprep.subr.mxu0 0.0
  %1531 = vmatpush1.msra.mxu0 0.0
  %1532 = vmatprep.subr.mxu0 0.0
  %1533 = vmatpush1.msra.mxu0 0.0
  %1534 = vmatprep.subr.mxu0 0.0
  %1535 = vmatpush1.msra.mxu0 0.0
  %1536 = vmatprep.subr.mxu0 0.0
  %1537 = vmatpush1.msra.mxu0 0.0
  %1538 = vmatprep.subr.mxu0 0.0
  %1539 = vmatpush1.msra.mxu0 0.0
  %1540 = vmatprep.subr.mxu0 0.0
  %1541 = vmatpush1.msra.mxu0 0.0
  %1542 = vmatprep.subr.mxu0 0.0
  %1543 = vmatpush1.msra.mxu0 0.0
  %1544 = vmatprep.subr.mxu0 0.0
  %1545 = vmatpush1.msra.mxu0 0.0
  %1546 = vmatprep.subr.mxu0 0.0
  %1547 = vmatpush1.msra.mxu0 0.0
  %1548 = vmatprep.subr.mxu0 0.0
  %1549 = vmatpush1.msra.mxu0 0.0
  %1550 = vmatprep.subr.mxu0 0.0
  %1551 = vmatpush1.msra.mxu0 0.0
  %1552 = vmatprep.subr.mxu0 0.0
  %1553 = vmatpush1.msra.mxu0 0.0
  %1554 = vmatprep.subr.mxu0 0.0
  %1555 = vmatpush1.msra.mxu0 0.0
  %1556 = vmatprep.subr.mxu0 0.0
  %1557 = vmatpush1.msra.mxu0 0.0
  %1558 = vmatprep.mubr.f32.mxu0 0.0
  %1559 = vmatmul.mubr.f32.gmra.mrb[0].mxu0 %v1492
  %v1560 = vpop.f32.mrb[0].mxu0
  %v1561 = vadd.f32 0.0, %v1560
  %v1562 = vpop.f32.mrb[0].mxu0
  %1563 = vdwg.mxu0
  %v1565 = vrot.slane %v1408, 2
  %v1567 = vadd.f32 %v1565, %v1561
  %v1568 = vxor.u32 %v1485, 2147483648
  %v1569 = vmul.f32 %v1568, 1.442695
  %v1570 = vpow.pop %v1569
  %v1571 = vadd.f32 %v1570, 1.0
  %v1572 = vrcp.pop %v1571
  %v1573 = vmul.f32 1.0, %v1572
  %v1574 = vtanh.pop %v1485
  %v1575 = vmul.f32 %v1573, %v1352
  %1577 = vrot.lane.b32.xlu0 %v1574, 32
  %v1578 = vpop.permute.xlu0 %1577
  %v1580 = vmul.f32 %v1573, %v1578
  %1582 = vrot.lane.b32.xlu0 %v1580, 32
  %v1583 = vpop.permute.xlu0 %1582
  %v1585 = vadd.f32 %v1575, %v1583
  %v1586 = vtanh.pop %v1585
  %1588 = vrot.lane.b32.xlu0 %v1586, 32
  %v1589 = vpop.permute.xlu0 %1588
  %v1591 = vmul.f32 %v1573, %v1589
  %v1592 = vxor.u32 %v1567, 2147483648
  %v1593 = vmul.f32 %v1592, 1.442695
  %v1594 = vpow.pop %v1593
  %v1595 = vadd.f32 %v1594, 1.0
  %v1596 = vrcp.pop %v1595
  %v1597 = vmul.f32 1.0, %v1596
  %v1598 = vtanh.pop %v1567
  %v1599 = vmul.f32 %v1597, %v1376
  %1601 = vrot.lane.b32.xlu0 %v1598, 32
  %v1602 = vpop.permute.xlu0 %1601
  %v1604 = vmul.f32 %v1597, %v1602
  %1606 = vrot.lane.b32.xlu0 %v1604, 32
  %v1607 = vpop.permute.xlu0 %1606
  %v1609 = vadd.f32 %v1599, %v1607
  %v1610 = vtanh.pop %v1609
  %1612 = vrot.lane.b32.xlu0 %v1610, 32
  %v1613 = vpop.permute.xlu0 %1612
  %v1615 = vmul.f32 %v1597, %v1613
  %v1618 = vunpack.c.l.s4 1983009808
  %v1619 = vunpack.c.0.s8 %v1618
  %v1620 = vlaneseq
  %v1621 = vshrl.u32 %v1620, 7
  %v1622 = vsub.s32 %v1619, %v1621
  %v1623 = vrot.slane %v1591, %v1622
  %1624 = vrot.lane.b32.xlu0 %v1623, 64
  %v1625 = vpop.permute.xlu0 %1624
  %1627 = vst.msk [vmem:[%s935] sm:$0x3] %vm447, %v1625
  %v1630 = vunpack.c.l.s4 1983009808
  %v1631 = vunpack.c.0.s8 %v1630
  %v1632 = vlaneseq
  %v1633 = vshrl.u32 %v1632, 7
  %v1634 = vsub.s32 %v1631, %v1633
  %v1635 = vrot.slane %v1615, %v1634
  %1636 = vrot.lane.b32.xlu0 %v1635, 96
  %v1637 = vpop.permute.xlu0 %1636
  %1639 = vst.msk [vmem:[%s922] sm:$0x3] %vm461, %v1637
  %v1640 = vld [vmem:[%s465] sm:$0xf]
  %v1641 = vld [vmem:[%s463] sm:$0xf]
  %v1642 = vld [vmem:[%s2] sm:$0xff]
  %v1643 = vld [vmem:[%s2 + $0x8] sm:$0xff]
  %v1644 = vld [vmem:[%s2 + $0x10] sm:$0xff]
  %v1645 = vld [vmem:[%s2 + $0x18] sm:$0xff]
  %v1646 = vsel %vm235, %v1625, 0
  %1648 = vmatprep.subr.mxu0 0.0
  %1649 = vmatpush1.msra.mxu0 %v1642
  %1650 = vmatprep.subr.mxu0 0.0
  %1651 = vmatpush1.msra.mxu0 %v1643
  %1652 = vmatprep.subr.mxu0 0.0
  %1653 = vmatpush1.msra.mxu0 %v1644
  %1654 = vmatprep.subr.mxu0 0.0
  %1655 = vmatpush1.msra.mxu0 %v1645
  %1656 = vmatprep.subr.mxu0 0.0
  %1657 = vmatpush1.msra.mxu0 0.0
  %1658 = vmatprep.subr.mxu0 0.0
  %1659 = vmatpush1.msra.mxu0 0.0
  %1660 = vmatprep.subr.mxu0 0.0
  %1661 = vmatpush1.msra.mxu0 0.0
  %1662 = vmatprep.subr.mxu0 0.0
  %1663 = vmatpush1.msra.mxu0 0.0
  %1664 = vmatprep.subr.mxu0 0.0
  %1665 = vmatpush1.msra.mxu0 0.0
  %1666 = vmatprep.subr.mxu0 0.0
  %1667 = vmatpush1.msra.mxu0 0.0
  %1668 = vmatprep.subr.mxu0 0.0
  %1669 = vmatpush1.msra.mxu0 0.0
  %1670 = vmatprep.subr.mxu0 0.0
  %1671 = vmatpush1.msra.mxu0 0.0
  %1672 = vmatprep.subr.mxu0 0.0
  %1673 = vmatpush1.msra.mxu0 0.0
  %1674 = vmatprep.subr.mxu0 0.0
  %1675 = vmatpush1.msra.mxu0 0.0
  %1676 = vmatprep.subr.mxu0 0.0
  %1677 = vmatpush1.msra.mxu0 0.0
  %1678 = vmatprep.subr.mxu0 0.0
  %1679 = vmatpush1.msra.mxu0 0.0
  %1680 = vmatprep.subr.mxu0 0.0
  %1681 = vmatpush1.msra.mxu0 0.0
  %1682 = vmatprep.subr.mxu0 0.0
  %1683 = vmatpush1.msra.mxu0 0.0
  %1684 = vmatprep.subr.mxu0 0.0
  %1685 = vmatpush1.msra.mxu0 0.0
  %1686 = vmatprep.subr.mxu0 0.0
  %1687 = vmatpush1.msra.mxu0 0.0
  %1688 = vmatprep.subr.mxu0 0.0
  %1689 = vmatpush1.msra.mxu0 0.0
  %1690 = vmatprep.subr.mxu0 0.0
  %1691 = vmatpush1.msra.mxu0 0.0
  %1692 = vmatprep.subr.mxu0 0.0
  %1693 = vmatpush1.msra.mxu0 0.0
  %1694 = vmatprep.subr.mxu0 0.0
  %1695 = vmatpush1.msra.mxu0 0.0
  %1696 = vmatprep.subr.mxu0 0.0
  %1697 = vmatpush1.msra.mxu0 0.0
  %1698 = vmatprep.subr.mxu0 0.0
  %1699 = vmatpush1.msra.mxu0 0.0
  %1700 = vmatprep.subr.mxu0 0.0
  %1701 = vmatpush1.msra.mxu0 0.0
  %1702 = vmatprep.subr.mxu0 0.0
  %1703 = vmatpush1.msra.mxu0 0.0
  %1704 = vmatprep.subr.mxu0 0.0
  %1705 = vmatpush1.msra.mxu0 0.0
  %1706 = vmatprep.subr.mxu0 0.0
  %1707 = vmatpush1.msra.mxu0 0.0
  %1708 = vmatprep.subr.mxu0 0.0
  %1709 = vmatpush1.msra.mxu0 0.0
  %1710 = vmatprep.subr.mxu0 0.0
  %1711 = vmatpush1.msra.mxu0 0.0
  %1712 = vmatprep.mubr.f32.mxu0 0.0
  %1713 = vmatmul.mubr.f32.gmra.mrb[0].mxu0 %v1646
  %v1714 = vpop.f32.mrb[0].mxu0
  %v1715 = vadd.f32 0.0, %v1714
  %v1716 = vpop.f32.mrb[0].mxu0
  %1717 = vdwg.mxu0
  %v1718 = vadd.f32 %v1640, %v1715
  %v1719 = vld [vmem:[%s3] sm:$0xff]
  %v1720 = vld [vmem:[%s3 + $0x8] sm:$0xff]
  %v1721 = vld [vmem:[%s3 + $0x10] sm:$0xff]
  %v1722 = vld [vmem:[%s3 + $0x18] sm:$0xff]
  %1723 = vrot.lane.b32.xlu0 %v1635, 64
  %v1724 = vpop.permute.xlu0 %1723
  %v1725 = vsel %vm235, %v1724, 0
  %1727 = vmatprep.subr.mxu0 0.0
  %1728 = vmatpush1.msra.mxu0 %v1719
  %1729 = vmatprep.subr.mxu0 0.0
  %1730 = vmatpush1.msra.mxu0 %v1720
  %1731 = vmatprep.subr.mxu0 0.0
  %1732 = vmatpush1.msra.mxu0 %v1721
  %1733 = vmatprep.subr.mxu0 0.0
  %1734 = vmatpush1.msra.mxu0 %v1722
  %1735 = vmatprep.subr.mxu0 0.0
  %1736 = vmatpush1.msra.mxu0 0.0
  %1737 = vmatprep.subr.mxu0 0.0
  %1738 = vmatpush1.msra.mxu0 0.0
  %1739 = vmatprep.subr.mxu0 0.0
  %1740 = vmatpush1.msra.mxu0 0.0
  %1741 = vmatprep.subr.mxu0 0.0
  %1742 = vmatpush1.msra.mxu0 0.0
  %1743 = vmatprep.subr.mxu0 0.0
  %1744 = vmatpush1.msra.mxu0 0.0
  %1745 = vmatprep.subr.mxu0 0.0
  %1746 = vmatpush1.msra.mxu0 0.0
  %1747 = vmatprep.subr.mxu0 0.0
  %1748 = vmatpush1.msra.mxu0 0.0
  %1749 = vmatprep.subr.mxu0 0.0
  %1750 = vmatpush1.msra.mxu0 0.0
  %1751 = vmatprep.subr.mxu0 0.0
  %1752 = vmatpush1.msra.mxu0 0.0
  %1753 = vmatprep.subr.mxu0 0.0
  %1754 = vmatpush1.msra.mxu0 0.0
  %1755 = vmatprep.subr.mxu0 0.0
  %1756 = vmatpush1.msra.mxu0 0.0
  %1757 = vmatprep.subr.mxu0 0.0
  %1758 = vmatpush1.msra.mxu0 0.0
  %1759 = vmatprep.subr.mxu0 0.0
  %1760 = vmatpush1.msra.mxu0 0.0
  %1761 = vmatprep.subr.mxu0 0.0
  %1762 = vmatpush1.msra.mxu0 0.0
  %1763 = vmatprep.subr.mxu0 0.0
  %1764 = vmatpush1.msra.mxu0 0.0
  %1765 = vmatprep.subr.mxu0 0.0
  %1766 = vmatpush1.msra.mxu0 0.0
  %1767 = vmatprep.subr.mxu0 0.0
  %1768 = vmatpush1.msra.mxu0 0.0
  %1769 = vmatprep.subr.mxu0 0.0
  %1770 = vmatpush1.msra.mxu0 0.0
  %1771 = vmatprep.subr.mxu0 0.0
  %1772 = vmatpush1.msra.mxu0 0.0
  %1773 = vmatprep.subr.mxu0 0.0
  %1774 = vmatpush1.msra.mxu0 0.0
  %1775 = vmatprep.subr.mxu0 0.0
  %1776 = vmatpush1.msra.mxu0 0.0
  %1777 = vmatprep.subr.mxu0 0.0
  %1778 = vmatpush1.msra.mxu0 0.0
  %1779 = vmatprep.subr.mxu0 0.0
  %1780 = vmatpush1.msra.mxu0 0.0
  %1781 = vmatprep.subr.mxu0 0.0
  %1782 = vmatpush1.msra.mxu0 0.0
  %1783 = vmatprep.subr.mxu0 0.0
  %1784 = vmatpush1.msra.mxu0 0.0
  %1785 = vmatprep.subr.mxu0 0.0
  %1786 = vmatpush1.msra.mxu0 0.0
  %1787 = vmatprep.subr.mxu0 0.0
  %1788 = vmatpush1.msra.mxu0 0.0
  %1789 = vmatprep.subr.mxu0 0.0
  %1790 = vmatpush1.msra.mxu0 0.0
  %1791 = vmatprep.mubr.f32.mxu0 0.0
  %1792 = vmatmul.mubr.f32.gmra.mrb[0].mxu0 %v1725
  %v1793 = vpop.f32.mrb[0].mxu0
  %v1794 = vadd.f32 0.0, %v1793
  %v1795 = vpop.f32.mrb[0].mxu0
  %1796 = vdwg.mxu0
  %v1798 = vrot.slane %v1641, 2
  %v1800 = vadd.f32 %v1798, %v1794
  %v1801 = vxor.u32 %v1718, 2147483648
  %v1802 = vmul.f32 %v1801, 1.442695
  %v1803 = vpow.pop %v1802
  %v1804 = vadd.f32 %v1803, 1.0
  %v1805 = vrcp.pop %v1804
  %v1806 = vmul.f32 1.0, %v1805
  %v1807 = vtanh.pop %v1718
  %v1808 = vmul.f32 %v1806, %v1585
  %1810 = vrot.lane.b32.xlu0 %v1807, 32
  %v1811 = vpop.permute.xlu0 %1810
  %v1813 = vmul.f32 %v1806, %v1811
  %1815 = vrot.lane.b32.xlu0 %v1813, 32
  %v1816 = vpop.permute.xlu0 %1815
  %v1818 = vadd.f32 %v1808, %v1816
  %v1819 = vtanh.pop %v1818
  %1821 = vrot.lane.b32.xlu0 %v1819, 32
  %v1822 = vpop.permute.xlu0 %1821
  %v1824 = vmul.f32 %v1806, %v1822
  %v1825 = vxor.u32 %v1800, 2147483648
  %v1826 = vmul.f32 %v1825, 1.442695
  %v1827 = vpow.pop %v1826
  %v1828 = vadd.f32 %v1827, 1.0
  %v1829 = vrcp.pop %v1828
  %v1830 = vmul.f32 1.0, %v1829
  %v1831 = vtanh.pop %v1800
  %v1832 = vmul.f32 %v1830, %v1609
  %1834 = vrot.lane.b32.xlu0 %v1831, 32
  %v1835 = vpop.permute.xlu0 %1834
  %v1837 = vmul.f32 %v1830, %v1835
  %1839 = vrot.lane.b32.xlu0 %v1837, 32
  %v1840 = vpop.permute.xlu0 %1839
  %v1842 = vadd.f32 %v1832, %v1840
  %v1843 = vtanh.pop %v1842
  %1845 = vrot.lane.b32.xlu0 %v1843, 32
  %v1846 = vpop.permute.xlu0 %1845
  %v1848 = vmul.f32 %v1830, %v1846
  %v1851 = vunpack.c.l.s4 1983009808
  %v1852 = vunpack.c.0.s8 %v1851
  %v1853 = vlaneseq
  %v1854 = vshrl.u32 %v1853, 7
  %v1855 = vsub.s32 %v1852, %v1854
  %v1856 = vrot.slane %v1824, %v1855
  %1857 = vrot.lane.b32.xlu0 %v1856, 64
  %v1858 = vpop.permute.xlu0 %1857
  %1860 = vst.msk [vmem:[%s698] sm:$0x3] %vm447, %v1858
  %v1863 = vunpack.c.l.s4 1983009808
  %v1864 = vunpack.c.0.s8 %v1863
  %v1865 = vlaneseq
  %v1866 = vshrl.u32 %v1865, 7
  %v1867 = vsub.s32 %v1864, %v1866
  %v1868 = vrot.slane %v1848, %v1867
  %1869 = vrot.lane.b32.xlu0 %v1868, 96
  %v1870 = vpop.permute.xlu0 %1869
  %1872 = vst.msk [vmem:[%s685] sm:$0x3] %vm461, %v1870
  %v1873 = vld [vmem:[%s229] sm:$0xf]
  %v1874 = vld [vmem:[#allocation2] sm:$0xf]
  %v1875 = vld [vmem:[%s2] sm:$0xff]
  %v1876 = vld [vmem:[%s2 + $0x8] sm:$0xff]
  %v1877 = vld [vmem:[%s2 + $0x10] sm:$0xff]
  %v1878 = vld [vmem:[%s2 + $0x18] sm:$0xff]
  %v1879 = vsel %vm235, %v1858, 0
  %1881 = vmatprep.subr.mxu0 0.0
  %1882 = vmatpush1.msra.mxu0 %v1875
  %1883 = vmatprep.subr.mxu0 0.0
  %1884 = vmatpush1.msra.mxu0 %v1876
  %1885 = vmatprep.subr.mxu0 0.0
  %1886 = vmatpush1.msra.mxu0 %v1877
  %1887 = vmatprep.subr.mxu0 0.0
  %1888 = vmatpush1.msra.mxu0 %v1878
  %1889 = vmatprep.subr.mxu0 0.0
  %1890 = vmatpush1.msra.mxu0 0.0
  %1891 = vmatprep.subr.mxu0 0.0
  %1892 = vmatpush1.msra.mxu0 0.0
  %1893 = vmatprep.subr.mxu0 0.0
  %1894 = vmatpush1.msra.mxu0 0.0
  %1895 = vmatprep.subr.mxu0 0.0
  %1896 = vmatpush1.msra.mxu0 0.0
  %1897 = vmatprep.subr.mxu0 0.0
  %1898 = vmatpush1.msra.mxu0 0.0
  %1899 = vmatprep.subr.mxu0 0.0
  %1900 = vmatpush1.msra.mxu0 0.0
  %1901 = vmatprep.subr.mxu0 0.0
  %1902 = vmatpush1.msra.mxu0 0.0
  %1903 = vmatprep.subr.mxu0 0.0
  %1904 = vmatpush1.msra.mxu0 0.0
  %1905 = vmatprep.subr.mxu0 0.0
  %1906 = vmatpush1.msra.mxu0 0.0
  %1907 = vmatprep.subr.mxu0 0.0
  %1908 = vmatpush1.msra.mxu0 0.0
  %1909 = vmatprep.subr.mxu0 0.0
  %1910 = vmatpush1.msra.mxu0 0.0
  %1911 = vmatprep.subr.mxu0 0.0
  %1912 = vmatpush1.msra.mxu0 0.0
  %1913 = vmatprep.subr.mxu0 0.0
  %1914 = vmatpush1.msra.mxu0 0.0
  %1915 = vmatprep.subr.mxu0 0.0
  %1916 = vmatpush1.msra.mxu0 0.0
  %1917 = vmatprep.subr.mxu0 0.0
  %1918 = vmatpush1.msra.mxu0 0.0
  %1919 = vmatprep.subr.mxu0 0.0
  %1920 = vmatpush1.msra.mxu0 0.0
  %1921 = vmatprep.subr.mxu0 0.0
  %1922 = vmatpush1.msra.mxu0 0.0
  %1923 = vmatprep.subr.mxu0 0.0
  %1924 = vmatpush1.msra.mxu0 0.0
  %1925 = vmatprep.subr.mxu0 0.0
  %1926 = vmatpush1.msra.mxu0 0.0
  %1927 = vmatprep.subr.mxu0 0.0
  %1928 = vmatpush1.msra.mxu0 0.0
  %1929 = vmatprep.subr.mxu0 0.0
  %1930 = vmatpush1.msra.mxu0 0.0
  %1931 = vmatprep.subr.mxu0 0.0
  %1932 = vmatpush1.msra.mxu0 0.0
  %1933 = vmatprep.subr.mxu0 0.0
  %1934 = vmatpush1.msra.mxu0 0.0
  %1935 = vmatprep.subr.mxu0 0.0
  %1936 = vmatpush1.msra.mxu0 0.0
  %1937 = vmatprep.subr.mxu0 0.0
  %1938 = vmatpush1.msra.mxu0 0.0
  %1939 = vmatprep.subr.mxu0 0.0
  %1940 = vmatpush1.msra.mxu0 0.0
  %1941 = vmatprep.subr.mxu0 0.0
  %1942 = vmatpush1.msra.mxu0 0.0
  %1943 = vmatprep.subr.mxu0 0.0
  %1944 = vmatpush1.msra.mxu0 0.0
  %1945 = vmatprep.mubr.f32.mxu0 0.0
  %1946 = vmatmul.mubr.f32.gmra.mrb[0].mxu0 %v1879
  %v1947 = vpop.f32.mrb[0].mxu0
  %v1948 = vadd.f32 0.0, %v1947
  %v1949 = vpop.f32.mrb[0].mxu0
  %1950 = vdwg.mxu0
  %v1951 = vadd.f32 %v1873, %v1948
  %v1952 = vld [vmem:[%s3] sm:$0xff]
  %v1953 = vld [vmem:[%s3 + $0x8] sm:$0xff]
  %v1954 = vld [vmem:[%s3 + $0x10] sm:$0xff]
  %v1955 = vld [vmem:[%s3 + $0x18] sm:$0xff]
  %1956 = vrot.lane.b32.xlu0 %v1868, 64
  %v1957 = vpop.permute.xlu0 %1956
  %v1958 = vsel %vm235, %v1957, 0
  %1960 = vmatprep.subr.mxu0 0.0
  %1961 = vmatpush1.msra.mxu0 %v1952
  %1962 = vmatprep.subr.mxu0 0.0
  %1963 = vmatpush1.msra.mxu0 %v1953
  %1964 = vmatprep.subr.mxu0 0.0
  %1965 = vmatpush1.msra.mxu0 %v1954
  %1966 = vmatprep.subr.mxu0 0.0
  %1967 = vmatpush1.msra.mxu0 %v1955
  %1968 = vmatprep.subr.mxu0 0.0
  %1969 = vmatpush1.msra.mxu0 0.0
  %1970 = vmatprep.subr.mxu0 0.0
  %1971 = vmatpush1.msra.mxu0 0.0
  %1972 = vmatprep.subr.mxu0 0.0
  %1973 = vmatpush1.msra.mxu0 0.0
  %1974 = vmatprep.subr.mxu0 0.0
  %1975 = vmatpush1.msra.mxu0 0.0
  %1976 = vmatprep.subr.mxu0 0.0
  %1977 = vmatpush1.msra.mxu0 0.0
  %1978 = vmatprep.subr.mxu0 0.0
  %1979 = vmatpush1.msra.mxu0 0.0
  %1980 = vmatprep.subr.mxu0 0.0
  %1981 = vmatpush1.msra.mxu0 0.0
  %1982 = vmatprep.subr.mxu0 0.0
  %1983 = vmatpush1.msra.mxu0 0.0
  %1984 = vmatprep.subr.mxu0 0.0
  %1985 = vmatpush1.msra.mxu0 0.0
  %1986 = vmatprep.subr.mxu0 0.0
  %1987 = vmatpush1.msra.mxu0 0.0
  %1988 = vmatprep.subr.mxu0 0.0
  %1989 = vmatpush1.msra.mxu0 0.0
  %1990 = vmatprep.subr.mxu0 0.0
  %1991 = vmatpush1.msra.mxu0 0.0
  %1992 = vmatprep.subr.mxu0 0.0
  %1993 = vmatpush1.msra.mxu0 0.0
  %1994 = vmatprep.subr.mxu0 0.0
  %1995 = vmatpush1.msra.mxu0 0.0
  %1996 = vmatprep.subr.mxu0 0.0
  %1997 = vmatpush1.msra.mxu0 0.0
  %1998 = vmatprep.subr.mxu0 0.0
  %1999 = vmatpush1.msra.mxu0 0.0
  %2000 = vmatprep.subr.mxu0 0.0
  %2001 = vmatpush1.msra.mxu0 0.0
  %2002 = vmatprep.subr.mxu0 0.0
  %2003 = vmatpush1.msra.mxu0 0.0
  %2004 = vmatprep.subr.mxu0 0.0
  %2005 = vmatpush1.msra.mxu0 0.0
  %2006 = vmatprep.subr.mxu0 0.0
  %2007 = vmatpush1.msra.mxu0 0.0
  %2008 = vmatprep.subr.mxu0 0.0
  %2009 = vmatpush1.msra.mxu0 0.0
  %2010 = vmatprep.subr.mxu0 0.0
  %2011 = vmatpush1.msra.mxu0 0.0
  %2012 = vmatprep.subr.mxu0 0.0
  %2013 = vmatpush1.msra.mxu0 0.0
  %2014 = vmatprep.subr.mxu0 0.0
  %2015 = vmatpush1.msra.mxu0 0.0
  %2016 = vmatprep.subr.mxu0 0.0
  %2017 = vmatpush1.msra.mxu0 0.0
  %2018 = vmatprep.subr.mxu0 0.0
  %2019 = vmatpush1.msra.mxu0 0.0
  %2020 = vmatprep.subr.mxu0 0.0
  %2021 = vmatpush1.msra.mxu0 0.0
  %2022 = vmatprep.subr.mxu0 0.0
  %2023 = vmatpush1.msra.mxu0 0.0
  %2024 = vmatprep.mubr.f32.mxu0 0.0
  %2025 = vmatmul.mubr.f32.gmra.mrb[0].mxu0 %v1958
  %v2026 = vpop.f32.mrb[0].mxu0
  %v2027 = vadd.f32 0.0, %v2026
  %v2028 = vpop.f32.mrb[0].mxu0
  %2029 = vdwg.mxu0
  %v2031 = vrot.slane %v1874, 2
  %v2033 = vadd.f32 %v2031, %v2027
  %v2034 = vxor.u32 %v1951, 2147483648
  %v2035 = vmul.f32 %v2034, 1.442695
  %v2036 = vpow.pop %v2035
  %v2037 = vadd.f32 %v2036, 1.0
  %v2038 = vrcp.pop %v2037
  %v2039 = vmul.f32 1.0, %v2038
  %v2040 = vtanh.pop %v1951
  %v2041 = vmul.f32 %v2039, %v1818
  %2043 = vrot.lane.b32.xlu0 %v2040, 32
  %v2044 = vpop.permute.xlu0 %2043
  %v2046 = vmul.f32 %v2039, %v2044
  %2048 = vrot.lane.b32.xlu0 %v2046, 32
  %v2049 = vpop.permute.xlu0 %2048
  %v2051 = vadd.f32 %v2041, %v2049
  %v2052 = vtanh.pop %v2051
  %2054 = vrot.lane.b32.xlu0 %v2052, 32
  %v2055 = vpop.permute.xlu0 %2054
  %v2057 = vmul.f32 %v2039, %v2055
  %v2058 = vxor.u32 %v2033, 2147483648
  %v2059 = vmul.f32 %v2058, 1.442695
  %v2060 = vpow.pop %v2059
  %v2061 = vadd.f32 %v2060, 1.0
  %v2062 = vrcp.pop %v2061
  %v2063 = vmul.f32 1.0, %v2062
  %v2064 = vtanh.pop %v2033
  %v2065 = vmul.f32 %v2063, %v1842
  %2067 = vrot.lane.b32.xlu0 %v2064, 32
  %v2068 = vpop.permute.xlu0 %2067
  %v2070 = vmul.f32 %v2063, %v2068
  %2072 = vrot.lane.b32.xlu0 %v2070, 32
  %v2073 = vpop.permute.xlu0 %2072
  %v2075 = vadd.f32 %v2065, %v2073
  %v2076 = vtanh.pop %v2075
  %2078 = vrot.lane.b32.xlu0 %v2076, 32
  %v2079 = vpop.permute.xlu0 %2078
  %v2081 = vmul.f32 %v2063, %v2079
  %v2084 = vunpack.c.l.s4 1983009808
  %v2085 = vunpack.c.0.s8 %v2084
  %v2086 = vlaneseq
  %v2087 = vshrl.u32 %v2086, 7
  %v2088 = vsub.s32 %v2085, %v2087
  %v2089 = vrot.slane %v2057, %v2088
  %2090 = vrot.lane.b32.xlu0 %v2089, 64
  %v2091 = vpop.permute.xlu0 %2090
  %2093 = vst.msk [vmem:[%s460] sm:$0x3] %vm447, %v2091
  %v2096 = vunpack.c.l.s4 1983009808
  %v2097 = vunpack.c.0.s8 %v2096
  %v2098 = vlaneseq
  %v2099 = vshrl.u32 %v2098, 7
  %v2100 = vsub.s32 %v2097, %v2099
  %v2101 = vrot.slane %v2081, %v2100
  %2102 = vrot.lane.b32.xlu0 %v2101, 96
  %v2103 = vpop.permute.xlu0 %2102
  %2105 = vst.msk [vmem:[%s5] sm:$0x3] %vm461, %v2103
  // Predicated region
  $region22: #{lstm_classifier_forward.3} parent=0 // pred_check
    _
  $region23: #{lstm_classifier_forward.3} parent=0 // pred_check_branch
    %2107 = sbr.rel (0) target = $region25
  $region24: #{lstm_classifier_forward.3} parent=0 // pred_region
    _
  $region25: #{lstm_classifier_forward.3} parent=0 // pred_fallthru
    _
  // Predicated region
  $region26: #{lstm_classifier_forward.3} parent=0 // pred_check
    _
  $region27: #{lstm_classifier_forward.3} parent=0 // pred_check_branch
    %2109 = sbr.rel (0) target = $region29
  $region28: #{lstm_classifier_forward.3} parent=0 // pred_region
    _
  $region29: #{lstm_classifier_forward.3} parent=0 // pred_fallthru
    _

// kernel: lstm_classifier_forward.4
$region0: #{lstm_classifier_forward.4}
  #allocation0 [shape = 'u32[]', space=smem, size = 0x4, offset = 0x4, fixed_abs, tag = 'smem constant byte address 0x4 - core index']
  #allocation1 [shape = 'u32[144,128]{1,0:T(1,128)}', space=vmem, size = 0x12000, scoped, tag = 'internal scratch']
  #allocation2 [shape = 'f32[8,2,256]{2,1,0:T(2,128)}', space=vmem, size = 0x4000, scoped, tag = 'scratch operand']
  %s0 = inlined_call_operand.vmem [shape: f32[8,2,64], index: 0, kind: input, shape index: {}]
  %s1 = inlined_call_operand.vmem [shape: f32[64,256], index: 1, kind: input, shape index: {}]
  %s2 = inlined_call_operand.vmem [shape: f32[32,128], index: 2, kind: input, shape index: {}]
  %s3 = inlined_call_operand.vmem [shape: f32[32,128], index: 3, kind: input, shape index: {}]
  %s4 = inlined_call_operand.vmem [shape: f32[1,256], index: 4, kind: input, shape index: {}]
  %s5 = inlined_call_operand.vmem [shape: f32[8,2,64], index: 5, kind: output, shape index: {}]
  %s6 = sld [smem:[#allocation0]]
  $region30: #{lstm_classifier_forward.4} parent=0
    _
  %s8 = ssub.s32 1, %s6
  %s9 = scalar_select 0, %s8, %s6
  // Predicated region
  $region2: #{lstm_classifier_forward.4} parent=0 // pred_check
    _
  $region3: #{lstm_classifier_forward.4} parent=0 // pred_check_branch
    %11 = sbr.rel (0) target = $region5
  $region4: #{lstm_classifier_forward.4} parent=0 // pred_region
    _
  $region5: #{lstm_classifier_forward.4} parent=0 // pred_fallthru
    _
  // Predicated region
  $region6: #{lstm_classifier_forward.4} parent=0 // pred_check
    _
  $region7: #{lstm_classifier_forward.4} parent=0 // pred_check_branch
    %13 = sbr.rel (0) target = $region9
  $region8: #{lstm_classifier_forward.4} parent=0 // pred_region
    _
  $region9: #{lstm_classifier_forward.4} parent=0 // pred_fallthru
    _
  // Predicated region
  $region10: #{lstm_classifier_forward.4} parent=0 // pred_check
    _
  $region11: #{lstm_classifier_forward.4} parent=0 // pred_check_branch
    %15 = sbr.rel (0) target = $region13
  $region12: #{lstm_classifier_forward.4} parent=0 // pred_region
    _
  $region13: #{lstm_classifier_forward.4} parent=0 // pred_fallthru
    _
  // Predicated region
  $region14: #{lstm_classifier_forward.4} parent=0 // pred_check
    _
  $region15: #{lstm_classifier_forward.4} parent=0 // pred_check_branch
    %17 = sbr.rel (0) target = $region17
  $region16: #{lstm_classifier_forward.4} parent=0 // pred_region
    _
  $region17: #{lstm_classifier_forward.4} parent=0 // pred_fallthru
    _
  // Predicated region
  $region18: #{lstm_classifier_forward.4} parent=0 // pred_check
    _
  $region19: #{lstm_classifier_forward.4} parent=0 // pred_check_branch
    %19 = sbr.rel (0) target = $region21
  $region20: #{lstm_classifier_forward.4} parent=0 // pred_region
    _
  $region21: #{lstm_classifier_forward.4} parent=0 // pred_fallthru
    _
  %v20 = vld [vmem:[%s0] sm:$0x3]
  %v21 = vld [vmem:[%s0 + $0x2] sm:$0x3]
  %v22 = vld [vmem:[%s0 + $0x4] sm:$0x3]
  %v23 = vld [vmem:[%s0 + $0x6] sm:$0x3]
  %v24 = vld [vmem:[%s0 + $0x8] sm:$0x3]
  %v25 = vld [vmem:[%s0 + $0xa] sm:$0x3]
  %v26 = vld [vmem:[%s0 + $0xc] sm:$0x3]
  %v27 = vld [vmem:[%s0 + $0xe] sm:$0x3]
  %v28 = vld [vmem:[%s1] sm:$0xff]
  %v29 = vld [vmem:[%s1 + $0x8] sm:$0xff]
  %v30 = vld [vmem:[%s1 + $0x10] sm:$0xff]
  %v31 = vld [vmem:[%s1 + $0x18] sm:$0xff]
  %v32 = vld [vmem:[%s1 + $0x20] sm:$0xff]
  %v33 = vld [vmem:[%s1 + $0x28] sm:$0xff]
  %v34 = vld [vmem:[%s1 + $0x30] sm:$0xff]
  %v35 = vld [vmem:[%s1 + $0x38] sm:$0xff]
  %v36 = vld [vmem:[%s1 + $0x40] sm:$0xff]
  %v37 = vld [vmem:[%s1 + $0x48] sm:$0xff]
  %v38 = vld [vmem:[%s1 + $0x50] sm:$0xff]
  %v39 = vld [vmem:[%s1 + $0x58] sm:$0xff]
  %v40 = vld [vmem:[%s1 + $0x60] sm:$0xff]
  %v41 = vld [vmem:[%s1 + $0x68] sm:$0xff]
  %v42 = vld [vmem:[%s1 + $0x70] sm:$0xff]
  %v43 = vld [vmem:[%s1 + $0x78] sm:$0xff]
  %v44 = vld [vmem:[%s4] sm:$0x3]
  %v46 = vlaneseq
  %v47 = vshrl.u32 %v46, 7
  %v48 = vsub.s32 0, %v47
  %v49 = vrot.slane %v44, %v48
  %v50 = vlaneseq
  %v51 = vshrl.u32 %v50, 7
  %v52 = vsub.s32 1, %v51
  %v53 = vrot.slane %v44, %v52
  %v64 = vcombine.low %v20, %v21
  %v65 = vcombine.low %v22, %v23
  %v67 = vunpack.c.l.s4 1983009808
  %v68 = vunpack.c.0.s8 %v67
  %v69 = vlaneseq
  %v70 = vshrl.u32 %v69, 7
  %v71 = vsub.s32 %v68, %v70
  %v72 = vrot.slane %v64, %v71
  %v74 = vunpack.c.l.s4 1983009808
  %v75 = vunpack.c.0.s8 %v74
  %v76 = vlaneseq
  %v77 = vshrl.u32 %v76, 7
  %v78 = vsub.s32 %v75, %v77
  %v79 = vrot.slane %v65, %v78
  %v80 = vcombine.low %v72, %v79
  %v81 = vcombine.low %v24, %v25
  %v82 = vcombine.low %v26, %v27
  %v84 = vunpack.c.l.s4 1983009808
  %v85 = vunpack.c.0.s8 %v84
  %v86 = vlaneseq
  %v87 = vshrl.u32 %v86, 7
  %v88 = vsub.s32 %v85, %v87
  %v89 = vrot.slane %v81, %v88
  %v91 = vunpack.c.l.s4 1983009808
  %v92 = vunpack.c.0.s8 %v91
  %v93 = vlaneseq
  %v94 = vshrl.u32 %v93, 7
  %v95 = vsub.s32 %v92, %v94
  %v96 = vrot.slane %v82, %v95
  %v97 = vcombine.low %v89, %v96
  %vm98 = vcmask 523264
  %v99 = vsel %vm98, %v80, 0
  %v101 = vsel %vm98, %v97, 0
  %103 = vmatprep.subr.mxu0 %v29
  %104 = vmatpush1.msra.mxu0 %v28
  %105 = vmatprep.subr.mxu0 %v31
  %106 = vmatpush1.msra.mxu0 %v30
  %107 = vmatprep.subr.mxu0 %v33
  %108 = vmatpush1.msra.mxu0 %v32
  %109 = vmatprep.subr.mxu0 %v35
  %110 = vmatpush1.msra.mxu0 %v34
  %111 = vmatprep.subr.mxu0 %v37
  %112 = vmatpush1.msra.mxu0 %v36
  %113 = vmatprep.subr.mxu0 %v39
  %114 = vmatpush1.msra.mxu0 %v38
  %115 = vmatprep.subr.mxu0 %v41
  %116 = vmatpush1.msra.mxu0 %v40
  %117 = vmatprep.subr.mxu0 %v43
  %118 = vmatpush1.msra.mxu0 %v42
  %119 = vmatprep.subr.mxu0 0.0
  %120 = vmatpush1.msra.mxu0 0.0
  %121 = vmatprep.subr.mxu0 0.0
  %122 = vmatpush1.msra.mxu0 0.0
  %123 = vmatprep.subr.mxu0 0.0
  %124 = vmatpush1.msra.mxu0 0.0
  %125 = vmatprep.subr.mxu0 0.0
  %126 = vmatpush1.msra.mxu0 0.0
  %127 = vmatprep.subr.mxu0 0.0
  %128 = vmatpush1.msra.mxu0 0.0
  %129 = vmatprep.subr.mxu0 0.0
  %130 = vmatpush1.msra.mxu0 0.0
  %131 = vmatprep.subr.mxu0 0.0
  %132 = vmatpush1.msra.mxu0 0.0
  %133 = vmatprep.subr.mxu0 0.0
  %134 = vmatpush1.msra.mxu0 0.0
  %135 = vmatprep.subr.mxu0 0.0
  %136 = vmatpush1.msra.mxu0 0.0
  %137 = vmatprep.subr.mxu0 0.0
  %138 = vmatpush1.msra.mxu0 0.0
  %139 = vmatprep.subr.mxu0 0.0
  %140 = vmatpush1.msra.mxu0 0.0
  %141 = vmatprep.subr.mxu0 0.0
  %142 = vmatpush1.msra.mxu0 0.0
  %143 = vmatprep.subr.mxu0 0.0
  %144 = vmatpush1.msra.mxu0 0.0
  %145 = vmatprep.subr.mxu0 0.0
  %146 = vmatpush1.msra.mxu0 0.0
  %147 = vmatprep.subr.mxu0 0.0
  %148 = vmatpush1.msra.mxu0 0.0
  %149 = vmatprep.subr.mxu0 0.0
  %150 = vmatpush1.msra.mxu0 0.0
  %151 = vmatprep.subr.mxu0 0.0
  %152 = vmatpush1.msra.mxu0 0.0
  %153 = vmatprep.subr.mxu0 0.0
  %154 = vmatpush1.msra.mxu0 0.0
  %155 = vmatprep.subr.mxu0 0.0
  %156 = vmatpush1.msra.mxu0 0.0
  %157 = vmatprep.subr.mxu0 0.0
  %158 = vmatpush1.msra.mxu0 0.0
  %159 = vmatprep.subr.mxu0 0.0
  %160 = vmatpush1.msra.mxu0 0.0
  %161 = vmatprep.subr.mxu0 0.0
  %162 = vmatpush1.msra.mxu0 0.0
  %163 = vmatprep.subr.mxu0 0.0
  %164 = vmatpush1.msra.mxu0 0.0
  %165 = vmatprep.subr.mxu0 0.0
  %166 = vmatpush1.msra.mxu0 0.0
  %167 = vmatprep.mubr.f32.mxu0 0.0
  %168 = vmatmul.mubr.f32.gmra.mrb[0].mxu0 %v99
  %v169 = vpop.f32.mrb[0].mxu0
  %v170 = vadd.f32 %v49, %v169
  %v171 = vpop.f32.mrb[0].mxu0
  %v172 = vadd.f32 %v53, %v171
  %173 = vmatprep.mubr.f32.mxu0 0.0
  %174 = vmatmul.mubr.f32.gmra.mrb[0].mxu0 %v101
  %v175 = vpop.f32.mrb[0].mxu0
  %v176 = vadd.f32 %v49, %v175
  %v177 = vpop.f32.mrb[0].mxu0
  %v178 = vadd.f32 %v53, %v177
  %179 = vdwg.mxu0
  %v184 = vcombine.low %v170, %v172
  %v185 = vcombine.high %v170, %v172
  %v187 = vunpack.c.l.s4 1983009808
  %v188 = vunpack.c.0.s8 %v187
  %v189 = vlaneseq
  %v190 = vshrl.u32 %v189, 7
  %v191 = vsub.s32 %v188, %v190
  %v192 = vrot.slane %v184, %v191
  %v194 = vunpack.c.l.s4 1983009808
  %v195 = vunpack.c.0.s8 %v194
  %v196 = vlaneseq
  %v197 = vshrl.u32 %v196, 7
  %v198 = vsub.s32 %v195, %v197
  %v199 = vrot.slane %v185, %v198
  %v200 = vcombine.high %v192, %v192
  %v201 = vcombine.high %v199, %v199
  %v202 = vcombine.low %v176, %v178
  %v203 = vcombine.high %v176, %v178
  %v205 = vunpack.c.l.s4 1983009808
  %v206 = vunpack.c.0.s8 %v205
  %v207 = vlaneseq
  %v208 = vshrl.u32 %v207, 7
  %v209 = vsub.s32 %v206, %v208
  %v210 = vrot.slane %v202, %v209
  %v212 = vunpack.c.l.s4 1983009808
  %v213 = vunpack.c.0.s8 %v212
  %v214 = vlaneseq
  %v215 = vshrl.u32 %v214, 7
  %v216 = vsub.s32 %v213, %v215
  %v217 = vrot.slane %v203, %v216
  %v218 = vcombine.high %v210, %v210
  %v219 = vcombine.high %v217, %v217
  %228 = vst [vmem:[#allocation2] sm:$0xf] %v192
  %229 = vst [vmem:[#allocation2 + $0x4] sm:$0xf] %v200
  %230 = vst [vmem:[#allocation2 + $0x8] sm:$0xf] %v199
  %231 = vst [vmem:[#allocation2 + $0xc] sm:$0xf] %v201
  %232 = vst [vmem:[#allocation2 + $0x10] sm:$0xf] %v210
  %233 = vst [vmem:[#allocation2 + $0x14] sm:$0xf] %v218
  %234 = vst [vmem:[#allocation2 + $0x18] sm:$0xf] %v217
  %235 = vst [vmem:[#allocation2 + $0x1c] sm:$0xf] %v219
  %v236 = vld [vmem:[#allocation2] sm:$0xf]
  %s237 = scalar_lea.vmem [#allocation2], 28
  %v238 = vld [vmem:[%s237] sm:$0xf]
  %v239 = vld [vmem:[%s2] sm:$0xff]
  %v240 = vld [vmem:[%s2 + $0x8] sm:$0xff]
  %v241 = vld [vmem:[%s2 + $0x10] sm:$0xff]
  %v242 = vld [vmem:[%s2 + $0x18] sm:$0xff]
  %vm243 = vcmask 261120
  %v245 = vsel %vm243, 0.0, 0
  %247 = vmatprep.subr.mxu0 0.0
  %248 = vmatpush1.msra.mxu0 %v239
  %249 = vmatprep.subr.mxu0 0.0
  %250 = vmatpush1.msra.mxu0 %v240
  %251 = vmatprep.subr.mxu0 0.0
  %252 = vmatpush1.msra.mxu0 %v241
  %253 = vmatprep.subr.mxu0 0.0
  %254 = vmatpush1.msra.mxu0 %v242
  %255 = vmatprep.subr.mxu0 0.0
  %256 = vmatpush1.msra.mxu0 0.0
  %257 = vmatprep.subr.mxu0 0.0
  %258 = vmatpush1.msra.mxu0 0.0
  %259 = vmatprep.subr.mxu0 0.0
  %260 = vmatpush1.msra.mxu0 0.0
  %261 = vmatprep.subr.mxu0 0.0
  %262 = vmatpush1.msra.mxu0 0.0
  %263 = vmatprep.subr.mxu0 0.0
  %264 = vmatpush1.msra.mxu0 0.0
  %265 = vmatprep.subr.mxu0 0.0
  %266 = vmatpush1.msra.mxu0 0.0
  %267 = vmatprep.subr.mxu0 0.0
  %268 = vmatpush1.msra.mxu0 0.0
  %269 = vmatprep.subr.mxu0 0.0
  %270 = vmatpush1.msra.mxu0 0.0
  %271 = vmatprep.subr.mxu0 0.0
  %272 = vmatpush1.msra.mxu0 0.0
  %273 = vmatprep.subr.mxu0 0.0
  %274 = vmatpush1.msra.mxu0 0.0
  %275 = vmatprep.subr.mxu0 0.0
  %276 = vmatpush1.msra.mxu0 0.0
  %277 = vmatprep.subr.mxu0 0.0
  %278 = vmatpush1.msra.mxu0 0.0
  %279 = vmatprep.subr.mxu0 0.0
  %280 = vmatpush1.msra.mxu0 0.0
  %281 = vmatprep.subr.mxu0 0.0
  %282 = vmatpush1.msra.mxu0 0.0
  %283 = vmatprep.subr.mxu0 0.0
  %284 = vmatpush1.msra.mxu0 0.0
  %285 = vmatprep.subr.mxu0 0.0
  %286 = vmatpush1.msra.mxu0 0.0
  %287 = vmatprep.subr.mxu0 0.0
  %288 = vmatpush1.msra.mxu0 0.0
  %289 = vmatprep.subr.mxu0 0.0
  %290 = vmatpush1.msra.mxu0 0.0
  %291 = vmatprep.subr.mxu0 0.0
  %292 = vmatpush1.msra.mxu0 0.0
  %293 = vmatprep.subr.mxu0 0.0
  %294 = vmatpush1.msra.mxu0 0.0
  %295 = vmatprep.subr.mxu0 0.0
  %296 = vmatpush1.msra.mxu0 0.0
  %297 = vmatprep.subr.mxu0 0.0
  %298 = vmatpush1.msra.mxu0 0.0
  %299 = vmatprep.subr.mxu0 0.0
  %300 = vmatpush1.msra.mxu0 0.0
  %301 = vmatprep.subr.mxu0 0.0
  %302 = vmatpush1.msra.mxu0 0.0
  %303 = vmatprep.subr.mxu0 0.0
  %304 = vmatpush1.msra.mxu0 0.0
  %305 = vmatprep.subr.mxu0 0.0
  %306 = vmatpush1.msra.mxu0 0.0
  %307 = vmatprep.subr.mxu0 0.0
  %308 = vmatpush1.msra.mxu0 0.0
  %309 = vmatprep.subr.mxu0 0.0
  %310 = vmatpush1.msra.mxu0 0.0
  %311 = vmatprep.mubr.f32.mxu0 0.0
  %312 = vmatmul.mubr.f32.gmra.mrb[0].mxu0 %v245
  %v313 = vpop.f32.mrb[0].mxu0
  %v314 = vadd.f32 0.0, %v313
  %v315 = vpop.f32.mrb[0].mxu0
  %316 = vdwg.mxu0
  %v317 = vadd.f32 %v236, %v314
  %v318 = vld [vmem:[%s3] sm:$0xff]
  %v319 = vld [vmem:[%s3 + $0x8] sm:$0xff]
  %v320 = vld [vmem:[%s3 + $0x10] sm:$0xff]
  %v321 = vld [vmem:[%s3 + $0x18] sm:$0xff]
  %322 = vmatprep.subr.mxu0 0.0
  %323 = vmatpush1.msra.mxu0 %v318
  %324 = vmatprep.subr.mxu0 0.0
  %325 = vmatpush1.msra.mxu0 %v319
  %326 = vmatprep.subr.mxu0 0.0
  %327 = vmatpush1.msra.mxu0 %v320
  %328 = vmatprep.subr.mxu0 0.0
  %329 = vmatpush1.msra.mxu0 %v321
  %330 = vmatprep.subr.mxu0 0.0
  %331 = vmatpush1.msra.mxu0 0.0
  %332 = vmatprep.subr.mxu0 0.0
  %333 = vmatpush1.msra.mxu0 0.0
  %334 = vmatprep.subr.mxu0 0.0
  %335 = vmatpush1.msra.mxu0 0.0
  %336 = vmatprep.subr.mxu0 0.0
  %337 = vmatpush1.msra.mxu0 0.0
  %338 = vmatprep.subr.mxu0 0.0
  %339 = vmatpush1.msra.mxu0 0.0
  %340 = vmatprep.subr.mxu0 0.0
  %341 = vmatpush1.msra.mxu0 0.0
  %342 = vmatprep.subr.mxu0 0.0
  %343 = vmatpush1.msra.mxu0 0.0
  %344 = vmatprep.subr.mxu0 0.0
  %345 = vmatpush1.msra.mxu0 0.0
  %346 = vmatprep.subr.mxu0 0.0
  %347 = vmatpush1.msra.mxu0 0.0
  %348 = vmatprep.subr.mxu0 0.0
  %349 = vmatpush1.msra.mxu0 0.0
  %350 = vmatprep.subr.mxu0 0.0
  %351 = vmatpush1.msra.mxu0 0.0
  %352 = vmatprep.subr.mxu0 0.0
  %353 = vmatpush1.msra.mxu0 0.0
  %354 = vmatprep.subr.mxu0 0.0
  %355 = vmatpush1.msra.mxu0 0.0
  %356 = vmatprep.subr.mxu0 0.0
  %357 = vmatpush1.msra.mxu0 0.0
  %358 = vmatprep.subr.mxu0 0.0
  %359 = vmatpush1.msra.mxu0 0.0
  %360 = vmatprep.subr.mxu0 0.0
  %361 = vmatpush1.msra.mxu0 0.0
  %362 = vmatprep.subr.mxu0 0.0
  %363 = vmatpush1.msra.mxu0 0.0
  %364 = vmatprep.subr.mxu0 0.0
  %365 = vmatpush1.msra.mxu0 0.0
  %366 = vmatprep.subr.mxu0 0.0
  %367 = vmatpush1.msra.mxu0 0.0
  %368 = vmatprep.subr.mxu0 0.0
  %369 = vmatpush1.msra.mxu0 0.0
  %370 = vmatprep.subr.mxu0 0.0
  %371 = vmatpush1.msra.mxu0 0.0
  %372 = vmatprep.subr.mxu0 0.0
  %373 = vmatpush1.msra.mxu0 0.0
  %374 = vmatprep.subr.mxu0 0.0
  %375 = vmatpush1.msra.mxu0 0.0
  %376 = vmatprep.subr.mxu0 0.0
  %377 = vmatpush1.msra.mxu0 0.0
  %378 = vmatprep.subr.mxu0 0.0
  %379 = vmatpush1.msra.mxu0 0.0
  %380 = vmatprep.subr.mxu0 0.0
  %381 = vmatpush1.msra.mxu0 0.0
  %382 = vmatprep.subr.mxu0 0.0
  %383 = vmatpush1.msra.mxu0 0.0
  %384 = vmatprep.subr.mxu0 0.0
  %385 = vmatpush1.msra.mxu0 0.0
  %386 = vmatprep.mubr.f32.mxu0 0.0
  %387 = vmatmul.mubr.f32.gmra.mrb[0].mxu0 %v245
  %v388 = vpop.f32.mrb[0].mxu0
  %v389 = vadd.f32 0.0, %v388
  %v390 = vpop.f32.mrb[0].mxu0
  %391 = vdwg.mxu0
  %v393 = vrot.slane %v238, 2
  %v395 = vadd.f32 %v393, %v389
  %v396 = vxor.u32 %v317, 2147483648
  %v397 = vmul.f32 %v396, 1.442695
  %v398 = vpow.pop %v397
  %v399 = vadd.f32 %v398, 1.0
  %v400 = vrcp.pop %v399
  %v401 = vmul.f32 1.0, %v400
  %v402 = vtanh.pop %v317
  %v403 = vmul.f32 %v401, 0.0
  %405 = vrot.lane.b32.xlu0 %v402, 32
  %v406 = vpop.permute.xlu0 %405
  %v408 = vmul.f32 %v401, %v406
  %410 = vrot.lane.b32.xlu0 %v408, 32
  %v411 = vpop.permute.xlu0 %410
  %v413 = vadd.f32 %v403, %v411
  %v414 = vtanh.pop %v413
  %416 = vrot.lane.b32.xlu0 %v414, 32
  %v417 = vpop.permute.xlu0 %416
  %v419 = vmul.f32 %v401, %v417
  %v420 = vxor.u32 %v395, 2147483648
  %v421 = vmul.f32 %v420, 1.442695
  %v422 = vpow.pop %v421
  %v423 = vadd.f32 %v422, 1.0
  %v424 = vrcp.pop %v423
  %v425 = vmul.f32 1.0, %v424
  %v426 = vtanh.pop %v395
  %v427 = vmul.f32 %v425, 0.0
  %429 = vrot.lane.b32.xlu0 %v426, 32
  %v430 = vpop.permute.xlu0 %429
  %v432 = vmul.f32 %v425, %v430
  %434 = vrot.lane.b32.xlu0 %v432, 32
  %v435 = vpop.permute.xlu0 %434
  %v437 = vadd.f32 %v427, %v435
  %v438 = vtanh.pop %v437
  %440 = vrot.lane.b32.xlu0 %v438, 32
  %v441 = vpop.permute.xlu0 %440
  %v443 = vmul.f32 %v425, %v441
  %v446 = vunpack.c.l.s4 1983009808
  %v447 = vunpack.c.0.s8 %v446
  %v448 = vlaneseq
  %v449 = vshrl.u32 %v448, 7
  %v450 = vsub.s32 %v447, %v449
  %v451 = vrot.slane %v419, %v450
  %452 = vrot.lane.b32.xlu0 %v451, 64
  %v453 = vpop.permute.xlu0 %452
  %vm455 = vcmask 254976
  %456 = vst.msk [vmem:[%s5] sm:$0x3] %vm455, %v453
  %v459 = vunpack.c.l.s4 1983009808
  %v460 = vunpack.c.0.s8 %v459
  %v461 = vlaneseq
  %v462 = vshrl.u32 %v461, 7
  %v463 = vsub.s32 %v460, %v462
  %v464 = vrot.slane %v443, %v463
  %465 = vrot.lane.b32.xlu0 %v464, 96
  %v466 = vpop.permute.xlu0 %465
  %s468 = scalar_lea.vmem %s5, 14
  %vm469 = vcmask 517376
  %470 = vst.msk [vmem:[%s468] sm:$0x3] %vm469, %v466
  %s471 = scalar_lea.vmem [#allocation2], 4
  %v472 = vld [vmem:[%s471] sm:$0xf]
  %s473 = scalar_lea.vmem [#allocation2], 24
  %v474 = vld [vmem:[%s473] sm:$0xf]
  %v475 = vld [vmem:[%s2] sm:$0xff]
  %v476 = vld [vmem:[%s2 + $0x8] sm:$0xff]
  %v477 = vld [vmem:[%s2 + $0x10] sm:$0xff]
  %v478 = vld [vmem:[%s2 + $0x18] sm:$0xff]
  %v479 = vsel %vm243, %v453, 0
  %481 = vmatprep.subr.mxu0 0.0
  %482 = vmatpush1.msra.mxu0 %v475
  %483 = vmatprep.subr.mxu0 0.0
  %484 = vmatpush1.msra.mxu0 %v476
  %485 = vmatprep.subr.mxu0 0.0
  %486 = vmatpush1.msra.mxu0 %v477
  %487 = vmatprep.subr.mxu0 0.0
  %488 = vmatpush1.msra.mxu0 %v478
  %489 = vmatprep.subr.mxu0 0.0
  %490 = vmatpush1.msra.mxu0 0.0
  %491 = vmatprep.subr.mxu0 0.0
  %492 = vmatpush1.msra.mxu0 0.0
  %493 = vmatprep.subr.mxu0 0.0
  %494 = vmatpush1.msra.mxu0 0.0
  %495 = vmatprep.subr.mxu0 0.0
  %496 = vmatpush1.msra.mxu0 0.0
  %497 = vmatprep.subr.mxu0 0.0
  %498 = vmatpush1.msra.mxu0 0.0
  %499 = vmatprep.subr.mxu0 0.0
  %500 = vmatpush1.msra.mxu0 0.0
  %501 = vmatprep.subr.mxu0 0.0
  %502 = vmatpush1.msra.mxu0 0.0
  %503 = vmatprep.subr.mxu0 0.0
  %504 = vmatpush1.msra.mxu0 0.0
  %505 = vmatprep.subr.mxu0 0.0
  %506 = vmatpush1.msra.mxu0 0.0
  %507 = vmatprep.subr.mxu0 0.0
  %508 = vmatpush1.msra.mxu0 0.0
  %509 = vmatprep.subr.mxu0 0.0
  %510 = vmatpush1.msra.mxu0 0.0
  %511 = vmatprep.subr.mxu0 0.0
  %512 = vmatpush1.msra.mxu0 0.0
  %513 = vmatprep.subr.mxu0 0.0
  %514 = vmatpush1.msra.mxu0 0.0
  %515 = vmatprep.subr.mxu0 0.0
  %516 = vmatpush1.msra.mxu0 0.0
  %517 = vmatprep.subr.mxu0 0.0
  %518 = vmatpush1.msra.mxu0 0.0
  %519 = vmatprep.subr.mxu0 0.0
  %520 = vmatpush1.msra.mxu0 0.0
  %521 = vmatprep.subr.mxu0 0.0
  %522 = vmatpush1.msra.mxu0 0.0
  %523 = vmatprep.subr.mxu0 0.0
  %524 = vmatpush1.msra.mxu0 0.0
  %525 = vmatprep.subr.mxu0 0.0
  %526 = vmatpush1.msra.mxu0 0.0
  %527 = vmatprep.subr.mxu0 0.0
  %528 = vmatpush1.msra.mxu0 0.0
  %529 = vmatprep.subr.mxu0 0.0
  %530 = vmatpush1.msra.mxu0 0.0
  %531 = vmatprep.subr.mxu0 0.0
  %532 = vmatpush1.msra.mxu0 0.0
  %533 = vmatprep.subr.mxu0 0.0
  %534 = vmatpush1.msra.mxu0 0.0
  %535 = vmatprep.subr.mxu0 0.0
  %536 = vmatpush1.msra.mxu0 0.0
  %537 = vmatprep.subr.mxu0 0.0
  %538 = vmatpush1.msra.mxu0 0.0
  %539 = vmatprep.subr.mxu0 0.0
  %540 = vmatpush1.msra.mxu0 0.0
  %541 = vmatprep.subr.mxu0 0.0
  %542 = vmatpush1.msra.mxu0 0.0
  %543 = vmatprep.subr.mxu0 0.0
  %544 = vmatpush1.msra.mxu0 0.0
  %545 = vmatprep.mubr.f32.mxu0 0.0
  %546 = vmatmul.mubr.f32.gmra.mrb[0].mxu0 %v479
  %v547 = vpop.f32.mrb[0].mxu0
  %v548 = vadd.f32 0.0, %v547
  %v549 = vpop.f32.mrb[0].mxu0
  %550 = vdwg.mxu0
  %v551 = vadd.f32 %v472, %v548
  %v552 = vld [vmem:[%s3] sm:$0xff]
  %v553 = vld [vmem:[%s3 + $0x8] sm:$0xff]
  %v554 = vld [vmem:[%s3 + $0x10] sm:$0xff]
  %v555 = vld [vmem:[%s3 + $0x18] sm:$0xff]
  %556 = vrot.lane.b32.xlu0 %v464, 64
  %v557 = vpop.permute.xlu0 %556
  %v558 = vsel %vm243, %v557, 0
  %560 = vmatprep.subr.mxu0 0.0
  %561 = vmatpush1.msra.mxu0 %v552
  %562 = vmatprep.subr.mxu0 0.0
  %563 = vmatpush1.msra.mxu0 %v553
  %564 = vmatprep.subr.mxu0 0.0
  %565 = vmatpush1.msra.mxu0 %v554
  %566 = vmatprep.subr.mxu0 0.0
  %567 = vmatpush1.msra.mxu0 %v555
  %568 = vmatprep.subr.mxu0 0.0
  %569 = vmatpush1.msra.mxu0 0.0
  %570 = vmatprep.subr.mxu0 0.0
  %571 = vmatpush1.msra.mxu0 0.0
  %572 = vmatprep.subr.mxu0 0.0
  %573 = vmatpush1.msra.mxu0 0.0
  %574 = vmatprep.subr.mxu0 0.0
  %575 = vmatpush1.msra.mxu0 0.0
  %576 = vmatprep.subr.mxu0 0.0
  %577 = vmatpush1.msra.mxu0 0.0
  %578 = vmatprep.subr.mxu0 0.0
  %579 = vmatpush1.msra.mxu0 0.0
  %580 = vmatprep.subr.mxu0 0.0
  %581 = vmatpush1.msra.mxu0 0.0
  %582 = vmatprep.subr.mxu0 0.0
  %583 = vmatpush1.msra.mxu0 0.0
  %584 = vmatprep.subr.mxu0 0.0
  %585 = vmatpush1.msra.mxu0 0.0
  %586 = vmatprep.subr.mxu0 0.0
  %587 = vmatpush1.msra.mxu0 0.0
  %588 = vmatprep.subr.mxu0 0.0
  %589 = vmatpush1.msra.mxu0 0.0
  %590 = vmatprep.subr.mxu0 0.0
  %591 = vmatpush1.msra.mxu0 0.0
  %592 = vmatprep.subr.mxu0 0.0
  %593 = vmatpush1.msra.mxu0 0.0
  %594 = vmatprep.subr.mxu0 0.0
  %595 = vmatpush1.msra.mxu0 0.0
  %596 = vmatprep.subr.mxu0 0.0
  %597 = vmatpush1.msra.mxu0 0.0
  %598 = vmatprep.subr.mxu0 0.0
  %599 = vmatpush1.msra.mxu0 0.0
  %600 = vmatprep.subr.mxu0 0.0
  %601 = vmatpush1.msra.mxu0 0.0
  %602 = vmatprep.subr.mxu0 0.0
  %603 = vmatpush1.msra.mxu0 0.0
  %604 = vmatprep.subr.mxu0 0.0
  %605 = vmatpush1.msra.mxu0 0.0
  %606 = vmatprep.subr.mxu0 0.0
  %607 = vmatpush1.msra.mxu0 0.0
  %608 = vmatprep.subr.mxu0 0.0
  %609 = vmatpush1.msra.mxu0 0.0
  %610 = vmatprep.subr.mxu0 0.0
  %611 = vmatpush1.msra.mxu0 0.0
  %612 = vmatprep.subr.mxu0 0.0
  %613 = vmatpush1.msra.mxu0 0.0
  %614 = vmatprep.subr.mxu0 0.0
  %615 = vmatpush1.msra.mxu0 0.0
  %616 = vmatprep.subr.mxu0 0.0
  %617 = vmatpush1.msra.mxu0 0.0
  %618 = vmatprep.subr.mxu0 0.0
  %619 = vmatpush1.msra.mxu0 0.0
  %620 = vmatprep.subr.mxu0 0.0
  %621 = vmatpush1.msra.mxu0 0.0
  %622 = vmatprep.subr.mxu0 0.0
  %623 = vmatpush1.msra.mxu0 0.0
  %624 = vmatprep.mubr.f32.mxu0 0.0
  %625 = vmatmul.mubr.f32.gmra.mrb[0].mxu0 %v558
  %v626 = vpop.f32.mrb[0].mxu0
  %v627 = vadd.f32 0.0, %v626
  %v628 = vpop.f32.mrb[0].mxu0
  %629 = vdwg.mxu0
  %v631 = vrot.slane %v474, 2
  %v633 = vadd.f32 %v631, %v627
  %v634 = vxor.u32 %v551, 2147483648
  %v635 = vmul.f32 %v634, 1.442695
  %v636 = vpow.pop %v635
  %v637 = vadd.f32 %v636, 1.0
  %v638 = vrcp.pop %v637
  %v639 = vmul.f32 1.0, %v638
  %v640 = vtanh.pop %v551
  %v641 = vmul.f32 %v639, %v413
  %643 = vrot.lane.b32.xlu0 %v640, 32
  %v644 = vpop.permute.xlu0 %643
  %v646 = vmul.f32 %v639, %v644
  %648 = vrot.lane.b32.xlu0 %v646, 32
  %v649 = vpop.permute.xlu0 %648
  %v651 = vadd.f32 %v641, %v649
  %v652 = vtanh.pop %v651
  %654 = vrot.lane.b32.xlu0 %v652, 32
  %v655 = vpop.permute.xlu0 %654
  %v657 = vmul.f32 %v639, %v655
  %v658 = vxor.u32 %v633, 2147483648
  %v659 = vmul.f32 %v658, 1.442695
  %v660 = vpow.pop %v659
  %v661 = vadd.f32 %v660, 1.0
  %v662 = vrcp.pop %v661
  %v663 = vmul.f32 1.0, %v662
  %v664 = vtanh.pop %v633
  %v665 = vmul.f32 %v663, %v437
  %667 = vrot.lane.b32.xlu0 %v664, 32
  %v668 = vpop.permute.xlu0 %667
  %v670 = vmul.f32 %v663, %v668
  %672 = vrot.lane.b32.xlu0 %v670, 32
  %v673 = vpop.permute.xlu0 %672
  %v675 = vadd.f32 %v665, %v673
  %v676 = vtanh.pop %v675
  %678 = vrot.lane.b32.xlu0 %v676, 32
  %v679 = vpop.permute.xlu0 %678
  %v681 = vmul.f32 %v663, %v679
  %v684 = vunpack.c.l.s4 1983009808
  %v685 = vunpack.c.0.s8 %v684
  %v686 = vlaneseq
  %v687 = vshrl.u32 %v686, 7
  %v688 = vsub.s32 %v685, %v687
  %v689 = vrot.slane %v657, %v688
  %690 = vrot.lane.b32.xlu0 %v689, 64
  %v691 = vpop.permute.xlu0 %690
  %s693 = scalar_lea.vmem %s5, 2
  %694 = vst.msk [vmem:[%s693] sm:$0x3] %vm455, %v691
  %v697 = vunpack.c.l.s4 1983009808
  %v698 = vunpack.c.0.s8 %v697
  %v699 = vlaneseq
  %v700 = vshrl.u32 %v699, 7
  %v701 = vsub.s32 %v698, %v700
  %v702 = vrot.slane %v681, %v701
  %703 = vrot.lane.b32.xlu0 %v702, 96
  %v704 = vpop.permute.xlu0 %703
  %s706 = scalar_lea.vmem %s5, 12
  %707 = vst.msk [vmem:[%s706] sm:$0x3] %vm469, %v704
  %s708 = scalar_lea.vmem [#allocation2], 8
  %v709 = vld [vmem:[%s708] sm:$0xf]
  %s710 = scalar_lea.vmem [#allocation2], 20
  %v711 = vld [vmem:[%s710] sm:$0xf]
  %v712 = vld [vmem:[%s2] sm:$0xff]
  %v713 = vld [vmem:[%s2 + $0x8] sm:$0xff]
  %v714 = vld [vmem:[%s2 + $0x10] sm:$0xff]
  %v715 = vld [vmem:[%s2 + $0x18] sm:$0xff]
  %v716 = vsel %vm243, %v691, 0
  %718 = vmatprep.subr.mxu0 0.0
  %719 = vmatpush1.msra.mxu0 %v712
  %720 = vmatprep.subr.mxu0 0.0
  %721 = vmatpush1.msra.mxu0 %v713
  %722 = vmatprep.subr.mxu0 0.0
  %723 = vmatpush1.msra.mxu0 %v714
  %724 = vmatprep.subr.mxu0 0.0
  %725 = vmatpush1.msra.mxu0 %v715
  %726 = vmatprep.subr.mxu0 0.0
  %727 = vmatpush1.msra.mxu0 0.0
  %728 = vmatprep.subr.mxu0 0.0
  %729 = vmatpush1.msra.mxu0 0.0
  %730 = vmatprep.subr.mxu0 0.0
  %731 = vmatpush1.msra.mxu0 0.0
  %732 = vmatprep.subr.mxu0 0.0
  %733 = vmatpush1.msra.mxu0 0.0
  %734 = vmatprep.subr.mxu0 0.0
  %735 = vmatpush1.msra.mxu0 0.0
  %736 = vmatprep.subr.mxu0 0.0
  %737 = vmatpush1.msra.mxu0 0.0
  %738 = vmatprep.subr.mxu0 0.0
  %739 = vmatpush1.msra.mxu0 0.0
  %740 = vmatprep.subr.mxu0 0.0
  %741 = vmatpush1.msra.mxu0 0.0
  %742 = vmatprep.subr.mxu0 0.0
  %743 = vmatpush1.msra.mxu0 0.0
  %744 = vmatprep.subr.mxu0 0.0
  %745 = vmatpush1.msra.mxu0 0.0
  %746 = vmatprep.subr.mxu0 0.0
  %747 = vmatpush1.msra.mxu0 0.0
  %748 = vmatprep.subr.mxu0 0.0
  %749 = vmatpush1.msra.mxu0 0.0
  %750 = vmatprep.subr.mxu0 0.0
  %751 = vmatpush1.msra.mxu0 0.0
  %752 = vmatprep.subr.mxu0 0.0
  %753 = vmatpush1.msra.mxu0 0.0
  %754 = vmatprep.subr.mxu0 0.0
  %755 = vmatpush1.msra.mxu0 0.0
  %756 = vmatprep.subr.mxu0 0.0
  %757 = vmatpush1.msra.mxu0 0.0
  %758 = vmatprep.subr.mxu0 0.0
  %759 = vmatpush1.msra.mxu0 0.0
  %760 = vmatprep.subr.mxu0 0.0
  %761 = vmatpush1.msra.mxu0 0.0
  %762 = vmatprep.subr.mxu0 0.0
  %763 = vmatpush1.msra.mxu0 0.0
  %764 = vmatprep.subr.mxu0 0.0
  %765 = vmatpush1.msra.mxu0 0.0
  %766 = vmatprep.subr.mxu0 0.0
  %767 = vmatpush1.msra.mxu0 0.0
  %768 = vmatprep.subr.mxu0 0.0
  %769 = vmatpush1.msra.mxu0 0.0
  %770 = vmatprep.subr.mxu0 0.0
  %771 = vmatpush1.msra.mxu0 0.0
  %772 = vmatprep.subr.mxu0 0.0
  %773 = vmatpush1.msra.mxu0 0.0
  %774 = vmatprep.subr.mxu0 0.0
  %775 = vmatpush1.msra.mxu0 0.0
  %776 = vmatprep.subr.mxu0 0.0
  %777 = vmatpush1.msra.mxu0 0.0
  %778 = vmatprep.subr.mxu0 0.0
  %779 = vmatpush1.msra.mxu0 0.0
  %780 = vmatprep.subr.mxu0 0.0
  %781 = vmatpush1.msra.mxu0 0.0
  %782 = vmatprep.mubr.f32.mxu0 0.0
  %783 = vmatmul.mubr.f32.gmra.mrb[0].mxu0 %v716
  %v784 = vpop.f32.mrb[0].mxu0
  %v785 = vadd.f32 0.0, %v784
  %v786 = vpop.f32.mrb[0].mxu0
  %787 = vdwg.mxu0
  %v788 = vadd.f32 %v709, %v785
  %v789 = vld [vmem:[%s3] sm:$0xff]
  %v790 = vld [vmem:[%s3 + $0x8] sm:$0xff]
  %v791 = vld [vmem:[%s3 + $0x10] sm:$0xff]
  %v792 = vld [vmem:[%s3 + $0x18] sm:$0xff]
  %793 = vrot.lane.b32.xlu0 %v702, 64
  %v794 = vpop.permute.xlu0 %793
  %v795 = vsel %vm243, %v794, 0
  %797 = vmatprep.subr.mxu0 0.0
  %798 = vmatpush1.msra.mxu0 %v789
  %799 = vmatprep.subr.mxu0 0.0
  %800 = vmatpush1.msra.mxu0 %v790
  %801 = vmatprep.subr.mxu0 0.0
  %802 = vmatpush1.msra.mxu0 %v791
  %803 = vmatprep.subr.mxu0 0.0
  %804 = vmatpush1.msra.mxu0 %v792
  %805 = vmatprep.subr.mxu0 0.0
  %806 = vmatpush1.msra.mxu0 0.0
  %807 = vmatprep.subr.mxu0 0.0
  %808 = vmatpush1.msra.mxu0 0.0
  %809 = vmatprep.subr.mxu0 0.0
  %810 = vmatpush1.msra.mxu0 0.0
  %811 = vmatprep.subr.mxu0 0.0
  %812 = vmatpush1.msra.mxu0 0.0
  %813 = vmatprep.subr.mxu0 0.0
  %814 = vmatpush1.msra.mxu0 0.0
  %815 = vmatprep.subr.mxu0 0.0
  %816 = vmatpush1.msra.mxu0 0.0
  %817 = vmatprep.subr.mxu0 0.0
  %818 = vmatpush1.msra.mxu0 0.0
  %819 = vmatprep.subr.mxu0 0.0
  %820 = vmatpush1.msra.mxu0 0.0
  %821 = vmatprep.subr.mxu0 0.0
  %822 = vmatpush1.msra.mxu0 0.0
  %823 = vmatprep.subr.mxu0 0.0
  %824 = vmatpush1.msra.mxu0 0.0
  %825 = vmatprep.subr.mxu0 0.0
  %826 = vmatpush1.msra.mxu0 0.0
  %827 = vmatprep.subr.mxu0 0.0
  %828 = vmatpush1.msra.mxu0 0.0
  %829 = vmatprep.subr.mxu0 0.0
  %830 = vmatpush1.msra.mxu0 0.0
  %831 = vmatprep.subr.mxu0 0.0
  %832 = vmatpush1.msra.mxu0 0.0
  %833 = vmatprep.subr.mxu0 0.0
  %834 = vmatpush1.msra.mxu0 0.0
  %835 = vmatprep.subr.mxu0 0.0
  %836 = vmatpush1.msra.mxu0 0.0
  %837 = vmatprep.subr.mxu0 0.0
  %838 = vmatpush1.msra.mxu0 0.0
  %839 = vmatprep.subr.mxu0 0.0
  %840 = vmatpush1.msra.mxu0 0.0
  %841 = vmatprep.subr.mxu0 0.0
  %842 = vmatpush1.msra.mxu0 0.0
  %843 = vmatprep.subr.mxu0 0.0
  %844 = vmatpush1.msra.mxu0 0.0
  %845 = vmatprep.subr.mxu0 0.0
  %846 = vmatpush1.msra.mxu0 0.0
  %847 = vmatprep.subr.mxu0 0.0
  %848 = vmatpush1.msra.mxu0 0.0
  %849 = vmatprep.subr.mxu0 0.0
  %850 = vmatpush1.msra.mxu0 0.0
  %851 = vmatprep.subr.mxu0 0.0
  %852 = vmatpush1.msra.mxu0 0.0
  %853 = vmatprep.subr.mxu0 0.0
  %854 = vmatpush1.msra.mxu0 0.0
  %855 = vmatprep.subr.mxu0 0.0
  %856 = vmatpush1.msra.mxu0 0.0
  %857 = vmatprep.subr.mxu0 0.0
  %858 = vmatpush1.msra.mxu0 0.0
  %859 = vmatprep.subr.mxu0 0.0
  %860 = vmatpush1.msra.mxu0 0.0
  %861 = vmatprep.mubr.f32.mxu0 0.0
  %862 = vmatmul.mubr.f32.gmra.mrb[0].mxu0 %v795
  %v863 = vpop.f32.mrb[0].mxu0
  %v864 = vadd.f32 0.0, %v863
  %v865 = vpop.f32.mrb[0].mxu0
  %866 = vdwg.mxu0
  %v868 = vrot.slane %v711, 2
  %v870 = vadd.f32 %v868, %v864
  %v871 = vxor.u32 %v788, 2147483648
  %v872 = vmul.f32 %v871, 1.442695
  %v873 = vpow.pop %v872
  %v874 = vadd.f32 %v873, 1.0
  %v875 = vrcp.pop %v874
  %v876 = vmul.f32 1.0, %v875
  %v877 = vtanh.pop %v788
  %v878 = vmul.f32 %v876, %v651
  %880 = vrot.lane.b32.xlu0 %v877, 32
  %v881 = vpop.permute.xlu0 %880
  %v883 = vmul.f32 %v876, %v881
  %885 = vrot.lane.b32.xlu0 %v883, 32
  %v886 = vpop.permute.xlu0 %885
  %v888 = vadd.f32 %v878, %v886
  %v889 = vtanh.pop %v888
  %891 = vrot.lane.b32.xlu0 %v889, 32
  %v892 = vpop.permute.xlu0 %891
  %v894 = vmul.f32 %v876, %v892
  %v895 = vxor.u32 %v870, 2147483648
  %v896 = vmul.f32 %v895, 1.442695
  %v897 = vpow.pop %v896
  %v898 = vadd.f32 %v897, 1.0
  %v899 = vrcp.pop %v898
  %v900 = vmul.f32 1.0, %v899
  %v901 = vtanh.pop %v870
  %v902 = vmul.f32 %v900, %v675
  %904 = vrot.lane.b32.xlu0 %v901, 32
  %v905 = vpop.permute.xlu0 %904
  %v907 = vmul.f32 %v900, %v905
  %909 = vrot.lane.b32.xlu0 %v907, 32
  %v910 = vpop.permute.xlu0 %909
  %v912 = vadd.f32 %v902, %v910
  %v913 = vtanh.pop %v912
  %915 = vrot.lane.b32.xlu0 %v913, 32
  %v916 = vpop.permute.xlu0 %915
  %v918 = vmul.f32 %v900, %v916
  %v921 = vunpack.c.l.s4 1983009808
  %v922 = vunpack.c.0.s8 %v921
  %v923 = vlaneseq
  %v924 = vshrl.u32 %v923, 7
  %v925 = vsub.s32 %v922, %v924
  %v926 = vrot.slane %v894, %v925
  %927 = vrot.lane.b32.xlu0 %v926, 64
  %v928 = vpop.permute.xlu0 %927
  %s930 = scalar_lea.vmem %s5, 4
  %931 = vst.msk [vmem:[%s930] sm:$0x3] %vm455, %v928
  %v934 = vunpack.c.l.s4 1983009808
  %v935 = vunpack.c.0.s8 %v934
  %v936 = vlaneseq
  %v937 = vshrl.u32 %v936, 7
  %v938 = vsub.s32 %v935, %v937
  %v939 = vrot.slane %v918, %v938
  %940 = vrot.lane.b32.xlu0 %v939, 96
  %v941 = vpop.permute.xlu0 %940
  %s943 = scalar_lea.vmem %s5, 10
  %944 = vst.msk [vmem:[%s943] sm:$0x3] %vm469, %v941
  %s945 = scalar_lea.vmem [#allocation2], 12
  %v946 = vld [vmem:[%s945] sm:$0xf]
  %s947 = scalar_lea.vmem [#allocation2], 16
  %v948 = vld [vmem:[%s947] sm:$0xf]
  %v949 = vld [vmem:[%s2] sm:$0xff]
  %v950 = vld [vmem:[%s2 + $0x8] sm:$0xff]
  %v951 = vld [vmem:[%s2 + $0x10] sm:$0xff]
  %v952 = vld [vmem:[%s2 + $0x18] sm:$0xff]
  %v953 = vsel %vm243, %v928, 0
  %955 = vmatprep.subr.mxu0 0.0
  %956 = vmatpush1.msra.mxu0 %v949
  %957 = vmatprep.subr.mxu0 0.0
  %958 = vmatpush1.msra.mxu0 %v950
  %959 = vmatprep.subr.mxu0 0.0
  %960 = vmatpush1.msra.mxu0 %v951
  %961 = vmatprep.subr.mxu0 0.0
  %962 = vmatpush1.msra.mxu0 %v952
  %963 = vmatprep.subr.mxu0 0.0
  %964 = vmatpush1.msra.mxu0 0.0
  %965 = vmatprep.subr.mxu0 0.0
  %966 = vmatpush1.msra.mxu0 0.0
  %967 = vmatprep.subr.mxu0 0.0
  %968 = vmatpush1.msra.mxu0 0.0
  %969 = vmatprep.subr.mxu0 0.0
  %970 = vmatpush1.msra.mxu0 0.0
  %971 = vmatprep.subr.mxu0 0.0
  %972 = vmatpush1.msra.mxu0 0.0
  %973 = vmatprep.subr.mxu0 0.0
  %974 = vmatpush1.msra.mxu0 0.0
  %975 = vmatprep.subr.mxu0 0.0
  %976 = vmatpush1.msra.mxu0 0.0
  %977 = vmatprep.subr.mxu0 0.0
  %978 = vmatpush1.msra.mxu0 0.0
  %979 = vmatprep.subr.mxu0 0.0
  %980 = vmatpush1.msra.mxu0 0.0
  %981 = vmatprep.subr.mxu0 0.0
  %982 = vmatpush1.msra.mxu0 0.0
  %983 = vmatprep.subr.mxu0 0.0
  %984 = vmatpush1.msra.mxu0 0.0
  %985 = vmatprep.subr.mxu0 0.0
  %986 = vmatpush1.msra.mxu0 0.0
  %987 = vmatprep.subr.mxu0 0.0
  %988 = vmatpush1.msra.mxu0 0.0
  %989 = vmatprep.subr.mxu0 0.0
  %990 = vmatpush1.msra.mxu0 0.0
  %991 = vmatprep.subr.mxu0 0.0
  %992 = vmatpush1.msra.mxu0 0.0
  %993 = vmatprep.subr.mxu0 0.0
  %994 = vmatpush1.msra.mxu0 0.0
  %995 = vmatprep.subr.mxu0 0.0
  %996 = vmatpush1.msra.mxu0 0.0
  %997 = vmatprep.subr.mxu0 0.0
  %998 = vmatpush1.msra.mxu0 0.0
  %999 = vmatprep.subr.mxu0 0.0
  %1000 = vmatpush1.msra.mxu0 0.0
  %1001 = vmatprep.subr.mxu0 0.0
  %1002 = vmatpush1.msra.mxu0 0.0
  %1003 = vmatprep.subr.mxu0 0.0
  %1004 = vmatpush1.msra.mxu0 0.0
  %1005 = vmatprep.subr.mxu0 0.0
  %1006 = vmatpush1.msra.mxu0 0.0
  %1007 = vmatprep.subr.mxu0 0.0
  %1008 = vmatpush1.msra.mxu0 0.0
  %1009 = vmatprep.subr.mxu0 0.0
  %1010 = vmatpush1.msra.mxu0 0.0
  %1011 = vmatprep.subr.mxu0 0.0
  %1012 = vmatpush1.msra.mxu0 0.0
  %1013 = vmatprep.subr.mxu0 0.0
  %1014 = vmatpush1.msra.mxu0 0.0
  %1015 = vmatprep.subr.mxu0 0.0
  %1016 = vmatpush1.msra.mxu0 0.0
  %1017 = vmatprep.subr.mxu0 0.0
  %1018 = vmatpush1.msra.mxu0 0.0
  %1019 = vmatprep.mubr.f32.mxu0 0.0
  %1020 = vmatmul.mubr.f32.gmra.mrb[0].mxu0 %v953
  %v1021 = vpop.f32.mrb[0].mxu0
  %v1022 = vadd.f32 0.0, %v1021
  %v1023 = vpop.f32.mrb[0].mxu0
  %1024 = vdwg.mxu0
  %v1025 = vadd.f32 %v946, %v1022
  %v1026 = vld [vmem:[%s3] sm:$0xff]
  %v1027 = vld [vmem:[%s3 + $0x8] sm:$0xff]
  %v1028 = vld [vmem:[%s3 + $0x10] sm:$0xff]
  %v1029 = vld [vmem:[%s3 + $0x18] sm:$0xff]
  %1030 = vrot.lane.b32.xlu0 %v939, 64
  %v1031 = vpop.permute.xlu0 %1030
  %v1032 = vsel %vm243, %v1031, 0
  %1034 = vmatprep.subr.mxu0 0.0
  %1035 = vmatpush1.msra.mxu0 %v1026
  %1036 = vmatprep.subr.mxu0 0.0
  %1037 = vmatpush1.msra.mxu0 %v1027
  %1038 = vmatprep.subr.mxu0 0.0
  %1039 = vmatpush1.msra.mxu0 %v1028
  %1040 = vmatprep.subr.mxu0 0.0
  %1041 = vmatpush1.msra.mxu0 %v1029
  %1042 = vmatprep.subr.mxu0 0.0
  %1043 = vmatpush1.msra.mxu0 0.0
  %1044 = vmatprep.subr.mxu0 0.0
  %1045 = vmatpush1.msra.mxu0 0.0
  %1046 = vmatprep.subr.mxu0 0.0
  %1047 = vmatpush1.msra.mxu0 0.0
  %1048 = vmatprep.subr.mxu0 0.0
  %1049 = vmatpush1.msra.mxu0 0.0
  %1050 = vmatprep.subr.mxu0 0.0
  %1051 = vmatpush1.msra.mxu0 0.0
  %1052 = vmatprep.subr.mxu0 0.0
  %1053 = vmatpush1.msra.mxu0 0.0
  %1054 = vmatprep.subr.mxu0 0.0
  %1055 = vmatpush1.msra.mxu0 0.0
  %1056 = vmatprep.subr.mxu0 0.0
  %1057 = vmatpush1.msra.mxu0 0.0
  %1058 = vmatprep.subr.mxu0 0.0
  %1059 = vmatpush1.msra.mxu0 0.0
  %1060 = vmatprep.subr.mxu0 0.0
  %1061 = vmatpush1.msra.mxu0 0.0
  %1062 = vmatprep.subr.mxu0 0.0
  %1063 = vmatpush1.msra.mxu0 0.0
  %1064 = vmatprep.subr.mxu0 0.0
  %1065 = vmatpush1.msra.mxu0 0.0
  %1066 = vmatprep.subr.mxu0 0.0
  %1067 = vmatpush1.msra.mxu0 0.0
  %1068 = vmatprep.subr.mxu0 0.0
  %1069 = vmatpush1.msra.mxu0 0.0
  %1070 = vmatprep.subr.mxu0 0.0
  %1071 = vmatpush1.msra.mxu0 0.0
  %1072 = vmatprep.subr.mxu0 0.0
  %1073 = vmatpush1.msra.mxu0 0.0
  %1074 = vmatprep.subr.mxu0 0.0
  %1075 = vmatpush1.msra.mxu0 0.0
  %1076 = vmatprep.subr.mxu0 0.0
  %1077 = vmatpush1.msra.mxu0 0.0
  %1078 = vmatprep.subr.mxu0 0.0
  %1079 = vmatpush1.msra.mxu0 0.0
  %1080 = vmatprep.subr.mxu0 0.0
  %1081 = vmatpush1.msra.mxu0 0.0
  %1082 = vmatprep.subr.mxu0 0.0
  %1083 = vmatpush1.msra.mxu0 0.0
  %1084 = vmatprep.subr.mxu0 0.0
  %1085 = vmatpush1.msra.mxu0 0.0
  %1086 = vmatprep.subr.mxu0 0.0
  %1087 = vmatpush1.msra.mxu0 0.0
  %1088 = vmatprep.subr.mxu0 0.0
  %1089 = vmatpush1.msra.mxu0 0.0
  %1090 = vmatprep.subr.mxu0 0.0
  %1091 = vmatpush1.msra.mxu0 0.0
  %1092 = vmatprep.subr.mxu0 0.0
  %1093 = vmatpush1.msra.mxu0 0.0
  %1094 = vmatprep.subr.mxu0 0.0
  %1095 = vmatpush1.msra.mxu0 0.0
  %1096 = vmatprep.subr.mxu0 0.0
  %1097 = vmatpush1.msra.mxu0 0.0
  %1098 = vmatprep.mubr.f32.mxu0 0.0
  %1099 = vmatmul.mubr.f32.gmra.mrb[0].mxu0 %v1032
  %v1100 = vpop.f32.mrb[0].mxu0
  %v1101 = vadd.f32 0.0, %v1100
  %v1102 = vpop.f32.mrb[0].mxu0
  %1103 = vdwg.mxu0
  %v1105 = vrot.slane %v948, 2
  %v1107 = vadd.f32 %v1105, %v1101
  %v1108 = vxor.u32 %v1025, 2147483648
  %v1109 = vmul.f32 %v1108, 1.442695
  %v1110 = vpow.pop %v1109
  %v1111 = vadd.f32 %v1110, 1.0
  %v1112 = vrcp.pop %v1111
  %v1113 = vmul.f32 1.0, %v1112
  %v1114 = vtanh.pop %v1025
  %v1115 = vmul.f32 %v1113, %v888
  %1117 = vrot.lane.b32.xlu0 %v1114, 32
  %v1118 = vpop.permute.xlu0 %1117
  %v1120 = vmul.f32 %v1113, %v1118
  %1122 = vrot.lane.b32.xlu0 %v1120, 32
  %v1123 = vpop.permute.xlu0 %1122
  %v1125 = vadd.f32 %v1115, %v1123
  %v1126 = vtanh.pop %v1125
  %1128 = vrot.lane.b32.xlu0 %v1126, 32
  %v1129 = vpop.permute.xlu0 %1128
  %v1131 = vmul.f32 %v1113, %v1129
  %v1132 = vxor.u32 %v1107, 2147483648
  %v1133 = vmul.f32 %v1132, 1.442695
  %v1134 = vpow.pop %v1133
  %v1135 = vadd.f32 %v1134, 1.0
  %v1136 = vrcp.pop %v1135
  %v1137 = vmul.f32 1.0, %v1136
  %v1138 = vtanh.pop %v1107
  %v1139 = vmul.f32 %v1137, %v912
  %1141 = vrot.lane.b32.xlu0 %v1138, 32
  %v1142 = vpop.permute.xlu0 %1141
  %v1144 = vmul.f32 %v1137, %v1142
  %1146 = vrot.lane.b32.xlu0 %v1144, 32
  %v1147 = vpop.permute.xlu0 %1146
  %v1149 = vadd.f32 %v1139, %v1147
  %v1150 = vtanh.pop %v1149
  %1152 = vrot.lane.b32.xlu0 %v1150, 32
  %v1153 = vpop.permute.xlu0 %1152
  %v1155 = vmul.f32 %v1137, %v1153
  %v1158 = vunpack.c.l.s4 1983009808
  %v1159 = vunpack.c.0.s8 %v1158
  %v1160 = vlaneseq
  %v1161 = vshrl.u32 %v1160, 7
  %v1162 = vsub.s32 %v1159, %v1161
  %v1163 = vrot.slane %v1131, %v1162
  %1164 = vrot.lane.b32.xlu0 %v1163, 64
  %v1165 = vpop.permute.xlu0 %1164
  %s1167 = scalar_lea.vmem %s5, 6
  %1168 = vst.msk [vmem:[%s1167] sm:$0x3] %vm455, %v1165
  %v1171 = vunpack.c.l.s4 1983009808
  %v1172 = vunpack.c.0.s8 %v1171
  %v1173 = vlaneseq
  %v1174 = vshrl.u32 %v1173, 7
  %v1175 = vsub.s32 %v1172, %v1174
  %v1176 = vrot.slane %v1155, %v1175
  %1177 = vrot.lane.b32.xlu0 %v1176, 96
  %v1178 = vpop.permute.xlu0 %1177
  %s1180 = scalar_lea.vmem %s5, 8
  %1181 = vst.msk [vmem:[%s1180] sm:$0x3] %vm469, %v1178
  %v1182 = vld [vmem:[%s947] sm:$0xf]
  %v1183 = vld [vmem:[%s945] sm:$0xf]
  %v1184 = vld [vmem:[%s2] sm:$0xff]
  %v1185 = vld [vmem:[%s2 + $0x8] sm:$0xff]
  %v1186 = vld [vmem:[%s2 + $0x10] sm:$0xff]
  %v1187 = vld [vmem:[%s2 + $0x18] sm:$0xff]
  %v1188 = vsel %vm243, %v1165, 0
  %1190 = vmatprep.subr.mxu0 0.0
  %1191 = vmatpush1.msra.mxu0 %v1184
  %1192 = vmatprep.subr.mxu0 0.0
  %1193 = vmatpush1.msra.mxu0 %v1185
  %1194 = vmatprep.subr.mxu0 0.0
  %1195 = vmatpush1.msra.mxu0 %v1186
  %1196 = vmatprep.subr.mxu0 0.0
  %1197 = vmatpush1.msra.mxu0 %v1187
  %1198 = vmatprep.subr.mxu0 0.0
  %1199 = vmatpush1.msra.mxu0 0.0
  %1200 = vmatprep.subr.mxu0 0.0
  %1201 = vmatpush1.msra.mxu0 0.0
  %1202 = vmatprep.subr.mxu0 0.0
  %1203 = vmatpush1.msra.mxu0 0.0
  %1204 = vmatprep.subr.mxu0 0.0
  %1205 = vmatpush1.msra.mxu0 0.0
  %1206 = vmatprep.subr.mxu0 0.0
  %1207 = vmatpush1.msra.mxu0 0.0
  %1208 = vmatprep.subr.mxu0 0.0
  %1209 = vmatpush1.msra.mxu0 0.0
  %1210 = vmatprep.subr.mxu0 0.0
  %1211 = vmatpush1.msra.mxu0 0.0
  %1212 = vmatprep.subr.mxu0 0.0
  %1213 = vmatpush1.msra.mxu0 0.0
  %1214 = vmatprep.subr.mxu0 0.0
  %1215 = vmatpush1.msra.mxu0 0.0
  %1216 = vmatprep.subr.mxu0 0.0
  %1217 = vmatpush1.msra.mxu0 0.0
  %1218 = vmatprep.subr.mxu0 0.0
  %1219 = vmatpush1.msra.mxu0 0.0
  %1220 = vmatprep.subr.mxu0 0.0
  %1221 = vmatpush1.msra.mxu0 0.0
  %1222 = vmatprep.subr.mxu0 0.0
  %1223 = vmatpush1.msra.mxu0 0.0
  %1224 = vmatprep.subr.mxu0 0.0
  %1225 = vmatpush1.msra.mxu0 0.0
  %1226 = vmatprep.subr.mxu0 0.0
  %1227 = vmatpush1.msra.mxu0 0.0
  %1228 = vmatprep.subr.mxu0 0.0
  %1229 = vmatpush1.msra.mxu0 0.0
  %1230 = vmatprep.subr.mxu0 0.0
  %1231 = vmatpush1.msra.mxu0 0.0
  %1232 = vmatprep.subr.mxu0 0.0
  %1233 = vmatpush1.msra.mxu0 0.0
  %1234 = vmatprep.subr.mxu0 0.0
  %1235 = vmatpush1.msra.mxu0 0.0
  %1236 = vmatprep.subr.mxu0 0.0
  %1237 = vmatpush1.msra.mxu0 0.0
  %1238 = vmatprep.subr.mxu0 0.0
  %1239 = vmatpush1.msra.mxu0 0.0
  %1240 = vmatprep.subr.mxu0 0.0
  %1241 = vmatpush1.msra.mxu0 0.0
  %1242 = vmatprep.subr.mxu0 0.0
  %1243 = vmatpush1.msra.mxu0 0.0
  %1244 = vmatprep.subr.mxu0 0.0
  %1245 = vmatpush1.msra.mxu0 0.0
  %1246 = vmatprep.subr.mxu0 0.0
  %1247 = vmatpush1.msra.mxu0 0.0
  %1248 = vmatprep.subr.mxu0 0.0
  %1249 = vmatpush1.msra.mxu0 0.0
  %1250 = vmatprep.subr.mxu0 0.0
  %1251 = vmatpush1.msra.mxu0 0.0
  %1252 = vmatprep.subr.mxu0 0.0
  %1253 = vmatpush1.msra.mxu0 0.0
  %1254 = vmatprep.mubr.f32.mxu0 0.0
  %1255 = vmatmul.mubr.f32.gmra.mrb[0].mxu0 %v1188
  %v1256 = vpop.f32.mrb[0].mxu0
  %v1257 = vadd.f32 0.0, %v1256
  %v1258 = vpop.f32.mrb[0].mxu0
  %1259 = vdwg.mxu0
  %v1260 = vadd.f32 %v1182, %v1257
  %v1261 = vld [vmem:[%s3] sm:$0xff]
  %v1262 = vld [vmem:[%s3 + $0x8] sm:$0xff]
  %v1263 = vld [vmem:[%s3 + $0x10] sm:$0xff]
  %v1264 = vld [vmem:[%s3 + $0x18] sm:$0xff]
  %1265 = vrot.lane.b32.xlu0 %v1176, 64
  %v1266 = vpop.permute.xlu0 %1265
  %v1267 = vsel %vm243, %v1266, 0
  %1269 = vmatprep.subr.mxu0 0.0
  %1270 = vmatpush1.msra.mxu0 %v1261
  %1271 = vmatprep.subr.mxu0 0.0
  %1272 = vmatpush1.msra.mxu0 %v1262
  %1273 = vmatprep.subr.mxu0 0.0
  %1274 = vmatpush1.msra.mxu0 %v1263
  %1275 = vmatprep.subr.mxu0 0.0
  %1276 = vmatpush1.msra.mxu0 %v1264
  %1277 = vmatprep.subr.mxu0 0.0
  %1278 = vmatpush1.msra.mxu0 0.0
  %1279 = vmatprep.subr.mxu0 0.0
  %1280 = vmatpush1.msra.mxu0 0.0
  %1281 = vmatprep.subr.mxu0 0.0
  %1282 = vmatpush1.msra.mxu0 0.0
  %1283 = vmatprep.subr.mxu0 0.0
  %1284 = vmatpush1.msra.mxu0 0.0
  %1285 = vmatprep.subr.mxu0 0.0
  %1286 = vmatpush1.msra.mxu0 0.0
  %1287 = vmatprep.subr.mxu0 0.0
  %1288 = vmatpush1.msra.mxu0 0.0
  %1289 = vmatprep.subr.mxu0 0.0
  %1290 = vmatpush1.msra.mxu0 0.0
  %1291 = vmatprep.subr.mxu0 0.0
  %1292 = vmatpush1.msra.mxu0 0.0
  %1293 = vmatprep.subr.mxu0 0.0
  %1294 = vmatpush1.msra.mxu0 0.0
  %1295 = vmatprep.subr.mxu0 0.0
  %1296 = vmatpush1.msra.mxu0 0.0
  %1297 = vmatprep.subr.mxu0 0.0
  %1298 = vmatpush1.msra.mxu0 0.0
  %1299 = vmatprep.subr.mxu0 0.0
  %1300 = vmatpush1.msra.mxu0 0.0
  %1301 = vmatprep.subr.mxu0 0.0
  %1302 = vmatpush1.msra.mxu0 0.0
  %1303 = vmatprep.subr.mxu0 0.0
  %1304 = vmatpush1.msra.mxu0 0.0
  %1305 = vmatprep.subr.mxu0 0.0
  %1306 = vmatpush1.msra.mxu0 0.0
  %1307 = vmatprep.subr.mxu0 0.0
  %1308 = vmatpush1.msra.mxu0 0.0
  %1309 = vmatprep.subr.mxu0 0.0
  %1310 = vmatpush1.msra.mxu0 0.0
  %1311 = vmatprep.subr.mxu0 0.0
  %1312 = vmatpush1.msra.mxu0 0.0
  %1313 = vmatprep.subr.mxu0 0.0
  %1314 = vmatpush1.msra.mxu0 0.0
  %1315 = vmatprep.subr.mxu0 0.0
  %1316 = vmatpush1.msra.mxu0 0.0
  %1317 = vmatprep.subr.mxu0 0.0
  %1318 = vmatpush1.msra.mxu0 0.0
  %1319 = vmatprep.subr.mxu0 0.0
  %1320 = vmatpush1.msra.mxu0 0.0
  %1321 = vmatprep.subr.mxu0 0.0
  %1322 = vmatpush1.msra.mxu0 0.0
  %1323 = vmatprep.subr.mxu0 0.0
  %1324 = vmatpush1.msra.mxu0 0.0
  %1325 = vmatprep.subr.mxu0 0.0
  %1326 = vmatpush1.msra.mxu0 0.0
  %1327 = vmatprep.subr.mxu0 0.0
  %1328 = vmatpush1.msra.mxu0 0.0
  %1329 = vmatprep.subr.mxu0 0.0
  %1330 = vmatpush1.msra.mxu0 0.0
  %1331 = vmatprep.subr.mxu0 0.0
  %1332 = vmatpush1.msra.mxu0 0.0
  %1333 = vmatprep.mubr.f32.mxu0 0.0
  %1334 = vmatmul.mubr.f32.gmra.mrb[0].mxu0 %v1267
  %v1335 = vpop.f32.mrb[0].mxu0
  %v1336 = vadd.f32 0.0, %v1335
  %v1337 = vpop.f32.mrb[0].mxu0
  %1338 = vdwg.mxu0
  %v1340 = vrot.slane %v1183, 2
  %v1342 = vadd.f32 %v1340, %v1336
  %v1343 = vxor.u32 %v1260, 2147483648
  %v1344 = vmul.f32 %v1343, 1.442695
  %v1345 = vpow.pop %v1344
  %v1346 = vadd.f32 %v1345, 1.0
  %v1347 = vrcp.pop %v1346
  %v1348 = vmul.f32 1.0, %v1347
  %v1349 = vtanh.pop %v1260
  %v1350 = vmul.f32 %v1348, %v1125
  %1352 = vrot.lane.b32.xlu0 %v1349, 32
  %v1353 = vpop.permute.xlu0 %1352
  %v1355 = vmul.f32 %v1348, %v1353
  %1357 = vrot.lane.b32.xlu0 %v1355, 32
  %v1358 = vpop.permute.xlu0 %1357
  %v1360 = vadd.f32 %v1350, %v1358
  %v1361 = vtanh.pop %v1360
  %1363 = vrot.lane.b32.xlu0 %v1361, 32
  %v1364 = vpop.permute.xlu0 %1363
  %v1366 = vmul.f32 %v1348, %v1364
  %v1367 = vxor.u32 %v1342, 2147483648
  %v1368 = vmul.f32 %v1367, 1.442695
  %v1369 = vpow.pop %v1368
  %v1370 = vadd.f32 %v1369, 1.0
  %v1371 = vrcp.pop %v1370
  %v1372 = vmul.f32 1.0, %v1371
  %v1373 = vtanh.pop %v1342
  %v1374 = vmul.f32 %v1372, %v1149
  %1376 = vrot.lane.b32.xlu0 %v1373, 32
  %v1377 = vpop.permute.xlu0 %1376
  %v1379 = vmul.f32 %v1372, %v1377
  %1381 = vrot.lane.b32.xlu0 %v1379, 32
  %v1382 = vpop.permute.xlu0 %1381
  %v1384 = vadd.f32 %v1374, %v1382
  %v1385 = vtanh.pop %v1384
  %1387 = vrot.lane.b32.xlu0 %v1385, 32
  %v1388 = vpop.permute.xlu0 %1387
  %v1390 = vmul.f32 %v1372, %v1388
  %v1393 = vunpack.c.l.s4 1983009808
  %v1394 = vunpack.c.0.s8 %v1393
  %v1395 = vlaneseq
  %v1396 = vshrl.u32 %v1395, 7
  %v1397 = vsub.s32 %v1394, %v1396
  %v1398 = vrot.slane %v1366, %v1397
  %1399 = vrot.lane.b32.xlu0 %v1398, 64
  %v1400 = vpop.permute.xlu0 %1399
  %1402 = vst.msk [vmem:[%s1180] sm:$0x3] %vm455, %v1400
  %v1405 = vunpack.c.l.s4 1983009808
  %v1406 = vunpack.c.0.s8 %v1405
  %v1407 = vlaneseq
  %v1408 = vshrl.u32 %v1407, 7
  %v1409 = vsub.s32 %v1406, %v1408
  %v1410 = vrot.slane %v1390, %v1409
  %1411 = vrot.lane.b32.xlu0 %v1410, 96
  %v1412 = vpop.permute.xlu0 %1411
  %1414 = vst.msk [vmem:[%s1167] sm:$0x3] %vm469, %v1412
  %v1415 = vld [vmem:[%s710] sm:$0xf]
  %v1416 = vld [vmem:[%s708] sm:$0xf]
  %v1417 = vld [vmem:[%s2] sm:$0xff]
  %v1418 = vld [vmem:[%s2 + $0x8] sm:$0xff]
  %v1419 = vld [vmem:[%s2 + $0x10] sm:$0xff]
  %v1420 = vld [vmem:[%s2 + $0x18] sm:$0xff]
  %v1421 = vsel %vm243, %v1400, 0
  %1423 = vmatprep.subr.mxu0 0.0
  %1424 = vmatpush1.msra.mxu0 %v1417
  %1425 = vmatprep.subr.mxu0 0.0
  %1426 = vmatpush1.msra.mxu0 %v1418
  %1427 = vmatprep.subr.mxu0 0.0
  %1428 = vmatpush1.msra.mxu0 %v1419
  %1429 = vmatprep.subr.mxu0 0.0
  %1430 = vmatpush1.msra.mxu0 %v1420
  %1431 = vmatprep.subr.mxu0 0.0
  %1432 = vmatpush1.msra.mxu0 0.0
  %1433 = vmatprep.subr.mxu0 0.0
  %1434 = vmatpush1.msra.mxu0 0.0
  %1435 = vmatprep.subr.mxu0 0.0
  %1436 = vmatpush1.msra.mxu0 0.0
  %1437 = vmatprep.subr.mxu0 0.0
  %1438 = vmatpush1.msra.mxu0 0.0
  %1439 = vmatprep.subr.mxu0 0.0
  %1440 = vmatpush1.msra.mxu0 0.0
  %1441 = vmatprep.subr.mxu0 0.0
  %1442 = vmatpush1.msra.mxu0 0.0
  %1443 = vmatprep.subr.mxu0 0.0
  %1444 = vmatpush1.msra.mxu0 0.0
  %1445 = vmatprep.subr.mxu0 0.0
  %1446 = vmatpush1.msra.mxu0 0.0
  %1447 = vmatprep.subr.mxu0 0.0
  %1448 = vmatpush1.msra.mxu0 0.0
  %1449 = vmatprep.subr.mxu0 0.0
  %1450 = vmatpush1.msra.mxu0 0.0
  %1451 = vmatprep.subr.mxu0 0.0
  %1452 = vmatpush1.msra.mxu0 0.0
  %1453 = vmatprep.subr.mxu0 0.0
  %1454 = vmatpush1.msra.mxu0 0.0
  %1455 = vmatprep.subr.mxu0 0.0
  %1456 = vmatpush1.msra.mxu0 0.0
  %1457 = vmatprep.subr.mxu0 0.0
  %1458 = vmatpush1.msra.mxu0 0.0
  %1459 = vmatprep.subr.mxu0 0.0
  %1460 = vmatpush1.msra.mxu0 0.0
  %1461 = vmatprep.subr.mxu0 0.0
  %1462 = vmatpush1.msra.mxu0 0.0
  %1463 = vmatprep.subr.mxu0 0.0
  %1464 = vmatpush1.msra.mxu0 0.0
  %1465 = vmatprep.subr.mxu0 0.0
  %1466 = vmatpush1.msra.mxu0 0.0
  %1467 = vmatprep.subr.mxu0 0.0
  %1468 = vmatpush1.msra.mxu0 0.0
  %1469 = vmatprep.subr.mxu0 0.0
  %1470 = vmatpush1.msra.mxu0 0.0
  %1471 = vmatprep.subr.mxu0 0.0
  %1472 = vmatpush1.msra.mxu0 0.0
  %1473 = vmatprep.subr.mxu0 0.0
  %1474 = vmatpush1.msra.mxu0 0.0
  %1475 = vmatprep.subr.mxu0 0.0
  %1476 = vmatpush1.msra.mxu0 0.0
  %1477 = vmatprep.subr.mxu0 0.0
  %1478 = vmatpush1.msra.mxu0 0.0
  %1479 = vmatprep.subr.mxu0 0.0
  %1480 = vmatpush1.msra.mxu0 0.0
  %1481 = vmatprep.subr.mxu0 0.0
  %1482 = vmatpush1.msra.mxu0 0.0
  %1483 = vmatprep.subr.mxu0 0.0
  %1484 = vmatpush1.msra.mxu0 0.0
  %1485 = vmatprep.subr.mxu0 0.0
  %1486 = vmatpush1.msra.mxu0 0.0
  %1487 = vmatprep.mubr.f32.mxu0 0.0
  %1488 = vmatmul.mubr.f32.gmra.mrb[0].mxu0 %v1421
  %v1489 = vpop.f32.mrb[0].mxu0
  %v1490 = vadd.f32 0.0, %v1489
  %v1491 = vpop.f32.mrb[0].mxu0
  %1492 = vdwg.mxu0
  %v1493 = vadd.f32 %v1415, %v1490
  %v1494 = vld [vmem:[%s3] sm:$0xff]
  %v1495 = vld [vmem:[%s3 + $0x8] sm:$0xff]
  %v1496 = vld [vmem:[%s3 + $0x10] sm:$0xff]
  %v1497 = vld [vmem:[%s3 + $0x18] sm:$0xff]
  %1498 = vrot.lane.b32.xlu0 %v1410, 64
  %v1499 = vpop.permute.xlu0 %1498
  %v1500 = vsel %vm243, %v1499, 0
  %1502 = vmatprep.subr.mxu0 0.0
  %1503 = vmatpush1.msra.mxu0 %v1494
  %1504 = vmatprep.subr.mxu0 0.0
  %1505 = vmatpush1.msra.mxu0 %v1495
  %1506 = vmatprep.subr.mxu0 0.0
  %1507 = vmatpush1.msra.mxu0 %v1496
  %1508 = vmatprep.subr.mxu0 0.0
  %1509 = vmatpush1.msra.mxu0 %v1497
  %1510 = vmatprep.subr.mxu0 0.0
  %1511 = vmatpush1.msra.mxu0 0.0
  %1512 = vmatprep.subr.mxu0 0.0
  %1513 = vmatpush1.msra.mxu0 0.0
  %1514 = vmatprep.subr.mxu0 0.0
  %1515 = vmatpush1.msra.mxu0 0.0
  %1516 = vmatprep.subr.mxu0 0.0
  %1517 = vmatpush1.msra.mxu0 0.0
  %1518 = vmatprep.subr.mxu0 0.0
  %1519 = vmatpush1.msra.mxu0 0.0
  %1520 = vmatprep.subr.mxu0 0.0
  %1521 = vmatpush1.msra.mxu0 0.0
  %1522 = vmatprep.subr.mxu0 0.0
  %1523 = vmatpush1.msra.mxu0 0.0
  %1524 = vmatprep.subr.mxu0 0.0
  %1525 = vmatpush1.msra.mxu0 0.0
  %1526 = vmatprep.subr.mxu0 0.0
  %1527 = vmatpush1.msra.mxu0 0.0
  %1528 = vmatprep.subr.mxu0 0.0
  %1529 = vmatpush1.msra.mxu0 0.0
  %1530 = vmatprep.subr.mxu0 0.0
  %1531 = vmatpush1.msra.mxu0 0.0
  %1532 = vmatprep.subr.mxu0 0.0
  %1533 = vmatpush1.msra.mxu0 0.0
  %1534 = vmatprep.subr.mxu0 0.0
  %1535 = vmatpush1.msra.mxu0 0.0
  %1536 = vmatprep.subr.mxu0 0.0
  %1537 = vmatpush1.msra.mxu0 0.0
  %1538 = vmatprep.subr.mxu0 0.0
  %1539 = vmatpush1.msra.mxu0 0.0
  %1540 = vmatprep.subr.mxu0 0.0
  %1541 = vmatpush1.msra.mxu0 0.0
  %1542 = vmatprep.subr.mxu0 0.0
  %1543 = vmatpush1.msra.mxu0 0.0
  %1544 = vmatprep.subr.mxu0 0.0
  %1545 = vmatpush1.msra.mxu0 0.0
  %1546 = vmatprep.subr.mxu0 0.0
  %1547 = vmatpush1.msra.mxu0 0.0
  %1548 = vmatprep.subr.mxu0 0.0
  %1549 = vmatpush1.msra.mxu0 0.0
  %1550 = vmatprep.subr.mxu0 0.0
  %1551 = vmatpush1.msra.mxu0 0.0
  %1552 = vmatprep.subr.mxu0 0.0
  %1553 = vmatpush1.msra.mxu0 0.0
  %1554 = vmatprep.subr.mxu0 0.0
  %1555 = vmatpush1.msra.mxu0 0.0
  %1556 = vmatprep.subr.mxu0 0.0
  %1557 = vmatpush1.msra.mxu0 0.0
  %1558 = vmatprep.subr.mxu0 0.0
  %1559 = vmatpush1.msra.mxu0 0.0
  %1560 = vmatprep.subr.mxu0 0.0
  %1561 = vmatpush1.msra.mxu0 0.0
  %1562 = vmatprep.subr.mxu0 0.0
  %1563 = vmatpush1.msra.mxu0 0.0
  %1564 = vmatprep.subr.mxu0 0.0
  %1565 = vmatpush1.msra.mxu0 0.0
  %1566 = vmatprep.mubr.f32.mxu0 0.0
  %1567 = vmatmul.mubr.f32.gmra.mrb[0].mxu0 %v1500
  %v1568 = vpop.f32.mrb[0].mxu0
  %v1569 = vadd.f32 0.0, %v1568
  %v1570 = vpop.f32.mrb[0].mxu0
  %1571 = vdwg.mxu0
  %v1573 = vrot.slane %v1416, 2
  %v1575 = vadd.f32 %v1573, %v1569
  %v1576 = vxor.u32 %v1493, 2147483648
  %v1577 = vmul.f32 %v1576, 1.442695
  %v1578 = vpow.pop %v1577
  %v1579 = vadd.f32 %v1578, 1.0
  %v1580 = vrcp.pop %v1579
  %v1581 = vmul.f32 1.0, %v1580
  %v1582 = vtanh.pop %v1493
  %v1583 = vmul.f32 %v1581, %v1360
  %1585 = vrot.lane.b32.xlu0 %v1582, 32
  %v1586 = vpop.permute.xlu0 %1585
  %v1588 = vmul.f32 %v1581, %v1586
  %1590 = vrot.lane.b32.xlu0 %v1588, 32
  %v1591 = vpop.permute.xlu0 %1590
  %v1593 = vadd.f32 %v1583, %v1591
  %v1594 = vtanh.pop %v1593
  %1596 = vrot.lane.b32.xlu0 %v1594, 32
  %v1597 = vpop.permute.xlu0 %1596
  %v1599 = vmul.f32 %v1581, %v1597
  %v1600 = vxor.u32 %v1575, 2147483648
  %v1601 = vmul.f32 %v1600, 1.442695
  %v1602 = vpow.pop %v1601
  %v1603 = vadd.f32 %v1602, 1.0
  %v1604 = vrcp.pop %v1603
  %v1605 = vmul.f32 1.0, %v1604
  %v1606 = vtanh.pop %v1575
  %v1607 = vmul.f32 %v1605, %v1384
  %1609 = vrot.lane.b32.xlu0 %v1606, 32
  %v1610 = vpop.permute.xlu0 %1609
  %v1612 = vmul.f32 %v1605, %v1610
  %1614 = vrot.lane.b32.xlu0 %v1612, 32
  %v1615 = vpop.permute.xlu0 %1614
  %v1617 = vadd.f32 %v1607, %v1615
  %v1618 = vtanh.pop %v1617
  %1620 = vrot.lane.b32.xlu0 %v1618, 32
  %v1621 = vpop.permute.xlu0 %1620
  %v1623 = vmul.f32 %v1605, %v1621
  %v1626 = vunpack.c.l.s4 1983009808
  %v1627 = vunpack.c.0.s8 %v1626
  %v1628 = vlaneseq
  %v1629 = vshrl.u32 %v1628, 7
  %v1630 = vsub.s32 %v1627, %v1629
  %v1631 = vrot.slane %v1599, %v1630
  %1632 = vrot.lane.b32.xlu0 %v1631, 64
  %v1633 = vpop.permute.xlu0 %1632
  %1635 = vst.msk [vmem:[%s943] sm:$0x3] %vm455, %v1633
  %v1638 = vunpack.c.l.s4 1983009808
  %v1639 = vunpack.c.0.s8 %v1638
  %v1640 = vlaneseq
  %v1641 = vshrl.u32 %v1640, 7
  %v1642 = vsub.s32 %v1639, %v1641
  %v1643 = vrot.slane %v1623, %v1642
  %1644 = vrot.lane.b32.xlu0 %v1643, 96
  %v1645 = vpop.permute.xlu0 %1644
  %1647 = vst.msk [vmem:[%s930] sm:$0x3] %vm469, %v1645
  %v1648 = vld [vmem:[%s473] sm:$0xf]
  %v1649 = vld [vmem:[%s471] sm:$0xf]
  %v1650 = vld [vmem:[%s2] sm:$0xff]
  %v1651 = vld [vmem:[%s2 + $0x8] sm:$0xff]
  %v1652 = vld [vmem:[%s2 + $0x10] sm:$0xff]
  %v1653 = vld [vmem:[%s2 + $0x18] sm:$0xff]
  %v1654 = vsel %vm243, %v1633, 0
  %1656 = vmatprep.subr.mxu0 0.0
  %1657 = vmatpush1.msra.mxu0 %v1650
  %1658 = vmatprep.subr.mxu0 0.0
  %1659 = vmatpush1.msra.mxu0 %v1651
  %1660 = vmatprep.subr.mxu0 0.0
  %1661 = vmatpush1.msra.mxu0 %v1652
  %1662 = vmatprep.subr.mxu0 0.0
  %1663 = vmatpush1.msra.mxu0 %v1653
  %1664 = vmatprep.subr.mxu0 0.0
  %1665 = vmatpush1.msra.mxu0 0.0
  %1666 = vmatprep.subr.mxu0 0.0
  %1667 = vmatpush1.msra.mxu0 0.0
  %1668 = vmatprep.subr.mxu0 0.0
  %1669 = vmatpush1.msra.mxu0 0.0
  %1670 = vmatprep.subr.mxu0 0.0
  %1671 = vmatpush1.msra.mxu0 0.0
  %1672 = vmatprep.subr.mxu0 0.0
  %1673 = vmatpush1.msra.mxu0 0.0
  %1674 = vmatprep.subr.mxu0 0.0
  %1675 = vmatpush1.msra.mxu0 0.0
  %1676 = vmatprep.subr.mxu0 0.0
  %1677 = vmatpush1.msra.mxu0 0.0
  %1678 = vmatprep.subr.mxu0 0.0
  %1679 = vmatpush1.msra.mxu0 0.0
  %1680 = vmatprep.subr.mxu0 0.0
  %1681 = vmatpush1.msra.mxu0 0.0
  %1682 = vmatprep.subr.mxu0 0.0
  %1683 = vmatpush1.msra.mxu0 0.0
  %1684 = vmatprep.subr.mxu0 0.0
  %1685 = vmatpush1.msra.mxu0 0.0
  %1686 = vmatprep.subr.mxu0 0.0
  %1687 = vmatpush1.msra.mxu0 0.0
  %1688 = vmatprep.subr.mxu0 0.0
  %1689 = vmatpush1.msra.mxu0 0.0
  %1690 = vmatprep.subr.mxu0 0.0
  %1691 = vmatpush1.msra.mxu0 0.0
  %1692 = vmatprep.subr.mxu0 0.0
  %1693 = vmatpush1.msra.mxu0 0.0
  %1694 = vmatprep.subr.mxu0 0.0
  %1695 = vmatpush1.msra.mxu0 0.0
  %1696 = vmatprep.subr.mxu0 0.0
  %1697 = vmatpush1.msra.mxu0 0.0
  %1698 = vmatprep.subr.mxu0 0.0
  %1699 = vmatpush1.msra.mxu0 0.0
  %1700 = vmatprep.subr.mxu0 0.0
  %1701 = vmatpush1.msra.mxu0 0.0
  %1702 = vmatprep.subr.mxu0 0.0
  %1703 = vmatpush1.msra.mxu0 0.0
  %1704 = vmatprep.subr.mxu0 0.0
  %1705 = vmatpush1.msra.mxu0 0.0
  %1706 = vmatprep.subr.mxu0 0.0
  %1707 = vmatpush1.msra.mxu0 0.0
  %1708 = vmatprep.subr.mxu0 0.0
  %1709 = vmatpush1.msra.mxu0 0.0
  %1710 = vmatprep.subr.mxu0 0.0
  %1711 = vmatpush1.msra.mxu0 0.0
  %1712 = vmatprep.subr.mxu0 0.0
  %1713 = vmatpush1.msra.mxu0 0.0
  %1714 = vmatprep.subr.mxu0 0.0
  %1715 = vmatpush1.msra.mxu0 0.0
  %1716 = vmatprep.subr.mxu0 0.0
  %1717 = vmatpush1.msra.mxu0 0.0
  %1718 = vmatprep.subr.mxu0 0.0
  %1719 = vmatpush1.msra.mxu0 0.0
  %1720 = vmatprep.mubr.f32.mxu0 0.0
  %1721 = vmatmul.mubr.f32.gmra.mrb[0].mxu0 %v1654
  %v1722 = vpop.f32.mrb[0].mxu0
  %v1723 = vadd.f32 0.0, %v1722
  %v1724 = vpop.f32.mrb[0].mxu0
  %1725 = vdwg.mxu0
  %v1726 = vadd.f32 %v1648, %v1723
  %v1727 = vld [vmem:[%s3] sm:$0xff]
  %v1728 = vld [vmem:[%s3 + $0x8] sm:$0xff]
  %v1729 = vld [vmem:[%s3 + $0x10] sm:$0xff]
  %v1730 = vld [vmem:[%s3 + $0x18] sm:$0xff]
  %1731 = vrot.lane.b32.xlu0 %v1643, 64
  %v1732 = vpop.permute.xlu0 %1731
  %v1733 = vsel %vm243, %v1732, 0
  %1735 = vmatprep.subr.mxu0 0.0
  %1736 = vmatpush1.msra.mxu0 %v1727
  %1737 = vmatprep.subr.mxu0 0.0
  %1738 = vmatpush1.msra.mxu0 %v1728
  %1739 = vmatprep.subr.mxu0 0.0
  %1740 = vmatpush1.msra.mxu0 %v1729
  %1741 = vmatprep.subr.mxu0 0.0
  %1742 = vmatpush1.msra.mxu0 %v1730
  %1743 = vmatprep.subr.mxu0 0.0
  %1744 = vmatpush1.msra.mxu0 0.0
  %1745 = vmatprep.subr.mxu0 0.0
  %1746 = vmatpush1.msra.mxu0 0.0
  %1747 = vmatprep.subr.mxu0 0.0
  %1748 = vmatpush1.msra.mxu0 0.0
  %1749 = vmatprep.subr.mxu0 0.0
  %1750 = vmatpush1.msra.mxu0 0.0
  %1751 = vmatprep.subr.mxu0 0.0
  %1752 = vmatpush1.msra.mxu0 0.0
  %1753 = vmatprep.subr.mxu0 0.0
  %1754 = vmatpush1.msra.mxu0 0.0
  %1755 = vmatprep.subr.mxu0 0.0
  %1756 = vmatpush1.msra.mxu0 0.0
  %1757 = vmatprep.subr.mxu0 0.0
  %1758 = vmatpush1.msra.mxu0 0.0
  %1759 = vmatprep.subr.mxu0 0.0
  %1760 = vmatpush1.msra.mxu0 0.0
  %1761 = vmatprep.subr.mxu0 0.0
  %1762 = vmatpush1.msra.mxu0 0.0
  %1763 = vmatprep.subr.mxu0 0.0
  %1764 = vmatpush1.msra.mxu0 0.0
  %1765 = vmatprep.subr.mxu0 0.0
  %1766 = vmatpush1.msra.mxu0 0.0
  %1767 = vmatprep.subr.mxu0 0.0
  %1768 = vmatpush1.msra.mxu0 0.0
  %1769 = vmatprep.subr.mxu0 0.0
  %1770 = vmatpush1.msra.mxu0 0.0
  %1771 = vmatprep.subr.mxu0 0.0
  %1772 = vmatpush1.msra.mxu0 0.0
  %1773 = vmatprep.subr.mxu0 0.0
  %1774 = vmatpush1.msra.mxu0 0.0
  %1775 = vmatprep.subr.mxu0 0.0
  %1776 = vmatpush1.msra.mxu0 0.0
  %1777 = vmatprep.subr.mxu0 0.0
  %1778 = vmatpush1.msra.mxu0 0.0
  %1779 = vmatprep.subr.mxu0 0.0
  %1780 = vmatpush1.msra.mxu0 0.0
  %1781 = vmatprep.subr.mxu0 0.0
  %1782 = vmatpush1.msra.mxu0 0.0
  %1783 = vmatprep.subr.mxu0 0.0
  %1784 = vmatpush1.msra.mxu0 0.0
  %1785 = vmatprep.subr.mxu0 0.0
  %1786 = vmatpush1.msra.mxu0 0.0
  %1787 = vmatprep.subr.mxu0 0.0
  %1788 = vmatpush1.msra.mxu0 0.0
  %1789 = vmatprep.subr.mxu0 0.0
  %1790 = vmatpush1.msra.mxu0 0.0
  %1791 = vmatprep.subr.mxu0 0.0
  %1792 = vmatpush1.msra.mxu0 0.0
  %1793 = vmatprep.subr.mxu0 0.0
  %1794 = vmatpush1.msra.mxu0 0.0
  %1795 = vmatprep.subr.mxu0 0.0
  %1796 = vmatpush1.msra.mxu0 0.0
  %1797 = vmatprep.subr.mxu0 0.0
  %1798 = vmatpush1.msra.mxu0 0.0
  %1799 = vmatprep.mubr.f32.mxu0 0.0
  %1800 = vmatmul.mubr.f32.gmra.mrb[0].mxu0 %v1733
  %v1801 = vpop.f32.mrb[0].mxu0
  %v1802 = vadd.f32 0.0, %v1801
  %v1803 = vpop.f32.mrb[0].mxu0
  %1804 = vdwg.mxu0
  %v1806 = vrot.slane %v1649, 2
  %v1808 = vadd.f32 %v1806, %v1802
  %v1809 = vxor.u32 %v1726, 2147483648
  %v1810 = vmul.f32 %v1809, 1.442695
  %v1811 = vpow.pop %v1810
  %v1812 = vadd.f32 %v1811, 1.0
  %v1813 = vrcp.pop %v1812
  %v1814 = vmul.f32 1.0, %v1813
  %v1815 = vtanh.pop %v1726
  %v1816 = vmul.f32 %v1814, %v1593
  %1818 = vrot.lane.b32.xlu0 %v1815, 32
  %v1819 = vpop.permute.xlu0 %1818
  %v1821 = vmul.f32 %v1814, %v1819
  %1823 = vrot.lane.b32.xlu0 %v1821, 32
  %v1824 = vpop.permute.xlu0 %1823
  %v1826 = vadd.f32 %v1816, %v1824
  %v1827 = vtanh.pop %v1826
  %1829 = vrot.lane.b32.xlu0 %v1827, 32
  %v1830 = vpop.permute.xlu0 %1829
  %v1832 = vmul.f32 %v1814, %v1830
  %v1833 = vxor.u32 %v1808, 2147483648
  %v1834 = vmul.f32 %v1833, 1.442695
  %v1835 = vpow.pop %v1834
  %v1836 = vadd.f32 %v1835, 1.0
  %v1837 = vrcp.pop %v1836
  %v1838 = vmul.f32 1.0, %v1837
  %v1839 = vtanh.pop %v1808
  %v1840 = vmul.f32 %v1838, %v1617
  %1842 = vrot.lane.b32.xlu0 %v1839, 32
  %v1843 = vpop.permute.xlu0 %1842
  %v1845 = vmul.f32 %v1838, %v1843
  %1847 = vrot.lane.b32.xlu0 %v1845, 32
  %v1848 = vpop.permute.xlu0 %1847
  %v1850 = vadd.f32 %v1840, %v1848
  %v1851 = vtanh.pop %v1850
  %1853 = vrot.lane.b32.xlu0 %v1851, 32
  %v1854 = vpop.permute.xlu0 %1853
  %v1856 = vmul.f32 %v1838, %v1854
  %v1859 = vunpack.c.l.s4 1983009808
  %v1860 = vunpack.c.0.s8 %v1859
  %v1861 = vlaneseq
  %v1862 = vshrl.u32 %v1861, 7
  %v1863 = vsub.s32 %v1860, %v1862
  %v1864 = vrot.slane %v1832, %v1863
  %1865 = vrot.lane.b32.xlu0 %v1864, 64
  %v1866 = vpop.permute.xlu0 %1865
  %1868 = vst.msk [vmem:[%s706] sm:$0x3] %vm455, %v1866
  %v1871 = vunpack.c.l.s4 1983009808
  %v1872 = vunpack.c.0.s8 %v1871
  %v1873 = vlaneseq
  %v1874 = vshrl.u32 %v1873, 7
  %v1875 = vsub.s32 %v1872, %v1874
  %v1876 = vrot.slane %v1856, %v1875
  %1877 = vrot.lane.b32.xlu0 %v1876, 96
  %v1878 = vpop.permute.xlu0 %1877
  %1880 = vst.msk [vmem:[%s693] sm:$0x3] %vm469, %v1878
  %v1881 = vld [vmem:[%s237] sm:$0xf]
  %v1882 = vld [vmem:[#allocation2] sm:$0xf]
  %v1883 = vld [vmem:[%s2] sm:$0xff]
  %v1884 = vld [vmem:[%s2 + $0x8] sm:$0xff]
  %v1885 = vld [vmem:[%s2 + $0x10] sm:$0xff]
  %v1886 = vld [vmem:[%s2 + $0x18] sm:$0xff]
  %v1887 = vsel %vm243, %v1866, 0
  %1889 = vmatprep.subr.mxu0 0.0
  %1890 = vmatpush1.msra.mxu0 %v1883
  %1891 = vmatprep.subr.mxu0 0.0
  %1892 = vmatpush1.msra.mxu0 %v1884
  %1893 = vmatprep.subr.mxu0 0.0
  %1894 = vmatpush1.msra.mxu0 %v1885
  %1895 = vmatprep.subr.mxu0 0.0
  %1896 = vmatpush1.msra.mxu0 %v1886
  %1897 = vmatprep.subr.mxu0 0.0
  %1898 = vmatpush1.msra.mxu0 0.0
  %1899 = vmatprep.subr.mxu0 0.0
  %1900 = vmatpush1.msra.mxu0 0.0
  %1901 = vmatprep.subr.mxu0 0.0
  %1902 = vmatpush1.msra.mxu0 0.0
  %1903 = vmatprep.subr.mxu0 0.0
  %1904 = vmatpush1.msra.mxu0 0.0
  %1905 = vmatprep.subr.mxu0 0.0
  %1906 = vmatpush1.msra.mxu0 0.0
  %1907 = vmatprep.subr.mxu0 0.0
  %1908 = vmatpush1.msra.mxu0 0.0
  %1909 = vmatprep.subr.mxu0 0.0
  %1910 = vmatpush1.msra.mxu0 0.0
  %1911 = vmatprep.subr.mxu0 0.0
  %1912 = vmatpush1.msra.mxu0 0.0
  %1913 = vmatprep.subr.mxu0 0.0
  %1914 = vmatpush1.msra.mxu0 0.0
  %1915 = vmatprep.subr.mxu0 0.0
  %1916 = vmatpush1.msra.mxu0 0.0
  %1917 = vmatprep.subr.mxu0 0.0
  %1918 = vmatpush1.msra.mxu0 0.0
  %1919 = vmatprep.subr.mxu0 0.0
  %1920 = vmatpush1.msra.mxu0 0.0
  %1921 = vmatprep.subr.mxu0 0.0
  %1922 = vmatpush1.msra.mxu0 0.0
  %1923 = vmatprep.subr.mxu0 0.0
  %1924 = vmatpush1.msra.mxu0 0.0
  %1925 = vmatprep.subr.mxu0 0.0
  %1926 = vmatpush1.msra.mxu0 0.0
  %1927 = vmatprep.subr.mxu0 0.0
  %1928 = vmatpush1.msra.mxu0 0.0
  %1929 = vmatprep.subr.mxu0 0.0
  %1930 = vmatpush1.msra.mxu0 0.0
  %1931 = vmatprep.subr.mxu0 0.0
  %1932 = vmatpush1.msra.mxu0 0.0
  %1933 = vmatprep.subr.mxu0 0.0
  %1934 = vmatpush1.msra.mxu0 0.0
  %1935 = vmatprep.subr.mxu0 0.0
  %1936 = vmatpush1.msra.mxu0 0.0
  %1937 = vmatprep.subr.mxu0 0.0
  %1938 = vmatpush1.msra.mxu0 0.0
  %1939 = vmatprep.subr.mxu0 0.0
  %1940 = vmatpush1.msra.mxu0 0.0
  %1941 = vmatprep.subr.mxu0 0.0
  %1942 = vmatpush1.msra.mxu0 0.0
  %1943 = vmatprep.subr.mxu0 0.0
  %1944 = vmatpush1.msra.mxu0 0.0
  %1945 = vmatprep.subr.mxu0 0.0
  %1946 = vmatpush1.msra.mxu0 0.0
  %1947 = vmatprep.subr.mxu0 0.0
  %1948 = vmatpush1.msra.mxu0 0.0
  %1949 = vmatprep.subr.mxu0 0.0
  %1950 = vmatpush1.msra.mxu0 0.0
  %1951 = vmatprep.subr.mxu0 0.0
  %1952 = vmatpush1.msra.mxu0 0.0
  %1953 = vmatprep.mubr.f32.mxu0 0.0
  %1954 = vmatmul.mubr.f32.gmra.mrb[0].mxu0 %v1887
  %v1955 = vpop.f32.mrb[0].mxu0
  %v1956 = vadd.f32 0.0, %v1955
  %v1957 = vpop.f32.mrb[0].mxu0
  %1958 = vdwg.mxu0
  %v1959 = vadd.f32 %v1881, %v1956
  %v1960 = vld [vmem:[%s3] sm:$0xff]
  %v1961 = vld [vmem:[%s3 + $0x8] sm:$0xff]
  %v1962 = vld [vmem:[%s3 + $0x10] sm:$0xff]
  %v1963 = vld [vmem:[%s3 + $0x18] sm:$0xff]
  %1964 = vrot.lane.b32.xlu0 %v1876, 64
  %v1965 = vpop.permute.xlu0 %1964
  %v1966 = vsel %vm243, %v1965, 0
  %1968 = vmatprep.subr.mxu0 0.0
  %1969 = vmatpush1.msra.mxu0 %v1960
  %1970 = vmatprep.subr.mxu0 0.0
  %1971 = vmatpush1.msra.mxu0 %v1961
  %1972 = vmatprep.subr.mxu0 0.0
  %1973 = vmatpush1.msra.mxu0 %v1962
  %1974 = vmatprep.subr.mxu0 0.0
  %1975 = vmatpush1.msra.mxu0 %v1963
  %1976 = vmatprep.subr.mxu0 0.0
  %1977 = vmatpush1.msra.mxu0 0.0
  %1978 = vmatprep.subr.mxu0 0.0
  %1979 = vmatpush1.msra.mxu0 0.0
  %1980 = vmatprep.subr.mxu0 0.0
  %1981 = vmatpush1.msra.mxu0 0.0
  %1982 = vmatprep.subr.mxu0 0.0
  %1983 = vmatpush1.msra.mxu0 0.0
  %1984 = vmatprep.subr.mxu0 0.0
  %1985 = vmatpush1.msra.mxu0 0.0
  %1986 = vmatprep.subr.mxu0 0.0
  %1987 = vmatpush1.msra.mxu0 0.0
  %1988 = vmatprep.subr.mxu0 0.0
  %1989 = vmatpush1.msra.mxu0 0.0
  %1990 = vmatprep.subr.mxu0 0.0
  %1991 = vmatpush1.msra.mxu0 0.0
  %1992 = vmatprep.subr.mxu0 0.0
  %1993 = vmatpush1.msra.mxu0 0.0
  %1994 = vmatprep.subr.mxu0 0.0
  %1995 = vmatpush1.msra.mxu0 0.0
  %1996 = vmatprep.subr.mxu0 0.0
  %1997 = vmatpush1.msra.mxu0 0.0
  %1998 = vmatprep.subr.mxu0 0.0
  %1999 = vmatpush1.msra.mxu0 0.0
  %2000 = vmatprep.subr.mxu0 0.0
  %2001 = vmatpush1.msra.mxu0 0.0
  %2002 = vmatprep.subr.mxu0 0.0
  %2003 = vmatpush1.msra.mxu0 0.0
  %2004 = vmatprep.subr.mxu0 0.0
  %2005 = vmatpush1.msra.mxu0 0.0
  %2006 = vmatprep.subr.mxu0 0.0
  %2007 = vmatpush1.msra.mxu0 0.0
  %2008 = vmatprep.subr.mxu0 0.0
  %2009 = vmatpush1.msra.mxu0 0.0
  %2010 = vmatprep.subr.mxu0 0.0
  %2011 = vmatpush1.msra.mxu0 0.0
  %2012 = vmatprep.subr.mxu0 0.0
  %2013 = vmatpush1.msra.mxu0 0.0
  %2014 = vmatprep.subr.mxu0 0.0
  %2015 = vmatpush1.msra.mxu0 0.0
  %2016 = vmatprep.subr.mxu0 0.0
  %2017 = vmatpush1.msra.mxu0 0.0
  %2018 = vmatprep.subr.mxu0 0.0
  %2019 = vmatpush1.msra.mxu0 0.0
  %2020 = vmatprep.subr.mxu0 0.0
  %2021 = vmatpush1.msra.mxu0 0.0
  %2022 = vmatprep.subr.mxu0 0.0
  %2023 = vmatpush1.msra.mxu0 0.0
  %2024 = vmatprep.subr.mxu0 0.0
  %2025 = vmatpush1.msra.mxu0 0.0
  %2026 = vmatprep.subr.mxu0 0.0
  %2027 = vmatpush1.msra.mxu0 0.0
  %2028 = vmatprep.subr.mxu0 0.0
  %2029 = vmatpush1.msra.mxu0 0.0
  %2030 = vmatprep.subr.mxu0 0.0
  %2031 = vmatpush1.msra.mxu0 0.0
  %2032 = vmatprep.mubr.f32.mxu0 0.0
  %2033 = vmatmul.mubr.f32.gmra.mrb[0].mxu0 %v1966
  %v2034 = vpop.f32.mrb[0].mxu0
  %v2035 = vadd.f32 0.0, %v2034
  %v2036 = vpop.f32.mrb[0].mxu0
  %2037 = vdwg.mxu0
  %v2039 = vrot.slane %v1882, 2
  %v2041 = vadd.f32 %v2039, %v2035
  %v2042 = vxor.u32 %v1959, 2147483648
  %v2043 = vmul.f32 %v2042, 1.442695
  %v2044 = vpow.pop %v2043
  %v2045 = vadd.f32 %v2044, 1.0
  %v2046 = vrcp.pop %v2045
  %v2047 = vmul.f32 1.0, %v2046
  %v2048 = vtanh.pop %v1959
  %v2049 = vmul.f32 %v2047, %v1826
  %2051 = vrot.lane.b32.xlu0 %v2048, 32
  %v2052 = vpop.permute.xlu0 %2051
  %v2054 = vmul.f32 %v2047, %v2052
  %2056 = vrot.lane.b32.xlu0 %v2054, 32
  %v2057 = vpop.permute.xlu0 %2056
  %v2059 = vadd.f32 %v2049, %v2057
  %v2060 = vtanh.pop %v2059
  %2062 = vrot.lane.b32.xlu0 %v2060, 32
  %v2063 = vpop.permute.xlu0 %2062
  %v2065 = vmul.f32 %v2047, %v2063
  %v2066 = vxor.u32 %v2041, 2147483648
  %v2067 = vmul.f32 %v2066, 1.442695
  %v2068 = vpow.pop %v2067
  %v2069 = vadd.f32 %v2068, 1.0
  %v2070 = vrcp.pop %v2069
  %v2071 = vmul.f32 1.0, %v2070
  %v2072 = vtanh.pop %v2041
  %v2073 = vmul.f32 %v2071, %v1850
  %2075 = vrot.lane.b32.xlu0 %v2072, 32
  %v2076 = vpop.permute.xlu0 %2075
  %v2078 = vmul.f32 %v2071, %v2076
  %2080 = vrot.lane.b32.xlu0 %v2078, 32
  %v2081 = vpop.permute.xlu0 %2080
  %v2083 = vadd.f32 %v2073, %v2081
  %v2084 = vtanh.pop %v2083
  %2086 = vrot.lane.b32.xlu0 %v2084, 32
  %v2087 = vpop.permute.xlu0 %2086
  %v2089 = vmul.f32 %v2071, %v2087
  %v2092 = vunpack.c.l.s4 1983009808
  %v2093 = vunpack.c.0.s8 %v2092
  %v2094 = vlaneseq
  %v2095 = vshrl.u32 %v2094, 7
  %v2096 = vsub.s32 %v2093, %v2095
  %v2097 = vrot.slane %v2065, %v2096
  %2098 = vrot.lane.b32.xlu0 %v2097, 64
  %v2099 = vpop.permute.xlu0 %2098
  %2101 = vst.msk [vmem:[%s468] sm:$0x3] %vm455, %v2099
  %v2104 = vunpack.c.l.s4 1983009808
  %v2105 = vunpack.c.0.s8 %v2104
  %v2106 = vlaneseq
  %v2107 = vshrl.u32 %v2106, 7
  %v2108 = vsub.s32 %v2105, %v2107
  %v2109 = vrot.slane %v2089, %v2108
  %2110 = vrot.lane.b32.xlu0 %v2109, 96
  %v2111 = vpop.permute.xlu0 %2110
  %2113 = vst.msk [vmem:[%s5] sm:$0x3] %vm469, %v2111
  // Predicated region
  $region22: #{lstm_classifier_forward.4} parent=0 // pred_check
    _
  $region23: #{lstm_classifier_forward.4} parent=0 // pred_check_branch
    %2115 = sbr.rel (0) target = $region25
  $region24: #{lstm_classifier_forward.4} parent=0 // pred_region
    _
  $region25: #{lstm_classifier_forward.4} parent=0 // pred_fallthru
    _
  // Predicated region
  $region26: #{lstm_classifier_forward.4} parent=0 // pred_check
    _
  $region27: #{lstm_classifier_forward.4} parent=0 // pred_check_branch
    %2117 = sbr.rel (0) target = $region29
  $region28: #{lstm_classifier_forward.4} parent=0 // pred_region
    _
  $region29: #{lstm_classifier_forward.4} parent=0 // pred_fallthru
    _

</llo_original>
